<compile_context>
chip_gen: v7x
topology: tpu7x:2x2x1
jax: 0.10.0
libtpu: 0.0.40
codegen_flags: <defaults>
</compile_context>

<pallas_src>
import functools

import jax
import jax.numpy as jnp
from jax.experimental import pallas as pl
from jax.experimental.pallas import tpu as pltpu

IN_FEATURES = 196608   # 3 * 256 * 256, fixed by the module definition
OUT_FEATURES = 10
N_SPLIT = 2            # K-stream split across TensorCores (parallel grid axis)


def _linear_kernel(x_ref, w_ref, o_ref, *acc_refs):
    """One K-tile of the partial  out_p[n, b] = sum_k w[n, k] * x[b, k].

    x_ref   : (B, tk)  VMEM -- activation K-tile
    w_ref   : (N, tk)  VMEM -- PyTorch-native [N, K] weight K-tile (lane-dense)
    o_ref   : (N, B)   VMEM -- per-split partial output (split axis squeezed)
    acc_refs: B refs of (N, 1) f32 VMEM scratch accumulators (one per batch row)
    """
    k = pl.program_id(1)

    @pl.when(k == 0)
    def _():
        for acc in acc_refs:
            acc[...] = jnp.zeros_like(acc)

    w = w_ref[...]                                  # (N, tk), lane-dense f32
    for b, acc in enumerate(acc_refs):              # static unroll over batch (B=2)
        xb = x_ref[pl.ds(b, 1), :]                  # (1, tk) -> sublane broadcast
        # VPU multiply + lane-axis reduction (XLU finish); no MXU involved.
        acc[...] += jnp.sum(w * xb, axis=1, keepdims=True)   # (N, 1)

    @pl.when(k == pl.num_programs(1) - 1)
    def _():
        for b, acc in enumerate(acc_refs):
            o_ref[:, pl.ds(b, 1)] = acc[...]        # tiny masked column store


@functools.partial(jax.jit, static_argnames=("tk",))
def linear_pallas(x, w, b, *, tk=49152):
    """out[B, N] = x[B, K] @ w[N, K]^T + b[N]  via a K-tiled Pallas kernel.

    `tk` must divide K // N_SPLIT (K = 196608; valid tk with N_SPLIT=2
    include 8192, 16384, 24576, 32768, 49152, 98304).
    """
    B, K = x.shape
    N, Kw = w.shape
    assert K == Kw
    assert K % (N_SPLIT * tk) == 0, "tk must divide K // N_SPLIT"
    nk = (K // N_SPLIT) // tk  # K-steps per split

    partials = pl.pallas_call(
        _linear_kernel,
        out_shape=jax.ShapeDtypeStruct((N_SPLIT, N, B), jnp.float32),
        grid_spec=pltpu.PrefetchScalarGridSpec(
            num_scalar_prefetch=0,
            grid=(N_SPLIT, nk),
            in_specs=[
                # x: walk K; split p handles K-blocks [p*nk, (p+1)*nk)
                pl.BlockSpec((B, tk), lambda p, k: (0, p * nk + k)),
                # w: same K walk, lane-dense [N, tk] tiles
                pl.BlockSpec((N, tk), lambda p, k: (0, p * nk + k)),
            ],
            # One (N, B) partial per split; resident across the reduction axis.
            out_specs=pl.BlockSpec((None, N, B), lambda p, k: (p, 0, 0)),
            scratch_shapes=[pltpu.VMEM((N, 1), jnp.float32) for _ in range(B)],
        ),
        compiler_params=pltpu.CompilerParams(
            # split axis can be sharded across TensorCores (v7x megacore);
            # the K axis is a reduction.
            dimension_semantics=("parallel", "arbitrary"),
            vmem_limit_bytes=32 * 1024 * 1024,
        ),
    )(x, w)

    # Combine the K-half partials and add the bias (tiny (B, N) op).
    out = jnp.transpose(partials.sum(axis=0)) + b[None, :]
    return out.astype(x.dtype)


def init_params(key, in_features=IN_FEATURES, out_features=OUT_FEATURES,
                dtype=jnp.float32):
    """Deterministic init matching PyTorch Linear's default:
    U(-1/sqrt(in_features), 1/sqrt(in_features)) for weight and bias.
    Weight kept in PyTorch-native (out_features, in_features) layout."""
    kw, kb = jax.random.split(key)
    bound = 1.0 / jnp.sqrt(jnp.float32(in_features))
    w = jax.random.uniform(kw, (out_features, in_features), dtype,
                           minval=-bound, maxval=bound)
    b = jax.random.uniform(kb, (out_features,), dtype,
                           minval=-bound, maxval=bound)
    return w, b


if __name__ == "__main__":
    key = jax.random.PRNGKey(0)
    k_x, k_p = jax.random.split(key)

    batch = 2
    x = jax.random.normal(k_x, (batch, IN_FEATURES), dtype=jnp.float32)
    w, b = init_params(k_p)

    out = linear_pallas(x, w, b)
    out = jax.block_until_ready(out)

    # Sanity check against plain-JAX reference (PyTorch semantics: x @ W^T + b).
    ref = x @ w.T + b
    assert out.shape == (batch, OUT_FEATURES)
    assert jnp.allclose(out, ref, atol=2e-3, rtol=1e-3)

    print("KERNEL_OK")
</pallas_src>

<mosaic_0001>
module attributes {stable_mosaic.version = 11 : i64} {
  func.func @_linear_kernel(%arg0: i32, %arg1: i32, %arg2: memref<2x49152xf32, #tpu.memory_space<vmem>>, %arg3: memref<10x49152xf32, #tpu.memory_space<vmem>>, %arg4: memref<1x10x2xf32, #tpu.memory_space<vmem>>, %arg5: memref<10x1xf32, #tpu.memory_space<vmem>>, %arg6: memref<10x1xf32, #tpu.memory_space<vmem>>) attributes {dimension_semantics = [#tpu.dimension_semantics<parallel>, #tpu.dimension_semantics<arbitrary>], iteration_bounds = array<i64: 2, 2>, scalar_prefetch = 0 : i64, scratch_operands = 2 : i64, tpu.core_type = #tpu.core_type<tc>, window_params = [{transform_indices = @transform_0, window_bounds = array<i64: 2, 49152>}, {transform_indices = @transform_1, window_bounds = array<i64: 10, 49152>}, {transform_indices = @transform_2, window_bounds = array<i64: 1, 10, 2>}]} {
    %c0_i32 = arith.constant 0 : i32
    %0 = arith.cmpi eq, %arg1, %c0_i32 : i32
    %1 = arith.extui %0 : i1 to i32
    %c0_i32_0 = arith.constant 0 : i32
    %2 = arith.cmpi ne, %1, %c0_i32_0 : i32
    scf.if %2 {
      %cst_15 = arith.constant 0.000000e+00 : f32
      %23 = vector.broadcast %cst_15 : f32 to vector<10x1xf32>
      %c0_16 = arith.constant 0 : index
      %c0_17 = arith.constant 0 : index
      %24 = vector.load %arg5[%c0_16, %c0_17] : memref<10x1xf32, #tpu.memory_space<vmem>>, vector<10x1xf32>
      tpu.vector_store %arg5[%c0_16, %c0_17], %23 {strides = array<i32>} : memref<10x1xf32, #tpu.memory_space<vmem>>, vector<10x1xf32>,
      %cst_18 = arith.constant 0.000000e+00 : f32
      %25 = vector.broadcast %cst_18 : f32 to vector<10x1xf32>
      %c0_19 = arith.constant 0 : index
      %c0_20 = arith.constant 0 : index
      %26 = vector.load %arg6[%c0_19, %c0_20] : memref<10x1xf32, #tpu.memory_space<vmem>>, vector<10x1xf32>
      tpu.vector_store %arg6[%c0_19, %c0_20], %25 {strides = array<i32>} : memref<10x1xf32, #tpu.memory_space<vmem>>, vector<10x1xf32>,
    } else {
    }
    %c0 = arith.constant 0 : index
    %c0_1 = arith.constant 0 : index
    %3 = vector.load %arg3[%c0, %c0_1] : memref<10x49152xf32, #tpu.memory_space<vmem>>, vector<10x49152xf32>
    %c0_2 = arith.constant 0 : index
    %c0_3 = arith.constant 0 : index
    %4 = vector.load %arg2[%c0_2, %c0_3] : memref<2x49152xf32, #tpu.memory_space<vmem>>, vector<1x49152xf32>
    %c0_4 = arith.constant 0 : index
    %c0_5 = arith.constant 0 : index
    %5 = vector.load %arg5[%c0_4, %c0_5] : memref<10x1xf32, #tpu.memory_space<vmem>>, vector<10x1xf32>
    %6 = vector.broadcast %4 : vector<1x49152xf32> to vector<10x49152xf32>
    %7 = arith.mulf %3, %6 : vector<10x49152xf32>
    %cst = arith.constant dense<0.000000e+00> : vector<10xf32>
    %8 = vector.multi_reduction <add>, %7, %cst [1] : vector<10x49152xf32> to vector<10xf32>
    %9 = vector.shape_cast %8 : vector<10xf32> to vector<10x1xf32>
    %10 = arith.addf %5, %9 : vector<10x1xf32>
    %c0_6 = arith.constant 0 : index
    %c0_7 = arith.constant 0 : index
    %11 = vector.load %arg5[%c0_6, %c0_7] : memref<10x1xf32, #tpu.memory_space<vmem>>, vector<10x1xf32>
    tpu.vector_store %arg5[%c0_6, %c0_7], %10 {strides = array<i32>} : memref<10x1xf32, #tpu.memory_space<vmem>>, vector<10x1xf32>,
    %c1 = arith.constant 1 : index
    %c0_8 = arith.constant 0 : index
    %12 = vector.load %arg2[%c1, %c0_8] : memref<2x49152xf32, #tpu.memory_space<vmem>>, vector<1x49152xf32>
    %c0_9 = arith.constant 0 : index
    %c0_10 = arith.constant 0 : index
    %13 = vector.load %arg6[%c0_9, %c0_10] : memref<10x1xf32, #tpu.memory_space<vmem>>, vector<10x1xf32>
    %14 = vector.broadcast %12 : vector<1x49152xf32> to vector<10x49152xf32>
    %15 = arith.mulf %3, %14 : vector<10x49152xf32>
    %cst_11 = arith.constant dense<0.000000e+00> : vector<10xf32>
    %16 = vector.multi_reduction <add>, %15, %cst_11 [1] : vector<10x49152xf32> to vector<10xf32>
    %17 = vector.shape_cast %16 : vector<10xf32> to vector<10x1xf32>
    %18 = arith.addf %13, %17 : vector<10x1xf32>
    %c0_12 = arith.constant 0 : index
    %c0_13 = arith.constant 0 : index
    %19 = vector.load %arg6[%c0_12, %c0_13] : memref<10x1xf32, #tpu.memory_space<vmem>>, vector<10x1xf32>
    tpu.vector_store %arg6[%c0_12, %c0_13], %18 {strides = array<i32>} : memref<10x1xf32, #tpu.memory_space<vmem>>, vector<10x1xf32>,
    %c1_i32 = arith.constant 1 : i32
    %20 = arith.cmpi eq, %arg1, %c1_i32 : i32
    %21 = arith.extui %20 : i1 to i32
    %c0_i32_14 = arith.constant 0 : i32
    %22 = arith.cmpi ne, %21, %c0_i32_14 : i32
    scf.if %22 {
      %c0_15 = arith.constant 0 : index
      %c0_16 = arith.constant 0 : index
      %23 = vector.load %arg5[%c0_15, %c0_16] : memref<10x1xf32, #tpu.memory_space<vmem>>, vector<10x1xf32>
      %c0_17 = arith.constant 0 : index
      %c0_18 = arith.constant 0 : index
      %c0_19 = arith.constant 0 : index
      %24 = vector.load %arg4[%c0_17, %c0_18, %c0_19] : memref<1x10x2xf32, #tpu.memory_space<vmem>>, vector<1x10x1xf32>
      %25 = vector.shape_cast %24 : vector<1x10x1xf32> to vector<10x1xf32>
      %26 = vector.shape_cast %23 : vector<10x1xf32> to vector<1x10x1xf32>
      tpu.vector_store %arg4[%c0_17, %c0_18, %c0_19], %26 {strides = array<i32>} : memref<1x10x2xf32, #tpu.memory_space<vmem>>, vector<1x10x1xf32>,
      %c0_20 = arith.constant 0 : index
      %c0_21 = arith.constant 0 : index
      %27 = vector.load %arg6[%c0_20, %c0_21] : memref<10x1xf32, #tpu.memory_space<vmem>>, vector<10x1xf32>
      %c0_22 = arith.constant 0 : index
      %c0_23 = arith.constant 0 : index
      %c1_24 = arith.constant 1 : index
      %28 = vector.load %arg4[%c0_22, %c0_23, %c1_24] : memref<1x10x2xf32, #tpu.memory_space<vmem>>, vector<1x10x1xf32>
      %29 = vector.shape_cast %28 : vector<1x10x1xf32> to vector<10x1xf32>
      %30 = vector.shape_cast %27 : vector<10x1xf32> to vector<1x10x1xf32>
      tpu.vector_store %arg4[%c0_22, %c0_23, %c1_24], %30 {strides = array<i32>} : memref<1x10x2xf32, #tpu.memory_space<vmem>>, vector<1x10x1xf32>,
    } else {
    }
    return
  }
  func.func @transform_0(%arg0: i32, %arg1: i32) -> (i32, i32) {
    %c2_i32 = arith.constant 2 : i32
    %0 = arith.muli %arg0, %c2_i32 : i32
    %1 = arith.addi %0, %arg1 : i32
    %c0_i32 = arith.constant 0 : i32
    %c0_i32_0 = arith.constant 0 : i32
    return %c0_i32, %1 : i32, i32
  }
  func.func @transform_1(%arg0: i32, %arg1: i32) -> (i32, i32) {
    %c2_i32 = arith.constant 2 : i32
    %0 = arith.muli %arg0, %c2_i32 : i32
    %1 = arith.addi %0, %arg1 : i32
    %c0_i32 = arith.constant 0 : i32
    %c0_i32_0 = arith.constant 0 : i32
    return %c0_i32, %1 : i32, i32
  }
  func.func @transform_2(%arg0: i32, %arg1: i32) -> (i32, i32, i32) {
    %c0_i32 = arith.constant 0 : i32
    %c0_i32_0 = arith.constant 0 : i32
    %c0_i32_1 = arith.constant 0 : i32
    return %arg0, %c0_i32, %c0_i32_0 : i32, i32, i32
  }
}

</mosaic_0001>

<llo_original>
// kernel: linear_pallas.1
$region0: #{linear_pallas.1}
  #allocation0 [shape = 'u32[]', space=smem, size = 0x4, offset = 0x4, fixed_abs, tag = 'smem constant byte address 0x4 - core index']
  #allocation1 [shape = 'u32[144,128]{1,0:T(1,128)}', space=vmem, size = 0x12000, scoped, tag = 'internal scratch']
  #allocation2 [shape = 'f32[10,1]{1,0:T(8,128)}', space=vmem, size = 0x2000, scoped, tag = 'scratch operand']
  #allocation3 [shape = 'f32[10,1]{1,0:T(8,128)}', space=vmem, size = 0x2000, scoped, tag = 'scratch operand']
  %s0 = inlined_call_operand.hbm [shape: f32[2,196608], index: 0, kind: input, shape index: {}]
  %s1 = inlined_call_operand.hbm [shape: f32[10,196608], index: 1, kind: input, shape index: {}]
  %s2 = inlined_call_operand.vmem [shape: f32[2,10,2], index: 2, kind: output, shape index: {}]
  %s3 = sld [smem:[#allocation0]]
  $region57: #{linear_pallas.1} parent=0
    _
  %s5 = ssub.s32 1, %s3
  %s6 = scalar_select 0, %s5, %s3
  $region1: #{linear_pallas.1} parent=0
    #allocation4 [shape = 'u8[786432]{0}', space=vmem, size = 0xc0000, scoped, tag = 'input window, operand 0']
    #allocation5 [shape = 's32[2]{0}', space=sflag, size = 0x8, scoped, tag = 'scoped memory for linear_pallas.1']
    #allocation6 [shape = 'u8[6291456]{0}', space=vmem, size = 0x600000, scoped, tag = 'input window, operand 1']
    #allocation7 [shape = 's32[2]{0}', space=sflag, size = 0x8, scoped, tag = 'scoped memory for linear_pallas.1']
    %7 = vsyncpa [#allocation5], 0
    %s8 = scalar_lea.sflag [#allocation5], 1
    %9 = vsyncpa %s8, 0
    %10 = vsyncpa [#allocation7], 0
    %s11 = scalar_lea.sflag [#allocation7], 1
    %12 = vsyncpa %s11, 0
    loop: start=0, step=1, limit=6
    $region2: #{linear_pallas.1} parent=1 // loop_pre_header
      _
    $region3: #{linear_pallas.1} parent=1 // loop_header
      %s14 = sphi 0, %s18
      %p15 = scmp.ge.s32.totalorder %s14, 6
      %s21 = sphi 0, %s33
      %s22 = sphi 0, %s29
      %s23 = sphi 0, %s21
      %s24 = sphi 0, %s22
      %s25 = sphi 0, %s23
      %s26 = sphi 0, %s24
      %s40 = sphi 0, %s42
      %s43 = sphi 0, %s40
      %s44 = sphi 0, %s43
      %s60 = sphi 0, %s44
      %s70 = sphi 0, %s72
      %s73 = sphi 0, %s70
      %s74 = sphi 0, %s73
      %s90 = sphi 0, %s74
      %s96 = sphi 0, %s98
      %s99 = sphi 0, %s96
      %s100 = sphi 0, %s99
      %s116 = sphi 0, %s100
    $region4: #{linear_pallas.1} parent=1 // loop_header_branch
      %17 = sbr.rel (%p15) target = $region8
    $region5: #{linear_pallas.1} parent=1 // loop_body
      %s19 = ssub.s32 %s14, 1
      %s20 = ssub.s32 %s14, 2
      %s27 = sadd.s32 1, %s22
      %p28 = scmp.ge.s32.totalorder %s27, 2
      %s29 = scalar_select %p28, 0, %s27
      %s30 = sadd.s32 1, %s21
      %s31 = scalar_select %p28, %s30, %s21
      %p32 = scmp.ge.s32.totalorder %s31, 2
      %s33 = scalar_select %p32, 0, %s31
      %s34 = smul.u32 %s21, 2
      %s35 = sadd.s32 %s34, %s22
      %s36 = smul.u32 %s33, 2
      %s37 = sadd.s32 %s36, %s29
      %s38 = ssub.s32 %s35, %s37
      %p39 = scmp.eq.s32.totalorder %s38, 0
      %s41 = sadd.s32 %s40, 1
      %s42 = scalar_select %p39, %s40, %s41
      %p45 = pneg %p39
      %p46 = scmp.eq.s32.totalorder %s14, 3
      %p47 = por %p45, %p46
      %p48 = scmp.ne.s32.totalorder %s40, %s43
      %p49 = scmp.eq.s32.totalorder %s14, 0
      %p50 = por %p48, %p49
      %p51 = scmp.ne.s32.totalorder %s40, %s43
      %p52 = scmp.eq.s32.totalorder %s19, 3
      %p53 = por %p51, %p52
      %p54 = scmp.ne.s32.totalorder %s43, %s44
      %p55 = scmp.eq.s32.totalorder %s19, 0
      %p56 = por %p54, %p55
      %p57 = scmp.ne.s32.totalorder %s43, %s44
      %p58 = scmp.eq.s32.totalorder %s20, 3
      %p59 = por %p57, %p58
      %p61 = scmp.ne.s32.totalorder %s44, %s60
      %p62 = scmp.eq.s32.totalorder %s20, 0
      %p63 = por %p61, %p62
      %s64 = smul.u32 %s21, 2
      %s65 = sadd.s32 %s64, %s22
      %s66 = smul.u32 %s33, 2
      %s67 = sadd.s32 %s66, %s29
      %s68 = ssub.s32 %s65, %s67
      %p69 = scmp.eq.s32.totalorder %s68, 0
      %s71 = sadd.s32 %s70, 1
      %s72 = scalar_select %p69, %s70, %s71
      %p75 = pneg %p69
      %p76 = scmp.eq.s32.totalorder %s14, 3
      %p77 = por %p75, %p76
      %p78 = scmp.ne.s32.totalorder %s70, %s73
      %p79 = scmp.eq.s32.totalorder %s14, 0
      %p80 = por %p78, %p79
      %p81 = scmp.ne.s32.totalorder %s70, %s73
      %p82 = scmp.eq.s32.totalorder %s19, 3
      %p83 = por %p81, %p82
      %p84 = scmp.ne.s32.totalorder %s73, %s74
      %p85 = scmp.eq.s32.totalorder %s19, 0
      %p86 = por %p84, %p85
      %p87 = scmp.ne.s32.totalorder %s73, %s74
      %p88 = scmp.eq.s32.totalorder %s20, 3
      %p89 = por %p87, %p88
      %p91 = scmp.ne.s32.totalorder %s74, %s90
      %p92 = scmp.eq.s32.totalorder %s20, 0
      %p93 = por %p91, %p92
      %s94 = ssub.s32 %s21, %s33
      %p95 = scmp.eq.s32.totalorder %s94, 0
      %s97 = sadd.s32 %s96, 1
      %s98 = scalar_select %p95, %s96, %s97
      %p101 = pneg %p95
      %p102 = scmp.eq.s32.totalorder %s14, 3
      %p103 = por %p101, %p102
      %p104 = scmp.ne.s32.totalorder %s96, %s99
      %p105 = scmp.eq.s32.totalorder %s14, 0
      %p106 = por %p104, %p105
      %p107 = scmp.ne.s32.totalorder %s96, %s99
      %p108 = scmp.eq.s32.totalorder %s19, 3
      %p109 = por %p107, %p108
      %p110 = scmp.ne.s32.totalorder %s99, %s100
      %p111 = scmp.eq.s32.totalorder %s19, 0
      %p112 = por %p110, %p111
      %p113 = scmp.ne.s32.totalorder %s99, %s100
      %p114 = scmp.eq.s32.totalorder %s20, 3
      %p115 = por %p113, %p114
      %p117 = scmp.ne.s32.totalorder %s100, %s116
      %p118 = scmp.eq.s32.totalorder %s20, 0
      %p119 = por %p117, %p118
      %p120 = scmp.le.s32.totalorder 1, %s14
      %p121 = scmp.lt.s32.totalorder %s14, 5
      %p122 = pnand %p120, %p121
      %p123 = pneg %p122
      // Predicated region
      $region9: #{linear_pallas.1} parent=5 // pred_check
        _
      $region10: #{linear_pallas.1} parent=5 // pred_check_branch
        %125 = sbr.rel (%p122) target = $region12
      $region11: #{linear_pallas.1} parent=5 // pred_region
        %s126 = ssub.s32 %s14, 1
      $region12: #{linear_pallas.1} parent=5 // pred_fallthru
        _
      %p127 = scmp.lt.s32.totalorder %s14, 4
      // Predicated region
      $region13: #{linear_pallas.1} parent=5 // pred_check
        %p128 = pneg %p127
      $region14: #{linear_pallas.1} parent=5 // pred_check_branch
        %130 = sbr.rel (%p128) target = $region16
      $region15: #{linear_pallas.1} parent=5 // pred_region
        // Predicated region
        $region17: #{linear_pallas.1} parent=15 // pred_check
          %p131 = pneg %p50
        $region18: #{linear_pallas.1} parent=15 // pred_check_branch
          %133 = sbr.rel (%p131) target = $region20
        $region19: #{linear_pallas.1} parent=15 // pred_region
          %s134 = sand.u32 %s40, 1
          %s135 = scalar_lea.sflag [#allocation5], %s134
          %s136 = sand.u32 %s40, 1
          %s137 = smul.addr %s136, 768
          %s138 = scalar_lea.vmem [#allocation4], %s137
          %s139 = smul.u32 %s21, 2
          %s140 = sadd.s32 %s139, %s22
          %s141 = smul.u32 384, %s140
          %s143 = ssub.s32 12288, 12288
          %144 = vsyncadd %s135, %s143
          %s145 = smul.addr %s141, 32
          %s146 = scalar_lea.hbm %s0, %s145
          %s148 = sshll.u32 %s138, 4
          %s149 = int_to_ptr.vmem [resolvable:$true] %s148
          %151 = dma.hbm_to_vmem [thread:$0]  %s146, 12288, %s149, %s135
        $region20: #{linear_pallas.1} parent=15 // pred_fallthru
          _
        // Predicated region
        $region21: #{linear_pallas.1} parent=15 // pred_check
          %p152 = pneg %p80
        $region22: #{linear_pallas.1} parent=15 // pred_check_branch
          %154 = sbr.rel (%p152) target = $region24
        $region23: #{linear_pallas.1} parent=15 // pred_region
          %s155 = sand.u32 %s70, 1
          %s156 = scalar_lea.sflag [#allocation7], %s155
          %s157 = sand.u32 %s70, 1
          %s158 = smul.addr %s157, 6144
          %s159 = scalar_lea.vmem [#allocation6], %s158
          %s160 = smul.u32 %s21, 2
          %s161 = sadd.s32 %s160, %s22
          %s162 = smul.u32 384, %s161
          %s164 = ssub.s32 98304, 98304
          %165 = vsyncadd %s156, %s164
          %s166 = smul.addr %s162, 128
          %s167 = scalar_lea.hbm %s1, %s166
          %s168 = sshll.u32 %s159, 4
          %s169 = int_to_ptr.vmem [resolvable:$true] %s168
          %174 = dma.hbm_to_vmem [thread:$0]  %s167, 98304, %s169, %s156, 196608, 49152, 3072
        $region24: #{linear_pallas.1} parent=15 // pred_fallthru
          _
      $region16: #{linear_pallas.1} parent=5 // pred_fallthru
        _
      %p175 = scmp.le.s32.totalorder 1, %s14
      %p176 = scmp.lt.s32.totalorder %s14, 5
      %p177 = pnand %p175, %p176
      %p178 = pneg %p177
      // Predicated region
      $region25: #{linear_pallas.1} parent=5 // pred_check
        _
      $region26: #{linear_pallas.1} parent=5 // pred_check_branch
        %180 = sbr.rel (%p177) target = $region28
      $region27: #{linear_pallas.1} parent=5 // pred_region
        %s181 = ssub.s32 %s14, 1
        %s182 = sand.u32 %s43, 1
        %s183 = scalar_lea.sflag [#allocation5], %s182
        %s184 = sand.u32 %s43, 1
        %s185 = smul.addr %s184, 768
        %s186 = scalar_lea.vmem [#allocation4], %s185
        // Predicated region
        $region29: #{linear_pallas.1} parent=27 // pred_check
          %p187 = pneg %p56
        $region30: #{linear_pallas.1} parent=27 // pred_check_branch
          %189 = sbr.rel (%p187) target = $region32
        $region31: #{linear_pallas.1} parent=27 // pred_region
          %190 = dma.done %s183, 12288
        $region32: #{linear_pallas.1} parent=27 // pred_fallthru
          _
        %s191 = sand.u32 %s73, 1
        %s192 = scalar_lea.sflag [#allocation7], %s191
        %s193 = sand.u32 %s73, 1
        %s194 = smul.addr %s193, 6144
        %s195 = scalar_lea.vmem [#allocation6], %s194
        // Predicated region
        $region33: #{linear_pallas.1} parent=27 // pred_check
          %p196 = pneg %p86
        $region34: #{linear_pallas.1} parent=27 // pred_check_branch
          %198 = sbr.rel (%p196) target = $region36
        $region35: #{linear_pallas.1} parent=27 // pred_region
          %199 = dma.done %s192, 98304
        $region36: #{linear_pallas.1} parent=27 // pred_fallthru
          _
        %s200 = sand.u32 %s43, 1
        %s201 = scalar_lea.sflag [#allocation5], %s200
        %s202 = sand.u32 %s43, 1
        %s203 = smul.addr %s202, 768
        %s204 = scalar_lea.vmem [#allocation4], %s203
        %p205 = pneg %p56
        %p206 = pneg %p53
        %s207 = sand.u32 %s73, 1
        %s208 = scalar_lea.sflag [#allocation7], %s207
        %s209 = sand.u32 %s73, 1
        %s210 = smul.addr %s209, 6144
        %s211 = scalar_lea.vmem [#allocation6], %s210
        %p212 = pneg %p86
        %p213 = pneg %p83
        %p214 = pneg %p112
        %p215 = pneg %p109
        %p216 = scmp.lt.s32.totalorder %s23, 1
        %s217 = scalar_select %p216, %s23, 1
        %s218 = smul.addr %s217, 2
        %s219 = smul.addr %s218, 8
        %s220 = scalar_lea.vmem %s2, %s219
        %s221 = smul.u32 %s23, 2
        %s222 = sadd.s32 %s221, %s24
        %s223 = smul.u32 384, %s222
        %s224 = smul.u32 %s23, 2
        %s225 = sadd.s32 %s224, %s24
        %s226 = smul.u32 384, %s225
        %p227 = scmp.lt.s32.totalorder %s23, 1
        %s228 = scalar_select %p227, %s23, 1
        %s229 = smul.addr %s228, 2
        %s230 = smul.addr %s229, 8
        %s231 = scalar_lea.vmem %s2, %s230
        %p232 = scmp.eq.s32.totalorder %s24, 0
        // Predicated region
        $region37: #{linear_pallas.1} parent=27 // pred_check
          %p233 = pneg %p232
        $region38: #{linear_pallas.1} parent=27 // pred_check_branch
          %235 = sbr.rel (%p233) target = $region40
        $region39: #{linear_pallas.1} parent=27 // pred_region
          %vm236 = vcmask 7168
          %237 = vst.msk [vmem:[#allocation2] sm:$0xff] %vm236, 0.0
          %vm238 = vcmask 1024
          %239 = vst.msk [vmem:[#allocation2 + $0x8] sm:$0x3] %vm238, 0.0
          %240 = vst.msk [vmem:[#allocation3] sm:$0xff] %vm236, 0.0
          %241 = vst.msk [vmem:[#allocation3 + $0x8] sm:$0x3] %vm238, 0.0
        $region40: #{linear_pallas.1} parent=27 // pred_fallthru
          _
        %v242 = vld [vmem:[%s195] sm:$0xff]
        %v243 = vld [vmem:[%s195 + $0x8] sm:$0xff]
        %v244 = vld [vmem:[%s195 + $0x10] sm:$0xff]
        %v245 = vld [vmem:[%s195 + $0x18] sm:$0xff]
        %v246 = vld [vmem:[%s195 + $0x20] sm:$0xff]
        %v247 = vld [vmem:[%s195 + $0x28] sm:$0xff]
        %v248 = vld [vmem:[%s195 + $0x30] sm:$0xff]
        %v249 = vld [vmem:[%s195 + $0x38] sm:$0xff]
        %v250 = vld [vmem:[%s195 + $0x40] sm:$0xff]
        %v251 = vld [vmem:[%s195 + $0x48] sm:$0xff]
        %v252 = vld [vmem:[%s195 + $0x50] sm:$0xff]
        %v253 = vld [vmem:[%s195 + $0x58] sm:$0xff]
        %v254 = vld [vmem:[%s195 + $0x60] sm:$0xff]
        %v255 = vld [vmem:[%s195 + $0x68] sm:$0xff]
        %v256 = vld [vmem:[%s195 + $0x70] sm:$0xff]
        %v257 = vld [vmem:[%s195 + $0x78] sm:$0xff]
        %v258 = vld [vmem:[%s195 + $0x80] sm:$0xff]
        %v259 = vld [vmem:[%s195 + $0x88] sm:$0xff]
        %v260 = vld [vmem:[%s195 + $0x90] sm:$0xff]
        %v261 = vld [vmem:[%s195 + $0x98] sm:$0xff]
        %v262 = vld [vmem:[%s195 + $0xa0] sm:$0xff]
        %v263 = vld [vmem:[%s195 + $0xa8] sm:$0xff]
        %v264 = vld [vmem:[%s195 + $0xb0] sm:$0xff]
        %v265 = vld [vmem:[%s195 + $0xb8] sm:$0xff]
        %v266 = vld [vmem:[%s195 + $0xc0] sm:$0xff]
        %v267 = vld [vmem:[%s195 + $0xc8] sm:$0xff]
        %v268 = vld [vmem:[%s195 + $0xd0] sm:$0xff]
        %v269 = vld [vmem:[%s195 + $0xd8] sm:$0xff]
        %v270 = vld [vmem:[%s195 + $0xe0] sm:$0xff]
        %v271 = vld [vmem:[%s195 + $0xe8] sm:$0xff]
        %v272 = vld [vmem:[%s195 + $0xf0] sm:$0xff]
        %v273 = vld [vmem:[%s195 + $0xf8] sm:$0xff]
        %v274 = vld [vmem:[%s195 + $0x100] sm:$0xff]
        %v275 = vld [vmem:[%s195 + $0x108] sm:$0xff]
        %v276 = vld [vmem:[%s195 + $0x110] sm:$0xff]
        %v277 = vld [vmem:[%s195 + $0x118] sm:$0xff]
        %v278 = vld [vmem:[%s195 + $0x120] sm:$0xff]
        %v279 = vld [vmem:[%s195 + $0x128] sm:$0xff]
        %v280 = vld [vmem:[%s195 + $0x130] sm:$0xff]
        %v281 = vld [vmem:[%s195 + $0x138] sm:$0xff]
        %v282 = vld [vmem:[%s195 + $0x140] sm:$0xff]
        %v283 = vld [vmem:[%s195 + $0x148] sm:$0xff]
        %v284 = vld [vmem:[%s195 + $0x150] sm:$0xff]
        %v285 = vld [vmem:[%s195 + $0x158] sm:$0xff]
        %v286 = vld [vmem:[%s195 + $0x160] sm:$0xff]
        %v287 = vld [vmem:[%s195 + $0x168] sm:$0xff]
        %v288 = vld [vmem:[%s195 + $0x170] sm:$0xff]
        %v289 = vld [vmem:[%s195 + $0x178] sm:$0xff]
        %v290 = vld [vmem:[%s195 + $0x180] sm:$0xff]
        %v291 = vld [vmem:[%s195 + $0x188] sm:$0xff]
        %v292 = vld [vmem:[%s195 + $0x190] sm:$0xff]
        %v293 = vld [vmem:[%s195 + $0x198] sm:$0xff]
        %v294 = vld [vmem:[%s195 + $0x1a0] sm:$0xff]
        %v295 = vld [vmem:[%s195 + $0x1a8] sm:$0xff]
        %v296 = vld [vmem:[%s195 + $0x1b0] sm:$0xff]
        %v297 = vld [vmem:[%s195 + $0x1b8] sm:$0xff]
        %v298 = vld [vmem:[%s195 + $0x1c0] sm:$0xff]
        %v299 = vld [vmem:[%s195 + $0x1c8] sm:$0xff]
        %v300 = vld [vmem:[%s195 + $0x1d0] sm:$0xff]
        %v301 = vld [vmem:[%s195 + $0x1d8] sm:$0xff]
        %v302 = vld [vmem:[%s195 + $0x1e0] sm:$0xff]
        %v303 = vld [vmem:[%s195 + $0x1e8] sm:$0xff]
        %v304 = vld [vmem:[%s195 + $0x1f0] sm:$0xff]
        %v305 = vld [vmem:[%s195 + $0x1f8] sm:$0xff]
        %v306 = vld [vmem:[%s195 + $0x200] sm:$0xff]
        %v307 = vld [vmem:[%s195 + $0x208] sm:$0xff]
        %v308 = vld [vmem:[%s195 + $0x210] sm:$0xff]
        %v309 = vld [vmem:[%s195 + $0x218] sm:$0xff]
        %v310 = vld [vmem:[%s195 + $0x220] sm:$0xff]
        %v311 = vld [vmem:[%s195 + $0x228] sm:$0xff]
        %v312 = vld [vmem:[%s195 + $0x230] sm:$0xff]
        %v313 = vld [vmem:[%s195 + $0x238] sm:$0xff]
        %v314 = vld [vmem:[%s195 + $0x240] sm:$0xff]
        %v315 = vld [vmem:[%s195 + $0x248] sm:$0xff]
        %v316 = vld [vmem:[%s195 + $0x250] sm:$0xff]
        %v317 = vld [vmem:[%s195 + $0x258] sm:$0xff]
        %v318 = vld [vmem:[%s195 + $0x260] sm:$0xff]
        %v319 = vld [vmem:[%s195 + $0x268] sm:$0xff]
        %v320 = vld [vmem:[%s195 + $0x270] sm:$0xff]
        %v321 = vld [vmem:[%s195 + $0x278] sm:$0xff]
        %v322 = vld [vmem:[%s195 + $0x280] sm:$0xff]
        %v323 = vld [vmem:[%s195 + $0x288] sm:$0xff]
        %v324 = vld [vmem:[%s195 + $0x290] sm:$0xff]
        %v325 = vld [vmem:[%s195 + $0x298] sm:$0xff]
        %v326 = vld [vmem:[%s195 + $0x2a0] sm:$0xff]
        %v327 = vld [vmem:[%s195 + $0x2a8] sm:$0xff]
        %v328 = vld [vmem:[%s195 + $0x2b0] sm:$0xff]
        %v329 = vld [vmem:[%s195 + $0x2b8] sm:$0xff]
        %v330 = vld [vmem:[%s195 + $0x2c0] sm:$0xff]
        %v331 = vld [vmem:[%s195 + $0x2c8] sm:$0xff]
        %v332 = vld [vmem:[%s195 + $0x2d0] sm:$0xff]
        %v333 = vld [vmem:[%s195 + $0x2d8] sm:$0xff]
        %v334 = vld [vmem:[%s195 + $0x2e0] sm:$0xff]
        %v335 = vld [vmem:[%s195 + $0x2e8] sm:$0xff]
        %v336 = vld [vmem:[%s195 + $0x2f0] sm:$0xff]
        %v337 = vld [vmem:[%s195 + $0x2f8] sm:$0xff]
        %v338 = vld [vmem:[%s195 + $0x300] sm:$0xff]
        %v339 = vld [vmem:[%s195 + $0x308] sm:$0xff]
        %v340 = vld [vmem:[%s195 + $0x310] sm:$0xff]
        %v341 = vld [vmem:[%s195 + $0x318] sm:$0xff]
        %v342 = vld [vmem:[%s195 + $0x320] sm:$0xff]
        %v343 = vld [vmem:[%s195 + $0x328] sm:$0xff]
        %v344 = vld [vmem:[%s195 + $0x330] sm:$0xff]
        %v345 = vld [vmem:[%s195 + $0x338] sm:$0xff]
        %v346 = vld [vmem:[%s195 + $0x340] sm:$0xff]
        %v347 = vld [vmem:[%s195 + $0x348] sm:$0xff]
        %v348 = vld [vmem:[%s195 + $0x350] sm:$0xff]
        %v349 = vld [vmem:[%s195 + $0x358] sm:$0xff]
        %v350 = vld [vmem:[%s195 + $0x360] sm:$0xff]
        %v351 = vld [vmem:[%s195 + $0x368] sm:$0xff]
        %v352 = vld [vmem:[%s195 + $0x370] sm:$0xff]
        %v353 = vld [vmem:[%s195 + $0x378] sm:$0xff]
        %v354 = vld [vmem:[%s195 + $0x380] sm:$0xff]
        %v355 = vld [vmem:[%s195 + $0x388] sm:$0xff]
        %v356 = vld [vmem:[%s195 + $0x390] sm:$0xff]
        %v357 = vld [vmem:[%s195 + $0x398] sm:$0xff]
        %v358 = vld [vmem:[%s195 + $0x3a0] sm:$0xff]
        %v359 = vld [vmem:[%s195 + $0x3a8] sm:$0xff]
        %v360 = vld [vmem:[%s195 + $0x3b0] sm:$0xff]
        %v361 = vld [vmem:[%s195 + $0x3b8] sm:$0xff]
        %v362 = vld [vmem:[%s195 + $0x3c0] sm:$0xff]
        %v363 = vld [vmem:[%s195 + $0x3c8] sm:$0xff]
        %v364 = vld [vmem:[%s195 + $0x3d0] sm:$0xff]
        %v365 = vld [vmem:[%s195 + $0x3d8] sm:$0xff]
        %v366 = vld [vmem:[%s195 + $0x3e0] sm:$0xff]
        %v367 = vld [vmem:[%s195 + $0x3e8] sm:$0xff]
        %v368 = vld [vmem:[%s195 + $0x3f0] sm:$0xff]
        %v369 = vld [vmem:[%s195 + $0x3f8] sm:$0xff]
        %v370 = vld [vmem:[%s195 + $0x400] sm:$0xff]
        %v371 = vld [vmem:[%s195 + $0x408] sm:$0xff]
        %v372 = vld [vmem:[%s195 + $0x410] sm:$0xff]
        %v373 = vld [vmem:[%s195 + $0x418] sm:$0xff]
        %v374 = vld [vmem:[%s195 + $0x420] sm:$0xff]
        %v375 = vld [vmem:[%s195 + $0x428] sm:$0xff]
        %v376 = vld [vmem:[%s195 + $0x430] sm:$0xff]
        %v377 = vld [vmem:[%s195 + $0x438] sm:$0xff]
        %v378 = vld [vmem:[%s195 + $0x440] sm:$0xff]
        %v379 = vld [vmem:[%s195 + $0x448] sm:$0xff]
        %v380 = vld [vmem:[%s195 + $0x450] sm:$0xff]
        %v381 = vld [vmem:[%s195 + $0x458] sm:$0xff]
        %v382 = vld [vmem:[%s195 + $0x460] sm:$0xff]
        %v383 = vld [vmem:[%s195 + $0x468] sm:$0xff]
        %v384 = vld [vmem:[%s195 + $0x470] sm:$0xff]
        %v385 = vld [vmem:[%s195 + $0x478] sm:$0xff]
        %v386 = vld [vmem:[%s195 + $0x480] sm:$0xff]
        %v387 = vld [vmem:[%s195 + $0x488] sm:$0xff]
        %v388 = vld [vmem:[%s195 + $0x490] sm:$0xff]
        %v389 = vld [vmem:[%s195 + $0x498] sm:$0xff]
        %v390 = vld [vmem:[%s195 + $0x4a0] sm:$0xff]
        %v391 = vld [vmem:[%s195 + $0x4a8] sm:$0xff]
        %v392 = vld [vmem:[%s195 + $0x4b0] sm:$0xff]
        %v393 = vld [vmem:[%s195 + $0x4b8] sm:$0xff]
        %v394 = vld [vmem:[%s195 + $0x4c0] sm:$0xff]
        %v395 = vld [vmem:[%s195 + $0x4c8] sm:$0xff]
        %v396 = vld [vmem:[%s195 + $0x4d0] sm:$0xff]
        %v397 = vld [vmem:[%s195 + $0x4d8] sm:$0xff]
        %v398 = vld [vmem:[%s195 + $0x4e0] sm:$0xff]
        %v399 = vld [vmem:[%s195 + $0x4e8] sm:$0xff]
        %v400 = vld [vmem:[%s195 + $0x4f0] sm:$0xff]
        %v401 = vld [vmem:[%s195 + $0x4f8] sm:$0xff]
        %v402 = vld [vmem:[%s195 + $0x500] sm:$0xff]
        %v403 = vld [vmem:[%s195 + $0x508] sm:$0xff]
        %v404 = vld [vmem:[%s195 + $0x510] sm:$0xff]
        %v405 = vld [vmem:[%s195 + $0x518] sm:$0xff]
        %v406 = vld [vmem:[%s195 + $0x520] sm:$0xff]
        %v407 = vld [vmem:[%s195 + $0x528] sm:$0xff]
        %v408 = vld [vmem:[%s195 + $0x530] sm:$0xff]
        %v409 = vld [vmem:[%s195 + $0x538] sm:$0xff]
        %v410 = vld [vmem:[%s195 + $0x540] sm:$0xff]
        %v411 = vld [vmem:[%s195 + $0x548] sm:$0xff]
        %v412 = vld [vmem:[%s195 + $0x550] sm:$0xff]
        %v413 = vld [vmem:[%s195 + $0x558] sm:$0xff]
        %v414 = vld [vmem:[%s195 + $0x560] sm:$0xff]
        %v415 = vld [vmem:[%s195 + $0x568] sm:$0xff]
        %v416 = vld [vmem:[%s195 + $0x570] sm:$0xff]
        %v417 = vld [vmem:[%s195 + $0x578] sm:$0xff]
        %v418 = vld [vmem:[%s195 + $0x580] sm:$0xff]
        %v419 = vld [vmem:[%s195 + $0x588] sm:$0xff]
        %v420 = vld [vmem:[%s195 + $0x590] sm:$0xff]
        %v421 = vld [vmem:[%s195 + $0x598] sm:$0xff]
        %v422 = vld [vmem:[%s195 + $0x5a0] sm:$0xff]
        %v423 = vld [vmem:[%s195 + $0x5a8] sm:$0xff]
        %v424 = vld [vmem:[%s195 + $0x5b0] sm:$0xff]
        %v425 = vld [vmem:[%s195 + $0x5b8] sm:$0xff]
        %v426 = vld [vmem:[%s195 + $0x5c0] sm:$0xff]
        %v427 = vld [vmem:[%s195 + $0x5c8] sm:$0xff]
        %v428 = vld [vmem:[%s195 + $0x5d0] sm:$0xff]
        %v429 = vld [vmem:[%s195 + $0x5d8] sm:$0xff]
        %v430 = vld [vmem:[%s195 + $0x5e0] sm:$0xff]
        %v431 = vld [vmem:[%s195 + $0x5e8] sm:$0xff]
        %v432 = vld [vmem:[%s195 + $0x5f0] sm:$0xff]
        %v433 = vld [vmem:[%s195 + $0x5f8] sm:$0xff]
        %v434 = vld [vmem:[%s195 + $0x600] sm:$0xff]
        %v435 = vld [vmem:[%s195 + $0x608] sm:$0xff]
        %v436 = vld [vmem:[%s195 + $0x610] sm:$0xff]
        %v437 = vld [vmem:[%s195 + $0x618] sm:$0xff]
        %v438 = vld [vmem:[%s195 + $0x620] sm:$0xff]
        %v439 = vld [vmem:[%s195 + $0x628] sm:$0xff]
        %v440 = vld [vmem:[%s195 + $0x630] sm:$0xff]
        %v441 = vld [vmem:[%s195 + $0x638] sm:$0xff]
        %v442 = vld [vmem:[%s195 + $0x640] sm:$0xff]
        %v443 = vld [vmem:[%s195 + $0x648] sm:$0xff]
        %v444 = vld [vmem:[%s195 + $0x650] sm:$0xff]
        %v445 = vld [vmem:[%s195 + $0x658] sm:$0xff]
        %v446 = vld [vmem:[%s195 + $0x660] sm:$0xff]
        %v447 = vld [vmem:[%s195 + $0x668] sm:$0xff]
        %v448 = vld [vmem:[%s195 + $0x670] sm:$0xff]
        %v449 = vld [vmem:[%s195 + $0x678] sm:$0xff]
        %v450 = vld [vmem:[%s195 + $0x680] sm:$0xff]
        %v451 = vld [vmem:[%s195 + $0x688] sm:$0xff]
        %v452 = vld [vmem:[%s195 + $0x690] sm:$0xff]
        %v453 = vld [vmem:[%s195 + $0x698] sm:$0xff]
        %v454 = vld [vmem:[%s195 + $0x6a0] sm:$0xff]
        %v455 = vld [vmem:[%s195 + $0x6a8] sm:$0xff]
        %v456 = vld [vmem:[%s195 + $0x6b0] sm:$0xff]
        %v457 = vld [vmem:[%s195 + $0x6b8] sm:$0xff]
        %v458 = vld [vmem:[%s195 + $0x6c0] sm:$0xff]
        %v459 = vld [vmem:[%s195 + $0x6c8] sm:$0xff]
        %v460 = vld [vmem:[%s195 + $0x6d0] sm:$0xff]
        %v461 = vld [vmem:[%s195 + $0x6d8] sm:$0xff]
        %v462 = vld [vmem:[%s195 + $0x6e0] sm:$0xff]
        %v463 = vld [vmem:[%s195 + $0x6e8] sm:$0xff]
        %v464 = vld [vmem:[%s195 + $0x6f0] sm:$0xff]
        %v465 = vld [vmem:[%s195 + $0x6f8] sm:$0xff]
        %v466 = vld [vmem:[%s195 + $0x700] sm:$0xff]
        %v467 = vld [vmem:[%s195 + $0x708] sm:$0xff]
        %v468 = vld [vmem:[%s195 + $0x710] sm:$0xff]
        %v469 = vld [vmem:[%s195 + $0x718] sm:$0xff]
        %v470 = vld [vmem:[%s195 + $0x720] sm:$0xff]
        %v471 = vld [vmem:[%s195 + $0x728] sm:$0xff]
        %v472 = vld [vmem:[%s195 + $0x730] sm:$0xff]
        %v473 = vld [vmem:[%s195 + $0x738] sm:$0xff]
        %v474 = vld [vmem:[%s195 + $0x740] sm:$0xff]
        %v475 = vld [vmem:[%s195 + $0x748] sm:$0xff]
        %v476 = vld [vmem:[%s195 + $0x750] sm:$0xff]
        %v477 = vld [vmem:[%s195 + $0x758] sm:$0xff]
        %v478 = vld [vmem:[%s195 + $0x760] sm:$0xff]
        %v479 = vld [vmem:[%s195 + $0x768] sm:$0xff]
        %v480 = vld [vmem:[%s195 + $0x770] sm:$0xff]
        %v481 = vld [vmem:[%s195 + $0x778] sm:$0xff]
        %v482 = vld [vmem:[%s195 + $0x780] sm:$0xff]
        %v483 = vld [vmem:[%s195 + $0x788] sm:$0xff]
        %v484 = vld [vmem:[%s195 + $0x790] sm:$0xff]
        %v485 = vld [vmem:[%s195 + $0x798] sm:$0xff]
        %v486 = vld [vmem:[%s195 + $0x7a0] sm:$0xff]
        %v487 = vld [vmem:[%s195 + $0x7a8] sm:$0xff]
        %v488 = vld [vmem:[%s195 + $0x7b0] sm:$0xff]
        %v489 = vld [vmem:[%s195 + $0x7b8] sm:$0xff]
        %v490 = vld [vmem:[%s195 + $0x7c0] sm:$0xff]
        %v491 = vld [vmem:[%s195 + $0x7c8] sm:$0xff]
        %v492 = vld [vmem:[%s195 + $0x7d0] sm:$0xff]
        %v493 = vld [vmem:[%s195 + $0x7d8] sm:$0xff]
        %v494 = vld [vmem:[%s195 + $0x7e0] sm:$0xff]
        %v495 = vld [vmem:[%s195 + $0x7e8] sm:$0xff]
        %v496 = vld [vmem:[%s195 + $0x7f0] sm:$0xff]
        %v497 = vld [vmem:[%s195 + $0x7f8] sm:$0xff]
        %v498 = vld [vmem:[%s195 + $0x800] sm:$0xff]
        %v499 = vld [vmem:[%s195 + $0x808] sm:$0xff]
        %v500 = vld [vmem:[%s195 + $0x810] sm:$0xff]
        %v501 = vld [vmem:[%s195 + $0x818] sm:$0xff]
        %v502 = vld [vmem:[%s195 + $0x820] sm:$0xff]
        %v503 = vld [vmem:[%s195 + $0x828] sm:$0xff]
        %v504 = vld [vmem:[%s195 + $0x830] sm:$0xff]
        %v505 = vld [vmem:[%s195 + $0x838] sm:$0xff]
        %v506 = vld [vmem:[%s195 + $0x840] sm:$0xff]
        %v507 = vld [vmem:[%s195 + $0x848] sm:$0xff]
        %v508 = vld [vmem:[%s195 + $0x850] sm:$0xff]
        %v509 = vld [vmem:[%s195 + $0x858] sm:$0xff]
        %v510 = vld [vmem:[%s195 + $0x860] sm:$0xff]
        %v511 = vld [vmem:[%s195 + $0x868] sm:$0xff]
        %v512 = vld [vmem:[%s195 + $0x870] sm:$0xff]
        %v513 = vld [vmem:[%s195 + $0x878] sm:$0xff]
        %v514 = vld [vmem:[%s195 + $0x880] sm:$0xff]
        %v515 = vld [vmem:[%s195 + $0x888] sm:$0xff]
        %v516 = vld [vmem:[%s195 + $0x890] sm:$0xff]
        %v517 = vld [vmem:[%s195 + $0x898] sm:$0xff]
        %v518 = vld [vmem:[%s195 + $0x8a0] sm:$0xff]
        %v519 = vld [vmem:[%s195 + $0x8a8] sm:$0xff]
        %v520 = vld [vmem:[%s195 + $0x8b0] sm:$0xff]
        %v521 = vld [vmem:[%s195 + $0x8b8] sm:$0xff]
        %v522 = vld [vmem:[%s195 + $0x8c0] sm:$0xff]
        %v523 = vld [vmem:[%s195 + $0x8c8] sm:$0xff]
        %v524 = vld [vmem:[%s195 + $0x8d0] sm:$0xff]
        %v525 = vld [vmem:[%s195 + $0x8d8] sm:$0xff]
        %v526 = vld [vmem:[%s195 + $0x8e0] sm:$0xff]
        %v527 = vld [vmem:[%s195 + $0x8e8] sm:$0xff]
        %v528 = vld [vmem:[%s195 + $0x8f0] sm:$0xff]
        %v529 = vld [vmem:[%s195 + $0x8f8] sm:$0xff]
        %v530 = vld [vmem:[%s195 + $0x900] sm:$0xff]
        %v531 = vld [vmem:[%s195 + $0x908] sm:$0xff]
        %v532 = vld [vmem:[%s195 + $0x910] sm:$0xff]
        %v533 = vld [vmem:[%s195 + $0x918] sm:$0xff]
        %v534 = vld [vmem:[%s195 + $0x920] sm:$0xff]
        %v535 = vld [vmem:[%s195 + $0x928] sm:$0xff]
        %v536 = vld [vmem:[%s195 + $0x930] sm:$0xff]
        %v537 = vld [vmem:[%s195 + $0x938] sm:$0xff]
        %v538 = vld [vmem:[%s195 + $0x940] sm:$0xff]
        %v539 = vld [vmem:[%s195 + $0x948] sm:$0xff]
        %v540 = vld [vmem:[%s195 + $0x950] sm:$0xff]
        %v541 = vld [vmem:[%s195 + $0x958] sm:$0xff]
        %v542 = vld [vmem:[%s195 + $0x960] sm:$0xff]
        %v543 = vld [vmem:[%s195 + $0x968] sm:$0xff]
        %v544 = vld [vmem:[%s195 + $0x970] sm:$0xff]
        %v545 = vld [vmem:[%s195 + $0x978] sm:$0xff]
        %v546 = vld [vmem:[%s195 + $0x980] sm:$0xff]
        %v547 = vld [vmem:[%s195 + $0x988] sm:$0xff]
        %v548 = vld [vmem:[%s195 + $0x990] sm:$0xff]
        %v549 = vld [vmem:[%s195 + $0x998] sm:$0xff]
        %v550 = vld [vmem:[%s195 + $0x9a0] sm:$0xff]
        %v551 = vld [vmem:[%s195 + $0x9a8] sm:$0xff]
        %v552 = vld [vmem:[%s195 + $0x9b0] sm:$0xff]
        %v553 = vld [vmem:[%s195 + $0x9b8] sm:$0xff]
        %v554 = vld [vmem:[%s195 + $0x9c0] sm:$0xff]
        %v555 = vld [vmem:[%s195 + $0x9c8] sm:$0xff]
        %v556 = vld [vmem:[%s195 + $0x9d0] sm:$0xff]
        %v557 = vld [vmem:[%s195 + $0x9d8] sm:$0xff]
        %v558 = vld [vmem:[%s195 + $0x9e0] sm:$0xff]
        %v559 = vld [vmem:[%s195 + $0x9e8] sm:$0xff]
        %v560 = vld [vmem:[%s195 + $0x9f0] sm:$0xff]
        %v561 = vld [vmem:[%s195 + $0x9f8] sm:$0xff]
        %v562 = vld [vmem:[%s195 + $0xa00] sm:$0xff]
        %v563 = vld [vmem:[%s195 + $0xa08] sm:$0xff]
        %v564 = vld [vmem:[%s195 + $0xa10] sm:$0xff]
        %v565 = vld [vmem:[%s195 + $0xa18] sm:$0xff]
        %v566 = vld [vmem:[%s195 + $0xa20] sm:$0xff]
        %v567 = vld [vmem:[%s195 + $0xa28] sm:$0xff]
        %v568 = vld [vmem:[%s195 + $0xa30] sm:$0xff]
        %v569 = vld [vmem:[%s195 + $0xa38] sm:$0xff]
        %v570 = vld [vmem:[%s195 + $0xa40] sm:$0xff]
        %v571 = vld [vmem:[%s195 + $0xa48] sm:$0xff]
        %v572 = vld [vmem:[%s195 + $0xa50] sm:$0xff]
        %v573 = vld [vmem:[%s195 + $0xa58] sm:$0xff]
        %v574 = vld [vmem:[%s195 + $0xa60] sm:$0xff]
        %v575 = vld [vmem:[%s195 + $0xa68] sm:$0xff]
        %v576 = vld [vmem:[%s195 + $0xa70] sm:$0xff]
        %v577 = vld [vmem:[%s195 + $0xa78] sm:$0xff]
        %v578 = vld [vmem:[%s195 + $0xa80] sm:$0xff]
        %v579 = vld [vmem:[%s195 + $0xa88] sm:$0xff]
        %v580 = vld [vmem:[%s195 + $0xa90] sm:$0xff]
        %v581 = vld [vmem:[%s195 + $0xa98] sm:$0xff]
        %v582 = vld [vmem:[%s195 + $0xaa0] sm:$0xff]
        %v583 = vld [vmem:[%s195 + $0xaa8] sm:$0xff]
        %v584 = vld [vmem:[%s195 + $0xab0] sm:$0xff]
        %v585 = vld [vmem:[%s195 + $0xab8] sm:$0xff]
        %v586 = vld [vmem:[%s195 + $0xac0] sm:$0xff]
        %v587 = vld [vmem:[%s195 + $0xac8] sm:$0xff]
        %v588 = vld [vmem:[%s195 + $0xad0] sm:$0xff]
        %v589 = vld [vmem:[%s195 + $0xad8] sm:$0xff]
        %v590 = vld [vmem:[%s195 + $0xae0] sm:$0xff]
        %v591 = vld [vmem:[%s195 + $0xae8] sm:$0xff]
        %v592 = vld [vmem:[%s195 + $0xaf0] sm:$0xff]
        %v593 = vld [vmem:[%s195 + $0xaf8] sm:$0xff]
        %v594 = vld [vmem:[%s195 + $0xb00] sm:$0xff]
        %v595 = vld [vmem:[%s195 + $0xb08] sm:$0xff]
        %v596 = vld [vmem:[%s195 + $0xb10] sm:$0xff]
        %v597 = vld [vmem:[%s195 + $0xb18] sm:$0xff]
        %v598 = vld [vmem:[%s195 + $0xb20] sm:$0xff]
        %v599 = vld [vmem:[%s195 + $0xb28] sm:$0xff]
        %v600 = vld [vmem:[%s195 + $0xb30] sm:$0xff]
        %v601 = vld [vmem:[%s195 + $0xb38] sm:$0xff]
        %v602 = vld [vmem:[%s195 + $0xb40] sm:$0xff]
        %v603 = vld [vmem:[%s195 + $0xb48] sm:$0xff]
        %v604 = vld [vmem:[%s195 + $0xb50] sm:$0xff]
        %v605 = vld [vmem:[%s195 + $0xb58] sm:$0xff]
        %v606 = vld [vmem:[%s195 + $0xb60] sm:$0xff]
        %v607 = vld [vmem:[%s195 + $0xb68] sm:$0xff]
        %v608 = vld [vmem:[%s195 + $0xb70] sm:$0xff]
        %v609 = vld [vmem:[%s195 + $0xb78] sm:$0xff]
        %v610 = vld [vmem:[%s195 + $0xb80] sm:$0xff]
        %v611 = vld [vmem:[%s195 + $0xb88] sm:$0xff]
        %v612 = vld [vmem:[%s195 + $0xb90] sm:$0xff]
        %v613 = vld [vmem:[%s195 + $0xb98] sm:$0xff]
        %v614 = vld [vmem:[%s195 + $0xba0] sm:$0xff]
        %v615 = vld [vmem:[%s195 + $0xba8] sm:$0xff]
        %v616 = vld [vmem:[%s195 + $0xbb0] sm:$0xff]
        %v617 = vld [vmem:[%s195 + $0xbb8] sm:$0xff]
        %v618 = vld [vmem:[%s195 + $0xbc0] sm:$0xff]
        %v619 = vld [vmem:[%s195 + $0xbc8] sm:$0xff]
        %v620 = vld [vmem:[%s195 + $0xbd0] sm:$0xff]
        %v621 = vld [vmem:[%s195 + $0xbd8] sm:$0xff]
        %v622 = vld [vmem:[%s195 + $0xbe0] sm:$0xff]
        %v623 = vld [vmem:[%s195 + $0xbe8] sm:$0xff]
        %v624 = vld [vmem:[%s195 + $0xbf0] sm:$0xff]
        %v625 = vld [vmem:[%s195 + $0xbf8] sm:$0xff]
        %v626 = vld [vmem:[%s195 + $0xc00] sm:$0x3]
        %v627 = vld [vmem:[%s195 + $0xc08] sm:$0x3]
        %v628 = vld [vmem:[%s195 + $0xc10] sm:$0x3]
        %v629 = vld [vmem:[%s195 + $0xc18] sm:$0x3]
        %v630 = vld [vmem:[%s195 + $0xc20] sm:$0x3]
        %v631 = vld [vmem:[%s195 + $0xc28] sm:$0x3]
        %v632 = vld [vmem:[%s195 + $0xc30] sm:$0x3]
        %v633 = vld [vmem:[%s195 + $0xc38] sm:$0x3]
        %v634 = vld [vmem:[%s195 + $0xc40] sm:$0x3]
        %v635 = vld [vmem:[%s195 + $0xc48] sm:$0x3]
        %v636 = vld [vmem:[%s195 + $0xc50] sm:$0x3]
        %v637 = vld [vmem:[%s195 + $0xc58] sm:$0x3]
        %v638 = vld [vmem:[%s195 + $0xc60] sm:$0x3]
        %v639 = vld [vmem:[%s195 + $0xc68] sm:$0x3]
        %v640 = vld [vmem:[%s195 + $0xc70] sm:$0x3]
        %v641 = vld [vmem:[%s195 + $0xc78] sm:$0x3]
        %v642 = vld [vmem:[%s195 + $0xc80] sm:$0x3]
        %v643 = vld [vmem:[%s195 + $0xc88] sm:$0x3]
        %v644 = vld [vmem:[%s195 + $0xc90] sm:$0x3]
        %v645 = vld [vmem:[%s195 + $0xc98] sm:$0x3]
        %v646 = vld [vmem:[%s195 + $0xca0] sm:$0x3]
        %v647 = vld [vmem:[%s195 + $0xca8] sm:$0x3]
        %v648 = vld [vmem:[%s195 + $0xcb0] sm:$0x3]
        %v649 = vld [vmem:[%s195 + $0xcb8] sm:$0x3]
        %v650 = vld [vmem:[%s195 + $0xcc0] sm:$0x3]
        %v651 = vld [vmem:[%s195 + $0xcc8] sm:$0x3]
        %v652 = vld [vmem:[%s195 + $0xcd0] sm:$0x3]
        %v653 = vld [vmem:[%s195 + $0xcd8] sm:$0x3]
        %v654 = vld [vmem:[%s195 + $0xce0] sm:$0x3]
        %v655 = vld [vmem:[%s195 + $0xce8] sm:$0x3]
        %v656 = vld [vmem:[%s195 + $0xcf0] sm:$0x3]
        %v657 = vld [vmem:[%s195 + $0xcf8] sm:$0x3]
        %v658 = vld [vmem:[%s195 + $0xd00] sm:$0x3]
        %v659 = vld [vmem:[%s195 + $0xd08] sm:$0x3]
        %v660 = vld [vmem:[%s195 + $0xd10] sm:$0x3]
        %v661 = vld [vmem:[%s195 + $0xd18] sm:$0x3]
        %v662 = vld [vmem:[%s195 + $0xd20] sm:$0x3]
        %v663 = vld [vmem:[%s195 + $0xd28] sm:$0x3]
        %v664 = vld [vmem:[%s195 + $0xd30] sm:$0x3]
        %v665 = vld [vmem:[%s195 + $0xd38] sm:$0x3]
        %v666 = vld [vmem:[%s195 + $0xd40] sm:$0x3]
        %v667 = vld [vmem:[%s195 + $0xd48] sm:$0x3]
        %v668 = vld [vmem:[%s195 + $0xd50] sm:$0x3]
        %v669 = vld [vmem:[%s195 + $0xd58] sm:$0x3]
        %v670 = vld [vmem:[%s195 + $0xd60] sm:$0x3]
        %v671 = vld [vmem:[%s195 + $0xd68] sm:$0x3]
        %v672 = vld [vmem:[%s195 + $0xd70] sm:$0x3]
        %v673 = vld [vmem:[%s195 + $0xd78] sm:$0x3]
        %v674 = vld [vmem:[%s195 + $0xd80] sm:$0x3]
        %v675 = vld [vmem:[%s195 + $0xd88] sm:$0x3]
        %v676 = vld [vmem:[%s195 + $0xd90] sm:$0x3]
        %v677 = vld [vmem:[%s195 + $0xd98] sm:$0x3]
        %v678 = vld [vmem:[%s195 + $0xda0] sm:$0x3]
        %v679 = vld [vmem:[%s195 + $0xda8] sm:$0x3]
        %v680 = vld [vmem:[%s195 + $0xdb0] sm:$0x3]
        %v681 = vld [vmem:[%s195 + $0xdb8] sm:$0x3]
        %v682 = vld [vmem:[%s195 + $0xdc0] sm:$0x3]
        %v683 = vld [vmem:[%s195 + $0xdc8] sm:$0x3]
        %v684 = vld [vmem:[%s195 + $0xdd0] sm:$0x3]
        %v685 = vld [vmem:[%s195 + $0xdd8] sm:$0x3]
        %v686 = vld [vmem:[%s195 + $0xde0] sm:$0x3]
        %v687 = vld [vmem:[%s195 + $0xde8] sm:$0x3]
        %v688 = vld [vmem:[%s195 + $0xdf0] sm:$0x3]
        %v689 = vld [vmem:[%s195 + $0xdf8] sm:$0x3]
        %v690 = vld [vmem:[%s195 + $0xe00] sm:$0x3]
        %v691 = vld [vmem:[%s195 + $0xe08] sm:$0x3]
        %v692 = vld [vmem:[%s195 + $0xe10] sm:$0x3]
        %v693 = vld [vmem:[%s195 + $0xe18] sm:$0x3]
        %v694 = vld [vmem:[%s195 + $0xe20] sm:$0x3]
        %v695 = vld [vmem:[%s195 + $0xe28] sm:$0x3]
        %v696 = vld [vmem:[%s195 + $0xe30] sm:$0x3]
        %v697 = vld [vmem:[%s195 + $0xe38] sm:$0x3]
        %v698 = vld [vmem:[%s195 + $0xe40] sm:$0x3]
        %v699 = vld [vmem:[%s195 + $0xe48] sm:$0x3]
        %v700 = vld [vmem:[%s195 + $0xe50] sm:$0x3]
        %v701 = vld [vmem:[%s195 + $0xe58] sm:$0x3]
        %v702 = vld [vmem:[%s195 + $0xe60] sm:$0x3]
        %v703 = vld [vmem:[%s195 + $0xe68] sm:$0x3]
        %v704 = vld [vmem:[%s195 + $0xe70] sm:$0x3]
        %v705 = vld [vmem:[%s195 + $0xe78] sm:$0x3]
        %v706 = vld [vmem:[%s195 + $0xe80] sm:$0x3]
        %v707 = vld [vmem:[%s195 + $0xe88] sm:$0x3]
        %v708 = vld [vmem:[%s195 + $0xe90] sm:$0x3]
        %v709 = vld [vmem:[%s195 + $0xe98] sm:$0x3]
        %v710 = vld [vmem:[%s195 + $0xea0] sm:$0x3]
        %v711 = vld [vmem:[%s195 + $0xea8] sm:$0x3]
        %v712 = vld [vmem:[%s195 + $0xeb0] sm:$0x3]
        %v713 = vld [vmem:[%s195 + $0xeb8] sm:$0x3]
        %v714 = vld [vmem:[%s195 + $0xec0] sm:$0x3]
        %v715 = vld [vmem:[%s195 + $0xec8] sm:$0x3]
        %v716 = vld [vmem:[%s195 + $0xed0] sm:$0x3]
        %v717 = vld [vmem:[%s195 + $0xed8] sm:$0x3]
        %v718 = vld [vmem:[%s195 + $0xee0] sm:$0x3]
        %v719 = vld [vmem:[%s195 + $0xee8] sm:$0x3]
        %v720 = vld [vmem:[%s195 + $0xef0] sm:$0x3]
        %v721 = vld [vmem:[%s195 + $0xef8] sm:$0x3]
        %v722 = vld [vmem:[%s195 + $0xf00] sm:$0x3]
        %v723 = vld [vmem:[%s195 + $0xf08] sm:$0x3]
        %v724 = vld [vmem:[%s195 + $0xf10] sm:$0x3]
        %v725 = vld [vmem:[%s195 + $0xf18] sm:$0x3]
        %v726 = vld [vmem:[%s195 + $0xf20] sm:$0x3]
        %v727 = vld [vmem:[%s195 + $0xf28] sm:$0x3]
        %v728 = vld [vmem:[%s195 + $0xf30] sm:$0x3]
        %v729 = vld [vmem:[%s195 + $0xf38] sm:$0x3]
        %v730 = vld [vmem:[%s195 + $0xf40] sm:$0x3]
        %v731 = vld [vmem:[%s195 + $0xf48] sm:$0x3]
        %v732 = vld [vmem:[%s195 + $0xf50] sm:$0x3]
        %v733 = vld [vmem:[%s195 + $0xf58] sm:$0x3]
        %v734 = vld [vmem:[%s195 + $0xf60] sm:$0x3]
        %v735 = vld [vmem:[%s195 + $0xf68] sm:$0x3]
        %v736 = vld [vmem:[%s195 + $0xf70] sm:$0x3]
        %v737 = vld [vmem:[%s195 + $0xf78] sm:$0x3]
        %v738 = vld [vmem:[%s195 + $0xf80] sm:$0x3]
        %v739 = vld [vmem:[%s195 + $0xf88] sm:$0x3]
        %v740 = vld [vmem:[%s195 + $0xf90] sm:$0x3]
        %v741 = vld [vmem:[%s195 + $0xf98] sm:$0x3]
        %v742 = vld [vmem:[%s195 + $0xfa0] sm:$0x3]
        %v743 = vld [vmem:[%s195 + $0xfa8] sm:$0x3]
        %v744 = vld [vmem:[%s195 + $0xfb0] sm:$0x3]
        %v745 = vld [vmem:[%s195 + $0xfb8] sm:$0x3]
        %v746 = vld [vmem:[%s195 + $0xfc0] sm:$0x3]
        %v747 = vld [vmem:[%s195 + $0xfc8] sm:$0x3]
        %v748 = vld [vmem:[%s195 + $0xfd0] sm:$0x3]
        %v749 = vld [vmem:[%s195 + $0xfd8] sm:$0x3]
        %v750 = vld [vmem:[%s195 + $0xfe0] sm:$0x3]
        %v751 = vld [vmem:[%s195 + $0xfe8] sm:$0x3]
        %v752 = vld [vmem:[%s195 + $0xff0] sm:$0x3]
        %v753 = vld [vmem:[%s195 + $0xff8] sm:$0x3]
        %v754 = vld [vmem:[%s195 + $0x1000] sm:$0x3]
        %v755 = vld [vmem:[%s195 + $0x1008] sm:$0x3]
        %v756 = vld [vmem:[%s195 + $0x1010] sm:$0x3]
        %v757 = vld [vmem:[%s195 + $0x1018] sm:$0x3]
        %v758 = vld [vmem:[%s195 + $0x1020] sm:$0x3]
        %v759 = vld [vmem:[%s195 + $0x1028] sm:$0x3]
        %v760 = vld [vmem:[%s195 + $0x1030] sm:$0x3]
        %v761 = vld [vmem:[%s195 + $0x1038] sm:$0x3]
        %v762 = vld [vmem:[%s195 + $0x1040] sm:$0x3]
        %v763 = vld [vmem:[%s195 + $0x1048] sm:$0x3]
        %v764 = vld [vmem:[%s195 + $0x1050] sm:$0x3]
        %v765 = vld [vmem:[%s195 + $0x1058] sm:$0x3]
        %v766 = vld [vmem:[%s195 + $0x1060] sm:$0x3]
        %v767 = vld [vmem:[%s195 + $0x1068] sm:$0x3]
        %v768 = vld [vmem:[%s195 + $0x1070] sm:$0x3]
        %v769 = vld [vmem:[%s195 + $0x1078] sm:$0x3]
        %v770 = vld [vmem:[%s195 + $0x1080] sm:$0x3]
        %v771 = vld [vmem:[%s195 + $0x1088] sm:$0x3]
        %v772 = vld [vmem:[%s195 + $0x1090] sm:$0x3]
        %v773 = vld [vmem:[%s195 + $0x1098] sm:$0x3]
        %v774 = vld [vmem:[%s195 + $0x10a0] sm:$0x3]
        %v775 = vld [vmem:[%s195 + $0x10a8] sm:$0x3]
        %v776 = vld [vmem:[%s195 + $0x10b0] sm:$0x3]
        %v777 = vld [vmem:[%s195 + $0x10b8] sm:$0x3]
        %v778 = vld [vmem:[%s195 + $0x10c0] sm:$0x3]
        %v779 = vld [vmem:[%s195 + $0x10c8] sm:$0x3]
        %v780 = vld [vmem:[%s195 + $0x10d0] sm:$0x3]
        %v781 = vld [vmem:[%s195 + $0x10d8] sm:$0x3]
        %v782 = vld [vmem:[%s195 + $0x10e0] sm:$0x3]
        %v783 = vld [vmem:[%s195 + $0x10e8] sm:$0x3]
        %v784 = vld [vmem:[%s195 + $0x10f0] sm:$0x3]
        %v785 = vld [vmem:[%s195 + $0x10f8] sm:$0x3]
        %v786 = vld [vmem:[%s195 + $0x1100] sm:$0x3]
        %v787 = vld [vmem:[%s195 + $0x1108] sm:$0x3]
        %v788 = vld [vmem:[%s195 + $0x1110] sm:$0x3]
        %v789 = vld [vmem:[%s195 + $0x1118] sm:$0x3]
        %v790 = vld [vmem:[%s195 + $0x1120] sm:$0x3]
        %v791 = vld [vmem:[%s195 + $0x1128] sm:$0x3]
        %v792 = vld [vmem:[%s195 + $0x1130] sm:$0x3]
        %v793 = vld [vmem:[%s195 + $0x1138] sm:$0x3]
        %v794 = vld [vmem:[%s195 + $0x1140] sm:$0x3]
        %v795 = vld [vmem:[%s195 + $0x1148] sm:$0x3]
        %v796 = vld [vmem:[%s195 + $0x1150] sm:$0x3]
        %v797 = vld [vmem:[%s195 + $0x1158] sm:$0x3]
        %v798 = vld [vmem:[%s195 + $0x1160] sm:$0x3]
        %v799 = vld [vmem:[%s195 + $0x1168] sm:$0x3]
        %v800 = vld [vmem:[%s195 + $0x1170] sm:$0x3]
        %v801 = vld [vmem:[%s195 + $0x1178] sm:$0x3]
        %v802 = vld [vmem:[%s195 + $0x1180] sm:$0x3]
        %v803 = vld [vmem:[%s195 + $0x1188] sm:$0x3]
        %v804 = vld [vmem:[%s195 + $0x1190] sm:$0x3]
        %v805 = vld [vmem:[%s195 + $0x1198] sm:$0x3]
        %v806 = vld [vmem:[%s195 + $0x11a0] sm:$0x3]
        %v807 = vld [vmem:[%s195 + $0x11a8] sm:$0x3]
        %v808 = vld [vmem:[%s195 + $0x11b0] sm:$0x3]
        %v809 = vld [vmem:[%s195 + $0x11b8] sm:$0x3]
        %v810 = vld [vmem:[%s195 + $0x11c0] sm:$0x3]
        %v811 = vld [vmem:[%s195 + $0x11c8] sm:$0x3]
        %v812 = vld [vmem:[%s195 + $0x11d0] sm:$0x3]
        %v813 = vld [vmem:[%s195 + $0x11d8] sm:$0x3]
        %v814 = vld [vmem:[%s195 + $0x11e0] sm:$0x3]
        %v815 = vld [vmem:[%s195 + $0x11e8] sm:$0x3]
        %v816 = vld [vmem:[%s195 + $0x11f0] sm:$0x3]
        %v817 = vld [vmem:[%s195 + $0x11f8] sm:$0x3]
        %v818 = vld [vmem:[%s195 + $0x1200] sm:$0x3]
        %v819 = vld [vmem:[%s195 + $0x1208] sm:$0x3]
        %v820 = vld [vmem:[%s195 + $0x1210] sm:$0x3]
        %v821 = vld [vmem:[%s195 + $0x1218] sm:$0x3]
        %v822 = vld [vmem:[%s195 + $0x1220] sm:$0x3]
        %v823 = vld [vmem:[%s195 + $0x1228] sm:$0x3]
        %v824 = vld [vmem:[%s195 + $0x1230] sm:$0x3]
        %v825 = vld [vmem:[%s195 + $0x1238] sm:$0x3]
        %v826 = vld [vmem:[%s195 + $0x1240] sm:$0x3]
        %v827 = vld [vmem:[%s195 + $0x1248] sm:$0x3]
        %v828 = vld [vmem:[%s195 + $0x1250] sm:$0x3]
        %v829 = vld [vmem:[%s195 + $0x1258] sm:$0x3]
        %v830 = vld [vmem:[%s195 + $0x1260] sm:$0x3]
        %v831 = vld [vmem:[%s195 + $0x1268] sm:$0x3]
        %v832 = vld [vmem:[%s195 + $0x1270] sm:$0x3]
        %v833 = vld [vmem:[%s195 + $0x1278] sm:$0x3]
        %v834 = vld [vmem:[%s195 + $0x1280] sm:$0x3]
        %v835 = vld [vmem:[%s195 + $0x1288] sm:$0x3]
        %v836 = vld [vmem:[%s195 + $0x1290] sm:$0x3]
        %v837 = vld [vmem:[%s195 + $0x1298] sm:$0x3]
        %v838 = vld [vmem:[%s195 + $0x12a0] sm:$0x3]
        %v839 = vld [vmem:[%s195 + $0x12a8] sm:$0x3]
        %v840 = vld [vmem:[%s195 + $0x12b0] sm:$0x3]
        %v841 = vld [vmem:[%s195 + $0x12b8] sm:$0x3]
        %v842 = vld [vmem:[%s195 + $0x12c0] sm:$0x3]
        %v843 = vld [vmem:[%s195 + $0x12c8] sm:$0x3]
        %v844 = vld [vmem:[%s195 + $0x12d0] sm:$0x3]
        %v845 = vld [vmem:[%s195 + $0x12d8] sm:$0x3]
        %v846 = vld [vmem:[%s195 + $0x12e0] sm:$0x3]
        %v847 = vld [vmem:[%s195 + $0x12e8] sm:$0x3]
        %v848 = vld [vmem:[%s195 + $0x12f0] sm:$0x3]
        %v849 = vld [vmem:[%s195 + $0x12f8] sm:$0x3]
        %v850 = vld [vmem:[%s195 + $0x1300] sm:$0x3]
        %v851 = vld [vmem:[%s195 + $0x1308] sm:$0x3]
        %v852 = vld [vmem:[%s195 + $0x1310] sm:$0x3]
        %v853 = vld [vmem:[%s195 + $0x1318] sm:$0x3]
        %v854 = vld [vmem:[%s195 + $0x1320] sm:$0x3]
        %v855 = vld [vmem:[%s195 + $0x1328] sm:$0x3]
        %v856 = vld [vmem:[%s195 + $0x1330] sm:$0x3]
        %v857 = vld [vmem:[%s195 + $0x1338] sm:$0x3]
        %v858 = vld [vmem:[%s195 + $0x1340] sm:$0x3]
        %v859 = vld [vmem:[%s195 + $0x1348] sm:$0x3]
        %v860 = vld [vmem:[%s195 + $0x1350] sm:$0x3]
        %v861 = vld [vmem:[%s195 + $0x1358] sm:$0x3]
        %v862 = vld [vmem:[%s195 + $0x1360] sm:$0x3]
        %v863 = vld [vmem:[%s195 + $0x1368] sm:$0x3]
        %v864 = vld [vmem:[%s195 + $0x1370] sm:$0x3]
        %v865 = vld [vmem:[%s195 + $0x1378] sm:$0x3]
        %v866 = vld [vmem:[%s195 + $0x1380] sm:$0x3]
        %v867 = vld [vmem:[%s195 + $0x1388] sm:$0x3]
        %v868 = vld [vmem:[%s195 + $0x1390] sm:$0x3]
        %v869 = vld [vmem:[%s195 + $0x1398] sm:$0x3]
        %v870 = vld [vmem:[%s195 + $0x13a0] sm:$0x3]
        %v871 = vld [vmem:[%s195 + $0x13a8] sm:$0x3]
        %v872 = vld [vmem:[%s195 + $0x13b0] sm:$0x3]
        %v873 = vld [vmem:[%s195 + $0x13b8] sm:$0x3]
        %v874 = vld [vmem:[%s195 + $0x13c0] sm:$0x3]
        %v875 = vld [vmem:[%s195 + $0x13c8] sm:$0x3]
        %v876 = vld [vmem:[%s195 + $0x13d0] sm:$0x3]
        %v877 = vld [vmem:[%s195 + $0x13d8] sm:$0x3]
        %v878 = vld [vmem:[%s195 + $0x13e0] sm:$0x3]
        %v879 = vld [vmem:[%s195 + $0x13e8] sm:$0x3]
        %v880 = vld [vmem:[%s195 + $0x13f0] sm:$0x3]
        %v881 = vld [vmem:[%s195 + $0x13f8] sm:$0x3]
        %v882 = vld [vmem:[%s195 + $0x1400] sm:$0x3]
        %v883 = vld [vmem:[%s195 + $0x1408] sm:$0x3]
        %v884 = vld [vmem:[%s195 + $0x1410] sm:$0x3]
        %v885 = vld [vmem:[%s195 + $0x1418] sm:$0x3]
        %v886 = vld [vmem:[%s195 + $0x1420] sm:$0x3]
        %v887 = vld [vmem:[%s195 + $0x1428] sm:$0x3]
        %v888 = vld [vmem:[%s195 + $0x1430] sm:$0x3]
        %v889 = vld [vmem:[%s195 + $0x1438] sm:$0x3]
        %v890 = vld [vmem:[%s195 + $0x1440] sm:$0x3]
        %v891 = vld [vmem:[%s195 + $0x1448] sm:$0x3]
        %v892 = vld [vmem:[%s195 + $0x1450] sm:$0x3]
        %v893 = vld [vmem:[%s195 + $0x1458] sm:$0x3]
        %v894 = vld [vmem:[%s195 + $0x1460] sm:$0x3]
        %v895 = vld [vmem:[%s195 + $0x1468] sm:$0x3]
        %v896 = vld [vmem:[%s195 + $0x1470] sm:$0x3]
        %v897 = vld [vmem:[%s195 + $0x1478] sm:$0x3]
        %v898 = vld [vmem:[%s195 + $0x1480] sm:$0x3]
        %v899 = vld [vmem:[%s195 + $0x1488] sm:$0x3]
        %v900 = vld [vmem:[%s195 + $0x1490] sm:$0x3]
        %v901 = vld [vmem:[%s195 + $0x1498] sm:$0x3]
        %v902 = vld [vmem:[%s195 + $0x14a0] sm:$0x3]
        %v903 = vld [vmem:[%s195 + $0x14a8] sm:$0x3]
        %v904 = vld [vmem:[%s195 + $0x14b0] sm:$0x3]
        %v905 = vld [vmem:[%s195 + $0x14b8] sm:$0x3]
        %v906 = vld [vmem:[%s195 + $0x14c0] sm:$0x3]
        %v907 = vld [vmem:[%s195 + $0x14c8] sm:$0x3]
        %v908 = vld [vmem:[%s195 + $0x14d0] sm:$0x3]
        %v909 = vld [vmem:[%s195 + $0x14d8] sm:$0x3]
        %v910 = vld [vmem:[%s195 + $0x14e0] sm:$0x3]
        %v911 = vld [vmem:[%s195 + $0x14e8] sm:$0x3]
        %v912 = vld [vmem:[%s195 + $0x14f0] sm:$0x3]
        %v913 = vld [vmem:[%s195 + $0x14f8] sm:$0x3]
        %v914 = vld [vmem:[%s195 + $0x1500] sm:$0x3]
        %v915 = vld [vmem:[%s195 + $0x1508] sm:$0x3]
        %v916 = vld [vmem:[%s195 + $0x1510] sm:$0x3]
        %v917 = vld [vmem:[%s195 + $0x1518] sm:$0x3]
        %v918 = vld [vmem:[%s195 + $0x1520] sm:$0x3]
        %v919 = vld [vmem:[%s195 + $0x1528] sm:$0x3]
        %v920 = vld [vmem:[%s195 + $0x1530] sm:$0x3]
        %v921 = vld [vmem:[%s195 + $0x1538] sm:$0x3]
        %v922 = vld [vmem:[%s195 + $0x1540] sm:$0x3]
        %v923 = vld [vmem:[%s195 + $0x1548] sm:$0x3]
        %v924 = vld [vmem:[%s195 + $0x1550] sm:$0x3]
        %v925 = vld [vmem:[%s195 + $0x1558] sm:$0x3]
        %v926 = vld [vmem:[%s195 + $0x1560] sm:$0x3]
        %v927 = vld [vmem:[%s195 + $0x1568] sm:$0x3]
        %v928 = vld [vmem:[%s195 + $0x1570] sm:$0x3]
        %v929 = vld [vmem:[%s195 + $0x1578] sm:$0x3]
        %v930 = vld [vmem:[%s195 + $0x1580] sm:$0x3]
        %v931 = vld [vmem:[%s195 + $0x1588] sm:$0x3]
        %v932 = vld [vmem:[%s195 + $0x1590] sm:$0x3]
        %v933 = vld [vmem:[%s195 + $0x1598] sm:$0x3]
        %v934 = vld [vmem:[%s195 + $0x15a0] sm:$0x3]
        %v935 = vld [vmem:[%s195 + $0x15a8] sm:$0x3]
        %v936 = vld [vmem:[%s195 + $0x15b0] sm:$0x3]
        %v937 = vld [vmem:[%s195 + $0x15b8] sm:$0x3]
        %v938 = vld [vmem:[%s195 + $0x15c0] sm:$0x3]
        %v939 = vld [vmem:[%s195 + $0x15c8] sm:$0x3]
        %v940 = vld [vmem:[%s195 + $0x15d0] sm:$0x3]
        %v941 = vld [vmem:[%s195 + $0x15d8] sm:$0x3]
        %v942 = vld [vmem:[%s195 + $0x15e0] sm:$0x3]
        %v943 = vld [vmem:[%s195 + $0x15e8] sm:$0x3]
        %v944 = vld [vmem:[%s195 + $0x15f0] sm:$0x3]
        %v945 = vld [vmem:[%s195 + $0x15f8] sm:$0x3]
        %v946 = vld [vmem:[%s195 + $0x1600] sm:$0x3]
        %v947 = vld [vmem:[%s195 + $0x1608] sm:$0x3]
        %v948 = vld [vmem:[%s195 + $0x1610] sm:$0x3]
        %v949 = vld [vmem:[%s195 + $0x1618] sm:$0x3]
        %v950 = vld [vmem:[%s195 + $0x1620] sm:$0x3]
        %v951 = vld [vmem:[%s195 + $0x1628] sm:$0x3]
        %v952 = vld [vmem:[%s195 + $0x1630] sm:$0x3]
        %v953 = vld [vmem:[%s195 + $0x1638] sm:$0x3]
        %v954 = vld [vmem:[%s195 + $0x1640] sm:$0x3]
        %v955 = vld [vmem:[%s195 + $0x1648] sm:$0x3]
        %v956 = vld [vmem:[%s195 + $0x1650] sm:$0x3]
        %v957 = vld [vmem:[%s195 + $0x1658] sm:$0x3]
        %v958 = vld [vmem:[%s195 + $0x1660] sm:$0x3]
        %v959 = vld [vmem:[%s195 + $0x1668] sm:$0x3]
        %v960 = vld [vmem:[%s195 + $0x1670] sm:$0x3]
        %v961 = vld [vmem:[%s195 + $0x1678] sm:$0x3]
        %v962 = vld [vmem:[%s195 + $0x1680] sm:$0x3]
        %v963 = vld [vmem:[%s195 + $0x1688] sm:$0x3]
        %v964 = vld [vmem:[%s195 + $0x1690] sm:$0x3]
        %v965 = vld [vmem:[%s195 + $0x1698] sm:$0x3]
        %v966 = vld [vmem:[%s195 + $0x16a0] sm:$0x3]
        %v967 = vld [vmem:[%s195 + $0x16a8] sm:$0x3]
        %v968 = vld [vmem:[%s195 + $0x16b0] sm:$0x3]
        %v969 = vld [vmem:[%s195 + $0x16b8] sm:$0x3]
        %v970 = vld [vmem:[%s195 + $0x16c0] sm:$0x3]
        %v971 = vld [vmem:[%s195 + $0x16c8] sm:$0x3]
        %v972 = vld [vmem:[%s195 + $0x16d0] sm:$0x3]
        %v973 = vld [vmem:[%s195 + $0x16d8] sm:$0x3]
        %v974 = vld [vmem:[%s195 + $0x16e0] sm:$0x3]
        %v975 = vld [vmem:[%s195 + $0x16e8] sm:$0x3]
        %v976 = vld [vmem:[%s195 + $0x16f0] sm:$0x3]
        %v977 = vld [vmem:[%s195 + $0x16f8] sm:$0x3]
        %v978 = vld [vmem:[%s195 + $0x1700] sm:$0x3]
        %v979 = vld [vmem:[%s195 + $0x1708] sm:$0x3]
        %v980 = vld [vmem:[%s195 + $0x1710] sm:$0x3]
        %v981 = vld [vmem:[%s195 + $0x1718] sm:$0x3]
        %v982 = vld [vmem:[%s195 + $0x1720] sm:$0x3]
        %v983 = vld [vmem:[%s195 + $0x1728] sm:$0x3]
        %v984 = vld [vmem:[%s195 + $0x1730] sm:$0x3]
        %v985 = vld [vmem:[%s195 + $0x1738] sm:$0x3]
        %v986 = vld [vmem:[%s195 + $0x1740] sm:$0x3]
        %v987 = vld [vmem:[%s195 + $0x1748] sm:$0x3]
        %v988 = vld [vmem:[%s195 + $0x1750] sm:$0x3]
        %v989 = vld [vmem:[%s195 + $0x1758] sm:$0x3]
        %v990 = vld [vmem:[%s195 + $0x1760] sm:$0x3]
        %v991 = vld [vmem:[%s195 + $0x1768] sm:$0x3]
        %v992 = vld [vmem:[%s195 + $0x1770] sm:$0x3]
        %v993 = vld [vmem:[%s195 + $0x1778] sm:$0x3]
        %v994 = vld [vmem:[%s195 + $0x1780] sm:$0x3]
        %v995 = vld [vmem:[%s195 + $0x1788] sm:$0x3]
        %v996 = vld [vmem:[%s195 + $0x1790] sm:$0x3]
        %v997 = vld [vmem:[%s195 + $0x1798] sm:$0x3]
        %v998 = vld [vmem:[%s195 + $0x17a0] sm:$0x3]
        %v999 = vld [vmem:[%s195 + $0x17a8] sm:$0x3]
        %v1000 = vld [vmem:[%s195 + $0x17b0] sm:$0x3]
        %v1001 = vld [vmem:[%s195 + $0x17b8] sm:$0x3]
        %v1002 = vld [vmem:[%s195 + $0x17c0] sm:$0x3]
        %v1003 = vld [vmem:[%s195 + $0x17c8] sm:$0x3]
        %v1004 = vld [vmem:[%s195 + $0x17d0] sm:$0x3]
        %v1005 = vld [vmem:[%s195 + $0x17d8] sm:$0x3]
        %v1006 = vld [vmem:[%s195 + $0x17e0] sm:$0x3]
        %v1007 = vld [vmem:[%s195 + $0x17e8] sm:$0x3]
        %v1008 = vld [vmem:[%s195 + $0x17f0] sm:$0x3]
        %v1009 = vld [vmem:[%s195 + $0x17f8] sm:$0x3]
        %v1010 = vld [vmem:[%s186] ss:$2 sm:$0xff]
        %s1011 = scalar_lea.vmem %s186, 16 [#allocation4]
        %v1012 = vld [vmem:[%s1011] ss:$2 sm:$0xff]
        %s1013 = scalar_lea.vmem %s186, 32 [#allocation4]
        %v1014 = vld [vmem:[%s1013] ss:$2 sm:$0xff]
        %s1015 = scalar_lea.vmem %s186, 48 [#allocation4]
        %v1016 = vld [vmem:[%s1015] ss:$2 sm:$0xff]
        %s1017 = scalar_lea.vmem %s186, 64 [#allocation4]
        %v1018 = vld [vmem:[%s1017] ss:$2 sm:$0xff]
        %s1019 = scalar_lea.vmem %s186, 80 [#allocation4]
        %v1020 = vld [vmem:[%s1019] ss:$2 sm:$0xff]
        %s1021 = scalar_lea.vmem %s186, 96 [#allocation4]
        %v1022 = vld [vmem:[%s1021] ss:$2 sm:$0xff]
        %s1023 = scalar_lea.vmem %s186, 112 [#allocation4]
        %v1024 = vld [vmem:[%s1023] ss:$2 sm:$0xff]
        %s1025 = scalar_lea.vmem %s186, 128 [#allocation4]
        %v1026 = vld [vmem:[%s1025] ss:$2 sm:$0xff]
        %s1027 = scalar_lea.vmem %s186, 144 [#allocation4]
        %v1028 = vld [vmem:[%s1027] ss:$2 sm:$0xff]
        %s1029 = scalar_lea.vmem %s186, 160 [#allocation4]
        %v1030 = vld [vmem:[%s1029] ss:$2 sm:$0xff]
        %s1031 = scalar_lea.vmem %s186, 176 [#allocation4]
        %v1032 = vld [vmem:[%s1031] ss:$2 sm:$0xff]
        %s1033 = scalar_lea.vmem %s186, 192 [#allocation4]
        %v1034 = vld [vmem:[%s1033] ss:$2 sm:$0xff]
        %s1035 = scalar_lea.vmem %s186, 208 [#allocation4]
        %v1036 = vld [vmem:[%s1035] ss:$2 sm:$0xff]
        %s1037 = scalar_lea.vmem %s186, 224 [#allocation4]
        %v1038 = vld [vmem:[%s1037] ss:$2 sm:$0xff]
        %s1039 = scalar_lea.vmem %s186, 240 [#allocation4]
        %v1040 = vld [vmem:[%s1039] ss:$2 sm:$0xff]
        %s1041 = scalar_lea.vmem %s186, 256 [#allocation4]
        %v1042 = vld [vmem:[%s1041] ss:$2 sm:$0xff]
        %s1043 = scalar_lea.vmem %s186, 272 [#allocation4]
        %v1044 = vld [vmem:[%s1043] ss:$2 sm:$0xff]
        %s1045 = scalar_lea.vmem %s186, 288 [#allocation4]
        %v1046 = vld [vmem:[%s1045] ss:$2 sm:$0xff]
        %s1047 = scalar_lea.vmem %s186, 304 [#allocation4]
        %v1048 = vld [vmem:[%s1047] ss:$2 sm:$0xff]
        %s1049 = scalar_lea.vmem %s186, 320 [#allocation4]
        %v1050 = vld [vmem:[%s1049] ss:$2 sm:$0xff]
        %s1051 = scalar_lea.vmem %s186, 336 [#allocation4]
        %v1052 = vld [vmem:[%s1051] ss:$2 sm:$0xff]
        %s1053 = scalar_lea.vmem %s186, 352 [#allocation4]
        %v1054 = vld [vmem:[%s1053] ss:$2 sm:$0xff]
        %s1055 = scalar_lea.vmem %s186, 368 [#allocation4]
        %v1056 = vld [vmem:[%s1055] ss:$2 sm:$0xff]
        %s1057 = scalar_lea.vmem %s186, 384 [#allocation4]
        %v1058 = vld [vmem:[%s1057] ss:$2 sm:$0xff]
        %s1059 = scalar_lea.vmem %s186, 400 [#allocation4]
        %v1060 = vld [vmem:[%s1059] ss:$2 sm:$0xff]
        %s1061 = scalar_lea.vmem %s186, 416 [#allocation4]
        %v1062 = vld [vmem:[%s1061] ss:$2 sm:$0xff]
        %s1063 = scalar_lea.vmem %s186, 432 [#allocation4]
        %v1064 = vld [vmem:[%s1063] ss:$2 sm:$0xff]
        %s1065 = scalar_lea.vmem %s186, 448 [#allocation4]
        %v1066 = vld [vmem:[%s1065] ss:$2 sm:$0xff]
        %s1067 = scalar_lea.vmem %s186, 464 [#allocation4]
        %v1068 = vld [vmem:[%s1067] ss:$2 sm:$0xff]
        %s1069 = scalar_lea.vmem %s186, 480 [#allocation4]
        %v1070 = vld [vmem:[%s1069] ss:$2 sm:$0xff]
        %s1071 = scalar_lea.vmem %s186, 496 [#allocation4]
        %v1072 = vld [vmem:[%s1071] ss:$2 sm:$0xff]
        %s1073 = scalar_lea.vmem %s186, 512 [#allocation4]
        %v1074 = vld [vmem:[%s1073] ss:$2 sm:$0xff]
        %s1075 = scalar_lea.vmem %s186, 528 [#allocation4]
        %v1076 = vld [vmem:[%s1075] ss:$2 sm:$0xff]
        %s1077 = scalar_lea.vmem %s186, 544 [#allocation4]
        %v1078 = vld [vmem:[%s1077] ss:$2 sm:$0xff]
        %s1079 = scalar_lea.vmem %s186, 560 [#allocation4]
        %v1080 = vld [vmem:[%s1079] ss:$2 sm:$0xff]
        %s1081 = scalar_lea.vmem %s186, 576 [#allocation4]
        %v1082 = vld [vmem:[%s1081] ss:$2 sm:$0xff]
        %s1083 = scalar_lea.vmem %s186, 592 [#allocation4]
        %v1084 = vld [vmem:[%s1083] ss:$2 sm:$0xff]
        %s1085 = scalar_lea.vmem %s186, 608 [#allocation4]
        %v1086 = vld [vmem:[%s1085] ss:$2 sm:$0xff]
        %s1087 = scalar_lea.vmem %s186, 624 [#allocation4]
        %v1088 = vld [vmem:[%s1087] ss:$2 sm:$0xff]
        %s1089 = scalar_lea.vmem %s186, 640 [#allocation4]
        %v1090 = vld [vmem:[%s1089] ss:$2 sm:$0xff]
        %s1091 = scalar_lea.vmem %s186, 656 [#allocation4]
        %v1092 = vld [vmem:[%s1091] ss:$2 sm:$0xff]
        %s1093 = scalar_lea.vmem %s186, 672 [#allocation4]
        %v1094 = vld [vmem:[%s1093] ss:$2 sm:$0xff]
        %s1095 = scalar_lea.vmem %s186, 688 [#allocation4]
        %v1096 = vld [vmem:[%s1095] ss:$2 sm:$0xff]
        %s1097 = scalar_lea.vmem %s186, 704 [#allocation4]
        %v1098 = vld [vmem:[%s1097] ss:$2 sm:$0xff]
        %s1099 = scalar_lea.vmem %s186, 720 [#allocation4]
        %v1100 = vld [vmem:[%s1099] ss:$2 sm:$0xff]
        %s1101 = scalar_lea.vmem %s186, 736 [#allocation4]
        %v1102 = vld [vmem:[%s1101] ss:$2 sm:$0xff]
        %s1103 = scalar_lea.vmem %s186, 752 [#allocation4]
        %v1104 = vld [vmem:[%s1103] ss:$2 sm:$0xff]
        %v1105 = vld [vmem:[#allocation2] sm:$0xff]
        %v1106 = vld [vmem:[#allocation2 + $0x8] sm:$0x3]
        %v1155 = vlaneseq
        %v1156 = vshrl.u32 %v1155, 7
        %v1157 = vsub.s32 0, %v1156
        %v1158 = vrot.slane %v1010, %v1157
        %v1159 = vlaneseq
        %v1160 = vshrl.u32 %v1159, 7
        %v1161 = vsub.s32 1, %v1160
        %v1162 = vrot.slane %v1010, %v1161
        %v1163 = vlaneseq
        %v1164 = vshrl.u32 %v1163, 7
        %v1165 = vsub.s32 2, %v1164
        %v1166 = vrot.slane %v1010, %v1165
        %v1167 = vlaneseq
        %v1168 = vshrl.u32 %v1167, 7
        %v1169 = vsub.s32 3, %v1168
        %v1170 = vrot.slane %v1010, %v1169
        %v1171 = vlaneseq
        %v1172 = vshrl.u32 %v1171, 7
        %v1173 = vsub.s32 4, %v1172
        %v1174 = vrot.slane %v1010, %v1173
        %v1175 = vlaneseq
        %v1176 = vshrl.u32 %v1175, 7
        %v1177 = vsub.s32 5, %v1176
        %v1178 = vrot.slane %v1010, %v1177
        %v1179 = vlaneseq
        %v1180 = vshrl.u32 %v1179, 7
        %v1181 = vsub.s32 6, %v1180
        %v1182 = vrot.slane %v1010, %v1181
        %v1183 = vlaneseq
        %v1184 = vshrl.u32 %v1183, 7
        %v1185 = vsub.s32 7, %v1184
        %v1186 = vrot.slane %v1010, %v1185
        %v1187 = vlaneseq
        %v1188 = vshrl.u32 %v1187, 7
        %v1189 = vsub.s32 0, %v1188
        %v1190 = vrot.slane %v1012, %v1189
        %v1191 = vlaneseq
        %v1192 = vshrl.u32 %v1191, 7
        %v1193 = vsub.s32 1, %v1192
        %v1194 = vrot.slane %v1012, %v1193
        %v1195 = vlaneseq
        %v1196 = vshrl.u32 %v1195, 7
        %v1197 = vsub.s32 2, %v1196
        %v1198 = vrot.slane %v1012, %v1197
        %v1199 = vlaneseq
        %v1200 = vshrl.u32 %v1199, 7
        %v1201 = vsub.s32 3, %v1200
        %v1202 = vrot.slane %v1012, %v1201
        %v1203 = vlaneseq
        %v1204 = vshrl.u32 %v1203, 7
        %v1205 = vsub.s32 4, %v1204
        %v1206 = vrot.slane %v1012, %v1205
        %v1207 = vlaneseq
        %v1208 = vshrl.u32 %v1207, 7
        %v1209 = vsub.s32 5, %v1208
        %v1210 = vrot.slane %v1012, %v1209
        %v1211 = vlaneseq
        %v1212 = vshrl.u32 %v1211, 7
        %v1213 = vsub.s32 6, %v1212
        %v1214 = vrot.slane %v1012, %v1213
        %v1215 = vlaneseq
        %v1216 = vshrl.u32 %v1215, 7
        %v1217 = vsub.s32 7, %v1216
        %v1218 = vrot.slane %v1012, %v1217
        %v1219 = vlaneseq
        %v1220 = vshrl.u32 %v1219, 7
        %v1221 = vsub.s32 0, %v1220
        %v1222 = vrot.slane %v1014, %v1221
        %v1223 = vlaneseq
        %v1224 = vshrl.u32 %v1223, 7
        %v1225 = vsub.s32 1, %v1224
        %v1226 = vrot.slane %v1014, %v1225
        %v1227 = vlaneseq
        %v1228 = vshrl.u32 %v1227, 7
        %v1229 = vsub.s32 2, %v1228
        %v1230 = vrot.slane %v1014, %v1229
        %v1231 = vlaneseq
        %v1232 = vshrl.u32 %v1231, 7
        %v1233 = vsub.s32 3, %v1232
        %v1234 = vrot.slane %v1014, %v1233
        %v1235 = vlaneseq
        %v1236 = vshrl.u32 %v1235, 7
        %v1237 = vsub.s32 4, %v1236
        %v1238 = vrot.slane %v1014, %v1237
        %v1239 = vlaneseq
        %v1240 = vshrl.u32 %v1239, 7
        %v1241 = vsub.s32 5, %v1240
        %v1242 = vrot.slane %v1014, %v1241
        %v1243 = vlaneseq
        %v1244 = vshrl.u32 %v1243, 7
        %v1245 = vsub.s32 6, %v1244
        %v1246 = vrot.slane %v1014, %v1245
        %v1247 = vlaneseq
        %v1248 = vshrl.u32 %v1247, 7
        %v1249 = vsub.s32 7, %v1248
        %v1250 = vrot.slane %v1014, %v1249
        %v1251 = vlaneseq
        %v1252 = vshrl.u32 %v1251, 7
        %v1253 = vsub.s32 0, %v1252
        %v1254 = vrot.slane %v1016, %v1253
        %v1255 = vlaneseq
        %v1256 = vshrl.u32 %v1255, 7
        %v1257 = vsub.s32 1, %v1256
        %v1258 = vrot.slane %v1016, %v1257
        %v1259 = vlaneseq
        %v1260 = vshrl.u32 %v1259, 7
        %v1261 = vsub.s32 2, %v1260
        %v1262 = vrot.slane %v1016, %v1261
        %v1263 = vlaneseq
        %v1264 = vshrl.u32 %v1263, 7
        %v1265 = vsub.s32 3, %v1264
        %v1266 = vrot.slane %v1016, %v1265
        %v1267 = vlaneseq
        %v1268 = vshrl.u32 %v1267, 7
        %v1269 = vsub.s32 4, %v1268
        %v1270 = vrot.slane %v1016, %v1269
        %v1271 = vlaneseq
        %v1272 = vshrl.u32 %v1271, 7
        %v1273 = vsub.s32 5, %v1272
        %v1274 = vrot.slane %v1016, %v1273
        %v1275 = vlaneseq
        %v1276 = vshrl.u32 %v1275, 7
        %v1277 = vsub.s32 6, %v1276
        %v1278 = vrot.slane %v1016, %v1277
        %v1279 = vlaneseq
        %v1280 = vshrl.u32 %v1279, 7
        %v1281 = vsub.s32 7, %v1280
        %v1282 = vrot.slane %v1016, %v1281
        %v1283 = vlaneseq
        %v1284 = vshrl.u32 %v1283, 7
        %v1285 = vsub.s32 0, %v1284
        %v1286 = vrot.slane %v1018, %v1285
        %v1287 = vlaneseq
        %v1288 = vshrl.u32 %v1287, 7
        %v1289 = vsub.s32 1, %v1288
        %v1290 = vrot.slane %v1018, %v1289
        %v1291 = vlaneseq
        %v1292 = vshrl.u32 %v1291, 7
        %v1293 = vsub.s32 2, %v1292
        %v1294 = vrot.slane %v1018, %v1293
        %v1295 = vlaneseq
        %v1296 = vshrl.u32 %v1295, 7
        %v1297 = vsub.s32 3, %v1296
        %v1298 = vrot.slane %v1018, %v1297
        %v1299 = vlaneseq
        %v1300 = vshrl.u32 %v1299, 7
        %v1301 = vsub.s32 4, %v1300
        %v1302 = vrot.slane %v1018, %v1301
        %v1303 = vlaneseq
        %v1304 = vshrl.u32 %v1303, 7
        %v1305 = vsub.s32 5, %v1304
        %v1306 = vrot.slane %v1018, %v1305
        %v1307 = vlaneseq
        %v1308 = vshrl.u32 %v1307, 7
        %v1309 = vsub.s32 6, %v1308
        %v1310 = vrot.slane %v1018, %v1309
        %v1311 = vlaneseq
        %v1312 = vshrl.u32 %v1311, 7
        %v1313 = vsub.s32 7, %v1312
        %v1314 = vrot.slane %v1018, %v1313
        %v1315 = vlaneseq
        %v1316 = vshrl.u32 %v1315, 7
        %v1317 = vsub.s32 0, %v1316
        %v1318 = vrot.slane %v1020, %v1317
        %v1319 = vlaneseq
        %v1320 = vshrl.u32 %v1319, 7
        %v1321 = vsub.s32 1, %v1320
        %v1322 = vrot.slane %v1020, %v1321
        %v1323 = vlaneseq
        %v1324 = vshrl.u32 %v1323, 7
        %v1325 = vsub.s32 2, %v1324
        %v1326 = vrot.slane %v1020, %v1325
        %v1327 = vlaneseq
        %v1328 = vshrl.u32 %v1327, 7
        %v1329 = vsub.s32 3, %v1328
        %v1330 = vrot.slane %v1020, %v1329
        %v1331 = vlaneseq
        %v1332 = vshrl.u32 %v1331, 7
        %v1333 = vsub.s32 4, %v1332
        %v1334 = vrot.slane %v1020, %v1333
        %v1335 = vlaneseq
        %v1336 = vshrl.u32 %v1335, 7
        %v1337 = vsub.s32 5, %v1336
        %v1338 = vrot.slane %v1020, %v1337
        %v1339 = vlaneseq
        %v1340 = vshrl.u32 %v1339, 7
        %v1341 = vsub.s32 6, %v1340
        %v1342 = vrot.slane %v1020, %v1341
        %v1343 = vlaneseq
        %v1344 = vshrl.u32 %v1343, 7
        %v1345 = vsub.s32 7, %v1344
        %v1346 = vrot.slane %v1020, %v1345
        %v1347 = vlaneseq
        %v1348 = vshrl.u32 %v1347, 7
        %v1349 = vsub.s32 0, %v1348
        %v1350 = vrot.slane %v1022, %v1349
        %v1351 = vlaneseq
        %v1352 = vshrl.u32 %v1351, 7
        %v1353 = vsub.s32 1, %v1352
        %v1354 = vrot.slane %v1022, %v1353
        %v1355 = vlaneseq
        %v1356 = vshrl.u32 %v1355, 7
        %v1357 = vsub.s32 2, %v1356
        %v1358 = vrot.slane %v1022, %v1357
        %v1359 = vlaneseq
        %v1360 = vshrl.u32 %v1359, 7
        %v1361 = vsub.s32 3, %v1360
        %v1362 = vrot.slane %v1022, %v1361
        %v1363 = vlaneseq
        %v1364 = vshrl.u32 %v1363, 7
        %v1365 = vsub.s32 4, %v1364
        %v1366 = vrot.slane %v1022, %v1365
        %v1367 = vlaneseq
        %v1368 = vshrl.u32 %v1367, 7
        %v1369 = vsub.s32 5, %v1368
        %v1370 = vrot.slane %v1022, %v1369
        %v1371 = vlaneseq
        %v1372 = vshrl.u32 %v1371, 7
        %v1373 = vsub.s32 6, %v1372
        %v1374 = vrot.slane %v1022, %v1373
        %v1375 = vlaneseq
        %v1376 = vshrl.u32 %v1375, 7
        %v1377 = vsub.s32 7, %v1376
        %v1378 = vrot.slane %v1022, %v1377
        %v1379 = vlaneseq
        %v1380 = vshrl.u32 %v1379, 7
        %v1381 = vsub.s32 0, %v1380
        %v1382 = vrot.slane %v1024, %v1381
        %v1383 = vlaneseq
        %v1384 = vshrl.u32 %v1383, 7
        %v1385 = vsub.s32 1, %v1384
        %v1386 = vrot.slane %v1024, %v1385
        %v1387 = vlaneseq
        %v1388 = vshrl.u32 %v1387, 7
        %v1389 = vsub.s32 2, %v1388
        %v1390 = vrot.slane %v1024, %v1389
        %v1391 = vlaneseq
        %v1392 = vshrl.u32 %v1391, 7
        %v1393 = vsub.s32 3, %v1392
        %v1394 = vrot.slane %v1024, %v1393
        %v1395 = vlaneseq
        %v1396 = vshrl.u32 %v1395, 7
        %v1397 = vsub.s32 4, %v1396
        %v1398 = vrot.slane %v1024, %v1397
        %v1399 = vlaneseq
        %v1400 = vshrl.u32 %v1399, 7
        %v1401 = vsub.s32 5, %v1400
        %v1402 = vrot.slane %v1024, %v1401
        %v1403 = vlaneseq
        %v1404 = vshrl.u32 %v1403, 7
        %v1405 = vsub.s32 6, %v1404
        %v1406 = vrot.slane %v1024, %v1405
        %v1407 = vlaneseq
        %v1408 = vshrl.u32 %v1407, 7
        %v1409 = vsub.s32 7, %v1408
        %v1410 = vrot.slane %v1024, %v1409
        %v1411 = vlaneseq
        %v1412 = vshrl.u32 %v1411, 7
        %v1413 = vsub.s32 0, %v1412
        %v1414 = vrot.slane %v1026, %v1413
        %v1415 = vlaneseq
        %v1416 = vshrl.u32 %v1415, 7
        %v1417 = vsub.s32 1, %v1416
        %v1418 = vrot.slane %v1026, %v1417
        %v1419 = vlaneseq
        %v1420 = vshrl.u32 %v1419, 7
        %v1421 = vsub.s32 2, %v1420
        %v1422 = vrot.slane %v1026, %v1421
        %v1423 = vlaneseq
        %v1424 = vshrl.u32 %v1423, 7
        %v1425 = vsub.s32 3, %v1424
        %v1426 = vrot.slane %v1026, %v1425
        %v1427 = vlaneseq
        %v1428 = vshrl.u32 %v1427, 7
        %v1429 = vsub.s32 4, %v1428
        %v1430 = vrot.slane %v1026, %v1429
        %v1431 = vlaneseq
        %v1432 = vshrl.u32 %v1431, 7
        %v1433 = vsub.s32 5, %v1432
        %v1434 = vrot.slane %v1026, %v1433
        %v1435 = vlaneseq
        %v1436 = vshrl.u32 %v1435, 7
        %v1437 = vsub.s32 6, %v1436
        %v1438 = vrot.slane %v1026, %v1437
        %v1439 = vlaneseq
        %v1440 = vshrl.u32 %v1439, 7
        %v1441 = vsub.s32 7, %v1440
        %v1442 = vrot.slane %v1026, %v1441
        %v1443 = vlaneseq
        %v1444 = vshrl.u32 %v1443, 7
        %v1445 = vsub.s32 0, %v1444
        %v1446 = vrot.slane %v1028, %v1445
        %v1447 = vlaneseq
        %v1448 = vshrl.u32 %v1447, 7
        %v1449 = vsub.s32 1, %v1448
        %v1450 = vrot.slane %v1028, %v1449
        %v1451 = vlaneseq
        %v1452 = vshrl.u32 %v1451, 7
        %v1453 = vsub.s32 2, %v1452
        %v1454 = vrot.slane %v1028, %v1453
        %v1455 = vlaneseq
        %v1456 = vshrl.u32 %v1455, 7
        %v1457 = vsub.s32 3, %v1456
        %v1458 = vrot.slane %v1028, %v1457
        %v1459 = vlaneseq
        %v1460 = vshrl.u32 %v1459, 7
        %v1461 = vsub.s32 4, %v1460
        %v1462 = vrot.slane %v1028, %v1461
        %v1463 = vlaneseq
        %v1464 = vshrl.u32 %v1463, 7
        %v1465 = vsub.s32 5, %v1464
        %v1466 = vrot.slane %v1028, %v1465
        %v1467 = vlaneseq
        %v1468 = vshrl.u32 %v1467, 7
        %v1469 = vsub.s32 6, %v1468
        %v1470 = vrot.slane %v1028, %v1469
        %v1471 = vlaneseq
        %v1472 = vshrl.u32 %v1471, 7
        %v1473 = vsub.s32 7, %v1472
        %v1474 = vrot.slane %v1028, %v1473
        %v1475 = vlaneseq
        %v1476 = vshrl.u32 %v1475, 7
        %v1477 = vsub.s32 0, %v1476
        %v1478 = vrot.slane %v1030, %v1477
        %v1479 = vlaneseq
        %v1480 = vshrl.u32 %v1479, 7
        %v1481 = vsub.s32 1, %v1480
        %v1482 = vrot.slane %v1030, %v1481
        %v1483 = vlaneseq
        %v1484 = vshrl.u32 %v1483, 7
        %v1485 = vsub.s32 2, %v1484
        %v1486 = vrot.slane %v1030, %v1485
        %v1487 = vlaneseq
        %v1488 = vshrl.u32 %v1487, 7
        %v1489 = vsub.s32 3, %v1488
        %v1490 = vrot.slane %v1030, %v1489
        %v1491 = vlaneseq
        %v1492 = vshrl.u32 %v1491, 7
        %v1493 = vsub.s32 4, %v1492
        %v1494 = vrot.slane %v1030, %v1493
        %v1495 = vlaneseq
        %v1496 = vshrl.u32 %v1495, 7
        %v1497 = vsub.s32 5, %v1496
        %v1498 = vrot.slane %v1030, %v1497
        %v1499 = vlaneseq
        %v1500 = vshrl.u32 %v1499, 7
        %v1501 = vsub.s32 6, %v1500
        %v1502 = vrot.slane %v1030, %v1501
        %v1503 = vlaneseq
        %v1504 = vshrl.u32 %v1503, 7
        %v1505 = vsub.s32 7, %v1504
        %v1506 = vrot.slane %v1030, %v1505
        %v1507 = vlaneseq
        %v1508 = vshrl.u32 %v1507, 7
        %v1509 = vsub.s32 0, %v1508
        %v1510 = vrot.slane %v1032, %v1509
        %v1511 = vlaneseq
        %v1512 = vshrl.u32 %v1511, 7
        %v1513 = vsub.s32 1, %v1512
        %v1514 = vrot.slane %v1032, %v1513
        %v1515 = vlaneseq
        %v1516 = vshrl.u32 %v1515, 7
        %v1517 = vsub.s32 2, %v1516
        %v1518 = vrot.slane %v1032, %v1517
        %v1519 = vlaneseq
        %v1520 = vshrl.u32 %v1519, 7
        %v1521 = vsub.s32 3, %v1520
        %v1522 = vrot.slane %v1032, %v1521
        %v1523 = vlaneseq
        %v1524 = vshrl.u32 %v1523, 7
        %v1525 = vsub.s32 4, %v1524
        %v1526 = vrot.slane %v1032, %v1525
        %v1527 = vlaneseq
        %v1528 = vshrl.u32 %v1527, 7
        %v1529 = vsub.s32 5, %v1528
        %v1530 = vrot.slane %v1032, %v1529
        %v1531 = vlaneseq
        %v1532 = vshrl.u32 %v1531, 7
        %v1533 = vsub.s32 6, %v1532
        %v1534 = vrot.slane %v1032, %v1533
        %v1535 = vlaneseq
        %v1536 = vshrl.u32 %v1535, 7
        %v1537 = vsub.s32 7, %v1536
        %v1538 = vrot.slane %v1032, %v1537
        %v1539 = vlaneseq
        %v1540 = vshrl.u32 %v1539, 7
        %v1541 = vsub.s32 0, %v1540
        %v1542 = vrot.slane %v1034, %v1541
        %v1543 = vlaneseq
        %v1544 = vshrl.u32 %v1543, 7
        %v1545 = vsub.s32 1, %v1544
        %v1546 = vrot.slane %v1034, %v1545
        %v1547 = vlaneseq
        %v1548 = vshrl.u32 %v1547, 7
        %v1549 = vsub.s32 2, %v1548
        %v1550 = vrot.slane %v1034, %v1549
        %v1551 = vlaneseq
        %v1552 = vshrl.u32 %v1551, 7
        %v1553 = vsub.s32 3, %v1552
        %v1554 = vrot.slane %v1034, %v1553
        %v1555 = vlaneseq
        %v1556 = vshrl.u32 %v1555, 7
        %v1557 = vsub.s32 4, %v1556
        %v1558 = vrot.slane %v1034, %v1557
        %v1559 = vlaneseq
        %v1560 = vshrl.u32 %v1559, 7
        %v1561 = vsub.s32 5, %v1560
        %v1562 = vrot.slane %v1034, %v1561
        %v1563 = vlaneseq
        %v1564 = vshrl.u32 %v1563, 7
        %v1565 = vsub.s32 6, %v1564
        %v1566 = vrot.slane %v1034, %v1565
        %v1567 = vlaneseq
        %v1568 = vshrl.u32 %v1567, 7
        %v1569 = vsub.s32 7, %v1568
        %v1570 = vrot.slane %v1034, %v1569
        %v1571 = vlaneseq
        %v1572 = vshrl.u32 %v1571, 7
        %v1573 = vsub.s32 0, %v1572
        %v1574 = vrot.slane %v1036, %v1573
        %v1575 = vlaneseq
        %v1576 = vshrl.u32 %v1575, 7
        %v1577 = vsub.s32 1, %v1576
        %v1578 = vrot.slane %v1036, %v1577
        %v1579 = vlaneseq
        %v1580 = vshrl.u32 %v1579, 7
        %v1581 = vsub.s32 2, %v1580
        %v1582 = vrot.slane %v1036, %v1581
        %v1583 = vlaneseq
        %v1584 = vshrl.u32 %v1583, 7
        %v1585 = vsub.s32 3, %v1584
        %v1586 = vrot.slane %v1036, %v1585
        %v1587 = vlaneseq
        %v1588 = vshrl.u32 %v1587, 7
        %v1589 = vsub.s32 4, %v1588
        %v1590 = vrot.slane %v1036, %v1589
        %v1591 = vlaneseq
        %v1592 = vshrl.u32 %v1591, 7
        %v1593 = vsub.s32 5, %v1592
        %v1594 = vrot.slane %v1036, %v1593
        %v1595 = vlaneseq
        %v1596 = vshrl.u32 %v1595, 7
        %v1597 = vsub.s32 6, %v1596
        %v1598 = vrot.slane %v1036, %v1597
        %v1599 = vlaneseq
        %v1600 = vshrl.u32 %v1599, 7
        %v1601 = vsub.s32 7, %v1600
        %v1602 = vrot.slane %v1036, %v1601
        %v1603 = vlaneseq
        %v1604 = vshrl.u32 %v1603, 7
        %v1605 = vsub.s32 0, %v1604
        %v1606 = vrot.slane %v1038, %v1605
        %v1607 = vlaneseq
        %v1608 = vshrl.u32 %v1607, 7
        %v1609 = vsub.s32 1, %v1608
        %v1610 = vrot.slane %v1038, %v1609
        %v1611 = vlaneseq
        %v1612 = vshrl.u32 %v1611, 7
        %v1613 = vsub.s32 2, %v1612
        %v1614 = vrot.slane %v1038, %v1613
        %v1615 = vlaneseq
        %v1616 = vshrl.u32 %v1615, 7
        %v1617 = vsub.s32 3, %v1616
        %v1618 = vrot.slane %v1038, %v1617
        %v1619 = vlaneseq
        %v1620 = vshrl.u32 %v1619, 7
        %v1621 = vsub.s32 4, %v1620
        %v1622 = vrot.slane %v1038, %v1621
        %v1623 = vlaneseq
        %v1624 = vshrl.u32 %v1623, 7
        %v1625 = vsub.s32 5, %v1624
        %v1626 = vrot.slane %v1038, %v1625
        %v1627 = vlaneseq
        %v1628 = vshrl.u32 %v1627, 7
        %v1629 = vsub.s32 6, %v1628
        %v1630 = vrot.slane %v1038, %v1629
        %v1631 = vlaneseq
        %v1632 = vshrl.u32 %v1631, 7
        %v1633 = vsub.s32 7, %v1632
        %v1634 = vrot.slane %v1038, %v1633
        %v1635 = vlaneseq
        %v1636 = vshrl.u32 %v1635, 7
        %v1637 = vsub.s32 0, %v1636
        %v1638 = vrot.slane %v1040, %v1637
        %v1639 = vlaneseq
        %v1640 = vshrl.u32 %v1639, 7
        %v1641 = vsub.s32 1, %v1640
        %v1642 = vrot.slane %v1040, %v1641
        %v1643 = vlaneseq
        %v1644 = vshrl.u32 %v1643, 7
        %v1645 = vsub.s32 2, %v1644
        %v1646 = vrot.slane %v1040, %v1645
        %v1647 = vlaneseq
        %v1648 = vshrl.u32 %v1647, 7
        %v1649 = vsub.s32 3, %v1648
        %v1650 = vrot.slane %v1040, %v1649
        %v1651 = vlaneseq
        %v1652 = vshrl.u32 %v1651, 7
        %v1653 = vsub.s32 4, %v1652
        %v1654 = vrot.slane %v1040, %v1653
        %v1655 = vlaneseq
        %v1656 = vshrl.u32 %v1655, 7
        %v1657 = vsub.s32 5, %v1656
        %v1658 = vrot.slane %v1040, %v1657
        %v1659 = vlaneseq
        %v1660 = vshrl.u32 %v1659, 7
        %v1661 = vsub.s32 6, %v1660
        %v1662 = vrot.slane %v1040, %v1661
        %v1663 = vlaneseq
        %v1664 = vshrl.u32 %v1663, 7
        %v1665 = vsub.s32 7, %v1664
        %v1666 = vrot.slane %v1040, %v1665
        %v1667 = vlaneseq
        %v1668 = vshrl.u32 %v1667, 7
        %v1669 = vsub.s32 0, %v1668
        %v1670 = vrot.slane %v1042, %v1669
        %v1671 = vlaneseq
        %v1672 = vshrl.u32 %v1671, 7
        %v1673 = vsub.s32 1, %v1672
        %v1674 = vrot.slane %v1042, %v1673
        %v1675 = vlaneseq
        %v1676 = vshrl.u32 %v1675, 7
        %v1677 = vsub.s32 2, %v1676
        %v1678 = vrot.slane %v1042, %v1677
        %v1679 = vlaneseq
        %v1680 = vshrl.u32 %v1679, 7
        %v1681 = vsub.s32 3, %v1680
        %v1682 = vrot.slane %v1042, %v1681
        %v1683 = vlaneseq
        %v1684 = vshrl.u32 %v1683, 7
        %v1685 = vsub.s32 4, %v1684
        %v1686 = vrot.slane %v1042, %v1685
        %v1687 = vlaneseq
        %v1688 = vshrl.u32 %v1687, 7
        %v1689 = vsub.s32 5, %v1688
        %v1690 = vrot.slane %v1042, %v1689
        %v1691 = vlaneseq
        %v1692 = vshrl.u32 %v1691, 7
        %v1693 = vsub.s32 6, %v1692
        %v1694 = vrot.slane %v1042, %v1693
        %v1695 = vlaneseq
        %v1696 = vshrl.u32 %v1695, 7
        %v1697 = vsub.s32 7, %v1696
        %v1698 = vrot.slane %v1042, %v1697
        %v1699 = vlaneseq
        %v1700 = vshrl.u32 %v1699, 7
        %v1701 = vsub.s32 0, %v1700
        %v1702 = vrot.slane %v1044, %v1701
        %v1703 = vlaneseq
        %v1704 = vshrl.u32 %v1703, 7
        %v1705 = vsub.s32 1, %v1704
        %v1706 = vrot.slane %v1044, %v1705
        %v1707 = vlaneseq
        %v1708 = vshrl.u32 %v1707, 7
        %v1709 = vsub.s32 2, %v1708
        %v1710 = vrot.slane %v1044, %v1709
        %v1711 = vlaneseq
        %v1712 = vshrl.u32 %v1711, 7
        %v1713 = vsub.s32 3, %v1712
        %v1714 = vrot.slane %v1044, %v1713
        %v1715 = vlaneseq
        %v1716 = vshrl.u32 %v1715, 7
        %v1717 = vsub.s32 4, %v1716
        %v1718 = vrot.slane %v1044, %v1717
        %v1719 = vlaneseq
        %v1720 = vshrl.u32 %v1719, 7
        %v1721 = vsub.s32 5, %v1720
        %v1722 = vrot.slane %v1044, %v1721
        %v1723 = vlaneseq
        %v1724 = vshrl.u32 %v1723, 7
        %v1725 = vsub.s32 6, %v1724
        %v1726 = vrot.slane %v1044, %v1725
        %v1727 = vlaneseq
        %v1728 = vshrl.u32 %v1727, 7
        %v1729 = vsub.s32 7, %v1728
        %v1730 = vrot.slane %v1044, %v1729
        %v1731 = vlaneseq
        %v1732 = vshrl.u32 %v1731, 7
        %v1733 = vsub.s32 0, %v1732
        %v1734 = vrot.slane %v1046, %v1733
        %v1735 = vlaneseq
        %v1736 = vshrl.u32 %v1735, 7
        %v1737 = vsub.s32 1, %v1736
        %v1738 = vrot.slane %v1046, %v1737
        %v1739 = vlaneseq
        %v1740 = vshrl.u32 %v1739, 7
        %v1741 = vsub.s32 2, %v1740
        %v1742 = vrot.slane %v1046, %v1741
        %v1743 = vlaneseq
        %v1744 = vshrl.u32 %v1743, 7
        %v1745 = vsub.s32 3, %v1744
        %v1746 = vrot.slane %v1046, %v1745
        %v1747 = vlaneseq
        %v1748 = vshrl.u32 %v1747, 7
        %v1749 = vsub.s32 4, %v1748
        %v1750 = vrot.slane %v1046, %v1749
        %v1751 = vlaneseq
        %v1752 = vshrl.u32 %v1751, 7
        %v1753 = vsub.s32 5, %v1752
        %v1754 = vrot.slane %v1046, %v1753
        %v1755 = vlaneseq
        %v1756 = vshrl.u32 %v1755, 7
        %v1757 = vsub.s32 6, %v1756
        %v1758 = vrot.slane %v1046, %v1757
        %v1759 = vlaneseq
        %v1760 = vshrl.u32 %v1759, 7
        %v1761 = vsub.s32 7, %v1760
        %v1762 = vrot.slane %v1046, %v1761
        %v1763 = vlaneseq
        %v1764 = vshrl.u32 %v1763, 7
        %v1765 = vsub.s32 0, %v1764
        %v1766 = vrot.slane %v1048, %v1765
        %v1767 = vlaneseq
        %v1768 = vshrl.u32 %v1767, 7
        %v1769 = vsub.s32 1, %v1768
        %v1770 = vrot.slane %v1048, %v1769
        %v1771 = vlaneseq
        %v1772 = vshrl.u32 %v1771, 7
        %v1773 = vsub.s32 2, %v1772
        %v1774 = vrot.slane %v1048, %v1773
        %v1775 = vlaneseq
        %v1776 = vshrl.u32 %v1775, 7
        %v1777 = vsub.s32 3, %v1776
        %v1778 = vrot.slane %v1048, %v1777
        %v1779 = vlaneseq
        %v1780 = vshrl.u32 %v1779, 7
        %v1781 = vsub.s32 4, %v1780
        %v1782 = vrot.slane %v1048, %v1781
        %v1783 = vlaneseq
        %v1784 = vshrl.u32 %v1783, 7
        %v1785 = vsub.s32 5, %v1784
        %v1786 = vrot.slane %v1048, %v1785
        %v1787 = vlaneseq
        %v1788 = vshrl.u32 %v1787, 7
        %v1789 = vsub.s32 6, %v1788
        %v1790 = vrot.slane %v1048, %v1789
        %v1791 = vlaneseq
        %v1792 = vshrl.u32 %v1791, 7
        %v1793 = vsub.s32 7, %v1792
        %v1794 = vrot.slane %v1048, %v1793
        %v1795 = vlaneseq
        %v1796 = vshrl.u32 %v1795, 7
        %v1797 = vsub.s32 0, %v1796
        %v1798 = vrot.slane %v1050, %v1797
        %v1799 = vlaneseq
        %v1800 = vshrl.u32 %v1799, 7
        %v1801 = vsub.s32 1, %v1800
        %v1802 = vrot.slane %v1050, %v1801
        %v1803 = vlaneseq
        %v1804 = vshrl.u32 %v1803, 7
        %v1805 = vsub.s32 2, %v1804
        %v1806 = vrot.slane %v1050, %v1805
        %v1807 = vlaneseq
        %v1808 = vshrl.u32 %v1807, 7
        %v1809 = vsub.s32 3, %v1808
        %v1810 = vrot.slane %v1050, %v1809
        %v1811 = vlaneseq
        %v1812 = vshrl.u32 %v1811, 7
        %v1813 = vsub.s32 4, %v1812
        %v1814 = vrot.slane %v1050, %v1813
        %v1815 = vlaneseq
        %v1816 = vshrl.u32 %v1815, 7
        %v1817 = vsub.s32 5, %v1816
        %v1818 = vrot.slane %v1050, %v1817
        %v1819 = vlaneseq
        %v1820 = vshrl.u32 %v1819, 7
        %v1821 = vsub.s32 6, %v1820
        %v1822 = vrot.slane %v1050, %v1821
        %v1823 = vlaneseq
        %v1824 = vshrl.u32 %v1823, 7
        %v1825 = vsub.s32 7, %v1824
        %v1826 = vrot.slane %v1050, %v1825
        %v1827 = vlaneseq
        %v1828 = vshrl.u32 %v1827, 7
        %v1829 = vsub.s32 0, %v1828
        %v1830 = vrot.slane %v1052, %v1829
        %v1831 = vlaneseq
        %v1832 = vshrl.u32 %v1831, 7
        %v1833 = vsub.s32 1, %v1832
        %v1834 = vrot.slane %v1052, %v1833
        %v1835 = vlaneseq
        %v1836 = vshrl.u32 %v1835, 7
        %v1837 = vsub.s32 2, %v1836
        %v1838 = vrot.slane %v1052, %v1837
        %v1839 = vlaneseq
        %v1840 = vshrl.u32 %v1839, 7
        %v1841 = vsub.s32 3, %v1840
        %v1842 = vrot.slane %v1052, %v1841
        %v1843 = vlaneseq
        %v1844 = vshrl.u32 %v1843, 7
        %v1845 = vsub.s32 4, %v1844
        %v1846 = vrot.slane %v1052, %v1845
        %v1847 = vlaneseq
        %v1848 = vshrl.u32 %v1847, 7
        %v1849 = vsub.s32 5, %v1848
        %v1850 = vrot.slane %v1052, %v1849
        %v1851 = vlaneseq
        %v1852 = vshrl.u32 %v1851, 7
        %v1853 = vsub.s32 6, %v1852
        %v1854 = vrot.slane %v1052, %v1853
        %v1855 = vlaneseq
        %v1856 = vshrl.u32 %v1855, 7
        %v1857 = vsub.s32 7, %v1856
        %v1858 = vrot.slane %v1052, %v1857
        %v1859 = vlaneseq
        %v1860 = vshrl.u32 %v1859, 7
        %v1861 = vsub.s32 0, %v1860
        %v1862 = vrot.slane %v1054, %v1861
        %v1863 = vlaneseq
        %v1864 = vshrl.u32 %v1863, 7
        %v1865 = vsub.s32 1, %v1864
        %v1866 = vrot.slane %v1054, %v1865
        %v1867 = vlaneseq
        %v1868 = vshrl.u32 %v1867, 7
        %v1869 = vsub.s32 2, %v1868
        %v1870 = vrot.slane %v1054, %v1869
        %v1871 = vlaneseq
        %v1872 = vshrl.u32 %v1871, 7
        %v1873 = vsub.s32 3, %v1872
        %v1874 = vrot.slane %v1054, %v1873
        %v1875 = vlaneseq
        %v1876 = vshrl.u32 %v1875, 7
        %v1877 = vsub.s32 4, %v1876
        %v1878 = vrot.slane %v1054, %v1877
        %v1879 = vlaneseq
        %v1880 = vshrl.u32 %v1879, 7
        %v1881 = vsub.s32 5, %v1880
        %v1882 = vrot.slane %v1054, %v1881
        %v1883 = vlaneseq
        %v1884 = vshrl.u32 %v1883, 7
        %v1885 = vsub.s32 6, %v1884
        %v1886 = vrot.slane %v1054, %v1885
        %v1887 = vlaneseq
        %v1888 = vshrl.u32 %v1887, 7
        %v1889 = vsub.s32 7, %v1888
        %v1890 = vrot.slane %v1054, %v1889
        %v1891 = vlaneseq
        %v1892 = vshrl.u32 %v1891, 7
        %v1893 = vsub.s32 0, %v1892
        %v1894 = vrot.slane %v1056, %v1893
        %v1895 = vlaneseq
        %v1896 = vshrl.u32 %v1895, 7
        %v1897 = vsub.s32 1, %v1896
        %v1898 = vrot.slane %v1056, %v1897
        %v1899 = vlaneseq
        %v1900 = vshrl.u32 %v1899, 7
        %v1901 = vsub.s32 2, %v1900
        %v1902 = vrot.slane %v1056, %v1901
        %v1903 = vlaneseq
        %v1904 = vshrl.u32 %v1903, 7
        %v1905 = vsub.s32 3, %v1904
        %v1906 = vrot.slane %v1056, %v1905
        %v1907 = vlaneseq
        %v1908 = vshrl.u32 %v1907, 7
        %v1909 = vsub.s32 4, %v1908
        %v1910 = vrot.slane %v1056, %v1909
        %v1911 = vlaneseq
        %v1912 = vshrl.u32 %v1911, 7
        %v1913 = vsub.s32 5, %v1912
        %v1914 = vrot.slane %v1056, %v1913
        %v1915 = vlaneseq
        %v1916 = vshrl.u32 %v1915, 7
        %v1917 = vsub.s32 6, %v1916
        %v1918 = vrot.slane %v1056, %v1917
        %v1919 = vlaneseq
        %v1920 = vshrl.u32 %v1919, 7
        %v1921 = vsub.s32 7, %v1920
        %v1922 = vrot.slane %v1056, %v1921
        %v1923 = vlaneseq
        %v1924 = vshrl.u32 %v1923, 7
        %v1925 = vsub.s32 0, %v1924
        %v1926 = vrot.slane %v1058, %v1925
        %v1927 = vlaneseq
        %v1928 = vshrl.u32 %v1927, 7
        %v1929 = vsub.s32 1, %v1928
        %v1930 = vrot.slane %v1058, %v1929
        %v1931 = vlaneseq
        %v1932 = vshrl.u32 %v1931, 7
        %v1933 = vsub.s32 2, %v1932
        %v1934 = vrot.slane %v1058, %v1933
        %v1935 = vlaneseq
        %v1936 = vshrl.u32 %v1935, 7
        %v1937 = vsub.s32 3, %v1936
        %v1938 = vrot.slane %v1058, %v1937
        %v1939 = vlaneseq
        %v1940 = vshrl.u32 %v1939, 7
        %v1941 = vsub.s32 4, %v1940
        %v1942 = vrot.slane %v1058, %v1941
        %v1943 = vlaneseq
        %v1944 = vshrl.u32 %v1943, 7
        %v1945 = vsub.s32 5, %v1944
        %v1946 = vrot.slane %v1058, %v1945
        %v1947 = vlaneseq
        %v1948 = vshrl.u32 %v1947, 7
        %v1949 = vsub.s32 6, %v1948
        %v1950 = vrot.slane %v1058, %v1949
        %v1951 = vlaneseq
        %v1952 = vshrl.u32 %v1951, 7
        %v1953 = vsub.s32 7, %v1952
        %v1954 = vrot.slane %v1058, %v1953
        %v1955 = vlaneseq
        %v1956 = vshrl.u32 %v1955, 7
        %v1957 = vsub.s32 0, %v1956
        %v1958 = vrot.slane %v1060, %v1957
        %v1959 = vlaneseq
        %v1960 = vshrl.u32 %v1959, 7
        %v1961 = vsub.s32 1, %v1960
        %v1962 = vrot.slane %v1060, %v1961
        %v1963 = vlaneseq
        %v1964 = vshrl.u32 %v1963, 7
        %v1965 = vsub.s32 2, %v1964
        %v1966 = vrot.slane %v1060, %v1965
        %v1967 = vlaneseq
        %v1968 = vshrl.u32 %v1967, 7
        %v1969 = vsub.s32 3, %v1968
        %v1970 = vrot.slane %v1060, %v1969
        %v1971 = vlaneseq
        %v1972 = vshrl.u32 %v1971, 7
        %v1973 = vsub.s32 4, %v1972
        %v1974 = vrot.slane %v1060, %v1973
        %v1975 = vlaneseq
        %v1976 = vshrl.u32 %v1975, 7
        %v1977 = vsub.s32 5, %v1976
        %v1978 = vrot.slane %v1060, %v1977
        %v1979 = vlaneseq
        %v1980 = vshrl.u32 %v1979, 7
        %v1981 = vsub.s32 6, %v1980
        %v1982 = vrot.slane %v1060, %v1981
        %v1983 = vlaneseq
        %v1984 = vshrl.u32 %v1983, 7
        %v1985 = vsub.s32 7, %v1984
        %v1986 = vrot.slane %v1060, %v1985
        %v1987 = vlaneseq
        %v1988 = vshrl.u32 %v1987, 7
        %v1989 = vsub.s32 0, %v1988
        %v1990 = vrot.slane %v1062, %v1989
        %v1991 = vlaneseq
        %v1992 = vshrl.u32 %v1991, 7
        %v1993 = vsub.s32 1, %v1992
        %v1994 = vrot.slane %v1062, %v1993
        %v1995 = vlaneseq
        %v1996 = vshrl.u32 %v1995, 7
        %v1997 = vsub.s32 2, %v1996
        %v1998 = vrot.slane %v1062, %v1997
        %v1999 = vlaneseq
        %v2000 = vshrl.u32 %v1999, 7
        %v2001 = vsub.s32 3, %v2000
        %v2002 = vrot.slane %v1062, %v2001
        %v2003 = vlaneseq
        %v2004 = vshrl.u32 %v2003, 7
        %v2005 = vsub.s32 4, %v2004
        %v2006 = vrot.slane %v1062, %v2005
        %v2007 = vlaneseq
        %v2008 = vshrl.u32 %v2007, 7
        %v2009 = vsub.s32 5, %v2008
        %v2010 = vrot.slane %v1062, %v2009
        %v2011 = vlaneseq
        %v2012 = vshrl.u32 %v2011, 7
        %v2013 = vsub.s32 6, %v2012
        %v2014 = vrot.slane %v1062, %v2013
        %v2015 = vlaneseq
        %v2016 = vshrl.u32 %v2015, 7
        %v2017 = vsub.s32 7, %v2016
        %v2018 = vrot.slane %v1062, %v2017
        %v2019 = vlaneseq
        %v2020 = vshrl.u32 %v2019, 7
        %v2021 = vsub.s32 0, %v2020
        %v2022 = vrot.slane %v1064, %v2021
        %v2023 = vlaneseq
        %v2024 = vshrl.u32 %v2023, 7
        %v2025 = vsub.s32 1, %v2024
        %v2026 = vrot.slane %v1064, %v2025
        %v2027 = vlaneseq
        %v2028 = vshrl.u32 %v2027, 7
        %v2029 = vsub.s32 2, %v2028
        %v2030 = vrot.slane %v1064, %v2029
        %v2031 = vlaneseq
        %v2032 = vshrl.u32 %v2031, 7
        %v2033 = vsub.s32 3, %v2032
        %v2034 = vrot.slane %v1064, %v2033
        %v2035 = vlaneseq
        %v2036 = vshrl.u32 %v2035, 7
        %v2037 = vsub.s32 4, %v2036
        %v2038 = vrot.slane %v1064, %v2037
        %v2039 = vlaneseq
        %v2040 = vshrl.u32 %v2039, 7
        %v2041 = vsub.s32 5, %v2040
        %v2042 = vrot.slane %v1064, %v2041
        %v2043 = vlaneseq
        %v2044 = vshrl.u32 %v2043, 7
        %v2045 = vsub.s32 6, %v2044
        %v2046 = vrot.slane %v1064, %v2045
        %v2047 = vlaneseq
        %v2048 = vshrl.u32 %v2047, 7
        %v2049 = vsub.s32 7, %v2048
        %v2050 = vrot.slane %v1064, %v2049
        %v2051 = vlaneseq
        %v2052 = vshrl.u32 %v2051, 7
        %v2053 = vsub.s32 0, %v2052
        %v2054 = vrot.slane %v1066, %v2053
        %v2055 = vlaneseq
        %v2056 = vshrl.u32 %v2055, 7
        %v2057 = vsub.s32 1, %v2056
        %v2058 = vrot.slane %v1066, %v2057
        %v2059 = vlaneseq
        %v2060 = vshrl.u32 %v2059, 7
        %v2061 = vsub.s32 2, %v2060
        %v2062 = vrot.slane %v1066, %v2061
        %v2063 = vlaneseq
        %v2064 = vshrl.u32 %v2063, 7
        %v2065 = vsub.s32 3, %v2064
        %v2066 = vrot.slane %v1066, %v2065
        %v2067 = vlaneseq
        %v2068 = vshrl.u32 %v2067, 7
        %v2069 = vsub.s32 4, %v2068
        %v2070 = vrot.slane %v1066, %v2069
        %v2071 = vlaneseq
        %v2072 = vshrl.u32 %v2071, 7
        %v2073 = vsub.s32 5, %v2072
        %v2074 = vrot.slane %v1066, %v2073
        %v2075 = vlaneseq
        %v2076 = vshrl.u32 %v2075, 7
        %v2077 = vsub.s32 6, %v2076
        %v2078 = vrot.slane %v1066, %v2077
        %v2079 = vlaneseq
        %v2080 = vshrl.u32 %v2079, 7
        %v2081 = vsub.s32 7, %v2080
        %v2082 = vrot.slane %v1066, %v2081
        %v2083 = vlaneseq
        %v2084 = vshrl.u32 %v2083, 7
        %v2085 = vsub.s32 0, %v2084
        %v2086 = vrot.slane %v1068, %v2085
        %v2087 = vlaneseq
        %v2088 = vshrl.u32 %v2087, 7
        %v2089 = vsub.s32 1, %v2088
        %v2090 = vrot.slane %v1068, %v2089
        %v2091 = vlaneseq
        %v2092 = vshrl.u32 %v2091, 7
        %v2093 = vsub.s32 2, %v2092
        %v2094 = vrot.slane %v1068, %v2093
        %v2095 = vlaneseq
        %v2096 = vshrl.u32 %v2095, 7
        %v2097 = vsub.s32 3, %v2096
        %v2098 = vrot.slane %v1068, %v2097
        %v2099 = vlaneseq
        %v2100 = vshrl.u32 %v2099, 7
        %v2101 = vsub.s32 4, %v2100
        %v2102 = vrot.slane %v1068, %v2101
        %v2103 = vlaneseq
        %v2104 = vshrl.u32 %v2103, 7
        %v2105 = vsub.s32 5, %v2104
        %v2106 = vrot.slane %v1068, %v2105
        %v2107 = vlaneseq
        %v2108 = vshrl.u32 %v2107, 7
        %v2109 = vsub.s32 6, %v2108
        %v2110 = vrot.slane %v1068, %v2109
        %v2111 = vlaneseq
        %v2112 = vshrl.u32 %v2111, 7
        %v2113 = vsub.s32 7, %v2112
        %v2114 = vrot.slane %v1068, %v2113
        %v2115 = vlaneseq
        %v2116 = vshrl.u32 %v2115, 7
        %v2117 = vsub.s32 0, %v2116
        %v2118 = vrot.slane %v1070, %v2117
        %v2119 = vlaneseq
        %v2120 = vshrl.u32 %v2119, 7
        %v2121 = vsub.s32 1, %v2120
        %v2122 = vrot.slane %v1070, %v2121
        %v2123 = vlaneseq
        %v2124 = vshrl.u32 %v2123, 7
        %v2125 = vsub.s32 2, %v2124
        %v2126 = vrot.slane %v1070, %v2125
        %v2127 = vlaneseq
        %v2128 = vshrl.u32 %v2127, 7
        %v2129 = vsub.s32 3, %v2128
        %v2130 = vrot.slane %v1070, %v2129
        %v2131 = vlaneseq
        %v2132 = vshrl.u32 %v2131, 7
        %v2133 = vsub.s32 4, %v2132
        %v2134 = vrot.slane %v1070, %v2133
        %v2135 = vlaneseq
        %v2136 = vshrl.u32 %v2135, 7
        %v2137 = vsub.s32 5, %v2136
        %v2138 = vrot.slane %v1070, %v2137
        %v2139 = vlaneseq
        %v2140 = vshrl.u32 %v2139, 7
        %v2141 = vsub.s32 6, %v2140
        %v2142 = vrot.slane %v1070, %v2141
        %v2143 = vlaneseq
        %v2144 = vshrl.u32 %v2143, 7
        %v2145 = vsub.s32 7, %v2144
        %v2146 = vrot.slane %v1070, %v2145
        %v2147 = vlaneseq
        %v2148 = vshrl.u32 %v2147, 7
        %v2149 = vsub.s32 0, %v2148
        %v2150 = vrot.slane %v1072, %v2149
        %v2151 = vlaneseq
        %v2152 = vshrl.u32 %v2151, 7
        %v2153 = vsub.s32 1, %v2152
        %v2154 = vrot.slane %v1072, %v2153
        %v2155 = vlaneseq
        %v2156 = vshrl.u32 %v2155, 7
        %v2157 = vsub.s32 2, %v2156
        %v2158 = vrot.slane %v1072, %v2157
        %v2159 = vlaneseq
        %v2160 = vshrl.u32 %v2159, 7
        %v2161 = vsub.s32 3, %v2160
        %v2162 = vrot.slane %v1072, %v2161
        %v2163 = vlaneseq
        %v2164 = vshrl.u32 %v2163, 7
        %v2165 = vsub.s32 4, %v2164
        %v2166 = vrot.slane %v1072, %v2165
        %v2167 = vlaneseq
        %v2168 = vshrl.u32 %v2167, 7
        %v2169 = vsub.s32 5, %v2168
        %v2170 = vrot.slane %v1072, %v2169
        %v2171 = vlaneseq
        %v2172 = vshrl.u32 %v2171, 7
        %v2173 = vsub.s32 6, %v2172
        %v2174 = vrot.slane %v1072, %v2173
        %v2175 = vlaneseq
        %v2176 = vshrl.u32 %v2175, 7
        %v2177 = vsub.s32 7, %v2176
        %v2178 = vrot.slane %v1072, %v2177
        %v2179 = vlaneseq
        %v2180 = vshrl.u32 %v2179, 7
        %v2181 = vsub.s32 0, %v2180
        %v2182 = vrot.slane %v1074, %v2181
        %v2183 = vlaneseq
        %v2184 = vshrl.u32 %v2183, 7
        %v2185 = vsub.s32 1, %v2184
        %v2186 = vrot.slane %v1074, %v2185
        %v2187 = vlaneseq
        %v2188 = vshrl.u32 %v2187, 7
        %v2189 = vsub.s32 2, %v2188
        %v2190 = vrot.slane %v1074, %v2189
        %v2191 = vlaneseq
        %v2192 = vshrl.u32 %v2191, 7
        %v2193 = vsub.s32 3, %v2192
        %v2194 = vrot.slane %v1074, %v2193
        %v2195 = vlaneseq
        %v2196 = vshrl.u32 %v2195, 7
        %v2197 = vsub.s32 4, %v2196
        %v2198 = vrot.slane %v1074, %v2197
        %v2199 = vlaneseq
        %v2200 = vshrl.u32 %v2199, 7
        %v2201 = vsub.s32 5, %v2200
        %v2202 = vrot.slane %v1074, %v2201
        %v2203 = vlaneseq
        %v2204 = vshrl.u32 %v2203, 7
        %v2205 = vsub.s32 6, %v2204
        %v2206 = vrot.slane %v1074, %v2205
        %v2207 = vlaneseq
        %v2208 = vshrl.u32 %v2207, 7
        %v2209 = vsub.s32 7, %v2208
        %v2210 = vrot.slane %v1074, %v2209
        %v2211 = vlaneseq
        %v2212 = vshrl.u32 %v2211, 7
        %v2213 = vsub.s32 0, %v2212
        %v2214 = vrot.slane %v1076, %v2213
        %v2215 = vlaneseq
        %v2216 = vshrl.u32 %v2215, 7
        %v2217 = vsub.s32 1, %v2216
        %v2218 = vrot.slane %v1076, %v2217
        %v2219 = vlaneseq
        %v2220 = vshrl.u32 %v2219, 7
        %v2221 = vsub.s32 2, %v2220
        %v2222 = vrot.slane %v1076, %v2221
        %v2223 = vlaneseq
        %v2224 = vshrl.u32 %v2223, 7
        %v2225 = vsub.s32 3, %v2224
        %v2226 = vrot.slane %v1076, %v2225
        %v2227 = vlaneseq
        %v2228 = vshrl.u32 %v2227, 7
        %v2229 = vsub.s32 4, %v2228
        %v2230 = vrot.slane %v1076, %v2229
        %v2231 = vlaneseq
        %v2232 = vshrl.u32 %v2231, 7
        %v2233 = vsub.s32 5, %v2232
        %v2234 = vrot.slane %v1076, %v2233
        %v2235 = vlaneseq
        %v2236 = vshrl.u32 %v2235, 7
        %v2237 = vsub.s32 6, %v2236
        %v2238 = vrot.slane %v1076, %v2237
        %v2239 = vlaneseq
        %v2240 = vshrl.u32 %v2239, 7
        %v2241 = vsub.s32 7, %v2240
        %v2242 = vrot.slane %v1076, %v2241
        %v2243 = vlaneseq
        %v2244 = vshrl.u32 %v2243, 7
        %v2245 = vsub.s32 0, %v2244
        %v2246 = vrot.slane %v1078, %v2245
        %v2247 = vlaneseq
        %v2248 = vshrl.u32 %v2247, 7
        %v2249 = vsub.s32 1, %v2248
        %v2250 = vrot.slane %v1078, %v2249
        %v2251 = vlaneseq
        %v2252 = vshrl.u32 %v2251, 7
        %v2253 = vsub.s32 2, %v2252
        %v2254 = vrot.slane %v1078, %v2253
        %v2255 = vlaneseq
        %v2256 = vshrl.u32 %v2255, 7
        %v2257 = vsub.s32 3, %v2256
        %v2258 = vrot.slane %v1078, %v2257
        %v2259 = vlaneseq
        %v2260 = vshrl.u32 %v2259, 7
        %v2261 = vsub.s32 4, %v2260
        %v2262 = vrot.slane %v1078, %v2261
        %v2263 = vlaneseq
        %v2264 = vshrl.u32 %v2263, 7
        %v2265 = vsub.s32 5, %v2264
        %v2266 = vrot.slane %v1078, %v2265
        %v2267 = vlaneseq
        %v2268 = vshrl.u32 %v2267, 7
        %v2269 = vsub.s32 6, %v2268
        %v2270 = vrot.slane %v1078, %v2269
        %v2271 = vlaneseq
        %v2272 = vshrl.u32 %v2271, 7
        %v2273 = vsub.s32 7, %v2272
        %v2274 = vrot.slane %v1078, %v2273
        %v2275 = vlaneseq
        %v2276 = vshrl.u32 %v2275, 7
        %v2277 = vsub.s32 0, %v2276
        %v2278 = vrot.slane %v1080, %v2277
        %v2279 = vlaneseq
        %v2280 = vshrl.u32 %v2279, 7
        %v2281 = vsub.s32 1, %v2280
        %v2282 = vrot.slane %v1080, %v2281
        %v2283 = vlaneseq
        %v2284 = vshrl.u32 %v2283, 7
        %v2285 = vsub.s32 2, %v2284
        %v2286 = vrot.slane %v1080, %v2285
        %v2287 = vlaneseq
        %v2288 = vshrl.u32 %v2287, 7
        %v2289 = vsub.s32 3, %v2288
        %v2290 = vrot.slane %v1080, %v2289
        %v2291 = vlaneseq
        %v2292 = vshrl.u32 %v2291, 7
        %v2293 = vsub.s32 4, %v2292
        %v2294 = vrot.slane %v1080, %v2293
        %v2295 = vlaneseq
        %v2296 = vshrl.u32 %v2295, 7
        %v2297 = vsub.s32 5, %v2296
        %v2298 = vrot.slane %v1080, %v2297
        %v2299 = vlaneseq
        %v2300 = vshrl.u32 %v2299, 7
        %v2301 = vsub.s32 6, %v2300
        %v2302 = vrot.slane %v1080, %v2301
        %v2303 = vlaneseq
        %v2304 = vshrl.u32 %v2303, 7
        %v2305 = vsub.s32 7, %v2304
        %v2306 = vrot.slane %v1080, %v2305
        %v2307 = vlaneseq
        %v2308 = vshrl.u32 %v2307, 7
        %v2309 = vsub.s32 0, %v2308
        %v2310 = vrot.slane %v1082, %v2309
        %v2311 = vlaneseq
        %v2312 = vshrl.u32 %v2311, 7
        %v2313 = vsub.s32 1, %v2312
        %v2314 = vrot.slane %v1082, %v2313
        %v2315 = vlaneseq
        %v2316 = vshrl.u32 %v2315, 7
        %v2317 = vsub.s32 2, %v2316
        %v2318 = vrot.slane %v1082, %v2317
        %v2319 = vlaneseq
        %v2320 = vshrl.u32 %v2319, 7
        %v2321 = vsub.s32 3, %v2320
        %v2322 = vrot.slane %v1082, %v2321
        %v2323 = vlaneseq
        %v2324 = vshrl.u32 %v2323, 7
        %v2325 = vsub.s32 4, %v2324
        %v2326 = vrot.slane %v1082, %v2325
        %v2327 = vlaneseq
        %v2328 = vshrl.u32 %v2327, 7
        %v2329 = vsub.s32 5, %v2328
        %v2330 = vrot.slane %v1082, %v2329
        %v2331 = vlaneseq
        %v2332 = vshrl.u32 %v2331, 7
        %v2333 = vsub.s32 6, %v2332
        %v2334 = vrot.slane %v1082, %v2333
        %v2335 = vlaneseq
        %v2336 = vshrl.u32 %v2335, 7
        %v2337 = vsub.s32 7, %v2336
        %v2338 = vrot.slane %v1082, %v2337
        %v2339 = vlaneseq
        %v2340 = vshrl.u32 %v2339, 7
        %v2341 = vsub.s32 0, %v2340
        %v2342 = vrot.slane %v1084, %v2341
        %v2343 = vlaneseq
        %v2344 = vshrl.u32 %v2343, 7
        %v2345 = vsub.s32 1, %v2344
        %v2346 = vrot.slane %v1084, %v2345
        %v2347 = vlaneseq
        %v2348 = vshrl.u32 %v2347, 7
        %v2349 = vsub.s32 2, %v2348
        %v2350 = vrot.slane %v1084, %v2349
        %v2351 = vlaneseq
        %v2352 = vshrl.u32 %v2351, 7
        %v2353 = vsub.s32 3, %v2352
        %v2354 = vrot.slane %v1084, %v2353
        %v2355 = vlaneseq
        %v2356 = vshrl.u32 %v2355, 7
        %v2357 = vsub.s32 4, %v2356
        %v2358 = vrot.slane %v1084, %v2357
        %v2359 = vlaneseq
        %v2360 = vshrl.u32 %v2359, 7
        %v2361 = vsub.s32 5, %v2360
        %v2362 = vrot.slane %v1084, %v2361
        %v2363 = vlaneseq
        %v2364 = vshrl.u32 %v2363, 7
        %v2365 = vsub.s32 6, %v2364
        %v2366 = vrot.slane %v1084, %v2365
        %v2367 = vlaneseq
        %v2368 = vshrl.u32 %v2367, 7
        %v2369 = vsub.s32 7, %v2368
        %v2370 = vrot.slane %v1084, %v2369
        %v2371 = vlaneseq
        %v2372 = vshrl.u32 %v2371, 7
        %v2373 = vsub.s32 0, %v2372
        %v2374 = vrot.slane %v1086, %v2373
        %v2375 = vlaneseq
        %v2376 = vshrl.u32 %v2375, 7
        %v2377 = vsub.s32 1, %v2376
        %v2378 = vrot.slane %v1086, %v2377
        %v2379 = vlaneseq
        %v2380 = vshrl.u32 %v2379, 7
        %v2381 = vsub.s32 2, %v2380
        %v2382 = vrot.slane %v1086, %v2381
        %v2383 = vlaneseq
        %v2384 = vshrl.u32 %v2383, 7
        %v2385 = vsub.s32 3, %v2384
        %v2386 = vrot.slane %v1086, %v2385
        %v2387 = vlaneseq
        %v2388 = vshrl.u32 %v2387, 7
        %v2389 = vsub.s32 4, %v2388
        %v2390 = vrot.slane %v1086, %v2389
        %v2391 = vlaneseq
        %v2392 = vshrl.u32 %v2391, 7
        %v2393 = vsub.s32 5, %v2392
        %v2394 = vrot.slane %v1086, %v2393
        %v2395 = vlaneseq
        %v2396 = vshrl.u32 %v2395, 7
        %v2397 = vsub.s32 6, %v2396
        %v2398 = vrot.slane %v1086, %v2397
        %v2399 = vlaneseq
        %v2400 = vshrl.u32 %v2399, 7
        %v2401 = vsub.s32 7, %v2400
        %v2402 = vrot.slane %v1086, %v2401
        %v2403 = vlaneseq
        %v2404 = vshrl.u32 %v2403, 7
        %v2405 = vsub.s32 0, %v2404
        %v2406 = vrot.slane %v1088, %v2405
        %v2407 = vlaneseq
        %v2408 = vshrl.u32 %v2407, 7
        %v2409 = vsub.s32 1, %v2408
        %v2410 = vrot.slane %v1088, %v2409
        %v2411 = vlaneseq
        %v2412 = vshrl.u32 %v2411, 7
        %v2413 = vsub.s32 2, %v2412
        %v2414 = vrot.slane %v1088, %v2413
        %v2415 = vlaneseq
        %v2416 = vshrl.u32 %v2415, 7
        %v2417 = vsub.s32 3, %v2416
        %v2418 = vrot.slane %v1088, %v2417
        %v2419 = vlaneseq
        %v2420 = vshrl.u32 %v2419, 7
        %v2421 = vsub.s32 4, %v2420
        %v2422 = vrot.slane %v1088, %v2421
        %v2423 = vlaneseq
        %v2424 = vshrl.u32 %v2423, 7
        %v2425 = vsub.s32 5, %v2424
        %v2426 = vrot.slane %v1088, %v2425
        %v2427 = vlaneseq
        %v2428 = vshrl.u32 %v2427, 7
        %v2429 = vsub.s32 6, %v2428
        %v2430 = vrot.slane %v1088, %v2429
        %v2431 = vlaneseq
        %v2432 = vshrl.u32 %v2431, 7
        %v2433 = vsub.s32 7, %v2432
        %v2434 = vrot.slane %v1088, %v2433
        %v2435 = vlaneseq
        %v2436 = vshrl.u32 %v2435, 7
        %v2437 = vsub.s32 0, %v2436
        %v2438 = vrot.slane %v1090, %v2437
        %v2439 = vlaneseq
        %v2440 = vshrl.u32 %v2439, 7
        %v2441 = vsub.s32 1, %v2440
        %v2442 = vrot.slane %v1090, %v2441
        %v2443 = vlaneseq
        %v2444 = vshrl.u32 %v2443, 7
        %v2445 = vsub.s32 2, %v2444
        %v2446 = vrot.slane %v1090, %v2445
        %v2447 = vlaneseq
        %v2448 = vshrl.u32 %v2447, 7
        %v2449 = vsub.s32 3, %v2448
        %v2450 = vrot.slane %v1090, %v2449
        %v2451 = vlaneseq
        %v2452 = vshrl.u32 %v2451, 7
        %v2453 = vsub.s32 4, %v2452
        %v2454 = vrot.slane %v1090, %v2453
        %v2455 = vlaneseq
        %v2456 = vshrl.u32 %v2455, 7
        %v2457 = vsub.s32 5, %v2456
        %v2458 = vrot.slane %v1090, %v2457
        %v2459 = vlaneseq
        %v2460 = vshrl.u32 %v2459, 7
        %v2461 = vsub.s32 6, %v2460
        %v2462 = vrot.slane %v1090, %v2461
        %v2463 = vlaneseq
        %v2464 = vshrl.u32 %v2463, 7
        %v2465 = vsub.s32 7, %v2464
        %v2466 = vrot.slane %v1090, %v2465
        %v2467 = vlaneseq
        %v2468 = vshrl.u32 %v2467, 7
        %v2469 = vsub.s32 0, %v2468
        %v2470 = vrot.slane %v1092, %v2469
        %v2471 = vlaneseq
        %v2472 = vshrl.u32 %v2471, 7
        %v2473 = vsub.s32 1, %v2472
        %v2474 = vrot.slane %v1092, %v2473
        %v2475 = vlaneseq
        %v2476 = vshrl.u32 %v2475, 7
        %v2477 = vsub.s32 2, %v2476
        %v2478 = vrot.slane %v1092, %v2477
        %v2479 = vlaneseq
        %v2480 = vshrl.u32 %v2479, 7
        %v2481 = vsub.s32 3, %v2480
        %v2482 = vrot.slane %v1092, %v2481
        %v2483 = vlaneseq
        %v2484 = vshrl.u32 %v2483, 7
        %v2485 = vsub.s32 4, %v2484
        %v2486 = vrot.slane %v1092, %v2485
        %v2487 = vlaneseq
        %v2488 = vshrl.u32 %v2487, 7
        %v2489 = vsub.s32 5, %v2488
        %v2490 = vrot.slane %v1092, %v2489
        %v2491 = vlaneseq
        %v2492 = vshrl.u32 %v2491, 7
        %v2493 = vsub.s32 6, %v2492
        %v2494 = vrot.slane %v1092, %v2493
        %v2495 = vlaneseq
        %v2496 = vshrl.u32 %v2495, 7
        %v2497 = vsub.s32 7, %v2496
        %v2498 = vrot.slane %v1092, %v2497
        %v2499 = vlaneseq
        %v2500 = vshrl.u32 %v2499, 7
        %v2501 = vsub.s32 0, %v2500
        %v2502 = vrot.slane %v1094, %v2501
        %v2503 = vlaneseq
        %v2504 = vshrl.u32 %v2503, 7
        %v2505 = vsub.s32 1, %v2504
        %v2506 = vrot.slane %v1094, %v2505
        %v2507 = vlaneseq
        %v2508 = vshrl.u32 %v2507, 7
        %v2509 = vsub.s32 2, %v2508
        %v2510 = vrot.slane %v1094, %v2509
        %v2511 = vlaneseq
        %v2512 = vshrl.u32 %v2511, 7
        %v2513 = vsub.s32 3, %v2512
        %v2514 = vrot.slane %v1094, %v2513
        %v2515 = vlaneseq
        %v2516 = vshrl.u32 %v2515, 7
        %v2517 = vsub.s32 4, %v2516
        %v2518 = vrot.slane %v1094, %v2517
        %v2519 = vlaneseq
        %v2520 = vshrl.u32 %v2519, 7
        %v2521 = vsub.s32 5, %v2520
        %v2522 = vrot.slane %v1094, %v2521
        %v2523 = vlaneseq
        %v2524 = vshrl.u32 %v2523, 7
        %v2525 = vsub.s32 6, %v2524
        %v2526 = vrot.slane %v1094, %v2525
        %v2527 = vlaneseq
        %v2528 = vshrl.u32 %v2527, 7
        %v2529 = vsub.s32 7, %v2528
        %v2530 = vrot.slane %v1094, %v2529
        %v2531 = vlaneseq
        %v2532 = vshrl.u32 %v2531, 7
        %v2533 = vsub.s32 0, %v2532
        %v2534 = vrot.slane %v1096, %v2533
        %v2535 = vlaneseq
        %v2536 = vshrl.u32 %v2535, 7
        %v2537 = vsub.s32 1, %v2536
        %v2538 = vrot.slane %v1096, %v2537
        %v2539 = vlaneseq
        %v2540 = vshrl.u32 %v2539, 7
        %v2541 = vsub.s32 2, %v2540
        %v2542 = vrot.slane %v1096, %v2541
        %v2543 = vlaneseq
        %v2544 = vshrl.u32 %v2543, 7
        %v2545 = vsub.s32 3, %v2544
        %v2546 = vrot.slane %v1096, %v2545
        %v2547 = vlaneseq
        %v2548 = vshrl.u32 %v2547, 7
        %v2549 = vsub.s32 4, %v2548
        %v2550 = vrot.slane %v1096, %v2549
        %v2551 = vlaneseq
        %v2552 = vshrl.u32 %v2551, 7
        %v2553 = vsub.s32 5, %v2552
        %v2554 = vrot.slane %v1096, %v2553
        %v2555 = vlaneseq
        %v2556 = vshrl.u32 %v2555, 7
        %v2557 = vsub.s32 6, %v2556
        %v2558 = vrot.slane %v1096, %v2557
        %v2559 = vlaneseq
        %v2560 = vshrl.u32 %v2559, 7
        %v2561 = vsub.s32 7, %v2560
        %v2562 = vrot.slane %v1096, %v2561
        %v2563 = vlaneseq
        %v2564 = vshrl.u32 %v2563, 7
        %v2565 = vsub.s32 0, %v2564
        %v2566 = vrot.slane %v1098, %v2565
        %v2567 = vlaneseq
        %v2568 = vshrl.u32 %v2567, 7
        %v2569 = vsub.s32 1, %v2568
        %v2570 = vrot.slane %v1098, %v2569
        %v2571 = vlaneseq
        %v2572 = vshrl.u32 %v2571, 7
        %v2573 = vsub.s32 2, %v2572
        %v2574 = vrot.slane %v1098, %v2573
        %v2575 = vlaneseq
        %v2576 = vshrl.u32 %v2575, 7
        %v2577 = vsub.s32 3, %v2576
        %v2578 = vrot.slane %v1098, %v2577
        %v2579 = vlaneseq
        %v2580 = vshrl.u32 %v2579, 7
        %v2581 = vsub.s32 4, %v2580
        %v2582 = vrot.slane %v1098, %v2581
        %v2583 = vlaneseq
        %v2584 = vshrl.u32 %v2583, 7
        %v2585 = vsub.s32 5, %v2584
        %v2586 = vrot.slane %v1098, %v2585
        %v2587 = vlaneseq
        %v2588 = vshrl.u32 %v2587, 7
        %v2589 = vsub.s32 6, %v2588
        %v2590 = vrot.slane %v1098, %v2589
        %v2591 = vlaneseq
        %v2592 = vshrl.u32 %v2591, 7
        %v2593 = vsub.s32 7, %v2592
        %v2594 = vrot.slane %v1098, %v2593
        %v2595 = vlaneseq
        %v2596 = vshrl.u32 %v2595, 7
        %v2597 = vsub.s32 0, %v2596
        %v2598 = vrot.slane %v1100, %v2597
        %v2599 = vlaneseq
        %v2600 = vshrl.u32 %v2599, 7
        %v2601 = vsub.s32 1, %v2600
        %v2602 = vrot.slane %v1100, %v2601
        %v2603 = vlaneseq
        %v2604 = vshrl.u32 %v2603, 7
        %v2605 = vsub.s32 2, %v2604
        %v2606 = vrot.slane %v1100, %v2605
        %v2607 = vlaneseq
        %v2608 = vshrl.u32 %v2607, 7
        %v2609 = vsub.s32 3, %v2608
        %v2610 = vrot.slane %v1100, %v2609
        %v2611 = vlaneseq
        %v2612 = vshrl.u32 %v2611, 7
        %v2613 = vsub.s32 4, %v2612
        %v2614 = vrot.slane %v1100, %v2613
        %v2615 = vlaneseq
        %v2616 = vshrl.u32 %v2615, 7
        %v2617 = vsub.s32 5, %v2616
        %v2618 = vrot.slane %v1100, %v2617
        %v2619 = vlaneseq
        %v2620 = vshrl.u32 %v2619, 7
        %v2621 = vsub.s32 6, %v2620
        %v2622 = vrot.slane %v1100, %v2621
        %v2623 = vlaneseq
        %v2624 = vshrl.u32 %v2623, 7
        %v2625 = vsub.s32 7, %v2624
        %v2626 = vrot.slane %v1100, %v2625
        %v2627 = vlaneseq
        %v2628 = vshrl.u32 %v2627, 7
        %v2629 = vsub.s32 0, %v2628
        %v2630 = vrot.slane %v1102, %v2629
        %v2631 = vlaneseq
        %v2632 = vshrl.u32 %v2631, 7
        %v2633 = vsub.s32 1, %v2632
        %v2634 = vrot.slane %v1102, %v2633
        %v2635 = vlaneseq
        %v2636 = vshrl.u32 %v2635, 7
        %v2637 = vsub.s32 2, %v2636
        %v2638 = vrot.slane %v1102, %v2637
        %v2639 = vlaneseq
        %v2640 = vshrl.u32 %v2639, 7
        %v2641 = vsub.s32 3, %v2640
        %v2642 = vrot.slane %v1102, %v2641
        %v2643 = vlaneseq
        %v2644 = vshrl.u32 %v2643, 7
        %v2645 = vsub.s32 4, %v2644
        %v2646 = vrot.slane %v1102, %v2645
        %v2647 = vlaneseq
        %v2648 = vshrl.u32 %v2647, 7
        %v2649 = vsub.s32 5, %v2648
        %v2650 = vrot.slane %v1102, %v2649
        %v2651 = vlaneseq
        %v2652 = vshrl.u32 %v2651, 7
        %v2653 = vsub.s32 6, %v2652
        %v2654 = vrot.slane %v1102, %v2653
        %v2655 = vlaneseq
        %v2656 = vshrl.u32 %v2655, 7
        %v2657 = vsub.s32 7, %v2656
        %v2658 = vrot.slane %v1102, %v2657
        %v2659 = vlaneseq
        %v2660 = vshrl.u32 %v2659, 7
        %v2661 = vsub.s32 0, %v2660
        %v2662 = vrot.slane %v1104, %v2661
        %v2663 = vlaneseq
        %v2664 = vshrl.u32 %v2663, 7
        %v2665 = vsub.s32 1, %v2664
        %v2666 = vrot.slane %v1104, %v2665
        %v2667 = vlaneseq
        %v2668 = vshrl.u32 %v2667, 7
        %v2669 = vsub.s32 2, %v2668
        %v2670 = vrot.slane %v1104, %v2669
        %v2671 = vlaneseq
        %v2672 = vshrl.u32 %v2671, 7
        %v2673 = vsub.s32 3, %v2672
        %v2674 = vrot.slane %v1104, %v2673
        %v2675 = vlaneseq
        %v2676 = vshrl.u32 %v2675, 7
        %v2677 = vsub.s32 4, %v2676
        %v2678 = vrot.slane %v1104, %v2677
        %v2679 = vlaneseq
        %v2680 = vshrl.u32 %v2679, 7
        %v2681 = vsub.s32 5, %v2680
        %v2682 = vrot.slane %v1104, %v2681
        %v2683 = vlaneseq
        %v2684 = vshrl.u32 %v2683, 7
        %v2685 = vsub.s32 6, %v2684
        %v2686 = vrot.slane %v1104, %v2685
        %v2687 = vlaneseq
        %v2688 = vshrl.u32 %v2687, 7
        %v2689 = vsub.s32 7, %v2688
        %v2690 = vrot.slane %v1104, %v2689
        %v3075 = vmul.f32 %v242, %v1158
        %v3076 = vmul.f32 %v243, %v1162
        %v3077 = vmul.f32 %v244, %v1166
        %v3078 = vmul.f32 %v245, %v1170
        %v3079 = vmul.f32 %v246, %v1174
        %v3080 = vmul.f32 %v247, %v1178
        %v3081 = vmul.f32 %v248, %v1182
        %v3082 = vmul.f32 %v249, %v1186
        %v3083 = vmul.f32 %v250, %v1190
        %v3084 = vmul.f32 %v251, %v1194
        %v3085 = vmul.f32 %v252, %v1198
        %v3086 = vmul.f32 %v253, %v1202
        %v3087 = vmul.f32 %v254, %v1206
        %v3088 = vmul.f32 %v255, %v1210
        %v3089 = vmul.f32 %v256, %v1214
        %v3090 = vmul.f32 %v257, %v1218
        %v3091 = vmul.f32 %v258, %v1222
        %v3092 = vmul.f32 %v259, %v1226
        %v3093 = vmul.f32 %v260, %v1230
        %v3094 = vmul.f32 %v261, %v1234
        %v3095 = vmul.f32 %v262, %v1238
        %v3096 = vmul.f32 %v263, %v1242
        %v3097 = vmul.f32 %v264, %v1246
        %v3098 = vmul.f32 %v265, %v1250
        %v3099 = vmul.f32 %v266, %v1254
        %v3100 = vmul.f32 %v267, %v1258
        %v3101 = vmul.f32 %v268, %v1262
        %v3102 = vmul.f32 %v269, %v1266
        %v3103 = vmul.f32 %v270, %v1270
        %v3104 = vmul.f32 %v271, %v1274
        %v3105 = vmul.f32 %v272, %v1278
        %v3106 = vmul.f32 %v273, %v1282
        %v3107 = vmul.f32 %v274, %v1286
        %v3108 = vmul.f32 %v275, %v1290
        %v3109 = vmul.f32 %v276, %v1294
        %v3110 = vmul.f32 %v277, %v1298
        %v3111 = vmul.f32 %v278, %v1302
        %v3112 = vmul.f32 %v279, %v1306
        %v3113 = vmul.f32 %v280, %v1310
        %v3114 = vmul.f32 %v281, %v1314
        %v3115 = vmul.f32 %v282, %v1318
        %v3116 = vmul.f32 %v283, %v1322
        %v3117 = vmul.f32 %v284, %v1326
        %v3118 = vmul.f32 %v285, %v1330
        %v3119 = vmul.f32 %v286, %v1334
        %v3120 = vmul.f32 %v287, %v1338
        %v3121 = vmul.f32 %v288, %v1342
        %v3122 = vmul.f32 %v289, %v1346
        %v3123 = vmul.f32 %v290, %v1350
        %v3124 = vmul.f32 %v291, %v1354
        %v3125 = vmul.f32 %v292, %v1358
        %v3126 = vmul.f32 %v293, %v1362
        %v3127 = vmul.f32 %v294, %v1366
        %v3128 = vmul.f32 %v295, %v1370
        %v3129 = vmul.f32 %v296, %v1374
        %v3130 = vmul.f32 %v297, %v1378
        %v3131 = vmul.f32 %v298, %v1382
        %v3132 = vmul.f32 %v299, %v1386
        %v3133 = vmul.f32 %v300, %v1390
        %v3134 = vmul.f32 %v301, %v1394
        %v3135 = vmul.f32 %v302, %v1398
        %v3136 = vmul.f32 %v303, %v1402
        %v3137 = vmul.f32 %v304, %v1406
        %v3138 = vmul.f32 %v305, %v1410
        %v3139 = vmul.f32 %v306, %v1414
        %v3140 = vmul.f32 %v307, %v1418
        %v3141 = vmul.f32 %v308, %v1422
        %v3142 = vmul.f32 %v309, %v1426
        %v3143 = vmul.f32 %v310, %v1430
        %v3144 = vmul.f32 %v311, %v1434
        %v3145 = vmul.f32 %v312, %v1438
        %v3146 = vmul.f32 %v313, %v1442
        %v3147 = vmul.f32 %v314, %v1446
        %v3148 = vmul.f32 %v315, %v1450
        %v3149 = vmul.f32 %v316, %v1454
        %v3150 = vmul.f32 %v317, %v1458
        %v3151 = vmul.f32 %v318, %v1462
        %v3152 = vmul.f32 %v319, %v1466
        %v3153 = vmul.f32 %v320, %v1470
        %v3154 = vmul.f32 %v321, %v1474
        %v3155 = vmul.f32 %v322, %v1478
        %v3156 = vmul.f32 %v323, %v1482
        %v3157 = vmul.f32 %v324, %v1486
        %v3158 = vmul.f32 %v325, %v1490
        %v3159 = vmul.f32 %v326, %v1494
        %v3160 = vmul.f32 %v327, %v1498
        %v3161 = vmul.f32 %v328, %v1502
        %v3162 = vmul.f32 %v329, %v1506
        %v3163 = vmul.f32 %v330, %v1510
        %v3164 = vmul.f32 %v331, %v1514
        %v3165 = vmul.f32 %v332, %v1518
        %v3166 = vmul.f32 %v333, %v1522
        %v3167 = vmul.f32 %v334, %v1526
        %v3168 = vmul.f32 %v335, %v1530
        %v3169 = vmul.f32 %v336, %v1534
        %v3170 = vmul.f32 %v337, %v1538
        %v3171 = vmul.f32 %v338, %v1542
        %v3172 = vmul.f32 %v339, %v1546
        %v3173 = vmul.f32 %v340, %v1550
        %v3174 = vmul.f32 %v341, %v1554
        %v3175 = vmul.f32 %v342, %v1558
        %v3176 = vmul.f32 %v343, %v1562
        %v3177 = vmul.f32 %v344, %v1566
        %v3178 = vmul.f32 %v345, %v1570
        %v3179 = vmul.f32 %v346, %v1574
        %v3180 = vmul.f32 %v347, %v1578
        %v3181 = vmul.f32 %v348, %v1582
        %v3182 = vmul.f32 %v349, %v1586
        %v3183 = vmul.f32 %v350, %v1590
        %v3184 = vmul.f32 %v351, %v1594
        %v3185 = vmul.f32 %v352, %v1598
        %v3186 = vmul.f32 %v353, %v1602
        %v3187 = vmul.f32 %v354, %v1606
        %v3188 = vmul.f32 %v355, %v1610
        %v3189 = vmul.f32 %v356, %v1614
        %v3190 = vmul.f32 %v357, %v1618
        %v3191 = vmul.f32 %v358, %v1622
        %v3192 = vmul.f32 %v359, %v1626
        %v3193 = vmul.f32 %v360, %v1630
        %v3194 = vmul.f32 %v361, %v1634
        %v3195 = vmul.f32 %v362, %v1638
        %v3196 = vmul.f32 %v363, %v1642
        %v3197 = vmul.f32 %v364, %v1646
        %v3198 = vmul.f32 %v365, %v1650
        %v3199 = vmul.f32 %v366, %v1654
        %v3200 = vmul.f32 %v367, %v1658
        %v3201 = vmul.f32 %v368, %v1662
        %v3202 = vmul.f32 %v369, %v1666
        %v3203 = vmul.f32 %v370, %v1670
        %v3204 = vmul.f32 %v371, %v1674
        %v3205 = vmul.f32 %v372, %v1678
        %v3206 = vmul.f32 %v373, %v1682
        %v3207 = vmul.f32 %v374, %v1686
        %v3208 = vmul.f32 %v375, %v1690
        %v3209 = vmul.f32 %v376, %v1694
        %v3210 = vmul.f32 %v377, %v1698
        %v3211 = vmul.f32 %v378, %v1702
        %v3212 = vmul.f32 %v379, %v1706
        %v3213 = vmul.f32 %v380, %v1710
        %v3214 = vmul.f32 %v381, %v1714
        %v3215 = vmul.f32 %v382, %v1718
        %v3216 = vmul.f32 %v383, %v1722
        %v3217 = vmul.f32 %v384, %v1726
        %v3218 = vmul.f32 %v385, %v1730
        %v3219 = vmul.f32 %v386, %v1734
        %v3220 = vmul.f32 %v387, %v1738
        %v3221 = vmul.f32 %v388, %v1742
        %v3222 = vmul.f32 %v389, %v1746
        %v3223 = vmul.f32 %v390, %v1750
        %v3224 = vmul.f32 %v391, %v1754
        %v3225 = vmul.f32 %v392, %v1758
        %v3226 = vmul.f32 %v393, %v1762
        %v3227 = vmul.f32 %v394, %v1766
        %v3228 = vmul.f32 %v395, %v1770
        %v3229 = vmul.f32 %v396, %v1774
        %v3230 = vmul.f32 %v397, %v1778
        %v3231 = vmul.f32 %v398, %v1782
        %v3232 = vmul.f32 %v399, %v1786
        %v3233 = vmul.f32 %v400, %v1790
        %v3234 = vmul.f32 %v401, %v1794
        %v3235 = vmul.f32 %v402, %v1798
        %v3236 = vmul.f32 %v403, %v1802
        %v3237 = vmul.f32 %v404, %v1806
        %v3238 = vmul.f32 %v405, %v1810
        %v3239 = vmul.f32 %v406, %v1814
        %v3240 = vmul.f32 %v407, %v1818
        %v3241 = vmul.f32 %v408, %v1822
        %v3242 = vmul.f32 %v409, %v1826
        %v3243 = vmul.f32 %v410, %v1830
        %v3244 = vmul.f32 %v411, %v1834
        %v3245 = vmul.f32 %v412, %v1838
        %v3246 = vmul.f32 %v413, %v1842
        %v3247 = vmul.f32 %v414, %v1846
        %v3248 = vmul.f32 %v415, %v1850
        %v3249 = vmul.f32 %v416, %v1854
        %v3250 = vmul.f32 %v417, %v1858
        %v3251 = vmul.f32 %v418, %v1862
        %v3252 = vmul.f32 %v419, %v1866
        %v3253 = vmul.f32 %v420, %v1870
        %v3254 = vmul.f32 %v421, %v1874
        %v3255 = vmul.f32 %v422, %v1878
        %v3256 = vmul.f32 %v423, %v1882
        %v3257 = vmul.f32 %v424, %v1886
        %v3258 = vmul.f32 %v425, %v1890
        %v3259 = vmul.f32 %v426, %v1894
        %v3260 = vmul.f32 %v427, %v1898
        %v3261 = vmul.f32 %v428, %v1902
        %v3262 = vmul.f32 %v429, %v1906
        %v3263 = vmul.f32 %v430, %v1910
        %v3264 = vmul.f32 %v431, %v1914
        %v3265 = vmul.f32 %v432, %v1918
        %v3266 = vmul.f32 %v433, %v1922
        %v3267 = vmul.f32 %v434, %v1926
        %v3268 = vmul.f32 %v435, %v1930
        %v3269 = vmul.f32 %v436, %v1934
        %v3270 = vmul.f32 %v437, %v1938
        %v3271 = vmul.f32 %v438, %v1942
        %v3272 = vmul.f32 %v439, %v1946
        %v3273 = vmul.f32 %v440, %v1950
        %v3274 = vmul.f32 %v441, %v1954
        %v3275 = vmul.f32 %v442, %v1958
        %v3276 = vmul.f32 %v443, %v1962
        %v3277 = vmul.f32 %v444, %v1966
        %v3278 = vmul.f32 %v445, %v1970
        %v3279 = vmul.f32 %v446, %v1974
        %v3280 = vmul.f32 %v447, %v1978
        %v3281 = vmul.f32 %v448, %v1982
        %v3282 = vmul.f32 %v449, %v1986
        %v3283 = vmul.f32 %v450, %v1990
        %v3284 = vmul.f32 %v451, %v1994
        %v3285 = vmul.f32 %v452, %v1998
        %v3286 = vmul.f32 %v453, %v2002
        %v3287 = vmul.f32 %v454, %v2006
        %v3288 = vmul.f32 %v455, %v2010
        %v3289 = vmul.f32 %v456, %v2014
        %v3290 = vmul.f32 %v457, %v2018
        %v3291 = vmul.f32 %v458, %v2022
        %v3292 = vmul.f32 %v459, %v2026
        %v3293 = vmul.f32 %v460, %v2030
        %v3294 = vmul.f32 %v461, %v2034
        %v3295 = vmul.f32 %v462, %v2038
        %v3296 = vmul.f32 %v463, %v2042
        %v3297 = vmul.f32 %v464, %v2046
        %v3298 = vmul.f32 %v465, %v2050
        %v3299 = vmul.f32 %v466, %v2054
        %v3300 = vmul.f32 %v467, %v2058
        %v3301 = vmul.f32 %v468, %v2062
        %v3302 = vmul.f32 %v469, %v2066
        %v3303 = vmul.f32 %v470, %v2070
        %v3304 = vmul.f32 %v471, %v2074
        %v3305 = vmul.f32 %v472, %v2078
        %v3306 = vmul.f32 %v473, %v2082
        %v3307 = vmul.f32 %v474, %v2086
        %v3308 = vmul.f32 %v475, %v2090
        %v3309 = vmul.f32 %v476, %v2094
        %v3310 = vmul.f32 %v477, %v2098
        %v3311 = vmul.f32 %v478, %v2102
        %v3312 = vmul.f32 %v479, %v2106
        %v3313 = vmul.f32 %v480, %v2110
        %v3314 = vmul.f32 %v481, %v2114
        %v3315 = vmul.f32 %v482, %v2118
        %v3316 = vmul.f32 %v483, %v2122
        %v3317 = vmul.f32 %v484, %v2126
        %v3318 = vmul.f32 %v485, %v2130
        %v3319 = vmul.f32 %v486, %v2134
        %v3320 = vmul.f32 %v487, %v2138
        %v3321 = vmul.f32 %v488, %v2142
        %v3322 = vmul.f32 %v489, %v2146
        %v3323 = vmul.f32 %v490, %v2150
        %v3324 = vmul.f32 %v491, %v2154
        %v3325 = vmul.f32 %v492, %v2158
        %v3326 = vmul.f32 %v493, %v2162
        %v3327 = vmul.f32 %v494, %v2166
        %v3328 = vmul.f32 %v495, %v2170
        %v3329 = vmul.f32 %v496, %v2174
        %v3330 = vmul.f32 %v497, %v2178
        %v3331 = vmul.f32 %v498, %v2182
        %v3332 = vmul.f32 %v499, %v2186
        %v3333 = vmul.f32 %v500, %v2190
        %v3334 = vmul.f32 %v501, %v2194
        %v3335 = vmul.f32 %v502, %v2198
        %v3336 = vmul.f32 %v503, %v2202
        %v3337 = vmul.f32 %v504, %v2206
        %v3338 = vmul.f32 %v505, %v2210
        %v3339 = vmul.f32 %v506, %v2214
        %v3340 = vmul.f32 %v507, %v2218
        %v3341 = vmul.f32 %v508, %v2222
        %v3342 = vmul.f32 %v509, %v2226
        %v3343 = vmul.f32 %v510, %v2230
        %v3344 = vmul.f32 %v511, %v2234
        %v3345 = vmul.f32 %v512, %v2238
        %v3346 = vmul.f32 %v513, %v2242
        %v3347 = vmul.f32 %v514, %v2246
        %v3348 = vmul.f32 %v515, %v2250
        %v3349 = vmul.f32 %v516, %v2254
        %v3350 = vmul.f32 %v517, %v2258
        %v3351 = vmul.f32 %v518, %v2262
        %v3352 = vmul.f32 %v519, %v2266
        %v3353 = vmul.f32 %v520, %v2270
        %v3354 = vmul.f32 %v521, %v2274
        %v3355 = vmul.f32 %v522, %v2278
        %v3356 = vmul.f32 %v523, %v2282
        %v3357 = vmul.f32 %v524, %v2286
        %v3358 = vmul.f32 %v525, %v2290
        %v3359 = vmul.f32 %v526, %v2294
        %v3360 = vmul.f32 %v527, %v2298
        %v3361 = vmul.f32 %v528, %v2302
        %v3362 = vmul.f32 %v529, %v2306
        %v3363 = vmul.f32 %v530, %v2310
        %v3364 = vmul.f32 %v531, %v2314
        %v3365 = vmul.f32 %v532, %v2318
        %v3366 = vmul.f32 %v533, %v2322
        %v3367 = vmul.f32 %v534, %v2326
        %v3368 = vmul.f32 %v535, %v2330
        %v3369 = vmul.f32 %v536, %v2334
        %v3370 = vmul.f32 %v537, %v2338
        %v3371 = vmul.f32 %v538, %v2342
        %v3372 = vmul.f32 %v539, %v2346
        %v3373 = vmul.f32 %v540, %v2350
        %v3374 = vmul.f32 %v541, %v2354
        %v3375 = vmul.f32 %v542, %v2358
        %v3376 = vmul.f32 %v543, %v2362
        %v3377 = vmul.f32 %v544, %v2366
        %v3378 = vmul.f32 %v545, %v2370
        %v3379 = vmul.f32 %v546, %v2374
        %v3380 = vmul.f32 %v547, %v2378
        %v3381 = vmul.f32 %v548, %v2382
        %v3382 = vmul.f32 %v549, %v2386
        %v3383 = vmul.f32 %v550, %v2390
        %v3384 = vmul.f32 %v551, %v2394
        %v3385 = vmul.f32 %v552, %v2398
        %v3386 = vmul.f32 %v553, %v2402
        %v3387 = vmul.f32 %v554, %v2406
        %v3388 = vmul.f32 %v555, %v2410
        %v3389 = vmul.f32 %v556, %v2414
        %v3390 = vmul.f32 %v557, %v2418
        %v3391 = vmul.f32 %v558, %v2422
        %v3392 = vmul.f32 %v559, %v2426
        %v3393 = vmul.f32 %v560, %v2430
        %v3394 = vmul.f32 %v561, %v2434
        %v3395 = vmul.f32 %v562, %v2438
        %v3396 = vmul.f32 %v563, %v2442
        %v3397 = vmul.f32 %v564, %v2446
        %v3398 = vmul.f32 %v565, %v2450
        %v3399 = vmul.f32 %v566, %v2454
        %v3400 = vmul.f32 %v567, %v2458
        %v3401 = vmul.f32 %v568, %v2462
        %v3402 = vmul.f32 %v569, %v2466
        %v3403 = vmul.f32 %v570, %v2470
        %v3404 = vmul.f32 %v571, %v2474
        %v3405 = vmul.f32 %v572, %v2478
        %v3406 = vmul.f32 %v573, %v2482
        %v3407 = vmul.f32 %v574, %v2486
        %v3408 = vmul.f32 %v575, %v2490
        %v3409 = vmul.f32 %v576, %v2494
        %v3410 = vmul.f32 %v577, %v2498
        %v3411 = vmul.f32 %v578, %v2502
        %v3412 = vmul.f32 %v579, %v2506
        %v3413 = vmul.f32 %v580, %v2510
        %v3414 = vmul.f32 %v581, %v2514
        %v3415 = vmul.f32 %v582, %v2518
        %v3416 = vmul.f32 %v583, %v2522
        %v3417 = vmul.f32 %v584, %v2526
        %v3418 = vmul.f32 %v585, %v2530
        %v3419 = vmul.f32 %v586, %v2534
        %v3420 = vmul.f32 %v587, %v2538
        %v3421 = vmul.f32 %v588, %v2542
        %v3422 = vmul.f32 %v589, %v2546
        %v3423 = vmul.f32 %v590, %v2550
        %v3424 = vmul.f32 %v591, %v2554
        %v3425 = vmul.f32 %v592, %v2558
        %v3426 = vmul.f32 %v593, %v2562
        %v3427 = vmul.f32 %v594, %v2566
        %v3428 = vmul.f32 %v595, %v2570
        %v3429 = vmul.f32 %v596, %v2574
        %v3430 = vmul.f32 %v597, %v2578
        %v3431 = vmul.f32 %v598, %v2582
        %v3432 = vmul.f32 %v599, %v2586
        %v3433 = vmul.f32 %v600, %v2590
        %v3434 = vmul.f32 %v601, %v2594
        %v3435 = vmul.f32 %v602, %v2598
        %v3436 = vmul.f32 %v603, %v2602
        %v3437 = vmul.f32 %v604, %v2606
        %v3438 = vmul.f32 %v605, %v2610
        %v3439 = vmul.f32 %v606, %v2614
        %v3440 = vmul.f32 %v607, %v2618
        %v3441 = vmul.f32 %v608, %v2622
        %v3442 = vmul.f32 %v609, %v2626
        %v3443 = vmul.f32 %v610, %v2630
        %v3444 = vmul.f32 %v611, %v2634
        %v3445 = vmul.f32 %v612, %v2638
        %v3446 = vmul.f32 %v613, %v2642
        %v3447 = vmul.f32 %v614, %v2646
        %v3448 = vmul.f32 %v615, %v2650
        %v3449 = vmul.f32 %v616, %v2654
        %v3450 = vmul.f32 %v617, %v2658
        %v3451 = vmul.f32 %v618, %v2662
        %v3452 = vmul.f32 %v619, %v2666
        %v3453 = vmul.f32 %v620, %v2670
        %v3454 = vmul.f32 %v621, %v2674
        %v3455 = vmul.f32 %v622, %v2678
        %v3456 = vmul.f32 %v623, %v2682
        %v3457 = vmul.f32 %v624, %v2686
        %v3458 = vmul.f32 %v625, %v2690
        %v3459 = vmul.f32 %v626, %v1158
        %v3460 = vmul.f32 %v627, %v1162
        %v3461 = vmul.f32 %v628, %v1166
        %v3462 = vmul.f32 %v629, %v1170
        %v3463 = vmul.f32 %v630, %v1174
        %v3464 = vmul.f32 %v631, %v1178
        %v3465 = vmul.f32 %v632, %v1182
        %v3466 = vmul.f32 %v633, %v1186
        %v3467 = vmul.f32 %v634, %v1190
        %v3468 = vmul.f32 %v635, %v1194
        %v3469 = vmul.f32 %v636, %v1198
        %v3470 = vmul.f32 %v637, %v1202
        %v3471 = vmul.f32 %v638, %v1206
        %v3472 = vmul.f32 %v639, %v1210
        %v3473 = vmul.f32 %v640, %v1214
        %v3474 = vmul.f32 %v641, %v1218
        %v3475 = vmul.f32 %v642, %v1222
        %v3476 = vmul.f32 %v643, %v1226
        %v3477 = vmul.f32 %v644, %v1230
        %v3478 = vmul.f32 %v645, %v1234
        %v3479 = vmul.f32 %v646, %v1238
        %v3480 = vmul.f32 %v647, %v1242
        %v3481 = vmul.f32 %v648, %v1246
        %v3482 = vmul.f32 %v649, %v1250
        %v3483 = vmul.f32 %v650, %v1254
        %v3484 = vmul.f32 %v651, %v1258
        %v3485 = vmul.f32 %v652, %v1262
        %v3486 = vmul.f32 %v653, %v1266
        %v3487 = vmul.f32 %v654, %v1270
        %v3488 = vmul.f32 %v655, %v1274
        %v3489 = vmul.f32 %v656, %v1278
        %v3490 = vmul.f32 %v657, %v1282
        %v3491 = vmul.f32 %v658, %v1286
        %v3492 = vmul.f32 %v659, %v1290
        %v3493 = vmul.f32 %v660, %v1294
        %v3494 = vmul.f32 %v661, %v1298
        %v3495 = vmul.f32 %v662, %v1302
        %v3496 = vmul.f32 %v663, %v1306
        %v3497 = vmul.f32 %v664, %v1310
        %v3498 = vmul.f32 %v665, %v1314
        %v3499 = vmul.f32 %v666, %v1318
        %v3500 = vmul.f32 %v667, %v1322
        %v3501 = vmul.f32 %v668, %v1326
        %v3502 = vmul.f32 %v669, %v1330
        %v3503 = vmul.f32 %v670, %v1334
        %v3504 = vmul.f32 %v671, %v1338
        %v3505 = vmul.f32 %v672, %v1342
        %v3506 = vmul.f32 %v673, %v1346
        %v3507 = vmul.f32 %v674, %v1350
        %v3508 = vmul.f32 %v675, %v1354
        %v3509 = vmul.f32 %v676, %v1358
        %v3510 = vmul.f32 %v677, %v1362
        %v3511 = vmul.f32 %v678, %v1366
        %v3512 = vmul.f32 %v679, %v1370
        %v3513 = vmul.f32 %v680, %v1374
        %v3514 = vmul.f32 %v681, %v1378
        %v3515 = vmul.f32 %v682, %v1382
        %v3516 = vmul.f32 %v683, %v1386
        %v3517 = vmul.f32 %v684, %v1390
        %v3518 = vmul.f32 %v685, %v1394
        %v3519 = vmul.f32 %v686, %v1398
        %v3520 = vmul.f32 %v687, %v1402
        %v3521 = vmul.f32 %v688, %v1406
        %v3522 = vmul.f32 %v689, %v1410
        %v3523 = vmul.f32 %v690, %v1414
        %v3524 = vmul.f32 %v691, %v1418
        %v3525 = vmul.f32 %v692, %v1422
        %v3526 = vmul.f32 %v693, %v1426
        %v3527 = vmul.f32 %v694, %v1430
        %v3528 = vmul.f32 %v695, %v1434
        %v3529 = vmul.f32 %v696, %v1438
        %v3530 = vmul.f32 %v697, %v1442
        %v3531 = vmul.f32 %v698, %v1446
        %v3532 = vmul.f32 %v699, %v1450
        %v3533 = vmul.f32 %v700, %v1454
        %v3534 = vmul.f32 %v701, %v1458
        %v3535 = vmul.f32 %v702, %v1462
        %v3536 = vmul.f32 %v703, %v1466
        %v3537 = vmul.f32 %v704, %v1470
        %v3538 = vmul.f32 %v705, %v1474
        %v3539 = vmul.f32 %v706, %v1478
        %v3540 = vmul.f32 %v707, %v1482
        %v3541 = vmul.f32 %v708, %v1486
        %v3542 = vmul.f32 %v709, %v1490
        %v3543 = vmul.f32 %v710, %v1494
        %v3544 = vmul.f32 %v711, %v1498
        %v3545 = vmul.f32 %v712, %v1502
        %v3546 = vmul.f32 %v713, %v1506
        %v3547 = vmul.f32 %v714, %v1510
        %v3548 = vmul.f32 %v715, %v1514
        %v3549 = vmul.f32 %v716, %v1518
        %v3550 = vmul.f32 %v717, %v1522
        %v3551 = vmul.f32 %v718, %v1526
        %v3552 = vmul.f32 %v719, %v1530
        %v3553 = vmul.f32 %v720, %v1534
        %v3554 = vmul.f32 %v721, %v1538
        %v3555 = vmul.f32 %v722, %v1542
        %v3556 = vmul.f32 %v723, %v1546
        %v3557 = vmul.f32 %v724, %v1550
        %v3558 = vmul.f32 %v725, %v1554
        %v3559 = vmul.f32 %v726, %v1558
        %v3560 = vmul.f32 %v727, %v1562
        %v3561 = vmul.f32 %v728, %v1566
        %v3562 = vmul.f32 %v729, %v1570
        %v3563 = vmul.f32 %v730, %v1574
        %v3564 = vmul.f32 %v731, %v1578
        %v3565 = vmul.f32 %v732, %v1582
        %v3566 = vmul.f32 %v733, %v1586
        %v3567 = vmul.f32 %v734, %v1590
        %v3568 = vmul.f32 %v735, %v1594
        %v3569 = vmul.f32 %v736, %v1598
        %v3570 = vmul.f32 %v737, %v1602
        %v3571 = vmul.f32 %v738, %v1606
        %v3572 = vmul.f32 %v739, %v1610
        %v3573 = vmul.f32 %v740, %v1614
        %v3574 = vmul.f32 %v741, %v1618
        %v3575 = vmul.f32 %v742, %v1622
        %v3576 = vmul.f32 %v743, %v1626
        %v3577 = vmul.f32 %v744, %v1630
        %v3578 = vmul.f32 %v745, %v1634
        %v3579 = vmul.f32 %v746, %v1638
        %v3580 = vmul.f32 %v747, %v1642
        %v3581 = vmul.f32 %v748, %v1646
        %v3582 = vmul.f32 %v749, %v1650
        %v3583 = vmul.f32 %v750, %v1654
        %v3584 = vmul.f32 %v751, %v1658
        %v3585 = vmul.f32 %v752, %v1662
        %v3586 = vmul.f32 %v753, %v1666
        %v3587 = vmul.f32 %v754, %v1670
        %v3588 = vmul.f32 %v755, %v1674
        %v3589 = vmul.f32 %v756, %v1678
        %v3590 = vmul.f32 %v757, %v1682
        %v3591 = vmul.f32 %v758, %v1686
        %v3592 = vmul.f32 %v759, %v1690
        %v3593 = vmul.f32 %v760, %v1694
        %v3594 = vmul.f32 %v761, %v1698
        %v3595 = vmul.f32 %v762, %v1702
        %v3596 = vmul.f32 %v763, %v1706
        %v3597 = vmul.f32 %v764, %v1710
        %v3598 = vmul.f32 %v765, %v1714
        %v3599 = vmul.f32 %v766, %v1718
        %v3600 = vmul.f32 %v767, %v1722
        %v3601 = vmul.f32 %v768, %v1726
        %v3602 = vmul.f32 %v769, %v1730
        %v3603 = vmul.f32 %v770, %v1734
        %v3604 = vmul.f32 %v771, %v1738
        %v3605 = vmul.f32 %v772, %v1742
        %v3606 = vmul.f32 %v773, %v1746
        %v3607 = vmul.f32 %v774, %v1750
        %v3608 = vmul.f32 %v775, %v1754
        %v3609 = vmul.f32 %v776, %v1758
        %v3610 = vmul.f32 %v777, %v1762
        %v3611 = vmul.f32 %v778, %v1766
        %v3612 = vmul.f32 %v779, %v1770
        %v3613 = vmul.f32 %v780, %v1774
        %v3614 = vmul.f32 %v781, %v1778
        %v3615 = vmul.f32 %v782, %v1782
        %v3616 = vmul.f32 %v783, %v1786
        %v3617 = vmul.f32 %v784, %v1790
        %v3618 = vmul.f32 %v785, %v1794
        %v3619 = vmul.f32 %v786, %v1798
        %v3620 = vmul.f32 %v787, %v1802
        %v3621 = vmul.f32 %v788, %v1806
        %v3622 = vmul.f32 %v789, %v1810
        %v3623 = vmul.f32 %v790, %v1814
        %v3624 = vmul.f32 %v791, %v1818
        %v3625 = vmul.f32 %v792, %v1822
        %v3626 = vmul.f32 %v793, %v1826
        %v3627 = vmul.f32 %v794, %v1830
        %v3628 = vmul.f32 %v795, %v1834
        %v3629 = vmul.f32 %v796, %v1838
        %v3630 = vmul.f32 %v797, %v1842
        %v3631 = vmul.f32 %v798, %v1846
        %v3632 = vmul.f32 %v799, %v1850
        %v3633 = vmul.f32 %v800, %v1854
        %v3634 = vmul.f32 %v801, %v1858
        %v3635 = vmul.f32 %v802, %v1862
        %v3636 = vmul.f32 %v803, %v1866
        %v3637 = vmul.f32 %v804, %v1870
        %v3638 = vmul.f32 %v805, %v1874
        %v3639 = vmul.f32 %v806, %v1878
        %v3640 = vmul.f32 %v807, %v1882
        %v3641 = vmul.f32 %v808, %v1886
        %v3642 = vmul.f32 %v809, %v1890
        %v3643 = vmul.f32 %v810, %v1894
        %v3644 = vmul.f32 %v811, %v1898
        %v3645 = vmul.f32 %v812, %v1902
        %v3646 = vmul.f32 %v813, %v1906
        %v3647 = vmul.f32 %v814, %v1910
        %v3648 = vmul.f32 %v815, %v1914
        %v3649 = vmul.f32 %v816, %v1918
        %v3650 = vmul.f32 %v817, %v1922
        %v3651 = vmul.f32 %v818, %v1926
        %v3652 = vmul.f32 %v819, %v1930
        %v3653 = vmul.f32 %v820, %v1934
        %v3654 = vmul.f32 %v821, %v1938
        %v3655 = vmul.f32 %v822, %v1942
        %v3656 = vmul.f32 %v823, %v1946
        %v3657 = vmul.f32 %v824, %v1950
        %v3658 = vmul.f32 %v825, %v1954
        %v3659 = vmul.f32 %v826, %v1958
        %v3660 = vmul.f32 %v827, %v1962
        %v3661 = vmul.f32 %v828, %v1966
        %v3662 = vmul.f32 %v829, %v1970
        %v3663 = vmul.f32 %v830, %v1974
        %v3664 = vmul.f32 %v831, %v1978
        %v3665 = vmul.f32 %v832, %v1982
        %v3666 = vmul.f32 %v833, %v1986
        %v3667 = vmul.f32 %v834, %v1990
        %v3668 = vmul.f32 %v835, %v1994
        %v3669 = vmul.f32 %v836, %v1998
        %v3670 = vmul.f32 %v837, %v2002
        %v3671 = vmul.f32 %v838, %v2006
        %v3672 = vmul.f32 %v839, %v2010
        %v3673 = vmul.f32 %v840, %v2014
        %v3674 = vmul.f32 %v841, %v2018
        %v3675 = vmul.f32 %v842, %v2022
        %v3676 = vmul.f32 %v843, %v2026
        %v3677 = vmul.f32 %v844, %v2030
        %v3678 = vmul.f32 %v845, %v2034
        %v3679 = vmul.f32 %v846, %v2038
        %v3680 = vmul.f32 %v847, %v2042
        %v3681 = vmul.f32 %v848, %v2046
        %v3682 = vmul.f32 %v849, %v2050
        %v3683 = vmul.f32 %v850, %v2054
        %v3684 = vmul.f32 %v851, %v2058
        %v3685 = vmul.f32 %v852, %v2062
        %v3686 = vmul.f32 %v853, %v2066
        %v3687 = vmul.f32 %v854, %v2070
        %v3688 = vmul.f32 %v855, %v2074
        %v3689 = vmul.f32 %v856, %v2078
        %v3690 = vmul.f32 %v857, %v2082
        %v3691 = vmul.f32 %v858, %v2086
        %v3692 = vmul.f32 %v859, %v2090
        %v3693 = vmul.f32 %v860, %v2094
        %v3694 = vmul.f32 %v861, %v2098
        %v3695 = vmul.f32 %v862, %v2102
        %v3696 = vmul.f32 %v863, %v2106
        %v3697 = vmul.f32 %v864, %v2110
        %v3698 = vmul.f32 %v865, %v2114
        %v3699 = vmul.f32 %v866, %v2118
        %v3700 = vmul.f32 %v867, %v2122
        %v3701 = vmul.f32 %v868, %v2126
        %v3702 = vmul.f32 %v869, %v2130
        %v3703 = vmul.f32 %v870, %v2134
        %v3704 = vmul.f32 %v871, %v2138
        %v3705 = vmul.f32 %v872, %v2142
        %v3706 = vmul.f32 %v873, %v2146
        %v3707 = vmul.f32 %v874, %v2150
        %v3708 = vmul.f32 %v875, %v2154
        %v3709 = vmul.f32 %v876, %v2158
        %v3710 = vmul.f32 %v877, %v2162
        %v3711 = vmul.f32 %v878, %v2166
        %v3712 = vmul.f32 %v879, %v2170
        %v3713 = vmul.f32 %v880, %v2174
        %v3714 = vmul.f32 %v881, %v2178
        %v3715 = vmul.f32 %v882, %v2182
        %v3716 = vmul.f32 %v883, %v2186
        %v3717 = vmul.f32 %v884, %v2190
        %v3718 = vmul.f32 %v885, %v2194
        %v3719 = vmul.f32 %v886, %v2198
        %v3720 = vmul.f32 %v887, %v2202
        %v3721 = vmul.f32 %v888, %v2206
        %v3722 = vmul.f32 %v889, %v2210
        %v3723 = vmul.f32 %v890, %v2214
        %v3724 = vmul.f32 %v891, %v2218
        %v3725 = vmul.f32 %v892, %v2222
        %v3726 = vmul.f32 %v893, %v2226
        %v3727 = vmul.f32 %v894, %v2230
        %v3728 = vmul.f32 %v895, %v2234
        %v3729 = vmul.f32 %v896, %v2238
        %v3730 = vmul.f32 %v897, %v2242
        %v3731 = vmul.f32 %v898, %v2246
        %v3732 = vmul.f32 %v899, %v2250
        %v3733 = vmul.f32 %v900, %v2254
        %v3734 = vmul.f32 %v901, %v2258
        %v3735 = vmul.f32 %v902, %v2262
        %v3736 = vmul.f32 %v903, %v2266
        %v3737 = vmul.f32 %v904, %v2270
        %v3738 = vmul.f32 %v905, %v2274
        %v3739 = vmul.f32 %v906, %v2278
        %v3740 = vmul.f32 %v907, %v2282
        %v3741 = vmul.f32 %v908, %v2286
        %v3742 = vmul.f32 %v909, %v2290
        %v3743 = vmul.f32 %v910, %v2294
        %v3744 = vmul.f32 %v911, %v2298
        %v3745 = vmul.f32 %v912, %v2302
        %v3746 = vmul.f32 %v913, %v2306
        %v3747 = vmul.f32 %v914, %v2310
        %v3748 = vmul.f32 %v915, %v2314
        %v3749 = vmul.f32 %v916, %v2318
        %v3750 = vmul.f32 %v917, %v2322
        %v3751 = vmul.f32 %v918, %v2326
        %v3752 = vmul.f32 %v919, %v2330
        %v3753 = vmul.f32 %v920, %v2334
        %v3754 = vmul.f32 %v921, %v2338
        %v3755 = vmul.f32 %v922, %v2342
        %v3756 = vmul.f32 %v923, %v2346
        %v3757 = vmul.f32 %v924, %v2350
        %v3758 = vmul.f32 %v925, %v2354
        %v3759 = vmul.f32 %v926, %v2358
        %v3760 = vmul.f32 %v927, %v2362
        %v3761 = vmul.f32 %v928, %v2366
        %v3762 = vmul.f32 %v929, %v2370
        %v3763 = vmul.f32 %v930, %v2374
        %v3764 = vmul.f32 %v931, %v2378
        %v3765 = vmul.f32 %v932, %v2382
        %v3766 = vmul.f32 %v933, %v2386
        %v3767 = vmul.f32 %v934, %v2390
        %v3768 = vmul.f32 %v935, %v2394
        %v3769 = vmul.f32 %v936, %v2398
        %v3770 = vmul.f32 %v937, %v2402
        %v3771 = vmul.f32 %v938, %v2406
        %v3772 = vmul.f32 %v939, %v2410
        %v3773 = vmul.f32 %v940, %v2414
        %v3774 = vmul.f32 %v941, %v2418
        %v3775 = vmul.f32 %v942, %v2422
        %v3776 = vmul.f32 %v943, %v2426
        %v3777 = vmul.f32 %v944, %v2430
        %v3778 = vmul.f32 %v945, %v2434
        %v3779 = vmul.f32 %v946, %v2438
        %v3780 = vmul.f32 %v947, %v2442
        %v3781 = vmul.f32 %v948, %v2446
        %v3782 = vmul.f32 %v949, %v2450
        %v3783 = vmul.f32 %v950, %v2454
        %v3784 = vmul.f32 %v951, %v2458
        %v3785 = vmul.f32 %v952, %v2462
        %v3786 = vmul.f32 %v953, %v2466
        %v3787 = vmul.f32 %v954, %v2470
        %v3788 = vmul.f32 %v955, %v2474
        %v3789 = vmul.f32 %v956, %v2478
        %v3790 = vmul.f32 %v957, %v2482
        %v3791 = vmul.f32 %v958, %v2486
        %v3792 = vmul.f32 %v959, %v2490
        %v3793 = vmul.f32 %v960, %v2494
        %v3794 = vmul.f32 %v961, %v2498
        %v3795 = vmul.f32 %v962, %v2502
        %v3796 = vmul.f32 %v963, %v2506
        %v3797 = vmul.f32 %v964, %v2510
        %v3798 = vmul.f32 %v965, %v2514
        %v3799 = vmul.f32 %v966, %v2518
        %v3800 = vmul.f32 %v967, %v2522
        %v3801 = vmul.f32 %v968, %v2526
        %v3802 = vmul.f32 %v969, %v2530
        %v3803 = vmul.f32 %v970, %v2534
        %v3804 = vmul.f32 %v971, %v2538
        %v3805 = vmul.f32 %v972, %v2542
        %v3806 = vmul.f32 %v973, %v2546
        %v3807 = vmul.f32 %v974, %v2550
        %v3808 = vmul.f32 %v975, %v2554
        %v3809 = vmul.f32 %v976, %v2558
        %v3810 = vmul.f32 %v977, %v2562
        %v3811 = vmul.f32 %v978, %v2566
        %v3812 = vmul.f32 %v979, %v2570
        %v3813 = vmul.f32 %v980, %v2574
        %v3814 = vmul.f32 %v981, %v2578
        %v3815 = vmul.f32 %v982, %v2582
        %v3816 = vmul.f32 %v983, %v2586
        %v3817 = vmul.f32 %v984, %v2590
        %v3818 = vmul.f32 %v985, %v2594
        %v3819 = vmul.f32 %v986, %v2598
        %v3820 = vmul.f32 %v987, %v2602
        %v3821 = vmul.f32 %v988, %v2606
        %v3822 = vmul.f32 %v989, %v2610
        %v3823 = vmul.f32 %v990, %v2614
        %v3824 = vmul.f32 %v991, %v2618
        %v3825 = vmul.f32 %v992, %v2622
        %v3826 = vmul.f32 %v993, %v2626
        %v3827 = vmul.f32 %v994, %v2630
        %v3828 = vmul.f32 %v995, %v2634
        %v3829 = vmul.f32 %v996, %v2638
        %v3830 = vmul.f32 %v997, %v2642
        %v3831 = vmul.f32 %v998, %v2646
        %v3832 = vmul.f32 %v999, %v2650
        %v3833 = vmul.f32 %v1000, %v2654
        %v3834 = vmul.f32 %v1001, %v2658
        %v3835 = vmul.f32 %v1002, %v2662
        %v3836 = vmul.f32 %v1003, %v2666
        %v3837 = vmul.f32 %v1004, %v2670
        %v3838 = vmul.f32 %v1005, %v2674
        %v3839 = vmul.f32 %v1006, %v2678
        %v3840 = vmul.f32 %v1007, %v2682
        %v3841 = vmul.f32 %v1008, %v2686
        %v3842 = vmul.f32 %v1009, %v2690
        %v3843 = vadd.f32 %v3075, %v3076
        %v3844 = vadd.f32 %v3843, %v3077
        %v3845 = vadd.f32 %v3844, %v3078
        %v3846 = vadd.f32 %v3845, %v3079
        %v3847 = vadd.f32 %v3846, %v3080
        %v3848 = vadd.f32 %v3847, %v3081
        %v3849 = vadd.f32 %v3848, %v3082
        %v3850 = vadd.f32 %v3849, %v3083
        %v3851 = vadd.f32 %v3850, %v3084
        %v3852 = vadd.f32 %v3851, %v3085
        %v3853 = vadd.f32 %v3852, %v3086
        %v3854 = vadd.f32 %v3853, %v3087
        %v3855 = vadd.f32 %v3854, %v3088
        %v3856 = vadd.f32 %v3855, %v3089
        %v3857 = vadd.f32 %v3856, %v3090
        %v3858 = vadd.f32 %v3857, %v3091
        %v3859 = vadd.f32 %v3858, %v3092
        %v3860 = vadd.f32 %v3859, %v3093
        %v3861 = vadd.f32 %v3860, %v3094
        %v3862 = vadd.f32 %v3861, %v3095
        %v3863 = vadd.f32 %v3862, %v3096
        %v3864 = vadd.f32 %v3863, %v3097
        %v3865 = vadd.f32 %v3864, %v3098
        %v3866 = vadd.f32 %v3865, %v3099
        %v3867 = vadd.f32 %v3866, %v3100
        %v3868 = vadd.f32 %v3867, %v3101
        %v3869 = vadd.f32 %v3868, %v3102
        %v3870 = vadd.f32 %v3869, %v3103
        %v3871 = vadd.f32 %v3870, %v3104
        %v3872 = vadd.f32 %v3871, %v3105
        %v3873 = vadd.f32 %v3872, %v3106
        %v3874 = vadd.f32 %v3873, %v3107
        %v3875 = vadd.f32 %v3874, %v3108
        %v3876 = vadd.f32 %v3875, %v3109
        %v3877 = vadd.f32 %v3876, %v3110
        %v3878 = vadd.f32 %v3877, %v3111
        %v3879 = vadd.f32 %v3878, %v3112
        %v3880 = vadd.f32 %v3879, %v3113
        %v3881 = vadd.f32 %v3880, %v3114
        %v3882 = vadd.f32 %v3881, %v3115
        %v3883 = vadd.f32 %v3882, %v3116
        %v3884 = vadd.f32 %v3883, %v3117
        %v3885 = vadd.f32 %v3884, %v3118
        %v3886 = vadd.f32 %v3885, %v3119
        %v3887 = vadd.f32 %v3886, %v3120
        %v3888 = vadd.f32 %v3887, %v3121
        %v3889 = vadd.f32 %v3888, %v3122
        %v3890 = vadd.f32 %v3889, %v3123
        %v3891 = vadd.f32 %v3890, %v3124
        %v3892 = vadd.f32 %v3891, %v3125
        %v3893 = vadd.f32 %v3892, %v3126
        %v3894 = vadd.f32 %v3893, %v3127
        %v3895 = vadd.f32 %v3894, %v3128
        %v3896 = vadd.f32 %v3895, %v3129
        %v3897 = vadd.f32 %v3896, %v3130
        %v3898 = vadd.f32 %v3897, %v3131
        %v3899 = vadd.f32 %v3898, %v3132
        %v3900 = vadd.f32 %v3899, %v3133
        %v3901 = vadd.f32 %v3900, %v3134
        %v3902 = vadd.f32 %v3901, %v3135
        %v3903 = vadd.f32 %v3902, %v3136
        %v3904 = vadd.f32 %v3903, %v3137
        %v3905 = vadd.f32 %v3904, %v3138
        %v3906 = vadd.f32 %v3905, %v3139
        %v3907 = vadd.f32 %v3906, %v3140
        %v3908 = vadd.f32 %v3907, %v3141
        %v3909 = vadd.f32 %v3908, %v3142
        %v3910 = vadd.f32 %v3909, %v3143
        %v3911 = vadd.f32 %v3910, %v3144
        %v3912 = vadd.f32 %v3911, %v3145
        %v3913 = vadd.f32 %v3912, %v3146
        %v3914 = vadd.f32 %v3913, %v3147
        %v3915 = vadd.f32 %v3914, %v3148
        %v3916 = vadd.f32 %v3915, %v3149
        %v3917 = vadd.f32 %v3916, %v3150
        %v3918 = vadd.f32 %v3917, %v3151
        %v3919 = vadd.f32 %v3918, %v3152
        %v3920 = vadd.f32 %v3919, %v3153
        %v3921 = vadd.f32 %v3920, %v3154
        %v3922 = vadd.f32 %v3921, %v3155
        %v3923 = vadd.f32 %v3922, %v3156
        %v3924 = vadd.f32 %v3923, %v3157
        %v3925 = vadd.f32 %v3924, %v3158
        %v3926 = vadd.f32 %v3925, %v3159
        %v3927 = vadd.f32 %v3926, %v3160
        %v3928 = vadd.f32 %v3927, %v3161
        %v3929 = vadd.f32 %v3928, %v3162
        %v3930 = vadd.f32 %v3929, %v3163
        %v3931 = vadd.f32 %v3930, %v3164
        %v3932 = vadd.f32 %v3931, %v3165
        %v3933 = vadd.f32 %v3932, %v3166
        %v3934 = vadd.f32 %v3933, %v3167
        %v3935 = vadd.f32 %v3934, %v3168
        %v3936 = vadd.f32 %v3935, %v3169
        %v3937 = vadd.f32 %v3936, %v3170
        %v3938 = vadd.f32 %v3937, %v3171
        %v3939 = vadd.f32 %v3938, %v3172
        %v3940 = vadd.f32 %v3939, %v3173
        %v3941 = vadd.f32 %v3940, %v3174
        %v3942 = vadd.f32 %v3941, %v3175
        %v3943 = vadd.f32 %v3942, %v3176
        %v3944 = vadd.f32 %v3943, %v3177
        %v3945 = vadd.f32 %v3944, %v3178
        %v3946 = vadd.f32 %v3945, %v3179
        %v3947 = vadd.f32 %v3946, %v3180
        %v3948 = vadd.f32 %v3947, %v3181
        %v3949 = vadd.f32 %v3948, %v3182
        %v3950 = vadd.f32 %v3949, %v3183
        %v3951 = vadd.f32 %v3950, %v3184
        %v3952 = vadd.f32 %v3951, %v3185
        %v3953 = vadd.f32 %v3952, %v3186
        %v3954 = vadd.f32 %v3953, %v3187
        %v3955 = vadd.f32 %v3954, %v3188
        %v3956 = vadd.f32 %v3955, %v3189
        %v3957 = vadd.f32 %v3956, %v3190
        %v3958 = vadd.f32 %v3957, %v3191
        %v3959 = vadd.f32 %v3958, %v3192
        %v3960 = vadd.f32 %v3959, %v3193
        %v3961 = vadd.f32 %v3960, %v3194
        %v3962 = vadd.f32 %v3961, %v3195
        %v3963 = vadd.f32 %v3962, %v3196
        %v3964 = vadd.f32 %v3963, %v3197
        %v3965 = vadd.f32 %v3964, %v3198
        %v3966 = vadd.f32 %v3965, %v3199
        %v3967 = vadd.f32 %v3966, %v3200
        %v3968 = vadd.f32 %v3967, %v3201
        %v3969 = vadd.f32 %v3968, %v3202
        %v3970 = vadd.f32 %v3969, %v3203
        %v3971 = vadd.f32 %v3970, %v3204
        %v3972 = vadd.f32 %v3971, %v3205
        %v3973 = vadd.f32 %v3972, %v3206
        %v3974 = vadd.f32 %v3973, %v3207
        %v3975 = vadd.f32 %v3974, %v3208
        %v3976 = vadd.f32 %v3975, %v3209
        %v3977 = vadd.f32 %v3976, %v3210
        %v3978 = vadd.f32 %v3977, %v3211
        %v3979 = vadd.f32 %v3978, %v3212
        %v3980 = vadd.f32 %v3979, %v3213
        %v3981 = vadd.f32 %v3980, %v3214
        %v3982 = vadd.f32 %v3981, %v3215
        %v3983 = vadd.f32 %v3982, %v3216
        %v3984 = vadd.f32 %v3983, %v3217
        %v3985 = vadd.f32 %v3984, %v3218
        %v3986 = vadd.f32 %v3985, %v3219
        %v3987 = vadd.f32 %v3986, %v3220
        %v3988 = vadd.f32 %v3987, %v3221
        %v3989 = vadd.f32 %v3988, %v3222
        %v3990 = vadd.f32 %v3989, %v3223
        %v3991 = vadd.f32 %v3990, %v3224
        %v3992 = vadd.f32 %v3991, %v3225
        %v3993 = vadd.f32 %v3992, %v3226
        %v3994 = vadd.f32 %v3993, %v3227
        %v3995 = vadd.f32 %v3994, %v3228
        %v3996 = vadd.f32 %v3995, %v3229
        %v3997 = vadd.f32 %v3996, %v3230
        %v3998 = vadd.f32 %v3997, %v3231
        %v3999 = vadd.f32 %v3998, %v3232
        %v4000 = vadd.f32 %v3999, %v3233
        %v4001 = vadd.f32 %v4000, %v3234
        %v4002 = vadd.f32 %v4001, %v3235
        %v4003 = vadd.f32 %v4002, %v3236
        %v4004 = vadd.f32 %v4003, %v3237
        %v4005 = vadd.f32 %v4004, %v3238
        %v4006 = vadd.f32 %v4005, %v3239
        %v4007 = vadd.f32 %v4006, %v3240
        %v4008 = vadd.f32 %v4007, %v3241
        %v4009 = vadd.f32 %v4008, %v3242
        %v4010 = vadd.f32 %v4009, %v3243
        %v4011 = vadd.f32 %v4010, %v3244
        %v4012 = vadd.f32 %v4011, %v3245
        %v4013 = vadd.f32 %v4012, %v3246
        %v4014 = vadd.f32 %v4013, %v3247
        %v4015 = vadd.f32 %v4014, %v3248
        %v4016 = vadd.f32 %v4015, %v3249
        %v4017 = vadd.f32 %v4016, %v3250
        %v4018 = vadd.f32 %v4017, %v3251
        %v4019 = vadd.f32 %v4018, %v3252
        %v4020 = vadd.f32 %v4019, %v3253
        %v4021 = vadd.f32 %v4020, %v3254
        %v4022 = vadd.f32 %v4021, %v3255
        %v4023 = vadd.f32 %v4022, %v3256
        %v4024 = vadd.f32 %v4023, %v3257
        %v4025 = vadd.f32 %v4024, %v3258
        %v4026 = vadd.f32 %v4025, %v3259
        %v4027 = vadd.f32 %v4026, %v3260
        %v4028 = vadd.f32 %v4027, %v3261
        %v4029 = vadd.f32 %v4028, %v3262
        %v4030 = vadd.f32 %v4029, %v3263
        %v4031 = vadd.f32 %v4030, %v3264
        %v4032 = vadd.f32 %v4031, %v3265
        %v4033 = vadd.f32 %v4032, %v3266
        %v4034 = vadd.f32 %v4033, %v3267
        %v4035 = vadd.f32 %v4034, %v3268
        %v4036 = vadd.f32 %v4035, %v3269
        %v4037 = vadd.f32 %v4036, %v3270
        %v4038 = vadd.f32 %v4037, %v3271
        %v4039 = vadd.f32 %v4038, %v3272
        %v4040 = vadd.f32 %v4039, %v3273
        %v4041 = vadd.f32 %v4040, %v3274
        %v4042 = vadd.f32 %v4041, %v3275
        %v4043 = vadd.f32 %v4042, %v3276
        %v4044 = vadd.f32 %v4043, %v3277
        %v4045 = vadd.f32 %v4044, %v3278
        %v4046 = vadd.f32 %v4045, %v3279
        %v4047 = vadd.f32 %v4046, %v3280
        %v4048 = vadd.f32 %v4047, %v3281
        %v4049 = vadd.f32 %v4048, %v3282
        %v4050 = vadd.f32 %v4049, %v3283
        %v4051 = vadd.f32 %v4050, %v3284
        %v4052 = vadd.f32 %v4051, %v3285
        %v4053 = vadd.f32 %v4052, %v3286
        %v4054 = vadd.f32 %v4053, %v3287
        %v4055 = vadd.f32 %v4054, %v3288
        %v4056 = vadd.f32 %v4055, %v3289
        %v4057 = vadd.f32 %v4056, %v3290
        %v4058 = vadd.f32 %v4057, %v3291
        %v4059 = vadd.f32 %v4058, %v3292
        %v4060 = vadd.f32 %v4059, %v3293
        %v4061 = vadd.f32 %v4060, %v3294
        %v4062 = vadd.f32 %v4061, %v3295
        %v4063 = vadd.f32 %v4062, %v3296
        %v4064 = vadd.f32 %v4063, %v3297
        %v4065 = vadd.f32 %v4064, %v3298
        %v4066 = vadd.f32 %v4065, %v3299
        %v4067 = vadd.f32 %v4066, %v3300
        %v4068 = vadd.f32 %v4067, %v3301
        %v4069 = vadd.f32 %v4068, %v3302
        %v4070 = vadd.f32 %v4069, %v3303
        %v4071 = vadd.f32 %v4070, %v3304
        %v4072 = vadd.f32 %v4071, %v3305
        %v4073 = vadd.f32 %v4072, %v3306
        %v4074 = vadd.f32 %v4073, %v3307
        %v4075 = vadd.f32 %v4074, %v3308
        %v4076 = vadd.f32 %v4075, %v3309
        %v4077 = vadd.f32 %v4076, %v3310
        %v4078 = vadd.f32 %v4077, %v3311
        %v4079 = vadd.f32 %v4078, %v3312
        %v4080 = vadd.f32 %v4079, %v3313
        %v4081 = vadd.f32 %v4080, %v3314
        %v4082 = vadd.f32 %v4081, %v3315
        %v4083 = vadd.f32 %v4082, %v3316
        %v4084 = vadd.f32 %v4083, %v3317
        %v4085 = vadd.f32 %v4084, %v3318
        %v4086 = vadd.f32 %v4085, %v3319
        %v4087 = vadd.f32 %v4086, %v3320
        %v4088 = vadd.f32 %v4087, %v3321
        %v4089 = vadd.f32 %v4088, %v3322
        %v4090 = vadd.f32 %v4089, %v3323
        %v4091 = vadd.f32 %v4090, %v3324
        %v4092 = vadd.f32 %v4091, %v3325
        %v4093 = vadd.f32 %v4092, %v3326
        %v4094 = vadd.f32 %v4093, %v3327
        %v4095 = vadd.f32 %v4094, %v3328
        %v4096 = vadd.f32 %v4095, %v3329
        %v4097 = vadd.f32 %v4096, %v3330
        %v4098 = vadd.f32 %v4097, %v3331
        %v4099 = vadd.f32 %v4098, %v3332
        %v4100 = vadd.f32 %v4099, %v3333
        %v4101 = vadd.f32 %v4100, %v3334
        %v4102 = vadd.f32 %v4101, %v3335
        %v4103 = vadd.f32 %v4102, %v3336
        %v4104 = vadd.f32 %v4103, %v3337
        %v4105 = vadd.f32 %v4104, %v3338
        %v4106 = vadd.f32 %v4105, %v3339
        %v4107 = vadd.f32 %v4106, %v3340
        %v4108 = vadd.f32 %v4107, %v3341
        %v4109 = vadd.f32 %v4108, %v3342
        %v4110 = vadd.f32 %v4109, %v3343
        %v4111 = vadd.f32 %v4110, %v3344
        %v4112 = vadd.f32 %v4111, %v3345
        %v4113 = vadd.f32 %v4112, %v3346
        %v4114 = vadd.f32 %v4113, %v3347
        %v4115 = vadd.f32 %v4114, %v3348
        %v4116 = vadd.f32 %v4115, %v3349
        %v4117 = vadd.f32 %v4116, %v3350
        %v4118 = vadd.f32 %v4117, %v3351
        %v4119 = vadd.f32 %v4118, %v3352
        %v4120 = vadd.f32 %v4119, %v3353
        %v4121 = vadd.f32 %v4120, %v3354
        %v4122 = vadd.f32 %v4121, %v3355
        %v4123 = vadd.f32 %v4122, %v3356
        %v4124 = vadd.f32 %v4123, %v3357
        %v4125 = vadd.f32 %v4124, %v3358
        %v4126 = vadd.f32 %v4125, %v3359
        %v4127 = vadd.f32 %v4126, %v3360
        %v4128 = vadd.f32 %v4127, %v3361
        %v4129 = vadd.f32 %v4128, %v3362
        %v4130 = vadd.f32 %v4129, %v3363
        %v4131 = vadd.f32 %v4130, %v3364
        %v4132 = vadd.f32 %v4131, %v3365
        %v4133 = vadd.f32 %v4132, %v3366
        %v4134 = vadd.f32 %v4133, %v3367
        %v4135 = vadd.f32 %v4134, %v3368
        %v4136 = vadd.f32 %v4135, %v3369
        %v4137 = vadd.f32 %v4136, %v3370
        %v4138 = vadd.f32 %v4137, %v3371
        %v4139 = vadd.f32 %v4138, %v3372
        %v4140 = vadd.f32 %v4139, %v3373
        %v4141 = vadd.f32 %v4140, %v3374
        %v4142 = vadd.f32 %v4141, %v3375
        %v4143 = vadd.f32 %v4142, %v3376
        %v4144 = vadd.f32 %v4143, %v3377
        %v4145 = vadd.f32 %v4144, %v3378
        %v4146 = vadd.f32 %v4145, %v3379
        %v4147 = vadd.f32 %v4146, %v3380
        %v4148 = vadd.f32 %v4147, %v3381
        %v4149 = vadd.f32 %v4148, %v3382
        %v4150 = vadd.f32 %v4149, %v3383
        %v4151 = vadd.f32 %v4150, %v3384
        %v4152 = vadd.f32 %v4151, %v3385
        %v4153 = vadd.f32 %v4152, %v3386
        %v4154 = vadd.f32 %v4153, %v3387
        %v4155 = vadd.f32 %v4154, %v3388
        %v4156 = vadd.f32 %v4155, %v3389
        %v4157 = vadd.f32 %v4156, %v3390
        %v4158 = vadd.f32 %v4157, %v3391
        %v4159 = vadd.f32 %v4158, %v3392
        %v4160 = vadd.f32 %v4159, %v3393
        %v4161 = vadd.f32 %v4160, %v3394
        %v4162 = vadd.f32 %v4161, %v3395
        %v4163 = vadd.f32 %v4162, %v3396
        %v4164 = vadd.f32 %v4163, %v3397
        %v4165 = vadd.f32 %v4164, %v3398
        %v4166 = vadd.f32 %v4165, %v3399
        %v4167 = vadd.f32 %v4166, %v3400
        %v4168 = vadd.f32 %v4167, %v3401
        %v4169 = vadd.f32 %v4168, %v3402
        %v4170 = vadd.f32 %v4169, %v3403
        %v4171 = vadd.f32 %v4170, %v3404
        %v4172 = vadd.f32 %v4171, %v3405
        %v4173 = vadd.f32 %v4172, %v3406
        %v4174 = vadd.f32 %v4173, %v3407
        %v4175 = vadd.f32 %v4174, %v3408
        %v4176 = vadd.f32 %v4175, %v3409
        %v4177 = vadd.f32 %v4176, %v3410
        %v4178 = vadd.f32 %v4177, %v3411
        %v4179 = vadd.f32 %v4178, %v3412
        %v4180 = vadd.f32 %v4179, %v3413
        %v4181 = vadd.f32 %v4180, %v3414
        %v4182 = vadd.f32 %v4181, %v3415
        %v4183 = vadd.f32 %v4182, %v3416
        %v4184 = vadd.f32 %v4183, %v3417
        %v4185 = vadd.f32 %v4184, %v3418
        %v4186 = vadd.f32 %v4185, %v3419
        %v4187 = vadd.f32 %v4186, %v3420
        %v4188 = vadd.f32 %v4187, %v3421
        %v4189 = vadd.f32 %v4188, %v3422
        %v4190 = vadd.f32 %v4189, %v3423
        %v4191 = vadd.f32 %v4190, %v3424
        %v4192 = vadd.f32 %v4191, %v3425
        %v4193 = vadd.f32 %v4192, %v3426
        %v4194 = vadd.f32 %v4193, %v3427
        %v4195 = vadd.f32 %v4194, %v3428
        %v4196 = vadd.f32 %v4195, %v3429
        %v4197 = vadd.f32 %v4196, %v3430
        %v4198 = vadd.f32 %v4197, %v3431
        %v4199 = vadd.f32 %v4198, %v3432
        %v4200 = vadd.f32 %v4199, %v3433
        %v4201 = vadd.f32 %v4200, %v3434
        %v4202 = vadd.f32 %v4201, %v3435
        %v4203 = vadd.f32 %v4202, %v3436
        %v4204 = vadd.f32 %v4203, %v3437
        %v4205 = vadd.f32 %v4204, %v3438
        %v4206 = vadd.f32 %v4205, %v3439
        %v4207 = vadd.f32 %v4206, %v3440
        %v4208 = vadd.f32 %v4207, %v3441
        %v4209 = vadd.f32 %v4208, %v3442
        %v4210 = vadd.f32 %v4209, %v3443
        %v4211 = vadd.f32 %v4210, %v3444
        %v4212 = vadd.f32 %v4211, %v3445
        %v4213 = vadd.f32 %v4212, %v3446
        %v4214 = vadd.f32 %v4213, %v3447
        %v4215 = vadd.f32 %v4214, %v3448
        %v4216 = vadd.f32 %v4215, %v3449
        %v4217 = vadd.f32 %v4216, %v3450
        %v4218 = vadd.f32 %v4217, %v3451
        %v4219 = vadd.f32 %v4218, %v3452
        %v4220 = vadd.f32 %v4219, %v3453
        %v4221 = vadd.f32 %v4220, %v3454
        %v4222 = vadd.f32 %v4221, %v3455
        %v4223 = vadd.f32 %v4222, %v3456
        %v4224 = vadd.f32 %v4223, %v3457
        %v4225 = vadd.f32 %v4224, %v3458
        %4226 = vadd.xlane.f32.xlu0 %v4225
        %v4227 = vpop.xlane.xlu0 %4226
        %vm4228 = vcmask 1041408
        %v4229 = vsel %vm4228, %v3459, 0.0
        %v4230 = vsel %vm4228, %v3460, 0.0
        %v4231 = vadd.f32 %v4229, %v4230
        %v4232 = vsel %vm4228, %v3461, 0.0
        %v4233 = vadd.f32 %v4231, %v4232
        %v4234 = vsel %vm4228, %v3462, 0.0
        %v4235 = vadd.f32 %v4233, %v4234
        %v4236 = vsel %vm4228, %v3463, 0.0
        %v4237 = vadd.f32 %v4235, %v4236
        %v4238 = vsel %vm4228, %v3464, 0.0
        %v4239 = vadd.f32 %v4237, %v4238
        %v4240 = vsel %vm4228, %v3465, 0.0
        %v4241 = vadd.f32 %v4239, %v4240
        %v4242 = vsel %vm4228, %v3466, 0.0
        %v4243 = vadd.f32 %v4241, %v4242
        %v4244 = vsel %vm4228, %v3467, 0.0
        %v4245 = vadd.f32 %v4243, %v4244
        %v4246 = vsel %vm4228, %v3468, 0.0
        %v4247 = vadd.f32 %v4245, %v4246
        %v4248 = vsel %vm4228, %v3469, 0.0
        %v4249 = vadd.f32 %v4247, %v4248
        %v4250 = vsel %vm4228, %v3470, 0.0
        %v4251 = vadd.f32 %v4249, %v4250
        %v4252 = vsel %vm4228, %v3471, 0.0
        %v4253 = vadd.f32 %v4251, %v4252
        %v4254 = vsel %vm4228, %v3472, 0.0
        %v4255 = vadd.f32 %v4253, %v4254
        %v4256 = vsel %vm4228, %v3473, 0.0
        %v4257 = vadd.f32 %v4255, %v4256
        %v4258 = vsel %vm4228, %v3474, 0.0
        %v4259 = vadd.f32 %v4257, %v4258
        %v4260 = vsel %vm4228, %v3475, 0.0
        %v4261 = vadd.f32 %v4259, %v4260
        %v4262 = vsel %vm4228, %v3476, 0.0
        %v4263 = vadd.f32 %v4261, %v4262
        %v4264 = vsel %vm4228, %v3477, 0.0
        %v4265 = vadd.f32 %v4263, %v4264
        %v4266 = vsel %vm4228, %v3478, 0.0
        %v4267 = vadd.f32 %v4265, %v4266
        %v4268 = vsel %vm4228, %v3479, 0.0
        %v4269 = vadd.f32 %v4267, %v4268
        %v4270 = vsel %vm4228, %v3480, 0.0
        %v4271 = vadd.f32 %v4269, %v4270
        %v4272 = vsel %vm4228, %v3481, 0.0
        %v4273 = vadd.f32 %v4271, %v4272
        %v4274 = vsel %vm4228, %v3482, 0.0
        %v4275 = vadd.f32 %v4273, %v4274
        %v4276 = vsel %vm4228, %v3483, 0.0
        %v4277 = vadd.f32 %v4275, %v4276
        %v4278 = vsel %vm4228, %v3484, 0.0
        %v4279 = vadd.f32 %v4277, %v4278
        %v4280 = vsel %vm4228, %v3485, 0.0
        %v4281 = vadd.f32 %v4279, %v4280
        %v4282 = vsel %vm4228, %v3486, 0.0
        %v4283 = vadd.f32 %v4281, %v4282
        %v4284 = vsel %vm4228, %v3487, 0.0
        %v4285 = vadd.f32 %v4283, %v4284
        %v4286 = vsel %vm4228, %v3488, 0.0
        %v4287 = vadd.f32 %v4285, %v4286
        %v4288 = vsel %vm4228, %v3489, 0.0
        %v4289 = vadd.f32 %v4287, %v4288
        %v4290 = vsel %vm4228, %v3490, 0.0
        %v4291 = vadd.f32 %v4289, %v4290
        %v4292 = vsel %vm4228, %v3491, 0.0
        %v4293 = vadd.f32 %v4291, %v4292
        %v4294 = vsel %vm4228, %v3492, 0.0
        %v4295 = vadd.f32 %v4293, %v4294
        %v4296 = vsel %vm4228, %v3493, 0.0
        %v4297 = vadd.f32 %v4295, %v4296
        %v4298 = vsel %vm4228, %v3494, 0.0
        %v4299 = vadd.f32 %v4297, %v4298
        %v4300 = vsel %vm4228, %v3495, 0.0
        %v4301 = vadd.f32 %v4299, %v4300
        %v4302 = vsel %vm4228, %v3496, 0.0
        %v4303 = vadd.f32 %v4301, %v4302
        %v4304 = vsel %vm4228, %v3497, 0.0
        %v4305 = vadd.f32 %v4303, %v4304
        %v4306 = vsel %vm4228, %v3498, 0.0
        %v4307 = vadd.f32 %v4305, %v4306
        %v4308 = vsel %vm4228, %v3499, 0.0
        %v4309 = vadd.f32 %v4307, %v4308
        %v4310 = vsel %vm4228, %v3500, 0.0
        %v4311 = vadd.f32 %v4309, %v4310
        %v4312 = vsel %vm4228, %v3501, 0.0
        %v4313 = vadd.f32 %v4311, %v4312
        %v4314 = vsel %vm4228, %v3502, 0.0
        %v4315 = vadd.f32 %v4313, %v4314
        %v4316 = vsel %vm4228, %v3503, 0.0
        %v4317 = vadd.f32 %v4315, %v4316
        %v4318 = vsel %vm4228, %v3504, 0.0
        %v4319 = vadd.f32 %v4317, %v4318
        %v4320 = vsel %vm4228, %v3505, 0.0
        %v4321 = vadd.f32 %v4319, %v4320
        %v4322 = vsel %vm4228, %v3506, 0.0
        %v4323 = vadd.f32 %v4321, %v4322
        %v4324 = vsel %vm4228, %v3507, 0.0
        %v4325 = vadd.f32 %v4323, %v4324
        %v4326 = vsel %vm4228, %v3508, 0.0
        %v4327 = vadd.f32 %v4325, %v4326
        %v4328 = vsel %vm4228, %v3509, 0.0
        %v4329 = vadd.f32 %v4327, %v4328
        %v4330 = vsel %vm4228, %v3510, 0.0
        %v4331 = vadd.f32 %v4329, %v4330
        %v4332 = vsel %vm4228, %v3511, 0.0
        %v4333 = vadd.f32 %v4331, %v4332
        %v4334 = vsel %vm4228, %v3512, 0.0
        %v4335 = vadd.f32 %v4333, %v4334
        %v4336 = vsel %vm4228, %v3513, 0.0
        %v4337 = vadd.f32 %v4335, %v4336
        %v4338 = vsel %vm4228, %v3514, 0.0
        %v4339 = vadd.f32 %v4337, %v4338
        %v4340 = vsel %vm4228, %v3515, 0.0
        %v4341 = vadd.f32 %v4339, %v4340
        %v4342 = vsel %vm4228, %v3516, 0.0
        %v4343 = vadd.f32 %v4341, %v4342
        %v4344 = vsel %vm4228, %v3517, 0.0
        %v4345 = vadd.f32 %v4343, %v4344
        %v4346 = vsel %vm4228, %v3518, 0.0
        %v4347 = vadd.f32 %v4345, %v4346
        %v4348 = vsel %vm4228, %v3519, 0.0
        %v4349 = vadd.f32 %v4347, %v4348
        %v4350 = vsel %vm4228, %v3520, 0.0
        %v4351 = vadd.f32 %v4349, %v4350
        %v4352 = vsel %vm4228, %v3521, 0.0
        %v4353 = vadd.f32 %v4351, %v4352
        %v4354 = vsel %vm4228, %v3522, 0.0
        %v4355 = vadd.f32 %v4353, %v4354
        %v4356 = vsel %vm4228, %v3523, 0.0
        %v4357 = vadd.f32 %v4355, %v4356
        %v4358 = vsel %vm4228, %v3524, 0.0
        %v4359 = vadd.f32 %v4357, %v4358
        %v4360 = vsel %vm4228, %v3525, 0.0
        %v4361 = vadd.f32 %v4359, %v4360
        %v4362 = vsel %vm4228, %v3526, 0.0
        %v4363 = vadd.f32 %v4361, %v4362
        %v4364 = vsel %vm4228, %v3527, 0.0
        %v4365 = vadd.f32 %v4363, %v4364
        %v4366 = vsel %vm4228, %v3528, 0.0
        %v4367 = vadd.f32 %v4365, %v4366
        %v4368 = vsel %vm4228, %v3529, 0.0
        %v4369 = vadd.f32 %v4367, %v4368
        %v4370 = vsel %vm4228, %v3530, 0.0
        %v4371 = vadd.f32 %v4369, %v4370
        %v4372 = vsel %vm4228, %v3531, 0.0
        %v4373 = vadd.f32 %v4371, %v4372
        %v4374 = vsel %vm4228, %v3532, 0.0
        %v4375 = vadd.f32 %v4373, %v4374
        %v4376 = vsel %vm4228, %v3533, 0.0
        %v4377 = vadd.f32 %v4375, %v4376
        %v4378 = vsel %vm4228, %v3534, 0.0
        %v4379 = vadd.f32 %v4377, %v4378
        %v4380 = vsel %vm4228, %v3535, 0.0
        %v4381 = vadd.f32 %v4379, %v4380
        %v4382 = vsel %vm4228, %v3536, 0.0
        %v4383 = vadd.f32 %v4381, %v4382
        %v4384 = vsel %vm4228, %v3537, 0.0
        %v4385 = vadd.f32 %v4383, %v4384
        %v4386 = vsel %vm4228, %v3538, 0.0
        %v4387 = vadd.f32 %v4385, %v4386
        %v4388 = vsel %vm4228, %v3539, 0.0
        %v4389 = vadd.f32 %v4387, %v4388
        %v4390 = vsel %vm4228, %v3540, 0.0
        %v4391 = vadd.f32 %v4389, %v4390
        %v4392 = vsel %vm4228, %v3541, 0.0
        %v4393 = vadd.f32 %v4391, %v4392
        %v4394 = vsel %vm4228, %v3542, 0.0
        %v4395 = vadd.f32 %v4393, %v4394
        %v4396 = vsel %vm4228, %v3543, 0.0
        %v4397 = vadd.f32 %v4395, %v4396
        %v4398 = vsel %vm4228, %v3544, 0.0
        %v4399 = vadd.f32 %v4397, %v4398
        %v4400 = vsel %vm4228, %v3545, 0.0
        %v4401 = vadd.f32 %v4399, %v4400
        %v4402 = vsel %vm4228, %v3546, 0.0
        %v4403 = vadd.f32 %v4401, %v4402
        %v4404 = vsel %vm4228, %v3547, 0.0
        %v4405 = vadd.f32 %v4403, %v4404
        %v4406 = vsel %vm4228, %v3548, 0.0
        %v4407 = vadd.f32 %v4405, %v4406
        %v4408 = vsel %vm4228, %v3549, 0.0
        %v4409 = vadd.f32 %v4407, %v4408
        %v4410 = vsel %vm4228, %v3550, 0.0
        %v4411 = vadd.f32 %v4409, %v4410
        %v4412 = vsel %vm4228, %v3551, 0.0
        %v4413 = vadd.f32 %v4411, %v4412
        %v4414 = vsel %vm4228, %v3552, 0.0
        %v4415 = vadd.f32 %v4413, %v4414
        %v4416 = vsel %vm4228, %v3553, 0.0
        %v4417 = vadd.f32 %v4415, %v4416
        %v4418 = vsel %vm4228, %v3554, 0.0
        %v4419 = vadd.f32 %v4417, %v4418
        %v4420 = vsel %vm4228, %v3555, 0.0
        %v4421 = vadd.f32 %v4419, %v4420
        %v4422 = vsel %vm4228, %v3556, 0.0
        %v4423 = vadd.f32 %v4421, %v4422
        %v4424 = vsel %vm4228, %v3557, 0.0
        %v4425 = vadd.f32 %v4423, %v4424
        %v4426 = vsel %vm4228, %v3558, 0.0
        %v4427 = vadd.f32 %v4425, %v4426
        %v4428 = vsel %vm4228, %v3559, 0.0
        %v4429 = vadd.f32 %v4427, %v4428
        %v4430 = vsel %vm4228, %v3560, 0.0
        %v4431 = vadd.f32 %v4429, %v4430
        %v4432 = vsel %vm4228, %v3561, 0.0
        %v4433 = vadd.f32 %v4431, %v4432
        %v4434 = vsel %vm4228, %v3562, 0.0
        %v4435 = vadd.f32 %v4433, %v4434
        %v4436 = vsel %vm4228, %v3563, 0.0
        %v4437 = vadd.f32 %v4435, %v4436
        %v4438 = vsel %vm4228, %v3564, 0.0
        %v4439 = vadd.f32 %v4437, %v4438
        %v4440 = vsel %vm4228, %v3565, 0.0
        %v4441 = vadd.f32 %v4439, %v4440
        %v4442 = vsel %vm4228, %v3566, 0.0
        %v4443 = vadd.f32 %v4441, %v4442
        %v4444 = vsel %vm4228, %v3567, 0.0
        %v4445 = vadd.f32 %v4443, %v4444
        %v4446 = vsel %vm4228, %v3568, 0.0
        %v4447 = vadd.f32 %v4445, %v4446
        %v4448 = vsel %vm4228, %v3569, 0.0
        %v4449 = vadd.f32 %v4447, %v4448
        %v4450 = vsel %vm4228, %v3570, 0.0
        %v4451 = vadd.f32 %v4449, %v4450
        %v4452 = vsel %vm4228, %v3571, 0.0
        %v4453 = vadd.f32 %v4451, %v4452
        %v4454 = vsel %vm4228, %v3572, 0.0
        %v4455 = vadd.f32 %v4453, %v4454
        %v4456 = vsel %vm4228, %v3573, 0.0
        %v4457 = vadd.f32 %v4455, %v4456
        %v4458 = vsel %vm4228, %v3574, 0.0
        %v4459 = vadd.f32 %v4457, %v4458
        %v4460 = vsel %vm4228, %v3575, 0.0
        %v4461 = vadd.f32 %v4459, %v4460
        %v4462 = vsel %vm4228, %v3576, 0.0
        %v4463 = vadd.f32 %v4461, %v4462
        %v4464 = vsel %vm4228, %v3577, 0.0
        %v4465 = vadd.f32 %v4463, %v4464
        %v4466 = vsel %vm4228, %v3578, 0.0
        %v4467 = vadd.f32 %v4465, %v4466
        %v4468 = vsel %vm4228, %v3579, 0.0
        %v4469 = vadd.f32 %v4467, %v4468
        %v4470 = vsel %vm4228, %v3580, 0.0
        %v4471 = vadd.f32 %v4469, %v4470
        %v4472 = vsel %vm4228, %v3581, 0.0
        %v4473 = vadd.f32 %v4471, %v4472
        %v4474 = vsel %vm4228, %v3582, 0.0
        %v4475 = vadd.f32 %v4473, %v4474
        %v4476 = vsel %vm4228, %v3583, 0.0
        %v4477 = vadd.f32 %v4475, %v4476
        %v4478 = vsel %vm4228, %v3584, 0.0
        %v4479 = vadd.f32 %v4477, %v4478
        %v4480 = vsel %vm4228, %v3585, 0.0
        %v4481 = vadd.f32 %v4479, %v4480
        %v4482 = vsel %vm4228, %v3586, 0.0
        %v4483 = vadd.f32 %v4481, %v4482
        %v4484 = vsel %vm4228, %v3587, 0.0
        %v4485 = vadd.f32 %v4483, %v4484
        %v4486 = vsel %vm4228, %v3588, 0.0
        %v4487 = vadd.f32 %v4485, %v4486
        %v4488 = vsel %vm4228, %v3589, 0.0
        %v4489 = vadd.f32 %v4487, %v4488
        %v4490 = vsel %vm4228, %v3590, 0.0
        %v4491 = vadd.f32 %v4489, %v4490
        %v4492 = vsel %vm4228, %v3591, 0.0
        %v4493 = vadd.f32 %v4491, %v4492
        %v4494 = vsel %vm4228, %v3592, 0.0
        %v4495 = vadd.f32 %v4493, %v4494
        %v4496 = vsel %vm4228, %v3593, 0.0
        %v4497 = vadd.f32 %v4495, %v4496
        %v4498 = vsel %vm4228, %v3594, 0.0
        %v4499 = vadd.f32 %v4497, %v4498
        %v4500 = vsel %vm4228, %v3595, 0.0
        %v4501 = vadd.f32 %v4499, %v4500
        %v4502 = vsel %vm4228, %v3596, 0.0
        %v4503 = vadd.f32 %v4501, %v4502
        %v4504 = vsel %vm4228, %v3597, 0.0
        %v4505 = vadd.f32 %v4503, %v4504
        %v4506 = vsel %vm4228, %v3598, 0.0
        %v4507 = vadd.f32 %v4505, %v4506
        %v4508 = vsel %vm4228, %v3599, 0.0
        %v4509 = vadd.f32 %v4507, %v4508
        %v4510 = vsel %vm4228, %v3600, 0.0
        %v4511 = vadd.f32 %v4509, %v4510
        %v4512 = vsel %vm4228, %v3601, 0.0
        %v4513 = vadd.f32 %v4511, %v4512
        %v4514 = vsel %vm4228, %v3602, 0.0
        %v4515 = vadd.f32 %v4513, %v4514
        %v4516 = vsel %vm4228, %v3603, 0.0
        %v4517 = vadd.f32 %v4515, %v4516
        %v4518 = vsel %vm4228, %v3604, 0.0
        %v4519 = vadd.f32 %v4517, %v4518
        %v4520 = vsel %vm4228, %v3605, 0.0
        %v4521 = vadd.f32 %v4519, %v4520
        %v4522 = vsel %vm4228, %v3606, 0.0
        %v4523 = vadd.f32 %v4521, %v4522
        %v4524 = vsel %vm4228, %v3607, 0.0
        %v4525 = vadd.f32 %v4523, %v4524
        %v4526 = vsel %vm4228, %v3608, 0.0
        %v4527 = vadd.f32 %v4525, %v4526
        %v4528 = vsel %vm4228, %v3609, 0.0
        %v4529 = vadd.f32 %v4527, %v4528
        %v4530 = vsel %vm4228, %v3610, 0.0
        %v4531 = vadd.f32 %v4529, %v4530
        %v4532 = vsel %vm4228, %v3611, 0.0
        %v4533 = vadd.f32 %v4531, %v4532
        %v4534 = vsel %vm4228, %v3612, 0.0
        %v4535 = vadd.f32 %v4533, %v4534
        %v4536 = vsel %vm4228, %v3613, 0.0
        %v4537 = vadd.f32 %v4535, %v4536
        %v4538 = vsel %vm4228, %v3614, 0.0
        %v4539 = vadd.f32 %v4537, %v4538
        %v4540 = vsel %vm4228, %v3615, 0.0
        %v4541 = vadd.f32 %v4539, %v4540
        %v4542 = vsel %vm4228, %v3616, 0.0
        %v4543 = vadd.f32 %v4541, %v4542
        %v4544 = vsel %vm4228, %v3617, 0.0
        %v4545 = vadd.f32 %v4543, %v4544
        %v4546 = vsel %vm4228, %v3618, 0.0
        %v4547 = vadd.f32 %v4545, %v4546
        %v4548 = vsel %vm4228, %v3619, 0.0
        %v4549 = vadd.f32 %v4547, %v4548
        %v4550 = vsel %vm4228, %v3620, 0.0
        %v4551 = vadd.f32 %v4549, %v4550
        %v4552 = vsel %vm4228, %v3621, 0.0
        %v4553 = vadd.f32 %v4551, %v4552
        %v4554 = vsel %vm4228, %v3622, 0.0
        %v4555 = vadd.f32 %v4553, %v4554
        %v4556 = vsel %vm4228, %v3623, 0.0
        %v4557 = vadd.f32 %v4555, %v4556
        %v4558 = vsel %vm4228, %v3624, 0.0
        %v4559 = vadd.f32 %v4557, %v4558
        %v4560 = vsel %vm4228, %v3625, 0.0
        %v4561 = vadd.f32 %v4559, %v4560
        %v4562 = vsel %vm4228, %v3626, 0.0
        %v4563 = vadd.f32 %v4561, %v4562
        %v4564 = vsel %vm4228, %v3627, 0.0
        %v4565 = vadd.f32 %v4563, %v4564
        %v4566 = vsel %vm4228, %v3628, 0.0
        %v4567 = vadd.f32 %v4565, %v4566
        %v4568 = vsel %vm4228, %v3629, 0.0
        %v4569 = vadd.f32 %v4567, %v4568
        %v4570 = vsel %vm4228, %v3630, 0.0
        %v4571 = vadd.f32 %v4569, %v4570
        %v4572 = vsel %vm4228, %v3631, 0.0
        %v4573 = vadd.f32 %v4571, %v4572
        %v4574 = vsel %vm4228, %v3632, 0.0
        %v4575 = vadd.f32 %v4573, %v4574
        %v4576 = vsel %vm4228, %v3633, 0.0
        %v4577 = vadd.f32 %v4575, %v4576
        %v4578 = vsel %vm4228, %v3634, 0.0
        %v4579 = vadd.f32 %v4577, %v4578
        %v4580 = vsel %vm4228, %v3635, 0.0
        %v4581 = vadd.f32 %v4579, %v4580
        %v4582 = vsel %vm4228, %v3636, 0.0
        %v4583 = vadd.f32 %v4581, %v4582
        %v4584 = vsel %vm4228, %v3637, 0.0
        %v4585 = vadd.f32 %v4583, %v4584
        %v4586 = vsel %vm4228, %v3638, 0.0
        %v4587 = vadd.f32 %v4585, %v4586
        %v4588 = vsel %vm4228, %v3639, 0.0
        %v4589 = vadd.f32 %v4587, %v4588
        %v4590 = vsel %vm4228, %v3640, 0.0
        %v4591 = vadd.f32 %v4589, %v4590
        %v4592 = vsel %vm4228, %v3641, 0.0
        %v4593 = vadd.f32 %v4591, %v4592
        %v4594 = vsel %vm4228, %v3642, 0.0
        %v4595 = vadd.f32 %v4593, %v4594
        %v4596 = vsel %vm4228, %v3643, 0.0
        %v4597 = vadd.f32 %v4595, %v4596
        %v4598 = vsel %vm4228, %v3644, 0.0
        %v4599 = vadd.f32 %v4597, %v4598
        %v4600 = vsel %vm4228, %v3645, 0.0
        %v4601 = vadd.f32 %v4599, %v4600
        %v4602 = vsel %vm4228, %v3646, 0.0
        %v4603 = vadd.f32 %v4601, %v4602
        %v4604 = vsel %vm4228, %v3647, 0.0
        %v4605 = vadd.f32 %v4603, %v4604
        %v4606 = vsel %vm4228, %v3648, 0.0
        %v4607 = vadd.f32 %v4605, %v4606
        %v4608 = vsel %vm4228, %v3649, 0.0
        %v4609 = vadd.f32 %v4607, %v4608
        %v4610 = vsel %vm4228, %v3650, 0.0
        %v4611 = vadd.f32 %v4609, %v4610
        %v4612 = vsel %vm4228, %v3651, 0.0
        %v4613 = vadd.f32 %v4611, %v4612
        %v4614 = vsel %vm4228, %v3652, 0.0
        %v4615 = vadd.f32 %v4613, %v4614
        %v4616 = vsel %vm4228, %v3653, 0.0
        %v4617 = vadd.f32 %v4615, %v4616
        %v4618 = vsel %vm4228, %v3654, 0.0
        %v4619 = vadd.f32 %v4617, %v4618
        %v4620 = vsel %vm4228, %v3655, 0.0
        %v4621 = vadd.f32 %v4619, %v4620
        %v4622 = vsel %vm4228, %v3656, 0.0
        %v4623 = vadd.f32 %v4621, %v4622
        %v4624 = vsel %vm4228, %v3657, 0.0
        %v4625 = vadd.f32 %v4623, %v4624
        %v4626 = vsel %vm4228, %v3658, 0.0
        %v4627 = vadd.f32 %v4625, %v4626
        %v4628 = vsel %vm4228, %v3659, 0.0
        %v4629 = vadd.f32 %v4627, %v4628
        %v4630 = vsel %vm4228, %v3660, 0.0
        %v4631 = vadd.f32 %v4629, %v4630
        %v4632 = vsel %vm4228, %v3661, 0.0
        %v4633 = vadd.f32 %v4631, %v4632
        %v4634 = vsel %vm4228, %v3662, 0.0
        %v4635 = vadd.f32 %v4633, %v4634
        %v4636 = vsel %vm4228, %v3663, 0.0
        %v4637 = vadd.f32 %v4635, %v4636
        %v4638 = vsel %vm4228, %v3664, 0.0
        %v4639 = vadd.f32 %v4637, %v4638
        %v4640 = vsel %vm4228, %v3665, 0.0
        %v4641 = vadd.f32 %v4639, %v4640
        %v4642 = vsel %vm4228, %v3666, 0.0
        %v4643 = vadd.f32 %v4641, %v4642
        %v4644 = vsel %vm4228, %v3667, 0.0
        %v4645 = vadd.f32 %v4643, %v4644
        %v4646 = vsel %vm4228, %v3668, 0.0
        %v4647 = vadd.f32 %v4645, %v4646
        %v4648 = vsel %vm4228, %v3669, 0.0
        %v4649 = vadd.f32 %v4647, %v4648
        %v4650 = vsel %vm4228, %v3670, 0.0
        %v4651 = vadd.f32 %v4649, %v4650
        %v4652 = vsel %vm4228, %v3671, 0.0
        %v4653 = vadd.f32 %v4651, %v4652
        %v4654 = vsel %vm4228, %v3672, 0.0
        %v4655 = vadd.f32 %v4653, %v4654
        %v4656 = vsel %vm4228, %v3673, 0.0
        %v4657 = vadd.f32 %v4655, %v4656
        %v4658 = vsel %vm4228, %v3674, 0.0
        %v4659 = vadd.f32 %v4657, %v4658
        %v4660 = vsel %vm4228, %v3675, 0.0
        %v4661 = vadd.f32 %v4659, %v4660
        %v4662 = vsel %vm4228, %v3676, 0.0
        %v4663 = vadd.f32 %v4661, %v4662
        %v4664 = vsel %vm4228, %v3677, 0.0
        %v4665 = vadd.f32 %v4663, %v4664
        %v4666 = vsel %vm4228, %v3678, 0.0
        %v4667 = vadd.f32 %v4665, %v4666
        %v4668 = vsel %vm4228, %v3679, 0.0
        %v4669 = vadd.f32 %v4667, %v4668
        %v4670 = vsel %vm4228, %v3680, 0.0
        %v4671 = vadd.f32 %v4669, %v4670
        %v4672 = vsel %vm4228, %v3681, 0.0
        %v4673 = vadd.f32 %v4671, %v4672
        %v4674 = vsel %vm4228, %v3682, 0.0
        %v4675 = vadd.f32 %v4673, %v4674
        %v4676 = vsel %vm4228, %v3683, 0.0
        %v4677 = vadd.f32 %v4675, %v4676
        %v4678 = vsel %vm4228, %v3684, 0.0
        %v4679 = vadd.f32 %v4677, %v4678
        %v4680 = vsel %vm4228, %v3685, 0.0
        %v4681 = vadd.f32 %v4679, %v4680
        %v4682 = vsel %vm4228, %v3686, 0.0
        %v4683 = vadd.f32 %v4681, %v4682
        %v4684 = vsel %vm4228, %v3687, 0.0
        %v4685 = vadd.f32 %v4683, %v4684
        %v4686 = vsel %vm4228, %v3688, 0.0
        %v4687 = vadd.f32 %v4685, %v4686
        %v4688 = vsel %vm4228, %v3689, 0.0
        %v4689 = vadd.f32 %v4687, %v4688
        %v4690 = vsel %vm4228, %v3690, 0.0
        %v4691 = vadd.f32 %v4689, %v4690
        %v4692 = vsel %vm4228, %v3691, 0.0
        %v4693 = vadd.f32 %v4691, %v4692
        %v4694 = vsel %vm4228, %v3692, 0.0
        %v4695 = vadd.f32 %v4693, %v4694
        %v4696 = vsel %vm4228, %v3693, 0.0
        %v4697 = vadd.f32 %v4695, %v4696
        %v4698 = vsel %vm4228, %v3694, 0.0
        %v4699 = vadd.f32 %v4697, %v4698
        %v4700 = vsel %vm4228, %v3695, 0.0
        %v4701 = vadd.f32 %v4699, %v4700
        %v4702 = vsel %vm4228, %v3696, 0.0
        %v4703 = vadd.f32 %v4701, %v4702
        %v4704 = vsel %vm4228, %v3697, 0.0
        %v4705 = vadd.f32 %v4703, %v4704
        %v4706 = vsel %vm4228, %v3698, 0.0
        %v4707 = vadd.f32 %v4705, %v4706
        %v4708 = vsel %vm4228, %v3699, 0.0
        %v4709 = vadd.f32 %v4707, %v4708
        %v4710 = vsel %vm4228, %v3700, 0.0
        %v4711 = vadd.f32 %v4709, %v4710
        %v4712 = vsel %vm4228, %v3701, 0.0
        %v4713 = vadd.f32 %v4711, %v4712
        %v4714 = vsel %vm4228, %v3702, 0.0
        %v4715 = vadd.f32 %v4713, %v4714
        %v4716 = vsel %vm4228, %v3703, 0.0
        %v4717 = vadd.f32 %v4715, %v4716
        %v4718 = vsel %vm4228, %v3704, 0.0
        %v4719 = vadd.f32 %v4717, %v4718
        %v4720 = vsel %vm4228, %v3705, 0.0
        %v4721 = vadd.f32 %v4719, %v4720
        %v4722 = vsel %vm4228, %v3706, 0.0
        %v4723 = vadd.f32 %v4721, %v4722
        %v4724 = vsel %vm4228, %v3707, 0.0
        %v4725 = vadd.f32 %v4723, %v4724
        %v4726 = vsel %vm4228, %v3708, 0.0
        %v4727 = vadd.f32 %v4725, %v4726
        %v4728 = vsel %vm4228, %v3709, 0.0
        %v4729 = vadd.f32 %v4727, %v4728
        %v4730 = vsel %vm4228, %v3710, 0.0
        %v4731 = vadd.f32 %v4729, %v4730
        %v4732 = vsel %vm4228, %v3711, 0.0
        %v4733 = vadd.f32 %v4731, %v4732
        %v4734 = vsel %vm4228, %v3712, 0.0
        %v4735 = vadd.f32 %v4733, %v4734
        %v4736 = vsel %vm4228, %v3713, 0.0
        %v4737 = vadd.f32 %v4735, %v4736
        %v4738 = vsel %vm4228, %v3714, 0.0
        %v4739 = vadd.f32 %v4737, %v4738
        %v4740 = vsel %vm4228, %v3715, 0.0
        %v4741 = vadd.f32 %v4739, %v4740
        %v4742 = vsel %vm4228, %v3716, 0.0
        %v4743 = vadd.f32 %v4741, %v4742
        %v4744 = vsel %vm4228, %v3717, 0.0
        %v4745 = vadd.f32 %v4743, %v4744
        %v4746 = vsel %vm4228, %v3718, 0.0
        %v4747 = vadd.f32 %v4745, %v4746
        %v4748 = vsel %vm4228, %v3719, 0.0
        %v4749 = vadd.f32 %v4747, %v4748
        %v4750 = vsel %vm4228, %v3720, 0.0
        %v4751 = vadd.f32 %v4749, %v4750
        %v4752 = vsel %vm4228, %v3721, 0.0
        %v4753 = vadd.f32 %v4751, %v4752
        %v4754 = vsel %vm4228, %v3722, 0.0
        %v4755 = vadd.f32 %v4753, %v4754
        %v4756 = vsel %vm4228, %v3723, 0.0
        %v4757 = vadd.f32 %v4755, %v4756
        %v4758 = vsel %vm4228, %v3724, 0.0
        %v4759 = vadd.f32 %v4757, %v4758
        %v4760 = vsel %vm4228, %v3725, 0.0
        %v4761 = vadd.f32 %v4759, %v4760
        %v4762 = vsel %vm4228, %v3726, 0.0
        %v4763 = vadd.f32 %v4761, %v4762
        %v4764 = vsel %vm4228, %v3727, 0.0
        %v4765 = vadd.f32 %v4763, %v4764
        %v4766 = vsel %vm4228, %v3728, 0.0
        %v4767 = vadd.f32 %v4765, %v4766
        %v4768 = vsel %vm4228, %v3729, 0.0
        %v4769 = vadd.f32 %v4767, %v4768
        %v4770 = vsel %vm4228, %v3730, 0.0
        %v4771 = vadd.f32 %v4769, %v4770
        %v4772 = vsel %vm4228, %v3731, 0.0
        %v4773 = vadd.f32 %v4771, %v4772
        %v4774 = vsel %vm4228, %v3732, 0.0
        %v4775 = vadd.f32 %v4773, %v4774
        %v4776 = vsel %vm4228, %v3733, 0.0
        %v4777 = vadd.f32 %v4775, %v4776
        %v4778 = vsel %vm4228, %v3734, 0.0
        %v4779 = vadd.f32 %v4777, %v4778
        %v4780 = vsel %vm4228, %v3735, 0.0
        %v4781 = vadd.f32 %v4779, %v4780
        %v4782 = vsel %vm4228, %v3736, 0.0
        %v4783 = vadd.f32 %v4781, %v4782
        %v4784 = vsel %vm4228, %v3737, 0.0
        %v4785 = vadd.f32 %v4783, %v4784
        %v4786 = vsel %vm4228, %v3738, 0.0
        %v4787 = vadd.f32 %v4785, %v4786
        %v4788 = vsel %vm4228, %v3739, 0.0
        %v4789 = vadd.f32 %v4787, %v4788
        %v4790 = vsel %vm4228, %v3740, 0.0
        %v4791 = vadd.f32 %v4789, %v4790
        %v4792 = vsel %vm4228, %v3741, 0.0
        %v4793 = vadd.f32 %v4791, %v4792
        %v4794 = vsel %vm4228, %v3742, 0.0
        %v4795 = vadd.f32 %v4793, %v4794
        %v4796 = vsel %vm4228, %v3743, 0.0
        %v4797 = vadd.f32 %v4795, %v4796
        %v4798 = vsel %vm4228, %v3744, 0.0
        %v4799 = vadd.f32 %v4797, %v4798
        %v4800 = vsel %vm4228, %v3745, 0.0
        %v4801 = vadd.f32 %v4799, %v4800
        %v4802 = vsel %vm4228, %v3746, 0.0
        %v4803 = vadd.f32 %v4801, %v4802
        %v4804 = vsel %vm4228, %v3747, 0.0
        %v4805 = vadd.f32 %v4803, %v4804
        %v4806 = vsel %vm4228, %v3748, 0.0
        %v4807 = vadd.f32 %v4805, %v4806
        %v4808 = vsel %vm4228, %v3749, 0.0
        %v4809 = vadd.f32 %v4807, %v4808
        %v4810 = vsel %vm4228, %v3750, 0.0
        %v4811 = vadd.f32 %v4809, %v4810
        %v4812 = vsel %vm4228, %v3751, 0.0
        %v4813 = vadd.f32 %v4811, %v4812
        %v4814 = vsel %vm4228, %v3752, 0.0
        %v4815 = vadd.f32 %v4813, %v4814
        %v4816 = vsel %vm4228, %v3753, 0.0
        %v4817 = vadd.f32 %v4815, %v4816
        %v4818 = vsel %vm4228, %v3754, 0.0
        %v4819 = vadd.f32 %v4817, %v4818
        %v4820 = vsel %vm4228, %v3755, 0.0
        %v4821 = vadd.f32 %v4819, %v4820
        %v4822 = vsel %vm4228, %v3756, 0.0
        %v4823 = vadd.f32 %v4821, %v4822
        %v4824 = vsel %vm4228, %v3757, 0.0
        %v4825 = vadd.f32 %v4823, %v4824
        %v4826 = vsel %vm4228, %v3758, 0.0
        %v4827 = vadd.f32 %v4825, %v4826
        %v4828 = vsel %vm4228, %v3759, 0.0
        %v4829 = vadd.f32 %v4827, %v4828
        %v4830 = vsel %vm4228, %v3760, 0.0
        %v4831 = vadd.f32 %v4829, %v4830
        %v4832 = vsel %vm4228, %v3761, 0.0
        %v4833 = vadd.f32 %v4831, %v4832
        %v4834 = vsel %vm4228, %v3762, 0.0
        %v4835 = vadd.f32 %v4833, %v4834
        %v4836 = vsel %vm4228, %v3763, 0.0
        %v4837 = vadd.f32 %v4835, %v4836
        %v4838 = vsel %vm4228, %v3764, 0.0
        %v4839 = vadd.f32 %v4837, %v4838
        %v4840 = vsel %vm4228, %v3765, 0.0
        %v4841 = vadd.f32 %v4839, %v4840
        %v4842 = vsel %vm4228, %v3766, 0.0
        %v4843 = vadd.f32 %v4841, %v4842
        %v4844 = vsel %vm4228, %v3767, 0.0
        %v4845 = vadd.f32 %v4843, %v4844
        %v4846 = vsel %vm4228, %v3768, 0.0
        %v4847 = vadd.f32 %v4845, %v4846
        %v4848 = vsel %vm4228, %v3769, 0.0
        %v4849 = vadd.f32 %v4847, %v4848
        %v4850 = vsel %vm4228, %v3770, 0.0
        %v4851 = vadd.f32 %v4849, %v4850
        %v4852 = vsel %vm4228, %v3771, 0.0
        %v4853 = vadd.f32 %v4851, %v4852
        %v4854 = vsel %vm4228, %v3772, 0.0
        %v4855 = vadd.f32 %v4853, %v4854
        %v4856 = vsel %vm4228, %v3773, 0.0
        %v4857 = vadd.f32 %v4855, %v4856
        %v4858 = vsel %vm4228, %v3774, 0.0
        %v4859 = vadd.f32 %v4857, %v4858
        %v4860 = vsel %vm4228, %v3775, 0.0
        %v4861 = vadd.f32 %v4859, %v4860
        %v4862 = vsel %vm4228, %v3776, 0.0
        %v4863 = vadd.f32 %v4861, %v4862
        %v4864 = vsel %vm4228, %v3777, 0.0
        %v4865 = vadd.f32 %v4863, %v4864
        %v4866 = vsel %vm4228, %v3778, 0.0
        %v4867 = vadd.f32 %v4865, %v4866
        %v4868 = vsel %vm4228, %v3779, 0.0
        %v4869 = vadd.f32 %v4867, %v4868
        %v4870 = vsel %vm4228, %v3780, 0.0
        %v4871 = vadd.f32 %v4869, %v4870
        %v4872 = vsel %vm4228, %v3781, 0.0
        %v4873 = vadd.f32 %v4871, %v4872
        %v4874 = vsel %vm4228, %v3782, 0.0
        %v4875 = vadd.f32 %v4873, %v4874
        %v4876 = vsel %vm4228, %v3783, 0.0
        %v4877 = vadd.f32 %v4875, %v4876
        %v4878 = vsel %vm4228, %v3784, 0.0
        %v4879 = vadd.f32 %v4877, %v4878
        %v4880 = vsel %vm4228, %v3785, 0.0
        %v4881 = vadd.f32 %v4879, %v4880
        %v4882 = vsel %vm4228, %v3786, 0.0
        %v4883 = vadd.f32 %v4881, %v4882
        %v4884 = vsel %vm4228, %v3787, 0.0
        %v4885 = vadd.f32 %v4883, %v4884
        %v4886 = vsel %vm4228, %v3788, 0.0
        %v4887 = vadd.f32 %v4885, %v4886
        %v4888 = vsel %vm4228, %v3789, 0.0
        %v4889 = vadd.f32 %v4887, %v4888
        %v4890 = vsel %vm4228, %v3790, 0.0
        %v4891 = vadd.f32 %v4889, %v4890
        %v4892 = vsel %vm4228, %v3791, 0.0
        %v4893 = vadd.f32 %v4891, %v4892
        %v4894 = vsel %vm4228, %v3792, 0.0
        %v4895 = vadd.f32 %v4893, %v4894
        %v4896 = vsel %vm4228, %v3793, 0.0
        %v4897 = vadd.f32 %v4895, %v4896
        %v4898 = vsel %vm4228, %v3794, 0.0
        %v4899 = vadd.f32 %v4897, %v4898
        %v4900 = vsel %vm4228, %v3795, 0.0
        %v4901 = vadd.f32 %v4899, %v4900
        %v4902 = vsel %vm4228, %v3796, 0.0
        %v4903 = vadd.f32 %v4901, %v4902
        %v4904 = vsel %vm4228, %v3797, 0.0
        %v4905 = vadd.f32 %v4903, %v4904
        %v4906 = vsel %vm4228, %v3798, 0.0
        %v4907 = vadd.f32 %v4905, %v4906
        %v4908 = vsel %vm4228, %v3799, 0.0
        %v4909 = vadd.f32 %v4907, %v4908
        %v4910 = vsel %vm4228, %v3800, 0.0
        %v4911 = vadd.f32 %v4909, %v4910
        %v4912 = vsel %vm4228, %v3801, 0.0
        %v4913 = vadd.f32 %v4911, %v4912
        %v4914 = vsel %vm4228, %v3802, 0.0
        %v4915 = vadd.f32 %v4913, %v4914
        %v4916 = vsel %vm4228, %v3803, 0.0
        %v4917 = vadd.f32 %v4915, %v4916
        %v4918 = vsel %vm4228, %v3804, 0.0
        %v4919 = vadd.f32 %v4917, %v4918
        %v4920 = vsel %vm4228, %v3805, 0.0
        %v4921 = vadd.f32 %v4919, %v4920
        %v4922 = vsel %vm4228, %v3806, 0.0
        %v4923 = vadd.f32 %v4921, %v4922
        %v4924 = vsel %vm4228, %v3807, 0.0
        %v4925 = vadd.f32 %v4923, %v4924
        %v4926 = vsel %vm4228, %v3808, 0.0
        %v4927 = vadd.f32 %v4925, %v4926
        %v4928 = vsel %vm4228, %v3809, 0.0
        %v4929 = vadd.f32 %v4927, %v4928
        %v4930 = vsel %vm4228, %v3810, 0.0
        %v4931 = vadd.f32 %v4929, %v4930
        %v4932 = vsel %vm4228, %v3811, 0.0
        %v4933 = vadd.f32 %v4931, %v4932
        %v4934 = vsel %vm4228, %v3812, 0.0
        %v4935 = vadd.f32 %v4933, %v4934
        %v4936 = vsel %vm4228, %v3813, 0.0
        %v4937 = vadd.f32 %v4935, %v4936
        %v4938 = vsel %vm4228, %v3814, 0.0
        %v4939 = vadd.f32 %v4937, %v4938
        %v4940 = vsel %vm4228, %v3815, 0.0
        %v4941 = vadd.f32 %v4939, %v4940
        %v4942 = vsel %vm4228, %v3816, 0.0
        %v4943 = vadd.f32 %v4941, %v4942
        %v4944 = vsel %vm4228, %v3817, 0.0
        %v4945 = vadd.f32 %v4943, %v4944
        %v4946 = vsel %vm4228, %v3818, 0.0
        %v4947 = vadd.f32 %v4945, %v4946
        %v4948 = vsel %vm4228, %v3819, 0.0
        %v4949 = vadd.f32 %v4947, %v4948
        %v4950 = vsel %vm4228, %v3820, 0.0
        %v4951 = vadd.f32 %v4949, %v4950
        %v4952 = vsel %vm4228, %v3821, 0.0
        %v4953 = vadd.f32 %v4951, %v4952
        %v4954 = vsel %vm4228, %v3822, 0.0
        %v4955 = vadd.f32 %v4953, %v4954
        %v4956 = vsel %vm4228, %v3823, 0.0
        %v4957 = vadd.f32 %v4955, %v4956
        %v4958 = vsel %vm4228, %v3824, 0.0
        %v4959 = vadd.f32 %v4957, %v4958
        %v4960 = vsel %vm4228, %v3825, 0.0
        %v4961 = vadd.f32 %v4959, %v4960
        %v4962 = vsel %vm4228, %v3826, 0.0
        %v4963 = vadd.f32 %v4961, %v4962
        %v4964 = vsel %vm4228, %v3827, 0.0
        %v4965 = vadd.f32 %v4963, %v4964
        %v4966 = vsel %vm4228, %v3828, 0.0
        %v4967 = vadd.f32 %v4965, %v4966
        %v4968 = vsel %vm4228, %v3829, 0.0
        %v4969 = vadd.f32 %v4967, %v4968
        %v4970 = vsel %vm4228, %v3830, 0.0
        %v4971 = vadd.f32 %v4969, %v4970
        %v4972 = vsel %vm4228, %v3831, 0.0
        %v4973 = vadd.f32 %v4971, %v4972
        %v4974 = vsel %vm4228, %v3832, 0.0
        %v4975 = vadd.f32 %v4973, %v4974
        %v4976 = vsel %vm4228, %v3833, 0.0
        %v4977 = vadd.f32 %v4975, %v4976
        %v4978 = vsel %vm4228, %v3834, 0.0
        %v4979 = vadd.f32 %v4977, %v4978
        %v4980 = vsel %vm4228, %v3835, 0.0
        %v4981 = vadd.f32 %v4979, %v4980
        %v4982 = vsel %vm4228, %v3836, 0.0
        %v4983 = vadd.f32 %v4981, %v4982
        %v4984 = vsel %vm4228, %v3837, 0.0
        %v4985 = vadd.f32 %v4983, %v4984
        %v4986 = vsel %vm4228, %v3838, 0.0
        %v4987 = vadd.f32 %v4985, %v4986
        %v4988 = vsel %vm4228, %v3839, 0.0
        %v4989 = vadd.f32 %v4987, %v4988
        %v4990 = vsel %vm4228, %v3840, 0.0
        %v4991 = vadd.f32 %v4989, %v4990
        %v4992 = vsel %vm4228, %v3841, 0.0
        %v4993 = vadd.f32 %v4991, %v4992
        %v4994 = vsel %vm4228, %v3842, 0.0
        %v4995 = vadd.f32 %v4993, %v4994
        %4996 = vadd.xlane.f32.xlu0 %v4995
        %v4997 = vpop.xlane.xlu0 %4996
        %v4998 = vadd.f32 %v1105, %v4227
        %v4999 = vadd.f32 %v1106, %v4997
        %vm5000 = vcmask 7168
        %5001 = vst.msk [vmem:[#allocation2] sm:$0xff] %vm5000, %v4998
        %vm5002 = vcmask 1024
        %5003 = vst.msk [vmem:[#allocation2 + $0x8] sm:$0x3] %vm5002, %v4999
        %s5004 = scalar_lea.vmem %s186, 1 [#allocation4]
        %v5005 = vld [vmem:[%s5004] ss:$2 sm:$0xff]
        %s5006 = scalar_lea.vmem %s186, 17 [#allocation4]
        %v5007 = vld [vmem:[%s5006] ss:$2 sm:$0xff]
        %s5008 = scalar_lea.vmem %s186, 33 [#allocation4]
        %v5009 = vld [vmem:[%s5008] ss:$2 sm:$0xff]
        %s5010 = scalar_lea.vmem %s186, 49 [#allocation4]
        %v5011 = vld [vmem:[%s5010] ss:$2 sm:$0xff]
        %s5012 = scalar_lea.vmem %s186, 65 [#allocation4]
        %v5013 = vld [vmem:[%s5012] ss:$2 sm:$0xff]
        %s5014 = scalar_lea.vmem %s186, 81 [#allocation4]
        %v5015 = vld [vmem:[%s5014] ss:$2 sm:$0xff]
        %s5016 = scalar_lea.vmem %s186, 97 [#allocation4]
        %v5017 = vld [vmem:[%s5016] ss:$2 sm:$0xff]
        %s5018 = scalar_lea.vmem %s186, 113 [#allocation4]
        %v5019 = vld [vmem:[%s5018] ss:$2 sm:$0xff]
        %s5020 = scalar_lea.vmem %s186, 129 [#allocation4]
        %v5021 = vld [vmem:[%s5020] ss:$2 sm:$0xff]
        %s5022 = scalar_lea.vmem %s186, 145 [#allocation4]
        %v5023 = vld [vmem:[%s5022] ss:$2 sm:$0xff]
        %s5024 = scalar_lea.vmem %s186, 161 [#allocation4]
        %v5025 = vld [vmem:[%s5024] ss:$2 sm:$0xff]
        %s5026 = scalar_lea.vmem %s186, 177 [#allocation4]
        %v5027 = vld [vmem:[%s5026] ss:$2 sm:$0xff]
        %s5028 = scalar_lea.vmem %s186, 193 [#allocation4]
        %v5029 = vld [vmem:[%s5028] ss:$2 sm:$0xff]
        %s5030 = scalar_lea.vmem %s186, 209 [#allocation4]
        %v5031 = vld [vmem:[%s5030] ss:$2 sm:$0xff]
        %s5032 = scalar_lea.vmem %s186, 225 [#allocation4]
        %v5033 = vld [vmem:[%s5032] ss:$2 sm:$0xff]
        %s5034 = scalar_lea.vmem %s186, 241 [#allocation4]
        %v5035 = vld [vmem:[%s5034] ss:$2 sm:$0xff]
        %s5036 = scalar_lea.vmem %s186, 257 [#allocation4]
        %v5037 = vld [vmem:[%s5036] ss:$2 sm:$0xff]
        %s5038 = scalar_lea.vmem %s186, 273 [#allocation4]
        %v5039 = vld [vmem:[%s5038] ss:$2 sm:$0xff]
        %s5040 = scalar_lea.vmem %s186, 289 [#allocation4]
        %v5041 = vld [vmem:[%s5040] ss:$2 sm:$0xff]
        %s5042 = scalar_lea.vmem %s186, 305 [#allocation4]
        %v5043 = vld [vmem:[%s5042] ss:$2 sm:$0xff]
        %s5044 = scalar_lea.vmem %s186, 321 [#allocation4]
        %v5045 = vld [vmem:[%s5044] ss:$2 sm:$0xff]
        %s5046 = scalar_lea.vmem %s186, 337 [#allocation4]
        %v5047 = vld [vmem:[%s5046] ss:$2 sm:$0xff]
        %s5048 = scalar_lea.vmem %s186, 353 [#allocation4]
        %v5049 = vld [vmem:[%s5048] ss:$2 sm:$0xff]
        %s5050 = scalar_lea.vmem %s186, 369 [#allocation4]
        %v5051 = vld [vmem:[%s5050] ss:$2 sm:$0xff]
        %s5052 = scalar_lea.vmem %s186, 385 [#allocation4]
        %v5053 = vld [vmem:[%s5052] ss:$2 sm:$0xff]
        %s5054 = scalar_lea.vmem %s186, 401 [#allocation4]
        %v5055 = vld [vmem:[%s5054] ss:$2 sm:$0xff]
        %s5056 = scalar_lea.vmem %s186, 417 [#allocation4]
        %v5057 = vld [vmem:[%s5056] ss:$2 sm:$0xff]
        %s5058 = scalar_lea.vmem %s186, 433 [#allocation4]
        %v5059 = vld [vmem:[%s5058] ss:$2 sm:$0xff]
        %s5060 = scalar_lea.vmem %s186, 449 [#allocation4]
        %v5061 = vld [vmem:[%s5060] ss:$2 sm:$0xff]
        %s5062 = scalar_lea.vmem %s186, 465 [#allocation4]
        %v5063 = vld [vmem:[%s5062] ss:$2 sm:$0xff]
        %s5064 = scalar_lea.vmem %s186, 481 [#allocation4]
        %v5065 = vld [vmem:[%s5064] ss:$2 sm:$0xff]
        %s5066 = scalar_lea.vmem %s186, 497 [#allocation4]
        %v5067 = vld [vmem:[%s5066] ss:$2 sm:$0xff]
        %s5068 = scalar_lea.vmem %s186, 513 [#allocation4]
        %v5069 = vld [vmem:[%s5068] ss:$2 sm:$0xff]
        %s5070 = scalar_lea.vmem %s186, 529 [#allocation4]
        %v5071 = vld [vmem:[%s5070] ss:$2 sm:$0xff]
        %s5072 = scalar_lea.vmem %s186, 545 [#allocation4]
        %v5073 = vld [vmem:[%s5072] ss:$2 sm:$0xff]
        %s5074 = scalar_lea.vmem %s186, 561 [#allocation4]
        %v5075 = vld [vmem:[%s5074] ss:$2 sm:$0xff]
        %s5076 = scalar_lea.vmem %s186, 577 [#allocation4]
        %v5077 = vld [vmem:[%s5076] ss:$2 sm:$0xff]
        %s5078 = scalar_lea.vmem %s186, 593 [#allocation4]
        %v5079 = vld [vmem:[%s5078] ss:$2 sm:$0xff]
        %s5080 = scalar_lea.vmem %s186, 609 [#allocation4]
        %v5081 = vld [vmem:[%s5080] ss:$2 sm:$0xff]
        %s5082 = scalar_lea.vmem %s186, 625 [#allocation4]
        %v5083 = vld [vmem:[%s5082] ss:$2 sm:$0xff]
        %s5084 = scalar_lea.vmem %s186, 641 [#allocation4]
        %v5085 = vld [vmem:[%s5084] ss:$2 sm:$0xff]
        %s5086 = scalar_lea.vmem %s186, 657 [#allocation4]
        %v5087 = vld [vmem:[%s5086] ss:$2 sm:$0xff]
        %s5088 = scalar_lea.vmem %s186, 673 [#allocation4]
        %v5089 = vld [vmem:[%s5088] ss:$2 sm:$0xff]
        %s5090 = scalar_lea.vmem %s186, 689 [#allocation4]
        %v5091 = vld [vmem:[%s5090] ss:$2 sm:$0xff]
        %s5092 = scalar_lea.vmem %s186, 705 [#allocation4]
        %v5093 = vld [vmem:[%s5092] ss:$2 sm:$0xff]
        %s5094 = scalar_lea.vmem %s186, 721 [#allocation4]
        %v5095 = vld [vmem:[%s5094] ss:$2 sm:$0xff]
        %s5096 = scalar_lea.vmem %s186, 737 [#allocation4]
        %v5097 = vld [vmem:[%s5096] ss:$2 sm:$0xff]
        %s5098 = scalar_lea.vmem %s186, 753 [#allocation4]
        %v5099 = vld [vmem:[%s5098] ss:$2 sm:$0xff]
        %v5100 = vld [vmem:[#allocation3] sm:$0xff]
        %v5101 = vld [vmem:[#allocation3 + $0x8] sm:$0x3]
        %v5150 = vlaneseq
        %v5151 = vshrl.u32 %v5150, 7
        %v5152 = vsub.s32 0, %v5151
        %v5153 = vrot.slane %v5005, %v5152
        %v5154 = vlaneseq
        %v5155 = vshrl.u32 %v5154, 7
        %v5156 = vsub.s32 1, %v5155
        %v5157 = vrot.slane %v5005, %v5156
        %v5158 = vlaneseq
        %v5159 = vshrl.u32 %v5158, 7
        %v5160 = vsub.s32 2, %v5159
        %v5161 = vrot.slane %v5005, %v5160
        %v5162 = vlaneseq
        %v5163 = vshrl.u32 %v5162, 7
        %v5164 = vsub.s32 3, %v5163
        %v5165 = vrot.slane %v5005, %v5164
        %v5166 = vlaneseq
        %v5167 = vshrl.u32 %v5166, 7
        %v5168 = vsub.s32 4, %v5167
        %v5169 = vrot.slane %v5005, %v5168
        %v5170 = vlaneseq
        %v5171 = vshrl.u32 %v5170, 7
        %v5172 = vsub.s32 5, %v5171
        %v5173 = vrot.slane %v5005, %v5172
        %v5174 = vlaneseq
        %v5175 = vshrl.u32 %v5174, 7
        %v5176 = vsub.s32 6, %v5175
        %v5177 = vrot.slane %v5005, %v5176
        %v5178 = vlaneseq
        %v5179 = vshrl.u32 %v5178, 7
        %v5180 = vsub.s32 7, %v5179
        %v5181 = vrot.slane %v5005, %v5180
        %v5182 = vlaneseq
        %v5183 = vshrl.u32 %v5182, 7
        %v5184 = vsub.s32 0, %v5183
        %v5185 = vrot.slane %v5007, %v5184
        %v5186 = vlaneseq
        %v5187 = vshrl.u32 %v5186, 7
        %v5188 = vsub.s32 1, %v5187
        %v5189 = vrot.slane %v5007, %v5188
        %v5190 = vlaneseq
        %v5191 = vshrl.u32 %v5190, 7
        %v5192 = vsub.s32 2, %v5191
        %v5193 = vrot.slane %v5007, %v5192
        %v5194 = vlaneseq
        %v5195 = vshrl.u32 %v5194, 7
        %v5196 = vsub.s32 3, %v5195
        %v5197 = vrot.slane %v5007, %v5196
        %v5198 = vlaneseq
        %v5199 = vshrl.u32 %v5198, 7
        %v5200 = vsub.s32 4, %v5199
        %v5201 = vrot.slane %v5007, %v5200
        %v5202 = vlaneseq
        %v5203 = vshrl.u32 %v5202, 7
        %v5204 = vsub.s32 5, %v5203
        %v5205 = vrot.slane %v5007, %v5204
        %v5206 = vlaneseq
        %v5207 = vshrl.u32 %v5206, 7
        %v5208 = vsub.s32 6, %v5207
        %v5209 = vrot.slane %v5007, %v5208
        %v5210 = vlaneseq
        %v5211 = vshrl.u32 %v5210, 7
        %v5212 = vsub.s32 7, %v5211
        %v5213 = vrot.slane %v5007, %v5212
        %v5214 = vlaneseq
        %v5215 = vshrl.u32 %v5214, 7
        %v5216 = vsub.s32 0, %v5215
        %v5217 = vrot.slane %v5009, %v5216
        %v5218 = vlaneseq
        %v5219 = vshrl.u32 %v5218, 7
        %v5220 = vsub.s32 1, %v5219
        %v5221 = vrot.slane %v5009, %v5220
        %v5222 = vlaneseq
        %v5223 = vshrl.u32 %v5222, 7
        %v5224 = vsub.s32 2, %v5223
        %v5225 = vrot.slane %v5009, %v5224
        %v5226 = vlaneseq
        %v5227 = vshrl.u32 %v5226, 7
        %v5228 = vsub.s32 3, %v5227
        %v5229 = vrot.slane %v5009, %v5228
        %v5230 = vlaneseq
        %v5231 = vshrl.u32 %v5230, 7
        %v5232 = vsub.s32 4, %v5231
        %v5233 = vrot.slane %v5009, %v5232
        %v5234 = vlaneseq
        %v5235 = vshrl.u32 %v5234, 7
        %v5236 = vsub.s32 5, %v5235
        %v5237 = vrot.slane %v5009, %v5236
        %v5238 = vlaneseq
        %v5239 = vshrl.u32 %v5238, 7
        %v5240 = vsub.s32 6, %v5239
        %v5241 = vrot.slane %v5009, %v5240
        %v5242 = vlaneseq
        %v5243 = vshrl.u32 %v5242, 7
        %v5244 = vsub.s32 7, %v5243
        %v5245 = vrot.slane %v5009, %v5244
        %v5246 = vlaneseq
        %v5247 = vshrl.u32 %v5246, 7
        %v5248 = vsub.s32 0, %v5247
        %v5249 = vrot.slane %v5011, %v5248
        %v5250 = vlaneseq
        %v5251 = vshrl.u32 %v5250, 7
        %v5252 = vsub.s32 1, %v5251
        %v5253 = vrot.slane %v5011, %v5252
        %v5254 = vlaneseq
        %v5255 = vshrl.u32 %v5254, 7
        %v5256 = vsub.s32 2, %v5255
        %v5257 = vrot.slane %v5011, %v5256
        %v5258 = vlaneseq
        %v5259 = vshrl.u32 %v5258, 7
        %v5260 = vsub.s32 3, %v5259
        %v5261 = vrot.slane %v5011, %v5260
        %v5262 = vlaneseq
        %v5263 = vshrl.u32 %v5262, 7
        %v5264 = vsub.s32 4, %v5263
        %v5265 = vrot.slane %v5011, %v5264
        %v5266 = vlaneseq
        %v5267 = vshrl.u32 %v5266, 7
        %v5268 = vsub.s32 5, %v5267
        %v5269 = vrot.slane %v5011, %v5268
        %v5270 = vlaneseq
        %v5271 = vshrl.u32 %v5270, 7
        %v5272 = vsub.s32 6, %v5271
        %v5273 = vrot.slane %v5011, %v5272
        %v5274 = vlaneseq
        %v5275 = vshrl.u32 %v5274, 7
        %v5276 = vsub.s32 7, %v5275
        %v5277 = vrot.slane %v5011, %v5276
        %v5278 = vlaneseq
        %v5279 = vshrl.u32 %v5278, 7
        %v5280 = vsub.s32 0, %v5279
        %v5281 = vrot.slane %v5013, %v5280
        %v5282 = vlaneseq
        %v5283 = vshrl.u32 %v5282, 7
        %v5284 = vsub.s32 1, %v5283
        %v5285 = vrot.slane %v5013, %v5284
        %v5286 = vlaneseq
        %v5287 = vshrl.u32 %v5286, 7
        %v5288 = vsub.s32 2, %v5287
        %v5289 = vrot.slane %v5013, %v5288
        %v5290 = vlaneseq
        %v5291 = vshrl.u32 %v5290, 7
        %v5292 = vsub.s32 3, %v5291
        %v5293 = vrot.slane %v5013, %v5292
        %v5294 = vlaneseq
        %v5295 = vshrl.u32 %v5294, 7
        %v5296 = vsub.s32 4, %v5295
        %v5297 = vrot.slane %v5013, %v5296
        %v5298 = vlaneseq
        %v5299 = vshrl.u32 %v5298, 7
        %v5300 = vsub.s32 5, %v5299
        %v5301 = vrot.slane %v5013, %v5300
        %v5302 = vlaneseq
        %v5303 = vshrl.u32 %v5302, 7
        %v5304 = vsub.s32 6, %v5303
        %v5305 = vrot.slane %v5013, %v5304
        %v5306 = vlaneseq
        %v5307 = vshrl.u32 %v5306, 7
        %v5308 = vsub.s32 7, %v5307
        %v5309 = vrot.slane %v5013, %v5308
        %v5310 = vlaneseq
        %v5311 = vshrl.u32 %v5310, 7
        %v5312 = vsub.s32 0, %v5311
        %v5313 = vrot.slane %v5015, %v5312
        %v5314 = vlaneseq
        %v5315 = vshrl.u32 %v5314, 7
        %v5316 = vsub.s32 1, %v5315
        %v5317 = vrot.slane %v5015, %v5316
        %v5318 = vlaneseq
        %v5319 = vshrl.u32 %v5318, 7
        %v5320 = vsub.s32 2, %v5319
        %v5321 = vrot.slane %v5015, %v5320
        %v5322 = vlaneseq
        %v5323 = vshrl.u32 %v5322, 7
        %v5324 = vsub.s32 3, %v5323
        %v5325 = vrot.slane %v5015, %v5324
        %v5326 = vlaneseq
        %v5327 = vshrl.u32 %v5326, 7
        %v5328 = vsub.s32 4, %v5327
        %v5329 = vrot.slane %v5015, %v5328
        %v5330 = vlaneseq
        %v5331 = vshrl.u32 %v5330, 7
        %v5332 = vsub.s32 5, %v5331
        %v5333 = vrot.slane %v5015, %v5332
        %v5334 = vlaneseq
        %v5335 = vshrl.u32 %v5334, 7
        %v5336 = vsub.s32 6, %v5335
        %v5337 = vrot.slane %v5015, %v5336
        %v5338 = vlaneseq
        %v5339 = vshrl.u32 %v5338, 7
        %v5340 = vsub.s32 7, %v5339
        %v5341 = vrot.slane %v5015, %v5340
        %v5342 = vlaneseq
        %v5343 = vshrl.u32 %v5342, 7
        %v5344 = vsub.s32 0, %v5343
        %v5345 = vrot.slane %v5017, %v5344
        %v5346 = vlaneseq
        %v5347 = vshrl.u32 %v5346, 7
        %v5348 = vsub.s32 1, %v5347
        %v5349 = vrot.slane %v5017, %v5348
        %v5350 = vlaneseq
        %v5351 = vshrl.u32 %v5350, 7
        %v5352 = vsub.s32 2, %v5351
        %v5353 = vrot.slane %v5017, %v5352
        %v5354 = vlaneseq
        %v5355 = vshrl.u32 %v5354, 7
        %v5356 = vsub.s32 3, %v5355
        %v5357 = vrot.slane %v5017, %v5356
        %v5358 = vlaneseq
        %v5359 = vshrl.u32 %v5358, 7
        %v5360 = vsub.s32 4, %v5359
        %v5361 = vrot.slane %v5017, %v5360
        %v5362 = vlaneseq
        %v5363 = vshrl.u32 %v5362, 7
        %v5364 = vsub.s32 5, %v5363
        %v5365 = vrot.slane %v5017, %v5364
        %v5366 = vlaneseq
        %v5367 = vshrl.u32 %v5366, 7
        %v5368 = vsub.s32 6, %v5367
        %v5369 = vrot.slane %v5017, %v5368
        %v5370 = vlaneseq
        %v5371 = vshrl.u32 %v5370, 7
        %v5372 = vsub.s32 7, %v5371
        %v5373 = vrot.slane %v5017, %v5372
        %v5374 = vlaneseq
        %v5375 = vshrl.u32 %v5374, 7
        %v5376 = vsub.s32 0, %v5375
        %v5377 = vrot.slane %v5019, %v5376
        %v5378 = vlaneseq
        %v5379 = vshrl.u32 %v5378, 7
        %v5380 = vsub.s32 1, %v5379
        %v5381 = vrot.slane %v5019, %v5380
        %v5382 = vlaneseq
        %v5383 = vshrl.u32 %v5382, 7
        %v5384 = vsub.s32 2, %v5383
        %v5385 = vrot.slane %v5019, %v5384
        %v5386 = vlaneseq
        %v5387 = vshrl.u32 %v5386, 7
        %v5388 = vsub.s32 3, %v5387
        %v5389 = vrot.slane %v5019, %v5388
        %v5390 = vlaneseq
        %v5391 = vshrl.u32 %v5390, 7
        %v5392 = vsub.s32 4, %v5391
        %v5393 = vrot.slane %v5019, %v5392
        %v5394 = vlaneseq
        %v5395 = vshrl.u32 %v5394, 7
        %v5396 = vsub.s32 5, %v5395
        %v5397 = vrot.slane %v5019, %v5396
        %v5398 = vlaneseq
        %v5399 = vshrl.u32 %v5398, 7
        %v5400 = vsub.s32 6, %v5399
        %v5401 = vrot.slane %v5019, %v5400
        %v5402 = vlaneseq
        %v5403 = vshrl.u32 %v5402, 7
        %v5404 = vsub.s32 7, %v5403
        %v5405 = vrot.slane %v5019, %v5404
        %v5406 = vlaneseq
        %v5407 = vshrl.u32 %v5406, 7
        %v5408 = vsub.s32 0, %v5407
        %v5409 = vrot.slane %v5021, %v5408
        %v5410 = vlaneseq
        %v5411 = vshrl.u32 %v5410, 7
        %v5412 = vsub.s32 1, %v5411
        %v5413 = vrot.slane %v5021, %v5412
        %v5414 = vlaneseq
        %v5415 = vshrl.u32 %v5414, 7
        %v5416 = vsub.s32 2, %v5415
        %v5417 = vrot.slane %v5021, %v5416
        %v5418 = vlaneseq
        %v5419 = vshrl.u32 %v5418, 7
        %v5420 = vsub.s32 3, %v5419
        %v5421 = vrot.slane %v5021, %v5420
        %v5422 = vlaneseq
        %v5423 = vshrl.u32 %v5422, 7
        %v5424 = vsub.s32 4, %v5423
        %v5425 = vrot.slane %v5021, %v5424
        %v5426 = vlaneseq
        %v5427 = vshrl.u32 %v5426, 7
        %v5428 = vsub.s32 5, %v5427
        %v5429 = vrot.slane %v5021, %v5428
        %v5430 = vlaneseq
        %v5431 = vshrl.u32 %v5430, 7
        %v5432 = vsub.s32 6, %v5431
        %v5433 = vrot.slane %v5021, %v5432
        %v5434 = vlaneseq
        %v5435 = vshrl.u32 %v5434, 7
        %v5436 = vsub.s32 7, %v5435
        %v5437 = vrot.slane %v5021, %v5436
        %v5438 = vlaneseq
        %v5439 = vshrl.u32 %v5438, 7
        %v5440 = vsub.s32 0, %v5439
        %v5441 = vrot.slane %v5023, %v5440
        %v5442 = vlaneseq
        %v5443 = vshrl.u32 %v5442, 7
        %v5444 = vsub.s32 1, %v5443
        %v5445 = vrot.slane %v5023, %v5444
        %v5446 = vlaneseq
        %v5447 = vshrl.u32 %v5446, 7
        %v5448 = vsub.s32 2, %v5447
        %v5449 = vrot.slane %v5023, %v5448
        %v5450 = vlaneseq
        %v5451 = vshrl.u32 %v5450, 7
        %v5452 = vsub.s32 3, %v5451
        %v5453 = vrot.slane %v5023, %v5452
        %v5454 = vlaneseq
        %v5455 = vshrl.u32 %v5454, 7
        %v5456 = vsub.s32 4, %v5455
        %v5457 = vrot.slane %v5023, %v5456
        %v5458 = vlaneseq
        %v5459 = vshrl.u32 %v5458, 7
        %v5460 = vsub.s32 5, %v5459
        %v5461 = vrot.slane %v5023, %v5460
        %v5462 = vlaneseq
        %v5463 = vshrl.u32 %v5462, 7
        %v5464 = vsub.s32 6, %v5463
        %v5465 = vrot.slane %v5023, %v5464
        %v5466 = vlaneseq
        %v5467 = vshrl.u32 %v5466, 7
        %v5468 = vsub.s32 7, %v5467
        %v5469 = vrot.slane %v5023, %v5468
        %v5470 = vlaneseq
        %v5471 = vshrl.u32 %v5470, 7
        %v5472 = vsub.s32 0, %v5471
        %v5473 = vrot.slane %v5025, %v5472
        %v5474 = vlaneseq
        %v5475 = vshrl.u32 %v5474, 7
        %v5476 = vsub.s32 1, %v5475
        %v5477 = vrot.slane %v5025, %v5476
        %v5478 = vlaneseq
        %v5479 = vshrl.u32 %v5478, 7
        %v5480 = vsub.s32 2, %v5479
        %v5481 = vrot.slane %v5025, %v5480
        %v5482 = vlaneseq
        %v5483 = vshrl.u32 %v5482, 7
        %v5484 = vsub.s32 3, %v5483
        %v5485 = vrot.slane %v5025, %v5484
        %v5486 = vlaneseq
        %v5487 = vshrl.u32 %v5486, 7
        %v5488 = vsub.s32 4, %v5487
        %v5489 = vrot.slane %v5025, %v5488
        %v5490 = vlaneseq
        %v5491 = vshrl.u32 %v5490, 7
        %v5492 = vsub.s32 5, %v5491
        %v5493 = vrot.slane %v5025, %v5492
        %v5494 = vlaneseq
        %v5495 = vshrl.u32 %v5494, 7
        %v5496 = vsub.s32 6, %v5495
        %v5497 = vrot.slane %v5025, %v5496
        %v5498 = vlaneseq
        %v5499 = vshrl.u32 %v5498, 7
        %v5500 = vsub.s32 7, %v5499
        %v5501 = vrot.slane %v5025, %v5500
        %v5502 = vlaneseq
        %v5503 = vshrl.u32 %v5502, 7
        %v5504 = vsub.s32 0, %v5503
        %v5505 = vrot.slane %v5027, %v5504
        %v5506 = vlaneseq
        %v5507 = vshrl.u32 %v5506, 7
        %v5508 = vsub.s32 1, %v5507
        %v5509 = vrot.slane %v5027, %v5508
        %v5510 = vlaneseq
        %v5511 = vshrl.u32 %v5510, 7
        %v5512 = vsub.s32 2, %v5511
        %v5513 = vrot.slane %v5027, %v5512
        %v5514 = vlaneseq
        %v5515 = vshrl.u32 %v5514, 7
        %v5516 = vsub.s32 3, %v5515
        %v5517 = vrot.slane %v5027, %v5516
        %v5518 = vlaneseq
        %v5519 = vshrl.u32 %v5518, 7
        %v5520 = vsub.s32 4, %v5519
        %v5521 = vrot.slane %v5027, %v5520
        %v5522 = vlaneseq
        %v5523 = vshrl.u32 %v5522, 7
        %v5524 = vsub.s32 5, %v5523
        %v5525 = vrot.slane %v5027, %v5524
        %v5526 = vlaneseq
        %v5527 = vshrl.u32 %v5526, 7
        %v5528 = vsub.s32 6, %v5527
        %v5529 = vrot.slane %v5027, %v5528
        %v5530 = vlaneseq
        %v5531 = vshrl.u32 %v5530, 7
        %v5532 = vsub.s32 7, %v5531
        %v5533 = vrot.slane %v5027, %v5532
        %v5534 = vlaneseq
        %v5535 = vshrl.u32 %v5534, 7
        %v5536 = vsub.s32 0, %v5535
        %v5537 = vrot.slane %v5029, %v5536
        %v5538 = vlaneseq
        %v5539 = vshrl.u32 %v5538, 7
        %v5540 = vsub.s32 1, %v5539
        %v5541 = vrot.slane %v5029, %v5540
        %v5542 = vlaneseq
        %v5543 = vshrl.u32 %v5542, 7
        %v5544 = vsub.s32 2, %v5543
        %v5545 = vrot.slane %v5029, %v5544
        %v5546 = vlaneseq
        %v5547 = vshrl.u32 %v5546, 7
        %v5548 = vsub.s32 3, %v5547
        %v5549 = vrot.slane %v5029, %v5548
        %v5550 = vlaneseq
        %v5551 = vshrl.u32 %v5550, 7
        %v5552 = vsub.s32 4, %v5551
        %v5553 = vrot.slane %v5029, %v5552
        %v5554 = vlaneseq
        %v5555 = vshrl.u32 %v5554, 7
        %v5556 = vsub.s32 5, %v5555
        %v5557 = vrot.slane %v5029, %v5556
        %v5558 = vlaneseq
        %v5559 = vshrl.u32 %v5558, 7
        %v5560 = vsub.s32 6, %v5559
        %v5561 = vrot.slane %v5029, %v5560
        %v5562 = vlaneseq
        %v5563 = vshrl.u32 %v5562, 7
        %v5564 = vsub.s32 7, %v5563
        %v5565 = vrot.slane %v5029, %v5564
        %v5566 = vlaneseq
        %v5567 = vshrl.u32 %v5566, 7
        %v5568 = vsub.s32 0, %v5567
        %v5569 = vrot.slane %v5031, %v5568
        %v5570 = vlaneseq
        %v5571 = vshrl.u32 %v5570, 7
        %v5572 = vsub.s32 1, %v5571
        %v5573 = vrot.slane %v5031, %v5572
        %v5574 = vlaneseq
        %v5575 = vshrl.u32 %v5574, 7
        %v5576 = vsub.s32 2, %v5575
        %v5577 = vrot.slane %v5031, %v5576
        %v5578 = vlaneseq
        %v5579 = vshrl.u32 %v5578, 7
        %v5580 = vsub.s32 3, %v5579
        %v5581 = vrot.slane %v5031, %v5580
        %v5582 = vlaneseq
        %v5583 = vshrl.u32 %v5582, 7
        %v5584 = vsub.s32 4, %v5583
        %v5585 = vrot.slane %v5031, %v5584
        %v5586 = vlaneseq
        %v5587 = vshrl.u32 %v5586, 7
        %v5588 = vsub.s32 5, %v5587
        %v5589 = vrot.slane %v5031, %v5588
        %v5590 = vlaneseq
        %v5591 = vshrl.u32 %v5590, 7
        %v5592 = vsub.s32 6, %v5591
        %v5593 = vrot.slane %v5031, %v5592
        %v5594 = vlaneseq
        %v5595 = vshrl.u32 %v5594, 7
        %v5596 = vsub.s32 7, %v5595
        %v5597 = vrot.slane %v5031, %v5596
        %v5598 = vlaneseq
        %v5599 = vshrl.u32 %v5598, 7
        %v5600 = vsub.s32 0, %v5599
        %v5601 = vrot.slane %v5033, %v5600
        %v5602 = vlaneseq
        %v5603 = vshrl.u32 %v5602, 7
        %v5604 = vsub.s32 1, %v5603
        %v5605 = vrot.slane %v5033, %v5604
        %v5606 = vlaneseq
        %v5607 = vshrl.u32 %v5606, 7
        %v5608 = vsub.s32 2, %v5607
        %v5609 = vrot.slane %v5033, %v5608
        %v5610 = vlaneseq
        %v5611 = vshrl.u32 %v5610, 7
        %v5612 = vsub.s32 3, %v5611
        %v5613 = vrot.slane %v5033, %v5612
        %v5614 = vlaneseq
        %v5615 = vshrl.u32 %v5614, 7
        %v5616 = vsub.s32 4, %v5615
        %v5617 = vrot.slane %v5033, %v5616
        %v5618 = vlaneseq
        %v5619 = vshrl.u32 %v5618, 7
        %v5620 = vsub.s32 5, %v5619
        %v5621 = vrot.slane %v5033, %v5620
        %v5622 = vlaneseq
        %v5623 = vshrl.u32 %v5622, 7
        %v5624 = vsub.s32 6, %v5623
        %v5625 = vrot.slane %v5033, %v5624
        %v5626 = vlaneseq
        %v5627 = vshrl.u32 %v5626, 7
        %v5628 = vsub.s32 7, %v5627
        %v5629 = vrot.slane %v5033, %v5628
        %v5630 = vlaneseq
        %v5631 = vshrl.u32 %v5630, 7
        %v5632 = vsub.s32 0, %v5631
        %v5633 = vrot.slane %v5035, %v5632
        %v5634 = vlaneseq
        %v5635 = vshrl.u32 %v5634, 7
        %v5636 = vsub.s32 1, %v5635
        %v5637 = vrot.slane %v5035, %v5636
        %v5638 = vlaneseq
        %v5639 = vshrl.u32 %v5638, 7
        %v5640 = vsub.s32 2, %v5639
        %v5641 = vrot.slane %v5035, %v5640
        %v5642 = vlaneseq
        %v5643 = vshrl.u32 %v5642, 7
        %v5644 = vsub.s32 3, %v5643
        %v5645 = vrot.slane %v5035, %v5644
        %v5646 = vlaneseq
        %v5647 = vshrl.u32 %v5646, 7
        %v5648 = vsub.s32 4, %v5647
        %v5649 = vrot.slane %v5035, %v5648
        %v5650 = vlaneseq
        %v5651 = vshrl.u32 %v5650, 7
        %v5652 = vsub.s32 5, %v5651
        %v5653 = vrot.slane %v5035, %v5652
        %v5654 = vlaneseq
        %v5655 = vshrl.u32 %v5654, 7
        %v5656 = vsub.s32 6, %v5655
        %v5657 = vrot.slane %v5035, %v5656
        %v5658 = vlaneseq
        %v5659 = vshrl.u32 %v5658, 7
        %v5660 = vsub.s32 7, %v5659
        %v5661 = vrot.slane %v5035, %v5660
        %v5662 = vlaneseq
        %v5663 = vshrl.u32 %v5662, 7
        %v5664 = vsub.s32 0, %v5663
        %v5665 = vrot.slane %v5037, %v5664
        %v5666 = vlaneseq
        %v5667 = vshrl.u32 %v5666, 7
        %v5668 = vsub.s32 1, %v5667
        %v5669 = vrot.slane %v5037, %v5668
        %v5670 = vlaneseq
        %v5671 = vshrl.u32 %v5670, 7
        %v5672 = vsub.s32 2, %v5671
        %v5673 = vrot.slane %v5037, %v5672
        %v5674 = vlaneseq
        %v5675 = vshrl.u32 %v5674, 7
        %v5676 = vsub.s32 3, %v5675
        %v5677 = vrot.slane %v5037, %v5676
        %v5678 = vlaneseq
        %v5679 = vshrl.u32 %v5678, 7
        %v5680 = vsub.s32 4, %v5679
        %v5681 = vrot.slane %v5037, %v5680
        %v5682 = vlaneseq
        %v5683 = vshrl.u32 %v5682, 7
        %v5684 = vsub.s32 5, %v5683
        %v5685 = vrot.slane %v5037, %v5684
        %v5686 = vlaneseq
        %v5687 = vshrl.u32 %v5686, 7
        %v5688 = vsub.s32 6, %v5687
        %v5689 = vrot.slane %v5037, %v5688
        %v5690 = vlaneseq
        %v5691 = vshrl.u32 %v5690, 7
        %v5692 = vsub.s32 7, %v5691
        %v5693 = vrot.slane %v5037, %v5692
        %v5694 = vlaneseq
        %v5695 = vshrl.u32 %v5694, 7
        %v5696 = vsub.s32 0, %v5695
        %v5697 = vrot.slane %v5039, %v5696
        %v5698 = vlaneseq
        %v5699 = vshrl.u32 %v5698, 7
        %v5700 = vsub.s32 1, %v5699
        %v5701 = vrot.slane %v5039, %v5700
        %v5702 = vlaneseq
        %v5703 = vshrl.u32 %v5702, 7
        %v5704 = vsub.s32 2, %v5703
        %v5705 = vrot.slane %v5039, %v5704
        %v5706 = vlaneseq
        %v5707 = vshrl.u32 %v5706, 7
        %v5708 = vsub.s32 3, %v5707
        %v5709 = vrot.slane %v5039, %v5708
        %v5710 = vlaneseq
        %v5711 = vshrl.u32 %v5710, 7
        %v5712 = vsub.s32 4, %v5711
        %v5713 = vrot.slane %v5039, %v5712
        %v5714 = vlaneseq
        %v5715 = vshrl.u32 %v5714, 7
        %v5716 = vsub.s32 5, %v5715
        %v5717 = vrot.slane %v5039, %v5716
        %v5718 = vlaneseq
        %v5719 = vshrl.u32 %v5718, 7
        %v5720 = vsub.s32 6, %v5719
        %v5721 = vrot.slane %v5039, %v5720
        %v5722 = vlaneseq
        %v5723 = vshrl.u32 %v5722, 7
        %v5724 = vsub.s32 7, %v5723
        %v5725 = vrot.slane %v5039, %v5724
        %v5726 = vlaneseq
        %v5727 = vshrl.u32 %v5726, 7
        %v5728 = vsub.s32 0, %v5727
        %v5729 = vrot.slane %v5041, %v5728
        %v5730 = vlaneseq
        %v5731 = vshrl.u32 %v5730, 7
        %v5732 = vsub.s32 1, %v5731
        %v5733 = vrot.slane %v5041, %v5732
        %v5734 = vlaneseq
        %v5735 = vshrl.u32 %v5734, 7
        %v5736 = vsub.s32 2, %v5735
        %v5737 = vrot.slane %v5041, %v5736
        %v5738 = vlaneseq
        %v5739 = vshrl.u32 %v5738, 7
        %v5740 = vsub.s32 3, %v5739
        %v5741 = vrot.slane %v5041, %v5740
        %v5742 = vlaneseq
        %v5743 = vshrl.u32 %v5742, 7
        %v5744 = vsub.s32 4, %v5743
        %v5745 = vrot.slane %v5041, %v5744
        %v5746 = vlaneseq
        %v5747 = vshrl.u32 %v5746, 7
        %v5748 = vsub.s32 5, %v5747
        %v5749 = vrot.slane %v5041, %v5748
        %v5750 = vlaneseq
        %v5751 = vshrl.u32 %v5750, 7
        %v5752 = vsub.s32 6, %v5751
        %v5753 = vrot.slane %v5041, %v5752
        %v5754 = vlaneseq
        %v5755 = vshrl.u32 %v5754, 7
        %v5756 = vsub.s32 7, %v5755
        %v5757 = vrot.slane %v5041, %v5756
        %v5758 = vlaneseq
        %v5759 = vshrl.u32 %v5758, 7
        %v5760 = vsub.s32 0, %v5759
        %v5761 = vrot.slane %v5043, %v5760
        %v5762 = vlaneseq
        %v5763 = vshrl.u32 %v5762, 7
        %v5764 = vsub.s32 1, %v5763
        %v5765 = vrot.slane %v5043, %v5764
        %v5766 = vlaneseq
        %v5767 = vshrl.u32 %v5766, 7
        %v5768 = vsub.s32 2, %v5767
        %v5769 = vrot.slane %v5043, %v5768
        %v5770 = vlaneseq
        %v5771 = vshrl.u32 %v5770, 7
        %v5772 = vsub.s32 3, %v5771
        %v5773 = vrot.slane %v5043, %v5772
        %v5774 = vlaneseq
        %v5775 = vshrl.u32 %v5774, 7
        %v5776 = vsub.s32 4, %v5775
        %v5777 = vrot.slane %v5043, %v5776
        %v5778 = vlaneseq
        %v5779 = vshrl.u32 %v5778, 7
        %v5780 = vsub.s32 5, %v5779
        %v5781 = vrot.slane %v5043, %v5780
        %v5782 = vlaneseq
        %v5783 = vshrl.u32 %v5782, 7
        %v5784 = vsub.s32 6, %v5783
        %v5785 = vrot.slane %v5043, %v5784
        %v5786 = vlaneseq
        %v5787 = vshrl.u32 %v5786, 7
        %v5788 = vsub.s32 7, %v5787
        %v5789 = vrot.slane %v5043, %v5788
        %v5790 = vlaneseq
        %v5791 = vshrl.u32 %v5790, 7
        %v5792 = vsub.s32 0, %v5791
        %v5793 = vrot.slane %v5045, %v5792
        %v5794 = vlaneseq
        %v5795 = vshrl.u32 %v5794, 7
        %v5796 = vsub.s32 1, %v5795
        %v5797 = vrot.slane %v5045, %v5796
        %v5798 = vlaneseq
        %v5799 = vshrl.u32 %v5798, 7
        %v5800 = vsub.s32 2, %v5799
        %v5801 = vrot.slane %v5045, %v5800
        %v5802 = vlaneseq
        %v5803 = vshrl.u32 %v5802, 7
        %v5804 = vsub.s32 3, %v5803
        %v5805 = vrot.slane %v5045, %v5804
        %v5806 = vlaneseq
        %v5807 = vshrl.u32 %v5806, 7
        %v5808 = vsub.s32 4, %v5807
        %v5809 = vrot.slane %v5045, %v5808
        %v5810 = vlaneseq
        %v5811 = vshrl.u32 %v5810, 7
        %v5812 = vsub.s32 5, %v5811
        %v5813 = vrot.slane %v5045, %v5812
        %v5814 = vlaneseq
        %v5815 = vshrl.u32 %v5814, 7
        %v5816 = vsub.s32 6, %v5815
        %v5817 = vrot.slane %v5045, %v5816
        %v5818 = vlaneseq
        %v5819 = vshrl.u32 %v5818, 7
        %v5820 = vsub.s32 7, %v5819
        %v5821 = vrot.slane %v5045, %v5820
        %v5822 = vlaneseq
        %v5823 = vshrl.u32 %v5822, 7
        %v5824 = vsub.s32 0, %v5823
        %v5825 = vrot.slane %v5047, %v5824
        %v5826 = vlaneseq
        %v5827 = vshrl.u32 %v5826, 7
        %v5828 = vsub.s32 1, %v5827
        %v5829 = vrot.slane %v5047, %v5828
        %v5830 = vlaneseq
        %v5831 = vshrl.u32 %v5830, 7
        %v5832 = vsub.s32 2, %v5831
        %v5833 = vrot.slane %v5047, %v5832
        %v5834 = vlaneseq
        %v5835 = vshrl.u32 %v5834, 7
        %v5836 = vsub.s32 3, %v5835
        %v5837 = vrot.slane %v5047, %v5836
        %v5838 = vlaneseq
        %v5839 = vshrl.u32 %v5838, 7
        %v5840 = vsub.s32 4, %v5839
        %v5841 = vrot.slane %v5047, %v5840
        %v5842 = vlaneseq
        %v5843 = vshrl.u32 %v5842, 7
        %v5844 = vsub.s32 5, %v5843
        %v5845 = vrot.slane %v5047, %v5844
        %v5846 = vlaneseq
        %v5847 = vshrl.u32 %v5846, 7
        %v5848 = vsub.s32 6, %v5847
        %v5849 = vrot.slane %v5047, %v5848
        %v5850 = vlaneseq
        %v5851 = vshrl.u32 %v5850, 7
        %v5852 = vsub.s32 7, %v5851
        %v5853 = vrot.slane %v5047, %v5852
        %v5854 = vlaneseq
        %v5855 = vshrl.u32 %v5854, 7
        %v5856 = vsub.s32 0, %v5855
        %v5857 = vrot.slane %v5049, %v5856
        %v5858 = vlaneseq
        %v5859 = vshrl.u32 %v5858, 7
        %v5860 = vsub.s32 1, %v5859
        %v5861 = vrot.slane %v5049, %v5860
        %v5862 = vlaneseq
        %v5863 = vshrl.u32 %v5862, 7
        %v5864 = vsub.s32 2, %v5863
        %v5865 = vrot.slane %v5049, %v5864
        %v5866 = vlaneseq
        %v5867 = vshrl.u32 %v5866, 7
        %v5868 = vsub.s32 3, %v5867
        %v5869 = vrot.slane %v5049, %v5868
        %v5870 = vlaneseq
        %v5871 = vshrl.u32 %v5870, 7
        %v5872 = vsub.s32 4, %v5871
        %v5873 = vrot.slane %v5049, %v5872
        %v5874 = vlaneseq
        %v5875 = vshrl.u32 %v5874, 7
        %v5876 = vsub.s32 5, %v5875
        %v5877 = vrot.slane %v5049, %v5876
        %v5878 = vlaneseq
        %v5879 = vshrl.u32 %v5878, 7
        %v5880 = vsub.s32 6, %v5879
        %v5881 = vrot.slane %v5049, %v5880
        %v5882 = vlaneseq
        %v5883 = vshrl.u32 %v5882, 7
        %v5884 = vsub.s32 7, %v5883
        %v5885 = vrot.slane %v5049, %v5884
        %v5886 = vlaneseq
        %v5887 = vshrl.u32 %v5886, 7
        %v5888 = vsub.s32 0, %v5887
        %v5889 = vrot.slane %v5051, %v5888
        %v5890 = vlaneseq
        %v5891 = vshrl.u32 %v5890, 7
        %v5892 = vsub.s32 1, %v5891
        %v5893 = vrot.slane %v5051, %v5892
        %v5894 = vlaneseq
        %v5895 = vshrl.u32 %v5894, 7
        %v5896 = vsub.s32 2, %v5895
        %v5897 = vrot.slane %v5051, %v5896
        %v5898 = vlaneseq
        %v5899 = vshrl.u32 %v5898, 7
        %v5900 = vsub.s32 3, %v5899
        %v5901 = vrot.slane %v5051, %v5900
        %v5902 = vlaneseq
        %v5903 = vshrl.u32 %v5902, 7
        %v5904 = vsub.s32 4, %v5903
        %v5905 = vrot.slane %v5051, %v5904
        %v5906 = vlaneseq
        %v5907 = vshrl.u32 %v5906, 7
        %v5908 = vsub.s32 5, %v5907
        %v5909 = vrot.slane %v5051, %v5908
        %v5910 = vlaneseq
        %v5911 = vshrl.u32 %v5910, 7
        %v5912 = vsub.s32 6, %v5911
        %v5913 = vrot.slane %v5051, %v5912
        %v5914 = vlaneseq
        %v5915 = vshrl.u32 %v5914, 7
        %v5916 = vsub.s32 7, %v5915
        %v5917 = vrot.slane %v5051, %v5916
        %v5918 = vlaneseq
        %v5919 = vshrl.u32 %v5918, 7
        %v5920 = vsub.s32 0, %v5919
        %v5921 = vrot.slane %v5053, %v5920
        %v5922 = vlaneseq
        %v5923 = vshrl.u32 %v5922, 7
        %v5924 = vsub.s32 1, %v5923
        %v5925 = vrot.slane %v5053, %v5924
        %v5926 = vlaneseq
        %v5927 = vshrl.u32 %v5926, 7
        %v5928 = vsub.s32 2, %v5927
        %v5929 = vrot.slane %v5053, %v5928
        %v5930 = vlaneseq
        %v5931 = vshrl.u32 %v5930, 7
        %v5932 = vsub.s32 3, %v5931
        %v5933 = vrot.slane %v5053, %v5932
        %v5934 = vlaneseq
        %v5935 = vshrl.u32 %v5934, 7
        %v5936 = vsub.s32 4, %v5935
        %v5937 = vrot.slane %v5053, %v5936
        %v5938 = vlaneseq
        %v5939 = vshrl.u32 %v5938, 7
        %v5940 = vsub.s32 5, %v5939
        %v5941 = vrot.slane %v5053, %v5940
        %v5942 = vlaneseq
        %v5943 = vshrl.u32 %v5942, 7
        %v5944 = vsub.s32 6, %v5943
        %v5945 = vrot.slane %v5053, %v5944
        %v5946 = vlaneseq
        %v5947 = vshrl.u32 %v5946, 7
        %v5948 = vsub.s32 7, %v5947
        %v5949 = vrot.slane %v5053, %v5948
        %v5950 = vlaneseq
        %v5951 = vshrl.u32 %v5950, 7
        %v5952 = vsub.s32 0, %v5951
        %v5953 = vrot.slane %v5055, %v5952
        %v5954 = vlaneseq
        %v5955 = vshrl.u32 %v5954, 7
        %v5956 = vsub.s32 1, %v5955
        %v5957 = vrot.slane %v5055, %v5956
        %v5958 = vlaneseq
        %v5959 = vshrl.u32 %v5958, 7
        %v5960 = vsub.s32 2, %v5959
        %v5961 = vrot.slane %v5055, %v5960
        %v5962 = vlaneseq
        %v5963 = vshrl.u32 %v5962, 7
        %v5964 = vsub.s32 3, %v5963
        %v5965 = vrot.slane %v5055, %v5964
        %v5966 = vlaneseq
        %v5967 = vshrl.u32 %v5966, 7
        %v5968 = vsub.s32 4, %v5967
        %v5969 = vrot.slane %v5055, %v5968
        %v5970 = vlaneseq
        %v5971 = vshrl.u32 %v5970, 7
        %v5972 = vsub.s32 5, %v5971
        %v5973 = vrot.slane %v5055, %v5972
        %v5974 = vlaneseq
        %v5975 = vshrl.u32 %v5974, 7
        %v5976 = vsub.s32 6, %v5975
        %v5977 = vrot.slane %v5055, %v5976
        %v5978 = vlaneseq
        %v5979 = vshrl.u32 %v5978, 7
        %v5980 = vsub.s32 7, %v5979
        %v5981 = vrot.slane %v5055, %v5980
        %v5982 = vlaneseq
        %v5983 = vshrl.u32 %v5982, 7
        %v5984 = vsub.s32 0, %v5983
        %v5985 = vrot.slane %v5057, %v5984
        %v5986 = vlaneseq
        %v5987 = vshrl.u32 %v5986, 7
        %v5988 = vsub.s32 1, %v5987
        %v5989 = vrot.slane %v5057, %v5988
        %v5990 = vlaneseq
        %v5991 = vshrl.u32 %v5990, 7
        %v5992 = vsub.s32 2, %v5991
        %v5993 = vrot.slane %v5057, %v5992
        %v5994 = vlaneseq
        %v5995 = vshrl.u32 %v5994, 7
        %v5996 = vsub.s32 3, %v5995
        %v5997 = vrot.slane %v5057, %v5996
        %v5998 = vlaneseq
        %v5999 = vshrl.u32 %v5998, 7
        %v6000 = vsub.s32 4, %v5999
        %v6001 = vrot.slane %v5057, %v6000
        %v6002 = vlaneseq
        %v6003 = vshrl.u32 %v6002, 7
        %v6004 = vsub.s32 5, %v6003
        %v6005 = vrot.slane %v5057, %v6004
        %v6006 = vlaneseq
        %v6007 = vshrl.u32 %v6006, 7
        %v6008 = vsub.s32 6, %v6007
        %v6009 = vrot.slane %v5057, %v6008
        %v6010 = vlaneseq
        %v6011 = vshrl.u32 %v6010, 7
        %v6012 = vsub.s32 7, %v6011
        %v6013 = vrot.slane %v5057, %v6012
        %v6014 = vlaneseq
        %v6015 = vshrl.u32 %v6014, 7
        %v6016 = vsub.s32 0, %v6015
        %v6017 = vrot.slane %v5059, %v6016
        %v6018 = vlaneseq
        %v6019 = vshrl.u32 %v6018, 7
        %v6020 = vsub.s32 1, %v6019
        %v6021 = vrot.slane %v5059, %v6020
        %v6022 = vlaneseq
        %v6023 = vshrl.u32 %v6022, 7
        %v6024 = vsub.s32 2, %v6023
        %v6025 = vrot.slane %v5059, %v6024
        %v6026 = vlaneseq
        %v6027 = vshrl.u32 %v6026, 7
        %v6028 = vsub.s32 3, %v6027
        %v6029 = vrot.slane %v5059, %v6028
        %v6030 = vlaneseq
        %v6031 = vshrl.u32 %v6030, 7
        %v6032 = vsub.s32 4, %v6031
        %v6033 = vrot.slane %v5059, %v6032
        %v6034 = vlaneseq
        %v6035 = vshrl.u32 %v6034, 7
        %v6036 = vsub.s32 5, %v6035
        %v6037 = vrot.slane %v5059, %v6036
        %v6038 = vlaneseq
        %v6039 = vshrl.u32 %v6038, 7
        %v6040 = vsub.s32 6, %v6039
        %v6041 = vrot.slane %v5059, %v6040
        %v6042 = vlaneseq
        %v6043 = vshrl.u32 %v6042, 7
        %v6044 = vsub.s32 7, %v6043
        %v6045 = vrot.slane %v5059, %v6044
        %v6046 = vlaneseq
        %v6047 = vshrl.u32 %v6046, 7
        %v6048 = vsub.s32 0, %v6047
        %v6049 = vrot.slane %v5061, %v6048
        %v6050 = vlaneseq
        %v6051 = vshrl.u32 %v6050, 7
        %v6052 = vsub.s32 1, %v6051
        %v6053 = vrot.slane %v5061, %v6052
        %v6054 = vlaneseq
        %v6055 = vshrl.u32 %v6054, 7
        %v6056 = vsub.s32 2, %v6055
        %v6057 = vrot.slane %v5061, %v6056
        %v6058 = vlaneseq
        %v6059 = vshrl.u32 %v6058, 7
        %v6060 = vsub.s32 3, %v6059
        %v6061 = vrot.slane %v5061, %v6060
        %v6062 = vlaneseq
        %v6063 = vshrl.u32 %v6062, 7
        %v6064 = vsub.s32 4, %v6063
        %v6065 = vrot.slane %v5061, %v6064
        %v6066 = vlaneseq
        %v6067 = vshrl.u32 %v6066, 7
        %v6068 = vsub.s32 5, %v6067
        %v6069 = vrot.slane %v5061, %v6068
        %v6070 = vlaneseq
        %v6071 = vshrl.u32 %v6070, 7
        %v6072 = vsub.s32 6, %v6071
        %v6073 = vrot.slane %v5061, %v6072
        %v6074 = vlaneseq
        %v6075 = vshrl.u32 %v6074, 7
        %v6076 = vsub.s32 7, %v6075
        %v6077 = vrot.slane %v5061, %v6076
        %v6078 = vlaneseq
        %v6079 = vshrl.u32 %v6078, 7
        %v6080 = vsub.s32 0, %v6079
        %v6081 = vrot.slane %v5063, %v6080
        %v6082 = vlaneseq
        %v6083 = vshrl.u32 %v6082, 7
        %v6084 = vsub.s32 1, %v6083
        %v6085 = vrot.slane %v5063, %v6084
        %v6086 = vlaneseq
        %v6087 = vshrl.u32 %v6086, 7
        %v6088 = vsub.s32 2, %v6087
        %v6089 = vrot.slane %v5063, %v6088
        %v6090 = vlaneseq
        %v6091 = vshrl.u32 %v6090, 7
        %v6092 = vsub.s32 3, %v6091
        %v6093 = vrot.slane %v5063, %v6092
        %v6094 = vlaneseq
        %v6095 = vshrl.u32 %v6094, 7
        %v6096 = vsub.s32 4, %v6095
        %v6097 = vrot.slane %v5063, %v6096
        %v6098 = vlaneseq
        %v6099 = vshrl.u32 %v6098, 7
        %v6100 = vsub.s32 5, %v6099
        %v6101 = vrot.slane %v5063, %v6100
        %v6102 = vlaneseq
        %v6103 = vshrl.u32 %v6102, 7
        %v6104 = vsub.s32 6, %v6103
        %v6105 = vrot.slane %v5063, %v6104
        %v6106 = vlaneseq
        %v6107 = vshrl.u32 %v6106, 7
        %v6108 = vsub.s32 7, %v6107
        %v6109 = vrot.slane %v5063, %v6108
        %v6110 = vlaneseq
        %v6111 = vshrl.u32 %v6110, 7
        %v6112 = vsub.s32 0, %v6111
        %v6113 = vrot.slane %v5065, %v6112
        %v6114 = vlaneseq
        %v6115 = vshrl.u32 %v6114, 7
        %v6116 = vsub.s32 1, %v6115
        %v6117 = vrot.slane %v5065, %v6116
        %v6118 = vlaneseq
        %v6119 = vshrl.u32 %v6118, 7
        %v6120 = vsub.s32 2, %v6119
        %v6121 = vrot.slane %v5065, %v6120
        %v6122 = vlaneseq
        %v6123 = vshrl.u32 %v6122, 7
        %v6124 = vsub.s32 3, %v6123
        %v6125 = vrot.slane %v5065, %v6124
        %v6126 = vlaneseq
        %v6127 = vshrl.u32 %v6126, 7
        %v6128 = vsub.s32 4, %v6127
        %v6129 = vrot.slane %v5065, %v6128
        %v6130 = vlaneseq
        %v6131 = vshrl.u32 %v6130, 7
        %v6132 = vsub.s32 5, %v6131
        %v6133 = vrot.slane %v5065, %v6132
        %v6134 = vlaneseq
        %v6135 = vshrl.u32 %v6134, 7
        %v6136 = vsub.s32 6, %v6135
        %v6137 = vrot.slane %v5065, %v6136
        %v6138 = vlaneseq
        %v6139 = vshrl.u32 %v6138, 7
        %v6140 = vsub.s32 7, %v6139
        %v6141 = vrot.slane %v5065, %v6140
        %v6142 = vlaneseq
        %v6143 = vshrl.u32 %v6142, 7
        %v6144 = vsub.s32 0, %v6143
        %v6145 = vrot.slane %v5067, %v6144
        %v6146 = vlaneseq
        %v6147 = vshrl.u32 %v6146, 7
        %v6148 = vsub.s32 1, %v6147
        %v6149 = vrot.slane %v5067, %v6148
        %v6150 = vlaneseq
        %v6151 = vshrl.u32 %v6150, 7
        %v6152 = vsub.s32 2, %v6151
        %v6153 = vrot.slane %v5067, %v6152
        %v6154 = vlaneseq
        %v6155 = vshrl.u32 %v6154, 7
        %v6156 = vsub.s32 3, %v6155
        %v6157 = vrot.slane %v5067, %v6156
        %v6158 = vlaneseq
        %v6159 = vshrl.u32 %v6158, 7
        %v6160 = vsub.s32 4, %v6159
        %v6161 = vrot.slane %v5067, %v6160
        %v6162 = vlaneseq
        %v6163 = vshrl.u32 %v6162, 7
        %v6164 = vsub.s32 5, %v6163
        %v6165 = vrot.slane %v5067, %v6164
        %v6166 = vlaneseq
        %v6167 = vshrl.u32 %v6166, 7
        %v6168 = vsub.s32 6, %v6167
        %v6169 = vrot.slane %v5067, %v6168
        %v6170 = vlaneseq
        %v6171 = vshrl.u32 %v6170, 7
        %v6172 = vsub.s32 7, %v6171
        %v6173 = vrot.slane %v5067, %v6172
        %v6174 = vlaneseq
        %v6175 = vshrl.u32 %v6174, 7
        %v6176 = vsub.s32 0, %v6175
        %v6177 = vrot.slane %v5069, %v6176
        %v6178 = vlaneseq
        %v6179 = vshrl.u32 %v6178, 7
        %v6180 = vsub.s32 1, %v6179
        %v6181 = vrot.slane %v5069, %v6180
        %v6182 = vlaneseq
        %v6183 = vshrl.u32 %v6182, 7
        %v6184 = vsub.s32 2, %v6183
        %v6185 = vrot.slane %v5069, %v6184
        %v6186 = vlaneseq
        %v6187 = vshrl.u32 %v6186, 7
        %v6188 = vsub.s32 3, %v6187
        %v6189 = vrot.slane %v5069, %v6188
        %v6190 = vlaneseq
        %v6191 = vshrl.u32 %v6190, 7
        %v6192 = vsub.s32 4, %v6191
        %v6193 = vrot.slane %v5069, %v6192
        %v6194 = vlaneseq
        %v6195 = vshrl.u32 %v6194, 7
        %v6196 = vsub.s32 5, %v6195
        %v6197 = vrot.slane %v5069, %v6196
        %v6198 = vlaneseq
        %v6199 = vshrl.u32 %v6198, 7
        %v6200 = vsub.s32 6, %v6199
        %v6201 = vrot.slane %v5069, %v6200
        %v6202 = vlaneseq
        %v6203 = vshrl.u32 %v6202, 7
        %v6204 = vsub.s32 7, %v6203
        %v6205 = vrot.slane %v5069, %v6204
        %v6206 = vlaneseq
        %v6207 = vshrl.u32 %v6206, 7
        %v6208 = vsub.s32 0, %v6207
        %v6209 = vrot.slane %v5071, %v6208
        %v6210 = vlaneseq
        %v6211 = vshrl.u32 %v6210, 7
        %v6212 = vsub.s32 1, %v6211
        %v6213 = vrot.slane %v5071, %v6212
        %v6214 = vlaneseq
        %v6215 = vshrl.u32 %v6214, 7
        %v6216 = vsub.s32 2, %v6215
        %v6217 = vrot.slane %v5071, %v6216
        %v6218 = vlaneseq
        %v6219 = vshrl.u32 %v6218, 7
        %v6220 = vsub.s32 3, %v6219
        %v6221 = vrot.slane %v5071, %v6220
        %v6222 = vlaneseq
        %v6223 = vshrl.u32 %v6222, 7
        %v6224 = vsub.s32 4, %v6223
        %v6225 = vrot.slane %v5071, %v6224
        %v6226 = vlaneseq
        %v6227 = vshrl.u32 %v6226, 7
        %v6228 = vsub.s32 5, %v6227
        %v6229 = vrot.slane %v5071, %v6228
        %v6230 = vlaneseq
        %v6231 = vshrl.u32 %v6230, 7
        %v6232 = vsub.s32 6, %v6231
        %v6233 = vrot.slane %v5071, %v6232
        %v6234 = vlaneseq
        %v6235 = vshrl.u32 %v6234, 7
        %v6236 = vsub.s32 7, %v6235
        %v6237 = vrot.slane %v5071, %v6236
        %v6238 = vlaneseq
        %v6239 = vshrl.u32 %v6238, 7
        %v6240 = vsub.s32 0, %v6239
        %v6241 = vrot.slane %v5073, %v6240
        %v6242 = vlaneseq
        %v6243 = vshrl.u32 %v6242, 7
        %v6244 = vsub.s32 1, %v6243
        %v6245 = vrot.slane %v5073, %v6244
        %v6246 = vlaneseq
        %v6247 = vshrl.u32 %v6246, 7
        %v6248 = vsub.s32 2, %v6247
        %v6249 = vrot.slane %v5073, %v6248
        %v6250 = vlaneseq
        %v6251 = vshrl.u32 %v6250, 7
        %v6252 = vsub.s32 3, %v6251
        %v6253 = vrot.slane %v5073, %v6252
        %v6254 = vlaneseq
        %v6255 = vshrl.u32 %v6254, 7
        %v6256 = vsub.s32 4, %v6255
        %v6257 = vrot.slane %v5073, %v6256
        %v6258 = vlaneseq
        %v6259 = vshrl.u32 %v6258, 7
        %v6260 = vsub.s32 5, %v6259
        %v6261 = vrot.slane %v5073, %v6260
        %v6262 = vlaneseq
        %v6263 = vshrl.u32 %v6262, 7
        %v6264 = vsub.s32 6, %v6263
        %v6265 = vrot.slane %v5073, %v6264
        %v6266 = vlaneseq
        %v6267 = vshrl.u32 %v6266, 7
        %v6268 = vsub.s32 7, %v6267
        %v6269 = vrot.slane %v5073, %v6268
        %v6270 = vlaneseq
        %v6271 = vshrl.u32 %v6270, 7
        %v6272 = vsub.s32 0, %v6271
        %v6273 = vrot.slane %v5075, %v6272
        %v6274 = vlaneseq
        %v6275 = vshrl.u32 %v6274, 7
        %v6276 = vsub.s32 1, %v6275
        %v6277 = vrot.slane %v5075, %v6276
        %v6278 = vlaneseq
        %v6279 = vshrl.u32 %v6278, 7
        %v6280 = vsub.s32 2, %v6279
        %v6281 = vrot.slane %v5075, %v6280
        %v6282 = vlaneseq
        %v6283 = vshrl.u32 %v6282, 7
        %v6284 = vsub.s32 3, %v6283
        %v6285 = vrot.slane %v5075, %v6284
        %v6286 = vlaneseq
        %v6287 = vshrl.u32 %v6286, 7
        %v6288 = vsub.s32 4, %v6287
        %v6289 = vrot.slane %v5075, %v6288
        %v6290 = vlaneseq
        %v6291 = vshrl.u32 %v6290, 7
        %v6292 = vsub.s32 5, %v6291
        %v6293 = vrot.slane %v5075, %v6292
        %v6294 = vlaneseq
        %v6295 = vshrl.u32 %v6294, 7
        %v6296 = vsub.s32 6, %v6295
        %v6297 = vrot.slane %v5075, %v6296
        %v6298 = vlaneseq
        %v6299 = vshrl.u32 %v6298, 7
        %v6300 = vsub.s32 7, %v6299
        %v6301 = vrot.slane %v5075, %v6300
        %v6302 = vlaneseq
        %v6303 = vshrl.u32 %v6302, 7
        %v6304 = vsub.s32 0, %v6303
        %v6305 = vrot.slane %v5077, %v6304
        %v6306 = vlaneseq
        %v6307 = vshrl.u32 %v6306, 7
        %v6308 = vsub.s32 1, %v6307
        %v6309 = vrot.slane %v5077, %v6308
        %v6310 = vlaneseq
        %v6311 = vshrl.u32 %v6310, 7
        %v6312 = vsub.s32 2, %v6311
        %v6313 = vrot.slane %v5077, %v6312
        %v6314 = vlaneseq
        %v6315 = vshrl.u32 %v6314, 7
        %v6316 = vsub.s32 3, %v6315
        %v6317 = vrot.slane %v5077, %v6316
        %v6318 = vlaneseq
        %v6319 = vshrl.u32 %v6318, 7
        %v6320 = vsub.s32 4, %v6319
        %v6321 = vrot.slane %v5077, %v6320
        %v6322 = vlaneseq
        %v6323 = vshrl.u32 %v6322, 7
        %v6324 = vsub.s32 5, %v6323
        %v6325 = vrot.slane %v5077, %v6324
        %v6326 = vlaneseq
        %v6327 = vshrl.u32 %v6326, 7
        %v6328 = vsub.s32 6, %v6327
        %v6329 = vrot.slane %v5077, %v6328
        %v6330 = vlaneseq
        %v6331 = vshrl.u32 %v6330, 7
        %v6332 = vsub.s32 7, %v6331
        %v6333 = vrot.slane %v5077, %v6332
        %v6334 = vlaneseq
        %v6335 = vshrl.u32 %v6334, 7
        %v6336 = vsub.s32 0, %v6335
        %v6337 = vrot.slane %v5079, %v6336
        %v6338 = vlaneseq
        %v6339 = vshrl.u32 %v6338, 7
        %v6340 = vsub.s32 1, %v6339
        %v6341 = vrot.slane %v5079, %v6340
        %v6342 = vlaneseq
        %v6343 = vshrl.u32 %v6342, 7
        %v6344 = vsub.s32 2, %v6343
        %v6345 = vrot.slane %v5079, %v6344
        %v6346 = vlaneseq
        %v6347 = vshrl.u32 %v6346, 7
        %v6348 = vsub.s32 3, %v6347
        %v6349 = vrot.slane %v5079, %v6348
        %v6350 = vlaneseq
        %v6351 = vshrl.u32 %v6350, 7
        %v6352 = vsub.s32 4, %v6351
        %v6353 = vrot.slane %v5079, %v6352
        %v6354 = vlaneseq
        %v6355 = vshrl.u32 %v6354, 7
        %v6356 = vsub.s32 5, %v6355
        %v6357 = vrot.slane %v5079, %v6356
        %v6358 = vlaneseq
        %v6359 = vshrl.u32 %v6358, 7
        %v6360 = vsub.s32 6, %v6359
        %v6361 = vrot.slane %v5079, %v6360
        %v6362 = vlaneseq
        %v6363 = vshrl.u32 %v6362, 7
        %v6364 = vsub.s32 7, %v6363
        %v6365 = vrot.slane %v5079, %v6364
        %v6366 = vlaneseq
        %v6367 = vshrl.u32 %v6366, 7
        %v6368 = vsub.s32 0, %v6367
        %v6369 = vrot.slane %v5081, %v6368
        %v6370 = vlaneseq
        %v6371 = vshrl.u32 %v6370, 7
        %v6372 = vsub.s32 1, %v6371
        %v6373 = vrot.slane %v5081, %v6372
        %v6374 = vlaneseq
        %v6375 = vshrl.u32 %v6374, 7
        %v6376 = vsub.s32 2, %v6375
        %v6377 = vrot.slane %v5081, %v6376
        %v6378 = vlaneseq
        %v6379 = vshrl.u32 %v6378, 7
        %v6380 = vsub.s32 3, %v6379
        %v6381 = vrot.slane %v5081, %v6380
        %v6382 = vlaneseq
        %v6383 = vshrl.u32 %v6382, 7
        %v6384 = vsub.s32 4, %v6383
        %v6385 = vrot.slane %v5081, %v6384
        %v6386 = vlaneseq
        %v6387 = vshrl.u32 %v6386, 7
        %v6388 = vsub.s32 5, %v6387
        %v6389 = vrot.slane %v5081, %v6388
        %v6390 = vlaneseq
        %v6391 = vshrl.u32 %v6390, 7
        %v6392 = vsub.s32 6, %v6391
        %v6393 = vrot.slane %v5081, %v6392
        %v6394 = vlaneseq
        %v6395 = vshrl.u32 %v6394, 7
        %v6396 = vsub.s32 7, %v6395
        %v6397 = vrot.slane %v5081, %v6396
        %v6398 = vlaneseq
        %v6399 = vshrl.u32 %v6398, 7
        %v6400 = vsub.s32 0, %v6399
        %v6401 = vrot.slane %v5083, %v6400
        %v6402 = vlaneseq
        %v6403 = vshrl.u32 %v6402, 7
        %v6404 = vsub.s32 1, %v6403
        %v6405 = vrot.slane %v5083, %v6404
        %v6406 = vlaneseq
        %v6407 = vshrl.u32 %v6406, 7
        %v6408 = vsub.s32 2, %v6407
        %v6409 = vrot.slane %v5083, %v6408
        %v6410 = vlaneseq
        %v6411 = vshrl.u32 %v6410, 7
        %v6412 = vsub.s32 3, %v6411
        %v6413 = vrot.slane %v5083, %v6412
        %v6414 = vlaneseq
        %v6415 = vshrl.u32 %v6414, 7
        %v6416 = vsub.s32 4, %v6415
        %v6417 = vrot.slane %v5083, %v6416
        %v6418 = vlaneseq
        %v6419 = vshrl.u32 %v6418, 7
        %v6420 = vsub.s32 5, %v6419
        %v6421 = vrot.slane %v5083, %v6420
        %v6422 = vlaneseq
        %v6423 = vshrl.u32 %v6422, 7
        %v6424 = vsub.s32 6, %v6423
        %v6425 = vrot.slane %v5083, %v6424
        %v6426 = vlaneseq
        %v6427 = vshrl.u32 %v6426, 7
        %v6428 = vsub.s32 7, %v6427
        %v6429 = vrot.slane %v5083, %v6428
        %v6430 = vlaneseq
        %v6431 = vshrl.u32 %v6430, 7
        %v6432 = vsub.s32 0, %v6431
        %v6433 = vrot.slane %v5085, %v6432
        %v6434 = vlaneseq
        %v6435 = vshrl.u32 %v6434, 7
        %v6436 = vsub.s32 1, %v6435
        %v6437 = vrot.slane %v5085, %v6436
        %v6438 = vlaneseq
        %v6439 = vshrl.u32 %v6438, 7
        %v6440 = vsub.s32 2, %v6439
        %v6441 = vrot.slane %v5085, %v6440
        %v6442 = vlaneseq
        %v6443 = vshrl.u32 %v6442, 7
        %v6444 = vsub.s32 3, %v6443
        %v6445 = vrot.slane %v5085, %v6444
        %v6446 = vlaneseq
        %v6447 = vshrl.u32 %v6446, 7
        %v6448 = vsub.s32 4, %v6447
        %v6449 = vrot.slane %v5085, %v6448
        %v6450 = vlaneseq
        %v6451 = vshrl.u32 %v6450, 7
        %v6452 = vsub.s32 5, %v6451
        %v6453 = vrot.slane %v5085, %v6452
        %v6454 = vlaneseq
        %v6455 = vshrl.u32 %v6454, 7
        %v6456 = vsub.s32 6, %v6455
        %v6457 = vrot.slane %v5085, %v6456
        %v6458 = vlaneseq
        %v6459 = vshrl.u32 %v6458, 7
        %v6460 = vsub.s32 7, %v6459
        %v6461 = vrot.slane %v5085, %v6460
        %v6462 = vlaneseq
        %v6463 = vshrl.u32 %v6462, 7
        %v6464 = vsub.s32 0, %v6463
        %v6465 = vrot.slane %v5087, %v6464
        %v6466 = vlaneseq
        %v6467 = vshrl.u32 %v6466, 7
        %v6468 = vsub.s32 1, %v6467
        %v6469 = vrot.slane %v5087, %v6468
        %v6470 = vlaneseq
        %v6471 = vshrl.u32 %v6470, 7
        %v6472 = vsub.s32 2, %v6471
        %v6473 = vrot.slane %v5087, %v6472
        %v6474 = vlaneseq
        %v6475 = vshrl.u32 %v6474, 7
        %v6476 = vsub.s32 3, %v6475
        %v6477 = vrot.slane %v5087, %v6476
        %v6478 = vlaneseq
        %v6479 = vshrl.u32 %v6478, 7
        %v6480 = vsub.s32 4, %v6479
        %v6481 = vrot.slane %v5087, %v6480
        %v6482 = vlaneseq
        %v6483 = vshrl.u32 %v6482, 7
        %v6484 = vsub.s32 5, %v6483
        %v6485 = vrot.slane %v5087, %v6484
        %v6486 = vlaneseq
        %v6487 = vshrl.u32 %v6486, 7
        %v6488 = vsub.s32 6, %v6487
        %v6489 = vrot.slane %v5087, %v6488
        %v6490 = vlaneseq
        %v6491 = vshrl.u32 %v6490, 7
        %v6492 = vsub.s32 7, %v6491
        %v6493 = vrot.slane %v5087, %v6492
        %v6494 = vlaneseq
        %v6495 = vshrl.u32 %v6494, 7
        %v6496 = vsub.s32 0, %v6495
        %v6497 = vrot.slane %v5089, %v6496
        %v6498 = vlaneseq
        %v6499 = vshrl.u32 %v6498, 7
        %v6500 = vsub.s32 1, %v6499
        %v6501 = vrot.slane %v5089, %v6500
        %v6502 = vlaneseq
        %v6503 = vshrl.u32 %v6502, 7
        %v6504 = vsub.s32 2, %v6503
        %v6505 = vrot.slane %v5089, %v6504
        %v6506 = vlaneseq
        %v6507 = vshrl.u32 %v6506, 7
        %v6508 = vsub.s32 3, %v6507
        %v6509 = vrot.slane %v5089, %v6508
        %v6510 = vlaneseq
        %v6511 = vshrl.u32 %v6510, 7
        %v6512 = vsub.s32 4, %v6511
        %v6513 = vrot.slane %v5089, %v6512
        %v6514 = vlaneseq
        %v6515 = vshrl.u32 %v6514, 7
        %v6516 = vsub.s32 5, %v6515
        %v6517 = vrot.slane %v5089, %v6516
        %v6518 = vlaneseq
        %v6519 = vshrl.u32 %v6518, 7
        %v6520 = vsub.s32 6, %v6519
        %v6521 = vrot.slane %v5089, %v6520
        %v6522 = vlaneseq
        %v6523 = vshrl.u32 %v6522, 7
        %v6524 = vsub.s32 7, %v6523
        %v6525 = vrot.slane %v5089, %v6524
        %v6526 = vlaneseq
        %v6527 = vshrl.u32 %v6526, 7
        %v6528 = vsub.s32 0, %v6527
        %v6529 = vrot.slane %v5091, %v6528
        %v6530 = vlaneseq
        %v6531 = vshrl.u32 %v6530, 7
        %v6532 = vsub.s32 1, %v6531
        %v6533 = vrot.slane %v5091, %v6532
        %v6534 = vlaneseq
        %v6535 = vshrl.u32 %v6534, 7
        %v6536 = vsub.s32 2, %v6535
        %v6537 = vrot.slane %v5091, %v6536
        %v6538 = vlaneseq
        %v6539 = vshrl.u32 %v6538, 7
        %v6540 = vsub.s32 3, %v6539
        %v6541 = vrot.slane %v5091, %v6540
        %v6542 = vlaneseq
        %v6543 = vshrl.u32 %v6542, 7
        %v6544 = vsub.s32 4, %v6543
        %v6545 = vrot.slane %v5091, %v6544
        %v6546 = vlaneseq
        %v6547 = vshrl.u32 %v6546, 7
        %v6548 = vsub.s32 5, %v6547
        %v6549 = vrot.slane %v5091, %v6548
        %v6550 = vlaneseq
        %v6551 = vshrl.u32 %v6550, 7
        %v6552 = vsub.s32 6, %v6551
        %v6553 = vrot.slane %v5091, %v6552
        %v6554 = vlaneseq
        %v6555 = vshrl.u32 %v6554, 7
        %v6556 = vsub.s32 7, %v6555
        %v6557 = vrot.slane %v5091, %v6556
        %v6558 = vlaneseq
        %v6559 = vshrl.u32 %v6558, 7
        %v6560 = vsub.s32 0, %v6559
        %v6561 = vrot.slane %v5093, %v6560
        %v6562 = vlaneseq
        %v6563 = vshrl.u32 %v6562, 7
        %v6564 = vsub.s32 1, %v6563
        %v6565 = vrot.slane %v5093, %v6564
        %v6566 = vlaneseq
        %v6567 = vshrl.u32 %v6566, 7
        %v6568 = vsub.s32 2, %v6567
        %v6569 = vrot.slane %v5093, %v6568
        %v6570 = vlaneseq
        %v6571 = vshrl.u32 %v6570, 7
        %v6572 = vsub.s32 3, %v6571
        %v6573 = vrot.slane %v5093, %v6572
        %v6574 = vlaneseq
        %v6575 = vshrl.u32 %v6574, 7
        %v6576 = vsub.s32 4, %v6575
        %v6577 = vrot.slane %v5093, %v6576
        %v6578 = vlaneseq
        %v6579 = vshrl.u32 %v6578, 7
        %v6580 = vsub.s32 5, %v6579
        %v6581 = vrot.slane %v5093, %v6580
        %v6582 = vlaneseq
        %v6583 = vshrl.u32 %v6582, 7
        %v6584 = vsub.s32 6, %v6583
        %v6585 = vrot.slane %v5093, %v6584
        %v6586 = vlaneseq
        %v6587 = vshrl.u32 %v6586, 7
        %v6588 = vsub.s32 7, %v6587
        %v6589 = vrot.slane %v5093, %v6588
        %v6590 = vlaneseq
        %v6591 = vshrl.u32 %v6590, 7
        %v6592 = vsub.s32 0, %v6591
        %v6593 = vrot.slane %v5095, %v6592
        %v6594 = vlaneseq
        %v6595 = vshrl.u32 %v6594, 7
        %v6596 = vsub.s32 1, %v6595
        %v6597 = vrot.slane %v5095, %v6596
        %v6598 = vlaneseq
        %v6599 = vshrl.u32 %v6598, 7
        %v6600 = vsub.s32 2, %v6599
        %v6601 = vrot.slane %v5095, %v6600
        %v6602 = vlaneseq
        %v6603 = vshrl.u32 %v6602, 7
        %v6604 = vsub.s32 3, %v6603
        %v6605 = vrot.slane %v5095, %v6604
        %v6606 = vlaneseq
        %v6607 = vshrl.u32 %v6606, 7
        %v6608 = vsub.s32 4, %v6607
        %v6609 = vrot.slane %v5095, %v6608
        %v6610 = vlaneseq
        %v6611 = vshrl.u32 %v6610, 7
        %v6612 = vsub.s32 5, %v6611
        %v6613 = vrot.slane %v5095, %v6612
        %v6614 = vlaneseq
        %v6615 = vshrl.u32 %v6614, 7
        %v6616 = vsub.s32 6, %v6615
        %v6617 = vrot.slane %v5095, %v6616
        %v6618 = vlaneseq
        %v6619 = vshrl.u32 %v6618, 7
        %v6620 = vsub.s32 7, %v6619
        %v6621 = vrot.slane %v5095, %v6620
        %v6622 = vlaneseq
        %v6623 = vshrl.u32 %v6622, 7
        %v6624 = vsub.s32 0, %v6623
        %v6625 = vrot.slane %v5097, %v6624
        %v6626 = vlaneseq
        %v6627 = vshrl.u32 %v6626, 7
        %v6628 = vsub.s32 1, %v6627
        %v6629 = vrot.slane %v5097, %v6628
        %v6630 = vlaneseq
        %v6631 = vshrl.u32 %v6630, 7
        %v6632 = vsub.s32 2, %v6631
        %v6633 = vrot.slane %v5097, %v6632
        %v6634 = vlaneseq
        %v6635 = vshrl.u32 %v6634, 7
        %v6636 = vsub.s32 3, %v6635
        %v6637 = vrot.slane %v5097, %v6636
        %v6638 = vlaneseq
        %v6639 = vshrl.u32 %v6638, 7
        %v6640 = vsub.s32 4, %v6639
        %v6641 = vrot.slane %v5097, %v6640
        %v6642 = vlaneseq
        %v6643 = vshrl.u32 %v6642, 7
        %v6644 = vsub.s32 5, %v6643
        %v6645 = vrot.slane %v5097, %v6644
        %v6646 = vlaneseq
        %v6647 = vshrl.u32 %v6646, 7
        %v6648 = vsub.s32 6, %v6647
        %v6649 = vrot.slane %v5097, %v6648
        %v6650 = vlaneseq
        %v6651 = vshrl.u32 %v6650, 7
        %v6652 = vsub.s32 7, %v6651
        %v6653 = vrot.slane %v5097, %v6652
        %v6654 = vlaneseq
        %v6655 = vshrl.u32 %v6654, 7
        %v6656 = vsub.s32 0, %v6655
        %v6657 = vrot.slane %v5099, %v6656
        %v6658 = vlaneseq
        %v6659 = vshrl.u32 %v6658, 7
        %v6660 = vsub.s32 1, %v6659
        %v6661 = vrot.slane %v5099, %v6660
        %v6662 = vlaneseq
        %v6663 = vshrl.u32 %v6662, 7
        %v6664 = vsub.s32 2, %v6663
        %v6665 = vrot.slane %v5099, %v6664
        %v6666 = vlaneseq
        %v6667 = vshrl.u32 %v6666, 7
        %v6668 = vsub.s32 3, %v6667
        %v6669 = vrot.slane %v5099, %v6668
        %v6670 = vlaneseq
        %v6671 = vshrl.u32 %v6670, 7
        %v6672 = vsub.s32 4, %v6671
        %v6673 = vrot.slane %v5099, %v6672
        %v6674 = vlaneseq
        %v6675 = vshrl.u32 %v6674, 7
        %v6676 = vsub.s32 5, %v6675
        %v6677 = vrot.slane %v5099, %v6676
        %v6678 = vlaneseq
        %v6679 = vshrl.u32 %v6678, 7
        %v6680 = vsub.s32 6, %v6679
        %v6681 = vrot.slane %v5099, %v6680
        %v6682 = vlaneseq
        %v6683 = vshrl.u32 %v6682, 7
        %v6684 = vsub.s32 7, %v6683
        %v6685 = vrot.slane %v5099, %v6684
        %v7070 = vmul.f32 %v242, %v5153
        %v7071 = vmul.f32 %v243, %v5157
        %v7072 = vmul.f32 %v244, %v5161
        %v7073 = vmul.f32 %v245, %v5165
        %v7074 = vmul.f32 %v246, %v5169
        %v7075 = vmul.f32 %v247, %v5173
        %v7076 = vmul.f32 %v248, %v5177
        %v7077 = vmul.f32 %v249, %v5181
        %v7078 = vmul.f32 %v250, %v5185
        %v7079 = vmul.f32 %v251, %v5189
        %v7080 = vmul.f32 %v252, %v5193
        %v7081 = vmul.f32 %v253, %v5197
        %v7082 = vmul.f32 %v254, %v5201
        %v7083 = vmul.f32 %v255, %v5205
        %v7084 = vmul.f32 %v256, %v5209
        %v7085 = vmul.f32 %v257, %v5213
        %v7086 = vmul.f32 %v258, %v5217
        %v7087 = vmul.f32 %v259, %v5221
        %v7088 = vmul.f32 %v260, %v5225
        %v7089 = vmul.f32 %v261, %v5229
        %v7090 = vmul.f32 %v262, %v5233
        %v7091 = vmul.f32 %v263, %v5237
        %v7092 = vmul.f32 %v264, %v5241
        %v7093 = vmul.f32 %v265, %v5245
        %v7094 = vmul.f32 %v266, %v5249
        %v7095 = vmul.f32 %v267, %v5253
        %v7096 = vmul.f32 %v268, %v5257
        %v7097 = vmul.f32 %v269, %v5261
        %v7098 = vmul.f32 %v270, %v5265
        %v7099 = vmul.f32 %v271, %v5269
        %v7100 = vmul.f32 %v272, %v5273
        %v7101 = vmul.f32 %v273, %v5277
        %v7102 = vmul.f32 %v274, %v5281
        %v7103 = vmul.f32 %v275, %v5285
        %v7104 = vmul.f32 %v276, %v5289
        %v7105 = vmul.f32 %v277, %v5293
        %v7106 = vmul.f32 %v278, %v5297
        %v7107 = vmul.f32 %v279, %v5301
        %v7108 = vmul.f32 %v280, %v5305
        %v7109 = vmul.f32 %v281, %v5309
        %v7110 = vmul.f32 %v282, %v5313
        %v7111 = vmul.f32 %v283, %v5317
        %v7112 = vmul.f32 %v284, %v5321
        %v7113 = vmul.f32 %v285, %v5325
        %v7114 = vmul.f32 %v286, %v5329
        %v7115 = vmul.f32 %v287, %v5333
        %v7116 = vmul.f32 %v288, %v5337
        %v7117 = vmul.f32 %v289, %v5341
        %v7118 = vmul.f32 %v290, %v5345
        %v7119 = vmul.f32 %v291, %v5349
        %v7120 = vmul.f32 %v292, %v5353
        %v7121 = vmul.f32 %v293, %v5357
        %v7122 = vmul.f32 %v294, %v5361
        %v7123 = vmul.f32 %v295, %v5365
        %v7124 = vmul.f32 %v296, %v5369
        %v7125 = vmul.f32 %v297, %v5373
        %v7126 = vmul.f32 %v298, %v5377
        %v7127 = vmul.f32 %v299, %v5381
        %v7128 = vmul.f32 %v300, %v5385
        %v7129 = vmul.f32 %v301, %v5389
        %v7130 = vmul.f32 %v302, %v5393
        %v7131 = vmul.f32 %v303, %v5397
        %v7132 = vmul.f32 %v304, %v5401
        %v7133 = vmul.f32 %v305, %v5405
        %v7134 = vmul.f32 %v306, %v5409
        %v7135 = vmul.f32 %v307, %v5413
        %v7136 = vmul.f32 %v308, %v5417
        %v7137 = vmul.f32 %v309, %v5421
        %v7138 = vmul.f32 %v310, %v5425
        %v7139 = vmul.f32 %v311, %v5429
        %v7140 = vmul.f32 %v312, %v5433
        %v7141 = vmul.f32 %v313, %v5437
        %v7142 = vmul.f32 %v314, %v5441
        %v7143 = vmul.f32 %v315, %v5445
        %v7144 = vmul.f32 %v316, %v5449
        %v7145 = vmul.f32 %v317, %v5453
        %v7146 = vmul.f32 %v318, %v5457
        %v7147 = vmul.f32 %v319, %v5461
        %v7148 = vmul.f32 %v320, %v5465
        %v7149 = vmul.f32 %v321, %v5469
        %v7150 = vmul.f32 %v322, %v5473
        %v7151 = vmul.f32 %v323, %v5477
        %v7152 = vmul.f32 %v324, %v5481
        %v7153 = vmul.f32 %v325, %v5485
        %v7154 = vmul.f32 %v326, %v5489
        %v7155 = vmul.f32 %v327, %v5493
        %v7156 = vmul.f32 %v328, %v5497
        %v7157 = vmul.f32 %v329, %v5501
        %v7158 = vmul.f32 %v330, %v5505
        %v7159 = vmul.f32 %v331, %v5509
        %v7160 = vmul.f32 %v332, %v5513
        %v7161 = vmul.f32 %v333, %v5517
        %v7162 = vmul.f32 %v334, %v5521
        %v7163 = vmul.f32 %v335, %v5525
        %v7164 = vmul.f32 %v336, %v5529
        %v7165 = vmul.f32 %v337, %v5533
        %v7166 = vmul.f32 %v338, %v5537
        %v7167 = vmul.f32 %v339, %v5541
        %v7168 = vmul.f32 %v340, %v5545
        %v7169 = vmul.f32 %v341, %v5549
        %v7170 = vmul.f32 %v342, %v5553
        %v7171 = vmul.f32 %v343, %v5557
        %v7172 = vmul.f32 %v344, %v5561
        %v7173 = vmul.f32 %v345, %v5565
        %v7174 = vmul.f32 %v346, %v5569
        %v7175 = vmul.f32 %v347, %v5573
        %v7176 = vmul.f32 %v348, %v5577
        %v7177 = vmul.f32 %v349, %v5581
        %v7178 = vmul.f32 %v350, %v5585
        %v7179 = vmul.f32 %v351, %v5589
        %v7180 = vmul.f32 %v352, %v5593
        %v7181 = vmul.f32 %v353, %v5597
        %v7182 = vmul.f32 %v354, %v5601
        %v7183 = vmul.f32 %v355, %v5605
        %v7184 = vmul.f32 %v356, %v5609
        %v7185 = vmul.f32 %v357, %v5613
        %v7186 = vmul.f32 %v358, %v5617
        %v7187 = vmul.f32 %v359, %v5621
        %v7188 = vmul.f32 %v360, %v5625
        %v7189 = vmul.f32 %v361, %v5629
        %v7190 = vmul.f32 %v362, %v5633
        %v7191 = vmul.f32 %v363, %v5637
        %v7192 = vmul.f32 %v364, %v5641
        %v7193 = vmul.f32 %v365, %v5645
        %v7194 = vmul.f32 %v366, %v5649
        %v7195 = vmul.f32 %v367, %v5653
        %v7196 = vmul.f32 %v368, %v5657
        %v7197 = vmul.f32 %v369, %v5661
        %v7198 = vmul.f32 %v370, %v5665
        %v7199 = vmul.f32 %v371, %v5669
        %v7200 = vmul.f32 %v372, %v5673
        %v7201 = vmul.f32 %v373, %v5677
        %v7202 = vmul.f32 %v374, %v5681
        %v7203 = vmul.f32 %v375, %v5685
        %v7204 = vmul.f32 %v376, %v5689
        %v7205 = vmul.f32 %v377, %v5693
        %v7206 = vmul.f32 %v378, %v5697
        %v7207 = vmul.f32 %v379, %v5701
        %v7208 = vmul.f32 %v380, %v5705
        %v7209 = vmul.f32 %v381, %v5709
        %v7210 = vmul.f32 %v382, %v5713
        %v7211 = vmul.f32 %v383, %v5717
        %v7212 = vmul.f32 %v384, %v5721
        %v7213 = vmul.f32 %v385, %v5725
        %v7214 = vmul.f32 %v386, %v5729
        %v7215 = vmul.f32 %v387, %v5733
        %v7216 = vmul.f32 %v388, %v5737
        %v7217 = vmul.f32 %v389, %v5741
        %v7218 = vmul.f32 %v390, %v5745
        %v7219 = vmul.f32 %v391, %v5749
        %v7220 = vmul.f32 %v392, %v5753
        %v7221 = vmul.f32 %v393, %v5757
        %v7222 = vmul.f32 %v394, %v5761
        %v7223 = vmul.f32 %v395, %v5765
        %v7224 = vmul.f32 %v396, %v5769
        %v7225 = vmul.f32 %v397, %v5773
        %v7226 = vmul.f32 %v398, %v5777
        %v7227 = vmul.f32 %v399, %v5781
        %v7228 = vmul.f32 %v400, %v5785
        %v7229 = vmul.f32 %v401, %v5789
        %v7230 = vmul.f32 %v402, %v5793
        %v7231 = vmul.f32 %v403, %v5797
        %v7232 = vmul.f32 %v404, %v5801
        %v7233 = vmul.f32 %v405, %v5805
        %v7234 = vmul.f32 %v406, %v5809
        %v7235 = vmul.f32 %v407, %v5813
        %v7236 = vmul.f32 %v408, %v5817
        %v7237 = vmul.f32 %v409, %v5821
        %v7238 = vmul.f32 %v410, %v5825
        %v7239 = vmul.f32 %v411, %v5829
        %v7240 = vmul.f32 %v412, %v5833
        %v7241 = vmul.f32 %v413, %v5837
        %v7242 = vmul.f32 %v414, %v5841
        %v7243 = vmul.f32 %v415, %v5845
        %v7244 = vmul.f32 %v416, %v5849
        %v7245 = vmul.f32 %v417, %v5853
        %v7246 = vmul.f32 %v418, %v5857
        %v7247 = vmul.f32 %v419, %v5861
        %v7248 = vmul.f32 %v420, %v5865
        %v7249 = vmul.f32 %v421, %v5869
        %v7250 = vmul.f32 %v422, %v5873
        %v7251 = vmul.f32 %v423, %v5877
        %v7252 = vmul.f32 %v424, %v5881
        %v7253 = vmul.f32 %v425, %v5885
        %v7254 = vmul.f32 %v426, %v5889
        %v7255 = vmul.f32 %v427, %v5893
        %v7256 = vmul.f32 %v428, %v5897
        %v7257 = vmul.f32 %v429, %v5901
        %v7258 = vmul.f32 %v430, %v5905
        %v7259 = vmul.f32 %v431, %v5909
        %v7260 = vmul.f32 %v432, %v5913
        %v7261 = vmul.f32 %v433, %v5917
        %v7262 = vmul.f32 %v434, %v5921
        %v7263 = vmul.f32 %v435, %v5925
        %v7264 = vmul.f32 %v436, %v5929
        %v7265 = vmul.f32 %v437, %v5933
        %v7266 = vmul.f32 %v438, %v5937
        %v7267 = vmul.f32 %v439, %v5941
        %v7268 = vmul.f32 %v440, %v5945
        %v7269 = vmul.f32 %v441, %v5949
        %v7270 = vmul.f32 %v442, %v5953
        %v7271 = vmul.f32 %v443, %v5957
        %v7272 = vmul.f32 %v444, %v5961
        %v7273 = vmul.f32 %v445, %v5965
        %v7274 = vmul.f32 %v446, %v5969
        %v7275 = vmul.f32 %v447, %v5973
        %v7276 = vmul.f32 %v448, %v5977
        %v7277 = vmul.f32 %v449, %v5981
        %v7278 = vmul.f32 %v450, %v5985
        %v7279 = vmul.f32 %v451, %v5989
        %v7280 = vmul.f32 %v452, %v5993
        %v7281 = vmul.f32 %v453, %v5997
        %v7282 = vmul.f32 %v454, %v6001
        %v7283 = vmul.f32 %v455, %v6005
        %v7284 = vmul.f32 %v456, %v6009
        %v7285 = vmul.f32 %v457, %v6013
        %v7286 = vmul.f32 %v458, %v6017
        %v7287 = vmul.f32 %v459, %v6021
        %v7288 = vmul.f32 %v460, %v6025
        %v7289 = vmul.f32 %v461, %v6029
        %v7290 = vmul.f32 %v462, %v6033
        %v7291 = vmul.f32 %v463, %v6037
        %v7292 = vmul.f32 %v464, %v6041
        %v7293 = vmul.f32 %v465, %v6045
        %v7294 = vmul.f32 %v466, %v6049
        %v7295 = vmul.f32 %v467, %v6053
        %v7296 = vmul.f32 %v468, %v6057
        %v7297 = vmul.f32 %v469, %v6061
        %v7298 = vmul.f32 %v470, %v6065
        %v7299 = vmul.f32 %v471, %v6069
        %v7300 = vmul.f32 %v472, %v6073
        %v7301 = vmul.f32 %v473, %v6077
        %v7302 = vmul.f32 %v474, %v6081
        %v7303 = vmul.f32 %v475, %v6085
        %v7304 = vmul.f32 %v476, %v6089
        %v7305 = vmul.f32 %v477, %v6093
        %v7306 = vmul.f32 %v478, %v6097
        %v7307 = vmul.f32 %v479, %v6101
        %v7308 = vmul.f32 %v480, %v6105
        %v7309 = vmul.f32 %v481, %v6109
        %v7310 = vmul.f32 %v482, %v6113
        %v7311 = vmul.f32 %v483, %v6117
        %v7312 = vmul.f32 %v484, %v6121
        %v7313 = vmul.f32 %v485, %v6125
        %v7314 = vmul.f32 %v486, %v6129
        %v7315 = vmul.f32 %v487, %v6133
        %v7316 = vmul.f32 %v488, %v6137
        %v7317 = vmul.f32 %v489, %v6141
        %v7318 = vmul.f32 %v490, %v6145
        %v7319 = vmul.f32 %v491, %v6149
        %v7320 = vmul.f32 %v492, %v6153
        %v7321 = vmul.f32 %v493, %v6157
        %v7322 = vmul.f32 %v494, %v6161
        %v7323 = vmul.f32 %v495, %v6165
        %v7324 = vmul.f32 %v496, %v6169
        %v7325 = vmul.f32 %v497, %v6173
        %v7326 = vmul.f32 %v498, %v6177
        %v7327 = vmul.f32 %v499, %v6181
        %v7328 = vmul.f32 %v500, %v6185
        %v7329 = vmul.f32 %v501, %v6189
        %v7330 = vmul.f32 %v502, %v6193
        %v7331 = vmul.f32 %v503, %v6197
        %v7332 = vmul.f32 %v504, %v6201
        %v7333 = vmul.f32 %v505, %v6205
        %v7334 = vmul.f32 %v506, %v6209
        %v7335 = vmul.f32 %v507, %v6213
        %v7336 = vmul.f32 %v508, %v6217
        %v7337 = vmul.f32 %v509, %v6221
        %v7338 = vmul.f32 %v510, %v6225
        %v7339 = vmul.f32 %v511, %v6229
        %v7340 = vmul.f32 %v512, %v6233
        %v7341 = vmul.f32 %v513, %v6237
        %v7342 = vmul.f32 %v514, %v6241
        %v7343 = vmul.f32 %v515, %v6245
        %v7344 = vmul.f32 %v516, %v6249
        %v7345 = vmul.f32 %v517, %v6253
        %v7346 = vmul.f32 %v518, %v6257
        %v7347 = vmul.f32 %v519, %v6261
        %v7348 = vmul.f32 %v520, %v6265
        %v7349 = vmul.f32 %v521, %v6269
        %v7350 = vmul.f32 %v522, %v6273
        %v7351 = vmul.f32 %v523, %v6277
        %v7352 = vmul.f32 %v524, %v6281
        %v7353 = vmul.f32 %v525, %v6285
        %v7354 = vmul.f32 %v526, %v6289
        %v7355 = vmul.f32 %v527, %v6293
        %v7356 = vmul.f32 %v528, %v6297
        %v7357 = vmul.f32 %v529, %v6301
        %v7358 = vmul.f32 %v530, %v6305
        %v7359 = vmul.f32 %v531, %v6309
        %v7360 = vmul.f32 %v532, %v6313
        %v7361 = vmul.f32 %v533, %v6317
        %v7362 = vmul.f32 %v534, %v6321
        %v7363 = vmul.f32 %v535, %v6325
        %v7364 = vmul.f32 %v536, %v6329
        %v7365 = vmul.f32 %v537, %v6333
        %v7366 = vmul.f32 %v538, %v6337
        %v7367 = vmul.f32 %v539, %v6341
        %v7368 = vmul.f32 %v540, %v6345
        %v7369 = vmul.f32 %v541, %v6349
        %v7370 = vmul.f32 %v542, %v6353
        %v7371 = vmul.f32 %v543, %v6357
        %v7372 = vmul.f32 %v544, %v6361
        %v7373 = vmul.f32 %v545, %v6365
        %v7374 = vmul.f32 %v546, %v6369
        %v7375 = vmul.f32 %v547, %v6373
        %v7376 = vmul.f32 %v548, %v6377
        %v7377 = vmul.f32 %v549, %v6381
        %v7378 = vmul.f32 %v550, %v6385
        %v7379 = vmul.f32 %v551, %v6389
        %v7380 = vmul.f32 %v552, %v6393
        %v7381 = vmul.f32 %v553, %v6397
        %v7382 = vmul.f32 %v554, %v6401
        %v7383 = vmul.f32 %v555, %v6405
        %v7384 = vmul.f32 %v556, %v6409
        %v7385 = vmul.f32 %v557, %v6413
        %v7386 = vmul.f32 %v558, %v6417
        %v7387 = vmul.f32 %v559, %v6421
        %v7388 = vmul.f32 %v560, %v6425
        %v7389 = vmul.f32 %v561, %v6429
        %v7390 = vmul.f32 %v562, %v6433
        %v7391 = vmul.f32 %v563, %v6437
        %v7392 = vmul.f32 %v564, %v6441
        %v7393 = vmul.f32 %v565, %v6445
        %v7394 = vmul.f32 %v566, %v6449
        %v7395 = vmul.f32 %v567, %v6453
        %v7396 = vmul.f32 %v568, %v6457
        %v7397 = vmul.f32 %v569, %v6461
        %v7398 = vmul.f32 %v570, %v6465
        %v7399 = vmul.f32 %v571, %v6469
        %v7400 = vmul.f32 %v572, %v6473
        %v7401 = vmul.f32 %v573, %v6477
        %v7402 = vmul.f32 %v574, %v6481
        %v7403 = vmul.f32 %v575, %v6485
        %v7404 = vmul.f32 %v576, %v6489
        %v7405 = vmul.f32 %v577, %v6493
        %v7406 = vmul.f32 %v578, %v6497
        %v7407 = vmul.f32 %v579, %v6501
        %v7408 = vmul.f32 %v580, %v6505
        %v7409 = vmul.f32 %v581, %v6509
        %v7410 = vmul.f32 %v582, %v6513
        %v7411 = vmul.f32 %v583, %v6517
        %v7412 = vmul.f32 %v584, %v6521
        %v7413 = vmul.f32 %v585, %v6525
        %v7414 = vmul.f32 %v586, %v6529
        %v7415 = vmul.f32 %v587, %v6533
        %v7416 = vmul.f32 %v588, %v6537
        %v7417 = vmul.f32 %v589, %v6541
        %v7418 = vmul.f32 %v590, %v6545
        %v7419 = vmul.f32 %v591, %v6549
        %v7420 = vmul.f32 %v592, %v6553
        %v7421 = vmul.f32 %v593, %v6557
        %v7422 = vmul.f32 %v594, %v6561
        %v7423 = vmul.f32 %v595, %v6565
        %v7424 = vmul.f32 %v596, %v6569
        %v7425 = vmul.f32 %v597, %v6573
        %v7426 = vmul.f32 %v598, %v6577
        %v7427 = vmul.f32 %v599, %v6581
        %v7428 = vmul.f32 %v600, %v6585
        %v7429 = vmul.f32 %v601, %v6589
        %v7430 = vmul.f32 %v602, %v6593
        %v7431 = vmul.f32 %v603, %v6597
        %v7432 = vmul.f32 %v604, %v6601
        %v7433 = vmul.f32 %v605, %v6605
        %v7434 = vmul.f32 %v606, %v6609
        %v7435 = vmul.f32 %v607, %v6613
        %v7436 = vmul.f32 %v608, %v6617
        %v7437 = vmul.f32 %v609, %v6621
        %v7438 = vmul.f32 %v610, %v6625
        %v7439 = vmul.f32 %v611, %v6629
        %v7440 = vmul.f32 %v612, %v6633
        %v7441 = vmul.f32 %v613, %v6637
        %v7442 = vmul.f32 %v614, %v6641
        %v7443 = vmul.f32 %v615, %v6645
        %v7444 = vmul.f32 %v616, %v6649
        %v7445 = vmul.f32 %v617, %v6653
        %v7446 = vmul.f32 %v618, %v6657
        %v7447 = vmul.f32 %v619, %v6661
        %v7448 = vmul.f32 %v620, %v6665
        %v7449 = vmul.f32 %v621, %v6669
        %v7450 = vmul.f32 %v622, %v6673
        %v7451 = vmul.f32 %v623, %v6677
        %v7452 = vmul.f32 %v624, %v6681
        %v7453 = vmul.f32 %v625, %v6685
        %v7454 = vmul.f32 %v626, %v5153
        %v7455 = vmul.f32 %v627, %v5157
        %v7456 = vmul.f32 %v628, %v5161
        %v7457 = vmul.f32 %v629, %v5165
        %v7458 = vmul.f32 %v630, %v5169
        %v7459 = vmul.f32 %v631, %v5173
        %v7460 = vmul.f32 %v632, %v5177
        %v7461 = vmul.f32 %v633, %v5181
        %v7462 = vmul.f32 %v634, %v5185
        %v7463 = vmul.f32 %v635, %v5189
        %v7464 = vmul.f32 %v636, %v5193
        %v7465 = vmul.f32 %v637, %v5197
        %v7466 = vmul.f32 %v638, %v5201
        %v7467 = vmul.f32 %v639, %v5205
        %v7468 = vmul.f32 %v640, %v5209
        %v7469 = vmul.f32 %v641, %v5213
        %v7470 = vmul.f32 %v642, %v5217
        %v7471 = vmul.f32 %v643, %v5221
        %v7472 = vmul.f32 %v644, %v5225
        %v7473 = vmul.f32 %v645, %v5229
        %v7474 = vmul.f32 %v646, %v5233
        %v7475 = vmul.f32 %v647, %v5237
        %v7476 = vmul.f32 %v648, %v5241
        %v7477 = vmul.f32 %v649, %v5245
        %v7478 = vmul.f32 %v650, %v5249
        %v7479 = vmul.f32 %v651, %v5253
        %v7480 = vmul.f32 %v652, %v5257
        %v7481 = vmul.f32 %v653, %v5261
        %v7482 = vmul.f32 %v654, %v5265
        %v7483 = vmul.f32 %v655, %v5269
        %v7484 = vmul.f32 %v656, %v5273
        %v7485 = vmul.f32 %v657, %v5277
        %v7486 = vmul.f32 %v658, %v5281
        %v7487 = vmul.f32 %v659, %v5285
        %v7488 = vmul.f32 %v660, %v5289
        %v7489 = vmul.f32 %v661, %v5293
        %v7490 = vmul.f32 %v662, %v5297
        %v7491 = vmul.f32 %v663, %v5301
        %v7492 = vmul.f32 %v664, %v5305
        %v7493 = vmul.f32 %v665, %v5309
        %v7494 = vmul.f32 %v666, %v5313
        %v7495 = vmul.f32 %v667, %v5317
        %v7496 = vmul.f32 %v668, %v5321
        %v7497 = vmul.f32 %v669, %v5325
        %v7498 = vmul.f32 %v670, %v5329
        %v7499 = vmul.f32 %v671, %v5333
        %v7500 = vmul.f32 %v672, %v5337
        %v7501 = vmul.f32 %v673, %v5341
        %v7502 = vmul.f32 %v674, %v5345
        %v7503 = vmul.f32 %v675, %v5349
        %v7504 = vmul.f32 %v676, %v5353
        %v7505 = vmul.f32 %v677, %v5357
        %v7506 = vmul.f32 %v678, %v5361
        %v7507 = vmul.f32 %v679, %v5365
        %v7508 = vmul.f32 %v680, %v5369
        %v7509 = vmul.f32 %v681, %v5373
        %v7510 = vmul.f32 %v682, %v5377
        %v7511 = vmul.f32 %v683, %v5381
        %v7512 = vmul.f32 %v684, %v5385
        %v7513 = vmul.f32 %v685, %v5389
        %v7514 = vmul.f32 %v686, %v5393
        %v7515 = vmul.f32 %v687, %v5397
        %v7516 = vmul.f32 %v688, %v5401
        %v7517 = vmul.f32 %v689, %v5405
        %v7518 = vmul.f32 %v690, %v5409
        %v7519 = vmul.f32 %v691, %v5413
        %v7520 = vmul.f32 %v692, %v5417
        %v7521 = vmul.f32 %v693, %v5421
        %v7522 = vmul.f32 %v694, %v5425
        %v7523 = vmul.f32 %v695, %v5429
        %v7524 = vmul.f32 %v696, %v5433
        %v7525 = vmul.f32 %v697, %v5437
        %v7526 = vmul.f32 %v698, %v5441
        %v7527 = vmul.f32 %v699, %v5445
        %v7528 = vmul.f32 %v700, %v5449
        %v7529 = vmul.f32 %v701, %v5453
        %v7530 = vmul.f32 %v702, %v5457
        %v7531 = vmul.f32 %v703, %v5461
        %v7532 = vmul.f32 %v704, %v5465
        %v7533 = vmul.f32 %v705, %v5469
        %v7534 = vmul.f32 %v706, %v5473
        %v7535 = vmul.f32 %v707, %v5477
        %v7536 = vmul.f32 %v708, %v5481
        %v7537 = vmul.f32 %v709, %v5485
        %v7538 = vmul.f32 %v710, %v5489
        %v7539 = vmul.f32 %v711, %v5493
        %v7540 = vmul.f32 %v712, %v5497
        %v7541 = vmul.f32 %v713, %v5501
        %v7542 = vmul.f32 %v714, %v5505
        %v7543 = vmul.f32 %v715, %v5509
        %v7544 = vmul.f32 %v716, %v5513
        %v7545 = vmul.f32 %v717, %v5517
        %v7546 = vmul.f32 %v718, %v5521
        %v7547 = vmul.f32 %v719, %v5525
        %v7548 = vmul.f32 %v720, %v5529
        %v7549 = vmul.f32 %v721, %v5533
        %v7550 = vmul.f32 %v722, %v5537
        %v7551 = vmul.f32 %v723, %v5541
        %v7552 = vmul.f32 %v724, %v5545
        %v7553 = vmul.f32 %v725, %v5549
        %v7554 = vmul.f32 %v726, %v5553
        %v7555 = vmul.f32 %v727, %v5557
        %v7556 = vmul.f32 %v728, %v5561
        %v7557 = vmul.f32 %v729, %v5565
        %v7558 = vmul.f32 %v730, %v5569
        %v7559 = vmul.f32 %v731, %v5573
        %v7560 = vmul.f32 %v732, %v5577
        %v7561 = vmul.f32 %v733, %v5581
        %v7562 = vmul.f32 %v734, %v5585
        %v7563 = vmul.f32 %v735, %v5589
        %v7564 = vmul.f32 %v736, %v5593
        %v7565 = vmul.f32 %v737, %v5597
        %v7566 = vmul.f32 %v738, %v5601
        %v7567 = vmul.f32 %v739, %v5605
        %v7568 = vmul.f32 %v740, %v5609
        %v7569 = vmul.f32 %v741, %v5613
        %v7570 = vmul.f32 %v742, %v5617
        %v7571 = vmul.f32 %v743, %v5621
        %v7572 = vmul.f32 %v744, %v5625
        %v7573 = vmul.f32 %v745, %v5629
        %v7574 = vmul.f32 %v746, %v5633
        %v7575 = vmul.f32 %v747, %v5637
        %v7576 = vmul.f32 %v748, %v5641
        %v7577 = vmul.f32 %v749, %v5645
        %v7578 = vmul.f32 %v750, %v5649
        %v7579 = vmul.f32 %v751, %v5653
        %v7580 = vmul.f32 %v752, %v5657
        %v7581 = vmul.f32 %v753, %v5661
        %v7582 = vmul.f32 %v754, %v5665
        %v7583 = vmul.f32 %v755, %v5669
        %v7584 = vmul.f32 %v756, %v5673
        %v7585 = vmul.f32 %v757, %v5677
        %v7586 = vmul.f32 %v758, %v5681
        %v7587 = vmul.f32 %v759, %v5685
        %v7588 = vmul.f32 %v760, %v5689
        %v7589 = vmul.f32 %v761, %v5693
        %v7590 = vmul.f32 %v762, %v5697
        %v7591 = vmul.f32 %v763, %v5701
        %v7592 = vmul.f32 %v764, %v5705
        %v7593 = vmul.f32 %v765, %v5709
        %v7594 = vmul.f32 %v766, %v5713
        %v7595 = vmul.f32 %v767, %v5717
        %v7596 = vmul.f32 %v768, %v5721
        %v7597 = vmul.f32 %v769, %v5725
        %v7598 = vmul.f32 %v770, %v5729
        %v7599 = vmul.f32 %v771, %v5733
        %v7600 = vmul.f32 %v772, %v5737
        %v7601 = vmul.f32 %v773, %v5741
        %v7602 = vmul.f32 %v774, %v5745
        %v7603 = vmul.f32 %v775, %v5749
        %v7604 = vmul.f32 %v776, %v5753
        %v7605 = vmul.f32 %v777, %v5757
        %v7606 = vmul.f32 %v778, %v5761
        %v7607 = vmul.f32 %v779, %v5765
        %v7608 = vmul.f32 %v780, %v5769
        %v7609 = vmul.f32 %v781, %v5773
        %v7610 = vmul.f32 %v782, %v5777
        %v7611 = vmul.f32 %v783, %v5781
        %v7612 = vmul.f32 %v784, %v5785
        %v7613 = vmul.f32 %v785, %v5789
        %v7614 = vmul.f32 %v786, %v5793
        %v7615 = vmul.f32 %v787, %v5797
        %v7616 = vmul.f32 %v788, %v5801
        %v7617 = vmul.f32 %v789, %v5805
        %v7618 = vmul.f32 %v790, %v5809
        %v7619 = vmul.f32 %v791, %v5813
        %v7620 = vmul.f32 %v792, %v5817
        %v7621 = vmul.f32 %v793, %v5821
        %v7622 = vmul.f32 %v794, %v5825
        %v7623 = vmul.f32 %v795, %v5829
        %v7624 = vmul.f32 %v796, %v5833
        %v7625 = vmul.f32 %v797, %v5837
        %v7626 = vmul.f32 %v798, %v5841
        %v7627 = vmul.f32 %v799, %v5845
        %v7628 = vmul.f32 %v800, %v5849
        %v7629 = vmul.f32 %v801, %v5853
        %v7630 = vmul.f32 %v802, %v5857
        %v7631 = vmul.f32 %v803, %v5861
        %v7632 = vmul.f32 %v804, %v5865
        %v7633 = vmul.f32 %v805, %v5869
        %v7634 = vmul.f32 %v806, %v5873
        %v7635 = vmul.f32 %v807, %v5877
        %v7636 = vmul.f32 %v808, %v5881
        %v7637 = vmul.f32 %v809, %v5885
        %v7638 = vmul.f32 %v810, %v5889
        %v7639 = vmul.f32 %v811, %v5893
        %v7640 = vmul.f32 %v812, %v5897
        %v7641 = vmul.f32 %v813, %v5901
        %v7642 = vmul.f32 %v814, %v5905
        %v7643 = vmul.f32 %v815, %v5909
        %v7644 = vmul.f32 %v816, %v5913
        %v7645 = vmul.f32 %v817, %v5917
        %v7646 = vmul.f32 %v818, %v5921
        %v7647 = vmul.f32 %v819, %v5925
        %v7648 = vmul.f32 %v820, %v5929
        %v7649 = vmul.f32 %v821, %v5933
        %v7650 = vmul.f32 %v822, %v5937
        %v7651 = vmul.f32 %v823, %v5941
        %v7652 = vmul.f32 %v824, %v5945
        %v7653 = vmul.f32 %v825, %v5949
        %v7654 = vmul.f32 %v826, %v5953
        %v7655 = vmul.f32 %v827, %v5957
        %v7656 = vmul.f32 %v828, %v5961
        %v7657 = vmul.f32 %v829, %v5965
        %v7658 = vmul.f32 %v830, %v5969
        %v7659 = vmul.f32 %v831, %v5973
        %v7660 = vmul.f32 %v832, %v5977
        %v7661 = vmul.f32 %v833, %v5981
        %v7662 = vmul.f32 %v834, %v5985
        %v7663 = vmul.f32 %v835, %v5989
        %v7664 = vmul.f32 %v836, %v5993
        %v7665 = vmul.f32 %v837, %v5997
        %v7666 = vmul.f32 %v838, %v6001
        %v7667 = vmul.f32 %v839, %v6005
        %v7668 = vmul.f32 %v840, %v6009
        %v7669 = vmul.f32 %v841, %v6013
        %v7670 = vmul.f32 %v842, %v6017
        %v7671 = vmul.f32 %v843, %v6021
        %v7672 = vmul.f32 %v844, %v6025
        %v7673 = vmul.f32 %v845, %v6029
        %v7674 = vmul.f32 %v846, %v6033
        %v7675 = vmul.f32 %v847, %v6037
        %v7676 = vmul.f32 %v848, %v6041
        %v7677 = vmul.f32 %v849, %v6045
        %v7678 = vmul.f32 %v850, %v6049
        %v7679 = vmul.f32 %v851, %v6053
        %v7680 = vmul.f32 %v852, %v6057
        %v7681 = vmul.f32 %v853, %v6061
        %v7682 = vmul.f32 %v854, %v6065
        %v7683 = vmul.f32 %v855, %v6069
        %v7684 = vmul.f32 %v856, %v6073
        %v7685 = vmul.f32 %v857, %v6077
        %v7686 = vmul.f32 %v858, %v6081
        %v7687 = vmul.f32 %v859, %v6085
        %v7688 = vmul.f32 %v860, %v6089
        %v7689 = vmul.f32 %v861, %v6093
        %v7690 = vmul.f32 %v862, %v6097
        %v7691 = vmul.f32 %v863, %v6101
        %v7692 = vmul.f32 %v864, %v6105
        %v7693 = vmul.f32 %v865, %v6109
        %v7694 = vmul.f32 %v866, %v6113
        %v7695 = vmul.f32 %v867, %v6117
        %v7696 = vmul.f32 %v868, %v6121
        %v7697 = vmul.f32 %v869, %v6125
        %v7698 = vmul.f32 %v870, %v6129
        %v7699 = vmul.f32 %v871, %v6133
        %v7700 = vmul.f32 %v872, %v6137
        %v7701 = vmul.f32 %v873, %v6141
        %v7702 = vmul.f32 %v874, %v6145
        %v7703 = vmul.f32 %v875, %v6149
        %v7704 = vmul.f32 %v876, %v6153
        %v7705 = vmul.f32 %v877, %v6157
        %v7706 = vmul.f32 %v878, %v6161
        %v7707 = vmul.f32 %v879, %v6165
        %v7708 = vmul.f32 %v880, %v6169
        %v7709 = vmul.f32 %v881, %v6173
        %v7710 = vmul.f32 %v882, %v6177
        %v7711 = vmul.f32 %v883, %v6181
        %v7712 = vmul.f32 %v884, %v6185
        %v7713 = vmul.f32 %v885, %v6189
        %v7714 = vmul.f32 %v886, %v6193
        %v7715 = vmul.f32 %v887, %v6197
        %v7716 = vmul.f32 %v888, %v6201
        %v7717 = vmul.f32 %v889, %v6205
        %v7718 = vmul.f32 %v890, %v6209
        %v7719 = vmul.f32 %v891, %v6213
        %v7720 = vmul.f32 %v892, %v6217
        %v7721 = vmul.f32 %v893, %v6221
        %v7722 = vmul.f32 %v894, %v6225
        %v7723 = vmul.f32 %v895, %v6229
        %v7724 = vmul.f32 %v896, %v6233
        %v7725 = vmul.f32 %v897, %v6237
        %v7726 = vmul.f32 %v898, %v6241
        %v7727 = vmul.f32 %v899, %v6245
        %v7728 = vmul.f32 %v900, %v6249
        %v7729 = vmul.f32 %v901, %v6253
        %v7730 = vmul.f32 %v902, %v6257
        %v7731 = vmul.f32 %v903, %v6261
        %v7732 = vmul.f32 %v904, %v6265
        %v7733 = vmul.f32 %v905, %v6269
        %v7734 = vmul.f32 %v906, %v6273
        %v7735 = vmul.f32 %v907, %v6277
        %v7736 = vmul.f32 %v908, %v6281
        %v7737 = vmul.f32 %v909, %v6285
        %v7738 = vmul.f32 %v910, %v6289
        %v7739 = vmul.f32 %v911, %v6293
        %v7740 = vmul.f32 %v912, %v6297
        %v7741 = vmul.f32 %v913, %v6301
        %v7742 = vmul.f32 %v914, %v6305
        %v7743 = vmul.f32 %v915, %v6309
        %v7744 = vmul.f32 %v916, %v6313
        %v7745 = vmul.f32 %v917, %v6317
        %v7746 = vmul.f32 %v918, %v6321
        %v7747 = vmul.f32 %v919, %v6325
        %v7748 = vmul.f32 %v920, %v6329
        %v7749 = vmul.f32 %v921, %v6333
        %v7750 = vmul.f32 %v922, %v6337
        %v7751 = vmul.f32 %v923, %v6341
        %v7752 = vmul.f32 %v924, %v6345
        %v7753 = vmul.f32 %v925, %v6349
        %v7754 = vmul.f32 %v926, %v6353
        %v7755 = vmul.f32 %v927, %v6357
        %v7756 = vmul.f32 %v928, %v6361
        %v7757 = vmul.f32 %v929, %v6365
        %v7758 = vmul.f32 %v930, %v6369
        %v7759 = vmul.f32 %v931, %v6373
        %v7760 = vmul.f32 %v932, %v6377
        %v7761 = vmul.f32 %v933, %v6381
        %v7762 = vmul.f32 %v934, %v6385
        %v7763 = vmul.f32 %v935, %v6389
        %v7764 = vmul.f32 %v936, %v6393
        %v7765 = vmul.f32 %v937, %v6397
        %v7766 = vmul.f32 %v938, %v6401
        %v7767 = vmul.f32 %v939, %v6405
        %v7768 = vmul.f32 %v940, %v6409
        %v7769 = vmul.f32 %v941, %v6413
        %v7770 = vmul.f32 %v942, %v6417
        %v7771 = vmul.f32 %v943, %v6421
        %v7772 = vmul.f32 %v944, %v6425
        %v7773 = vmul.f32 %v945, %v6429
        %v7774 = vmul.f32 %v946, %v6433
        %v7775 = vmul.f32 %v947, %v6437
        %v7776 = vmul.f32 %v948, %v6441
        %v7777 = vmul.f32 %v949, %v6445
        %v7778 = vmul.f32 %v950, %v6449
        %v7779 = vmul.f32 %v951, %v6453
        %v7780 = vmul.f32 %v952, %v6457
        %v7781 = vmul.f32 %v953, %v6461
        %v7782 = vmul.f32 %v954, %v6465
        %v7783 = vmul.f32 %v955, %v6469
        %v7784 = vmul.f32 %v956, %v6473
        %v7785 = vmul.f32 %v957, %v6477
        %v7786 = vmul.f32 %v958, %v6481
        %v7787 = vmul.f32 %v959, %v6485
        %v7788 = vmul.f32 %v960, %v6489
        %v7789 = vmul.f32 %v961, %v6493
        %v7790 = vmul.f32 %v962, %v6497
        %v7791 = vmul.f32 %v963, %v6501
        %v7792 = vmul.f32 %v964, %v6505
        %v7793 = vmul.f32 %v965, %v6509
        %v7794 = vmul.f32 %v966, %v6513
        %v7795 = vmul.f32 %v967, %v6517
        %v7796 = vmul.f32 %v968, %v6521
        %v7797 = vmul.f32 %v969, %v6525
        %v7798 = vmul.f32 %v970, %v6529
        %v7799 = vmul.f32 %v971, %v6533
        %v7800 = vmul.f32 %v972, %v6537
        %v7801 = vmul.f32 %v973, %v6541
        %v7802 = vmul.f32 %v974, %v6545
        %v7803 = vmul.f32 %v975, %v6549
        %v7804 = vmul.f32 %v976, %v6553
        %v7805 = vmul.f32 %v977, %v6557
        %v7806 = vmul.f32 %v978, %v6561
        %v7807 = vmul.f32 %v979, %v6565
        %v7808 = vmul.f32 %v980, %v6569
        %v7809 = vmul.f32 %v981, %v6573
        %v7810 = vmul.f32 %v982, %v6577
        %v7811 = vmul.f32 %v983, %v6581
        %v7812 = vmul.f32 %v984, %v6585
        %v7813 = vmul.f32 %v985, %v6589
        %v7814 = vmul.f32 %v986, %v6593
        %v7815 = vmul.f32 %v987, %v6597
        %v7816 = vmul.f32 %v988, %v6601
        %v7817 = vmul.f32 %v989, %v6605
        %v7818 = vmul.f32 %v990, %v6609
        %v7819 = vmul.f32 %v991, %v6613
        %v7820 = vmul.f32 %v992, %v6617
        %v7821 = vmul.f32 %v993, %v6621
        %v7822 = vmul.f32 %v994, %v6625
        %v7823 = vmul.f32 %v995, %v6629
        %v7824 = vmul.f32 %v996, %v6633
        %v7825 = vmul.f32 %v997, %v6637
        %v7826 = vmul.f32 %v998, %v6641
        %v7827 = vmul.f32 %v999, %v6645
        %v7828 = vmul.f32 %v1000, %v6649
        %v7829 = vmul.f32 %v1001, %v6653
        %v7830 = vmul.f32 %v1002, %v6657
        %v7831 = vmul.f32 %v1003, %v6661
        %v7832 = vmul.f32 %v1004, %v6665
        %v7833 = vmul.f32 %v1005, %v6669
        %v7834 = vmul.f32 %v1006, %v6673
        %v7835 = vmul.f32 %v1007, %v6677
        %v7836 = vmul.f32 %v1008, %v6681
        %v7837 = vmul.f32 %v1009, %v6685
        %v7838 = vadd.f32 %v7070, %v7071
        %v7839 = vadd.f32 %v7838, %v7072
        %v7840 = vadd.f32 %v7839, %v7073
        %v7841 = vadd.f32 %v7840, %v7074
        %v7842 = vadd.f32 %v7841, %v7075
        %v7843 = vadd.f32 %v7842, %v7076
        %v7844 = vadd.f32 %v7843, %v7077
        %v7845 = vadd.f32 %v7844, %v7078
        %v7846 = vadd.f32 %v7845, %v7079
        %v7847 = vadd.f32 %v7846, %v7080
        %v7848 = vadd.f32 %v7847, %v7081
        %v7849 = vadd.f32 %v7848, %v7082
        %v7850 = vadd.f32 %v7849, %v7083
        %v7851 = vadd.f32 %v7850, %v7084
        %v7852 = vadd.f32 %v7851, %v7085
        %v7853 = vadd.f32 %v7852, %v7086
        %v7854 = vadd.f32 %v7853, %v7087
        %v7855 = vadd.f32 %v7854, %v7088
        %v7856 = vadd.f32 %v7855, %v7089
        %v7857 = vadd.f32 %v7856, %v7090
        %v7858 = vadd.f32 %v7857, %v7091
        %v7859 = vadd.f32 %v7858, %v7092
        %v7860 = vadd.f32 %v7859, %v7093
        %v7861 = vadd.f32 %v7860, %v7094
        %v7862 = vadd.f32 %v7861, %v7095
        %v7863 = vadd.f32 %v7862, %v7096
        %v7864 = vadd.f32 %v7863, %v7097
        %v7865 = vadd.f32 %v7864, %v7098
        %v7866 = vadd.f32 %v7865, %v7099
        %v7867 = vadd.f32 %v7866, %v7100
        %v7868 = vadd.f32 %v7867, %v7101
        %v7869 = vadd.f32 %v7868, %v7102
        %v7870 = vadd.f32 %v7869, %v7103
        %v7871 = vadd.f32 %v7870, %v7104
        %v7872 = vadd.f32 %v7871, %v7105
        %v7873 = vadd.f32 %v7872, %v7106
        %v7874 = vadd.f32 %v7873, %v7107
        %v7875 = vadd.f32 %v7874, %v7108
        %v7876 = vadd.f32 %v7875, %v7109
        %v7877 = vadd.f32 %v7876, %v7110
        %v7878 = vadd.f32 %v7877, %v7111
        %v7879 = vadd.f32 %v7878, %v7112
        %v7880 = vadd.f32 %v7879, %v7113
        %v7881 = vadd.f32 %v7880, %v7114
        %v7882 = vadd.f32 %v7881, %v7115
        %v7883 = vadd.f32 %v7882, %v7116
        %v7884 = vadd.f32 %v7883, %v7117
        %v7885 = vadd.f32 %v7884, %v7118
        %v7886 = vadd.f32 %v7885, %v7119
        %v7887 = vadd.f32 %v7886, %v7120
        %v7888 = vadd.f32 %v7887, %v7121
        %v7889 = vadd.f32 %v7888, %v7122
        %v7890 = vadd.f32 %v7889, %v7123
        %v7891 = vadd.f32 %v7890, %v7124
        %v7892 = vadd.f32 %v7891, %v7125
        %v7893 = vadd.f32 %v7892, %v7126
        %v7894 = vadd.f32 %v7893, %v7127
        %v7895 = vadd.f32 %v7894, %v7128
        %v7896 = vadd.f32 %v7895, %v7129
        %v7897 = vadd.f32 %v7896, %v7130
        %v7898 = vadd.f32 %v7897, %v7131
        %v7899 = vadd.f32 %v7898, %v7132
        %v7900 = vadd.f32 %v7899, %v7133
        %v7901 = vadd.f32 %v7900, %v7134
        %v7902 = vadd.f32 %v7901, %v7135
        %v7903 = vadd.f32 %v7902, %v7136
        %v7904 = vadd.f32 %v7903, %v7137
        %v7905 = vadd.f32 %v7904, %v7138
        %v7906 = vadd.f32 %v7905, %v7139
        %v7907 = vadd.f32 %v7906, %v7140
        %v7908 = vadd.f32 %v7907, %v7141
        %v7909 = vadd.f32 %v7908, %v7142
        %v7910 = vadd.f32 %v7909, %v7143
        %v7911 = vadd.f32 %v7910, %v7144
        %v7912 = vadd.f32 %v7911, %v7145
        %v7913 = vadd.f32 %v7912, %v7146
        %v7914 = vadd.f32 %v7913, %v7147
        %v7915 = vadd.f32 %v7914, %v7148
        %v7916 = vadd.f32 %v7915, %v7149
        %v7917 = vadd.f32 %v7916, %v7150
        %v7918 = vadd.f32 %v7917, %v7151
        %v7919 = vadd.f32 %v7918, %v7152
        %v7920 = vadd.f32 %v7919, %v7153
        %v7921 = vadd.f32 %v7920, %v7154
        %v7922 = vadd.f32 %v7921, %v7155
        %v7923 = vadd.f32 %v7922, %v7156
        %v7924 = vadd.f32 %v7923, %v7157
        %v7925 = vadd.f32 %v7924, %v7158
        %v7926 = vadd.f32 %v7925, %v7159
        %v7927 = vadd.f32 %v7926, %v7160
        %v7928 = vadd.f32 %v7927, %v7161
        %v7929 = vadd.f32 %v7928, %v7162
        %v7930 = vadd.f32 %v7929, %v7163
        %v7931 = vadd.f32 %v7930, %v7164
        %v7932 = vadd.f32 %v7931, %v7165
        %v7933 = vadd.f32 %v7932, %v7166
        %v7934 = vadd.f32 %v7933, %v7167
        %v7935 = vadd.f32 %v7934, %v7168
        %v7936 = vadd.f32 %v7935, %v7169
        %v7937 = vadd.f32 %v7936, %v7170
        %v7938 = vadd.f32 %v7937, %v7171
        %v7939 = vadd.f32 %v7938, %v7172
        %v7940 = vadd.f32 %v7939, %v7173
        %v7941 = vadd.f32 %v7940, %v7174
        %v7942 = vadd.f32 %v7941, %v7175
        %v7943 = vadd.f32 %v7942, %v7176
        %v7944 = vadd.f32 %v7943, %v7177
        %v7945 = vadd.f32 %v7944, %v7178
        %v7946 = vadd.f32 %v7945, %v7179
        %v7947 = vadd.f32 %v7946, %v7180
        %v7948 = vadd.f32 %v7947, %v7181
        %v7949 = vadd.f32 %v7948, %v7182
        %v7950 = vadd.f32 %v7949, %v7183
        %v7951 = vadd.f32 %v7950, %v7184
        %v7952 = vadd.f32 %v7951, %v7185
        %v7953 = vadd.f32 %v7952, %v7186
        %v7954 = vadd.f32 %v7953, %v7187
        %v7955 = vadd.f32 %v7954, %v7188
        %v7956 = vadd.f32 %v7955, %v7189
        %v7957 = vadd.f32 %v7956, %v7190
        %v7958 = vadd.f32 %v7957, %v7191
        %v7959 = vadd.f32 %v7958, %v7192
        %v7960 = vadd.f32 %v7959, %v7193
        %v7961 = vadd.f32 %v7960, %v7194
        %v7962 = vadd.f32 %v7961, %v7195
        %v7963 = vadd.f32 %v7962, %v7196
        %v7964 = vadd.f32 %v7963, %v7197
        %v7965 = vadd.f32 %v7964, %v7198
        %v7966 = vadd.f32 %v7965, %v7199
        %v7967 = vadd.f32 %v7966, %v7200
        %v7968 = vadd.f32 %v7967, %v7201
        %v7969 = vadd.f32 %v7968, %v7202
        %v7970 = vadd.f32 %v7969, %v7203
        %v7971 = vadd.f32 %v7970, %v7204
        %v7972 = vadd.f32 %v7971, %v7205
        %v7973 = vadd.f32 %v7972, %v7206
        %v7974 = vadd.f32 %v7973, %v7207
        %v7975 = vadd.f32 %v7974, %v7208
        %v7976 = vadd.f32 %v7975, %v7209
        %v7977 = vadd.f32 %v7976, %v7210
        %v7978 = vadd.f32 %v7977, %v7211
        %v7979 = vadd.f32 %v7978, %v7212
        %v7980 = vadd.f32 %v7979, %v7213
        %v7981 = vadd.f32 %v7980, %v7214
        %v7982 = vadd.f32 %v7981, %v7215
        %v7983 = vadd.f32 %v7982, %v7216
        %v7984 = vadd.f32 %v7983, %v7217
        %v7985 = vadd.f32 %v7984, %v7218
        %v7986 = vadd.f32 %v7985, %v7219
        %v7987 = vadd.f32 %v7986, %v7220
        %v7988 = vadd.f32 %v7987, %v7221
        %v7989 = vadd.f32 %v7988, %v7222
        %v7990 = vadd.f32 %v7989, %v7223
        %v7991 = vadd.f32 %v7990, %v7224
        %v7992 = vadd.f32 %v7991, %v7225
        %v7993 = vadd.f32 %v7992, %v7226
        %v7994 = vadd.f32 %v7993, %v7227
        %v7995 = vadd.f32 %v7994, %v7228
        %v7996 = vadd.f32 %v7995, %v7229
        %v7997 = vadd.f32 %v7996, %v7230
        %v7998 = vadd.f32 %v7997, %v7231
        %v7999 = vadd.f32 %v7998, %v7232
        %v8000 = vadd.f32 %v7999, %v7233
        %v8001 = vadd.f32 %v8000, %v7234
        %v8002 = vadd.f32 %v8001, %v7235
        %v8003 = vadd.f32 %v8002, %v7236
        %v8004 = vadd.f32 %v8003, %v7237
        %v8005 = vadd.f32 %v8004, %v7238
        %v8006 = vadd.f32 %v8005, %v7239
        %v8007 = vadd.f32 %v8006, %v7240
        %v8008 = vadd.f32 %v8007, %v7241
        %v8009 = vadd.f32 %v8008, %v7242
        %v8010 = vadd.f32 %v8009, %v7243
        %v8011 = vadd.f32 %v8010, %v7244
        %v8012 = vadd.f32 %v8011, %v7245
        %v8013 = vadd.f32 %v8012, %v7246
        %v8014 = vadd.f32 %v8013, %v7247
        %v8015 = vadd.f32 %v8014, %v7248
        %v8016 = vadd.f32 %v8015, %v7249
        %v8017 = vadd.f32 %v8016, %v7250
        %v8018 = vadd.f32 %v8017, %v7251
        %v8019 = vadd.f32 %v8018, %v7252
        %v8020 = vadd.f32 %v8019, %v7253
        %v8021 = vadd.f32 %v8020, %v7254
        %v8022 = vadd.f32 %v8021, %v7255
        %v8023 = vadd.f32 %v8022, %v7256
        %v8024 = vadd.f32 %v8023, %v7257
        %v8025 = vadd.f32 %v8024, %v7258
        %v8026 = vadd.f32 %v8025, %v7259
        %v8027 = vadd.f32 %v8026, %v7260
        %v8028 = vadd.f32 %v8027, %v7261
        %v8029 = vadd.f32 %v8028, %v7262
        %v8030 = vadd.f32 %v8029, %v7263
        %v8031 = vadd.f32 %v8030, %v7264
        %v8032 = vadd.f32 %v8031, %v7265
        %v8033 = vadd.f32 %v8032, %v7266
        %v8034 = vadd.f32 %v8033, %v7267
        %v8035 = vadd.f32 %v8034, %v7268
        %v8036 = vadd.f32 %v8035, %v7269
        %v8037 = vadd.f32 %v8036, %v7270
        %v8038 = vadd.f32 %v8037, %v7271
        %v8039 = vadd.f32 %v8038, %v7272
        %v8040 = vadd.f32 %v8039, %v7273
        %v8041 = vadd.f32 %v8040, %v7274
        %v8042 = vadd.f32 %v8041, %v7275
        %v8043 = vadd.f32 %v8042, %v7276
        %v8044 = vadd.f32 %v8043, %v7277
        %v8045 = vadd.f32 %v8044, %v7278
        %v8046 = vadd.f32 %v8045, %v7279
        %v8047 = vadd.f32 %v8046, %v7280
        %v8048 = vadd.f32 %v8047, %v7281
        %v8049 = vadd.f32 %v8048, %v7282
        %v8050 = vadd.f32 %v8049, %v7283
        %v8051 = vadd.f32 %v8050, %v7284
        %v8052 = vadd.f32 %v8051, %v7285
        %v8053 = vadd.f32 %v8052, %v7286
        %v8054 = vadd.f32 %v8053, %v7287
        %v8055 = vadd.f32 %v8054, %v7288
        %v8056 = vadd.f32 %v8055, %v7289
        %v8057 = vadd.f32 %v8056, %v7290
        %v8058 = vadd.f32 %v8057, %v7291
        %v8059 = vadd.f32 %v8058, %v7292
        %v8060 = vadd.f32 %v8059, %v7293
        %v8061 = vadd.f32 %v8060, %v7294
        %v8062 = vadd.f32 %v8061, %v7295
        %v8063 = vadd.f32 %v8062, %v7296
        %v8064 = vadd.f32 %v8063, %v7297
        %v8065 = vadd.f32 %v8064, %v7298
        %v8066 = vadd.f32 %v8065, %v7299
        %v8067 = vadd.f32 %v8066, %v7300
        %v8068 = vadd.f32 %v8067, %v7301
        %v8069 = vadd.f32 %v8068, %v7302
        %v8070 = vadd.f32 %v8069, %v7303
        %v8071 = vadd.f32 %v8070, %v7304
        %v8072 = vadd.f32 %v8071, %v7305
        %v8073 = vadd.f32 %v8072, %v7306
        %v8074 = vadd.f32 %v8073, %v7307
        %v8075 = vadd.f32 %v8074, %v7308
        %v8076 = vadd.f32 %v8075, %v7309
        %v8077 = vadd.f32 %v8076, %v7310
        %v8078 = vadd.f32 %v8077, %v7311
        %v8079 = vadd.f32 %v8078, %v7312
        %v8080 = vadd.f32 %v8079, %v7313
        %v8081 = vadd.f32 %v8080, %v7314
        %v8082 = vadd.f32 %v8081, %v7315
        %v8083 = vadd.f32 %v8082, %v7316
        %v8084 = vadd.f32 %v8083, %v7317
        %v8085 = vadd.f32 %v8084, %v7318
        %v8086 = vadd.f32 %v8085, %v7319
        %v8087 = vadd.f32 %v8086, %v7320
        %v8088 = vadd.f32 %v8087, %v7321
        %v8089 = vadd.f32 %v8088, %v7322
        %v8090 = vadd.f32 %v8089, %v7323
        %v8091 = vadd.f32 %v8090, %v7324
        %v8092 = vadd.f32 %v8091, %v7325
        %v8093 = vadd.f32 %v8092, %v7326
        %v8094 = vadd.f32 %v8093, %v7327
        %v8095 = vadd.f32 %v8094, %v7328
        %v8096 = vadd.f32 %v8095, %v7329
        %v8097 = vadd.f32 %v8096, %v7330
        %v8098 = vadd.f32 %v8097, %v7331
        %v8099 = vadd.f32 %v8098, %v7332
        %v8100 = vadd.f32 %v8099, %v7333
        %v8101 = vadd.f32 %v8100, %v7334
        %v8102 = vadd.f32 %v8101, %v7335
        %v8103 = vadd.f32 %v8102, %v7336
        %v8104 = vadd.f32 %v8103, %v7337
        %v8105 = vadd.f32 %v8104, %v7338
        %v8106 = vadd.f32 %v8105, %v7339
        %v8107 = vadd.f32 %v8106, %v7340
        %v8108 = vadd.f32 %v8107, %v7341
        %v8109 = vadd.f32 %v8108, %v7342
        %v8110 = vadd.f32 %v8109, %v7343
        %v8111 = vadd.f32 %v8110, %v7344
        %v8112 = vadd.f32 %v8111, %v7345
        %v8113 = vadd.f32 %v8112, %v7346
        %v8114 = vadd.f32 %v8113, %v7347
        %v8115 = vadd.f32 %v8114, %v7348
        %v8116 = vadd.f32 %v8115, %v7349
        %v8117 = vadd.f32 %v8116, %v7350
        %v8118 = vadd.f32 %v8117, %v7351
        %v8119 = vadd.f32 %v8118, %v7352
        %v8120 = vadd.f32 %v8119, %v7353
        %v8121 = vadd.f32 %v8120, %v7354
        %v8122 = vadd.f32 %v8121, %v7355
        %v8123 = vadd.f32 %v8122, %v7356
        %v8124 = vadd.f32 %v8123, %v7357
        %v8125 = vadd.f32 %v8124, %v7358
        %v8126 = vadd.f32 %v8125, %v7359
        %v8127 = vadd.f32 %v8126, %v7360
        %v8128 = vadd.f32 %v8127, %v7361
        %v8129 = vadd.f32 %v8128, %v7362
        %v8130 = vadd.f32 %v8129, %v7363
        %v8131 = vadd.f32 %v8130, %v7364
        %v8132 = vadd.f32 %v8131, %v7365
        %v8133 = vadd.f32 %v8132, %v7366
        %v8134 = vadd.f32 %v8133, %v7367
        %v8135 = vadd.f32 %v8134, %v7368
        %v8136 = vadd.f32 %v8135, %v7369
        %v8137 = vadd.f32 %v8136, %v7370
        %v8138 = vadd.f32 %v8137, %v7371
        %v8139 = vadd.f32 %v8138, %v7372
        %v8140 = vadd.f32 %v8139, %v7373
        %v8141 = vadd.f32 %v8140, %v7374
        %v8142 = vadd.f32 %v8141, %v7375
        %v8143 = vadd.f32 %v8142, %v7376
        %v8144 = vadd.f32 %v8143, %v7377
        %v8145 = vadd.f32 %v8144, %v7378
        %v8146 = vadd.f32 %v8145, %v7379
        %v8147 = vadd.f32 %v8146, %v7380
        %v8148 = vadd.f32 %v8147, %v7381
        %v8149 = vadd.f32 %v8148, %v7382
        %v8150 = vadd.f32 %v8149, %v7383
        %v8151 = vadd.f32 %v8150, %v7384
        %v8152 = vadd.f32 %v8151, %v7385
        %v8153 = vadd.f32 %v8152, %v7386
        %v8154 = vadd.f32 %v8153, %v7387
        %v8155 = vadd.f32 %v8154, %v7388
        %v8156 = vadd.f32 %v8155, %v7389
        %v8157 = vadd.f32 %v8156, %v7390
        %v8158 = vadd.f32 %v8157, %v7391
        %v8159 = vadd.f32 %v8158, %v7392
        %v8160 = vadd.f32 %v8159, %v7393
        %v8161 = vadd.f32 %v8160, %v7394
        %v8162 = vadd.f32 %v8161, %v7395
        %v8163 = vadd.f32 %v8162, %v7396
        %v8164 = vadd.f32 %v8163, %v7397
        %v8165 = vadd.f32 %v8164, %v7398
        %v8166 = vadd.f32 %v8165, %v7399
        %v8167 = vadd.f32 %v8166, %v7400
        %v8168 = vadd.f32 %v8167, %v7401
        %v8169 = vadd.f32 %v8168, %v7402
        %v8170 = vadd.f32 %v8169, %v7403
        %v8171 = vadd.f32 %v8170, %v7404
        %v8172 = vadd.f32 %v8171, %v7405
        %v8173 = vadd.f32 %v8172, %v7406
        %v8174 = vadd.f32 %v8173, %v7407
        %v8175 = vadd.f32 %v8174, %v7408
        %v8176 = vadd.f32 %v8175, %v7409
        %v8177 = vadd.f32 %v8176, %v7410
        %v8178 = vadd.f32 %v8177, %v7411
        %v8179 = vadd.f32 %v8178, %v7412
        %v8180 = vadd.f32 %v8179, %v7413
        %v8181 = vadd.f32 %v8180, %v7414
        %v8182 = vadd.f32 %v8181, %v7415
        %v8183 = vadd.f32 %v8182, %v7416
        %v8184 = vadd.f32 %v8183, %v7417
        %v8185 = vadd.f32 %v8184, %v7418
        %v8186 = vadd.f32 %v8185, %v7419
        %v8187 = vadd.f32 %v8186, %v7420
        %v8188 = vadd.f32 %v8187, %v7421
        %v8189 = vadd.f32 %v8188, %v7422
        %v8190 = vadd.f32 %v8189, %v7423
        %v8191 = vadd.f32 %v8190, %v7424
        %v8192 = vadd.f32 %v8191, %v7425
        %v8193 = vadd.f32 %v8192, %v7426
        %v8194 = vadd.f32 %v8193, %v7427
        %v8195 = vadd.f32 %v8194, %v7428
        %v8196 = vadd.f32 %v8195, %v7429
        %v8197 = vadd.f32 %v8196, %v7430
        %v8198 = vadd.f32 %v8197, %v7431
        %v8199 = vadd.f32 %v8198, %v7432
        %v8200 = vadd.f32 %v8199, %v7433
        %v8201 = vadd.f32 %v8200, %v7434
        %v8202 = vadd.f32 %v8201, %v7435
        %v8203 = vadd.f32 %v8202, %v7436
        %v8204 = vadd.f32 %v8203, %v7437
        %v8205 = vadd.f32 %v8204, %v7438
        %v8206 = vadd.f32 %v8205, %v7439
        %v8207 = vadd.f32 %v8206, %v7440
        %v8208 = vadd.f32 %v8207, %v7441
        %v8209 = vadd.f32 %v8208, %v7442
        %v8210 = vadd.f32 %v8209, %v7443
        %v8211 = vadd.f32 %v8210, %v7444
        %v8212 = vadd.f32 %v8211, %v7445
        %v8213 = vadd.f32 %v8212, %v7446
        %v8214 = vadd.f32 %v8213, %v7447
        %v8215 = vadd.f32 %v8214, %v7448
        %v8216 = vadd.f32 %v8215, %v7449
        %v8217 = vadd.f32 %v8216, %v7450
        %v8218 = vadd.f32 %v8217, %v7451
        %v8219 = vadd.f32 %v8218, %v7452
        %v8220 = vadd.f32 %v8219, %v7453
        %8221 = vadd.xlane.f32.xlu0 %v8220
        %v8222 = vpop.xlane.xlu0 %8221
        %v8223 = vsel %vm4228, %v7454, 0.0
        %v8224 = vsel %vm4228, %v7455, 0.0
        %v8225 = vadd.f32 %v8223, %v8224
        %v8226 = vsel %vm4228, %v7456, 0.0
        %v8227 = vadd.f32 %v8225, %v8226
        %v8228 = vsel %vm4228, %v7457, 0.0
        %v8229 = vadd.f32 %v8227, %v8228
        %v8230 = vsel %vm4228, %v7458, 0.0
        %v8231 = vadd.f32 %v8229, %v8230
        %v8232 = vsel %vm4228, %v7459, 0.0
        %v8233 = vadd.f32 %v8231, %v8232
        %v8234 = vsel %vm4228, %v7460, 0.0
        %v8235 = vadd.f32 %v8233, %v8234
        %v8236 = vsel %vm4228, %v7461, 0.0
        %v8237 = vadd.f32 %v8235, %v8236
        %v8238 = vsel %vm4228, %v7462, 0.0
        %v8239 = vadd.f32 %v8237, %v8238
        %v8240 = vsel %vm4228, %v7463, 0.0
        %v8241 = vadd.f32 %v8239, %v8240
        %v8242 = vsel %vm4228, %v7464, 0.0
        %v8243 = vadd.f32 %v8241, %v8242
        %v8244 = vsel %vm4228, %v7465, 0.0
        %v8245 = vadd.f32 %v8243, %v8244
        %v8246 = vsel %vm4228, %v7466, 0.0
        %v8247 = vadd.f32 %v8245, %v8246
        %v8248 = vsel %vm4228, %v7467, 0.0
        %v8249 = vadd.f32 %v8247, %v8248
        %v8250 = vsel %vm4228, %v7468, 0.0
        %v8251 = vadd.f32 %v8249, %v8250
        %v8252 = vsel %vm4228, %v7469, 0.0
        %v8253 = vadd.f32 %v8251, %v8252
        %v8254 = vsel %vm4228, %v7470, 0.0
        %v8255 = vadd.f32 %v8253, %v8254
        %v8256 = vsel %vm4228, %v7471, 0.0
        %v8257 = vadd.f32 %v8255, %v8256
        %v8258 = vsel %vm4228, %v7472, 0.0
        %v8259 = vadd.f32 %v8257, %v8258
        %v8260 = vsel %vm4228, %v7473, 0.0
        %v8261 = vadd.f32 %v8259, %v8260
        %v8262 = vsel %vm4228, %v7474, 0.0
        %v8263 = vadd.f32 %v8261, %v8262
        %v8264 = vsel %vm4228, %v7475, 0.0
        %v8265 = vadd.f32 %v8263, %v8264
        %v8266 = vsel %vm4228, %v7476, 0.0
        %v8267 = vadd.f32 %v8265, %v8266
        %v8268 = vsel %vm4228, %v7477, 0.0
        %v8269 = vadd.f32 %v8267, %v8268
        %v8270 = vsel %vm4228, %v7478, 0.0
        %v8271 = vadd.f32 %v8269, %v8270
        %v8272 = vsel %vm4228, %v7479, 0.0
        %v8273 = vadd.f32 %v8271, %v8272
        %v8274 = vsel %vm4228, %v7480, 0.0
        %v8275 = vadd.f32 %v8273, %v8274
        %v8276 = vsel %vm4228, %v7481, 0.0
        %v8277 = vadd.f32 %v8275, %v8276
        %v8278 = vsel %vm4228, %v7482, 0.0
        %v8279 = vadd.f32 %v8277, %v8278
        %v8280 = vsel %vm4228, %v7483, 0.0
        %v8281 = vadd.f32 %v8279, %v8280
        %v8282 = vsel %vm4228, %v7484, 0.0
        %v8283 = vadd.f32 %v8281, %v8282
        %v8284 = vsel %vm4228, %v7485, 0.0
        %v8285 = vadd.f32 %v8283, %v8284
        %v8286 = vsel %vm4228, %v7486, 0.0
        %v8287 = vadd.f32 %v8285, %v8286
        %v8288 = vsel %vm4228, %v7487, 0.0
        %v8289 = vadd.f32 %v8287, %v8288
        %v8290 = vsel %vm4228, %v7488, 0.0
        %v8291 = vadd.f32 %v8289, %v8290
        %v8292 = vsel %vm4228, %v7489, 0.0
        %v8293 = vadd.f32 %v8291, %v8292
        %v8294 = vsel %vm4228, %v7490, 0.0
        %v8295 = vadd.f32 %v8293, %v8294
        %v8296 = vsel %vm4228, %v7491, 0.0
        %v8297 = vadd.f32 %v8295, %v8296
        %v8298 = vsel %vm4228, %v7492, 0.0
        %v8299 = vadd.f32 %v8297, %v8298
        %v8300 = vsel %vm4228, %v7493, 0.0
        %v8301 = vadd.f32 %v8299, %v8300
        %v8302 = vsel %vm4228, %v7494, 0.0
        %v8303 = vadd.f32 %v8301, %v8302
        %v8304 = vsel %vm4228, %v7495, 0.0
        %v8305 = vadd.f32 %v8303, %v8304
        %v8306 = vsel %vm4228, %v7496, 0.0
        %v8307 = vadd.f32 %v8305, %v8306
        %v8308 = vsel %vm4228, %v7497, 0.0
        %v8309 = vadd.f32 %v8307, %v8308
        %v8310 = vsel %vm4228, %v7498, 0.0
        %v8311 = vadd.f32 %v8309, %v8310
        %v8312 = vsel %vm4228, %v7499, 0.0
        %v8313 = vadd.f32 %v8311, %v8312
        %v8314 = vsel %vm4228, %v7500, 0.0
        %v8315 = vadd.f32 %v8313, %v8314
        %v8316 = vsel %vm4228, %v7501, 0.0
        %v8317 = vadd.f32 %v8315, %v8316
        %v8318 = vsel %vm4228, %v7502, 0.0
        %v8319 = vadd.f32 %v8317, %v8318
        %v8320 = vsel %vm4228, %v7503, 0.0
        %v8321 = vadd.f32 %v8319, %v8320
        %v8322 = vsel %vm4228, %v7504, 0.0
        %v8323 = vadd.f32 %v8321, %v8322
        %v8324 = vsel %vm4228, %v7505, 0.0
        %v8325 = vadd.f32 %v8323, %v8324
        %v8326 = vsel %vm4228, %v7506, 0.0
        %v8327 = vadd.f32 %v8325, %v8326
        %v8328 = vsel %vm4228, %v7507, 0.0
        %v8329 = vadd.f32 %v8327, %v8328
        %v8330 = vsel %vm4228, %v7508, 0.0
        %v8331 = vadd.f32 %v8329, %v8330
        %v8332 = vsel %vm4228, %v7509, 0.0
        %v8333 = vadd.f32 %v8331, %v8332
        %v8334 = vsel %vm4228, %v7510, 0.0
        %v8335 = vadd.f32 %v8333, %v8334
        %v8336 = vsel %vm4228, %v7511, 0.0
        %v8337 = vadd.f32 %v8335, %v8336
        %v8338 = vsel %vm4228, %v7512, 0.0
        %v8339 = vadd.f32 %v8337, %v8338
        %v8340 = vsel %vm4228, %v7513, 0.0
        %v8341 = vadd.f32 %v8339, %v8340
        %v8342 = vsel %vm4228, %v7514, 0.0
        %v8343 = vadd.f32 %v8341, %v8342
        %v8344 = vsel %vm4228, %v7515, 0.0
        %v8345 = vadd.f32 %v8343, %v8344
        %v8346 = vsel %vm4228, %v7516, 0.0
        %v8347 = vadd.f32 %v8345, %v8346
        %v8348 = vsel %vm4228, %v7517, 0.0
        %v8349 = vadd.f32 %v8347, %v8348
        %v8350 = vsel %vm4228, %v7518, 0.0
        %v8351 = vadd.f32 %v8349, %v8350
        %v8352 = vsel %vm4228, %v7519, 0.0
        %v8353 = vadd.f32 %v8351, %v8352
        %v8354 = vsel %vm4228, %v7520, 0.0
        %v8355 = vadd.f32 %v8353, %v8354
        %v8356 = vsel %vm4228, %v7521, 0.0
        %v8357 = vadd.f32 %v8355, %v8356
        %v8358 = vsel %vm4228, %v7522, 0.0
        %v8359 = vadd.f32 %v8357, %v8358
        %v8360 = vsel %vm4228, %v7523, 0.0
        %v8361 = vadd.f32 %v8359, %v8360
        %v8362 = vsel %vm4228, %v7524, 0.0
        %v8363 = vadd.f32 %v8361, %v8362
        %v8364 = vsel %vm4228, %v7525, 0.0
        %v8365 = vadd.f32 %v8363, %v8364
        %v8366 = vsel %vm4228, %v7526, 0.0
        %v8367 = vadd.f32 %v8365, %v8366
        %v8368 = vsel %vm4228, %v7527, 0.0
        %v8369 = vadd.f32 %v8367, %v8368
        %v8370 = vsel %vm4228, %v7528, 0.0
        %v8371 = vadd.f32 %v8369, %v8370
        %v8372 = vsel %vm4228, %v7529, 0.0
        %v8373 = vadd.f32 %v8371, %v8372
        %v8374 = vsel %vm4228, %v7530, 0.0
        %v8375 = vadd.f32 %v8373, %v8374
        %v8376 = vsel %vm4228, %v7531, 0.0
        %v8377 = vadd.f32 %v8375, %v8376
        %v8378 = vsel %vm4228, %v7532, 0.0
        %v8379 = vadd.f32 %v8377, %v8378
        %v8380 = vsel %vm4228, %v7533, 0.0
        %v8381 = vadd.f32 %v8379, %v8380
        %v8382 = vsel %vm4228, %v7534, 0.0
        %v8383 = vadd.f32 %v8381, %v8382
        %v8384 = vsel %vm4228, %v7535, 0.0
        %v8385 = vadd.f32 %v8383, %v8384
        %v8386 = vsel %vm4228, %v7536, 0.0
        %v8387 = vadd.f32 %v8385, %v8386
        %v8388 = vsel %vm4228, %v7537, 0.0
        %v8389 = vadd.f32 %v8387, %v8388
        %v8390 = vsel %vm4228, %v7538, 0.0
        %v8391 = vadd.f32 %v8389, %v8390
        %v8392 = vsel %vm4228, %v7539, 0.0
        %v8393 = vadd.f32 %v8391, %v8392
        %v8394 = vsel %vm4228, %v7540, 0.0
        %v8395 = vadd.f32 %v8393, %v8394
        %v8396 = vsel %vm4228, %v7541, 0.0
        %v8397 = vadd.f32 %v8395, %v8396
        %v8398 = vsel %vm4228, %v7542, 0.0
        %v8399 = vadd.f32 %v8397, %v8398
        %v8400 = vsel %vm4228, %v7543, 0.0
        %v8401 = vadd.f32 %v8399, %v8400
        %v8402 = vsel %vm4228, %v7544, 0.0
        %v8403 = vadd.f32 %v8401, %v8402
        %v8404 = vsel %vm4228, %v7545, 0.0
        %v8405 = vadd.f32 %v8403, %v8404
        %v8406 = vsel %vm4228, %v7546, 0.0
        %v8407 = vadd.f32 %v8405, %v8406
        %v8408 = vsel %vm4228, %v7547, 0.0
        %v8409 = vadd.f32 %v8407, %v8408
        %v8410 = vsel %vm4228, %v7548, 0.0
        %v8411 = vadd.f32 %v8409, %v8410
        %v8412 = vsel %vm4228, %v7549, 0.0
        %v8413 = vadd.f32 %v8411, %v8412
        %v8414 = vsel %vm4228, %v7550, 0.0
        %v8415 = vadd.f32 %v8413, %v8414
        %v8416 = vsel %vm4228, %v7551, 0.0
        %v8417 = vadd.f32 %v8415, %v8416
        %v8418 = vsel %vm4228, %v7552, 0.0
        %v8419 = vadd.f32 %v8417, %v8418
        %v8420 = vsel %vm4228, %v7553, 0.0
        %v8421 = vadd.f32 %v8419, %v8420
        %v8422 = vsel %vm4228, %v7554, 0.0
        %v8423 = vadd.f32 %v8421, %v8422
        %v8424 = vsel %vm4228, %v7555, 0.0
        %v8425 = vadd.f32 %v8423, %v8424
        %v8426 = vsel %vm4228, %v7556, 0.0
        %v8427 = vadd.f32 %v8425, %v8426
        %v8428 = vsel %vm4228, %v7557, 0.0
        %v8429 = vadd.f32 %v8427, %v8428
        %v8430 = vsel %vm4228, %v7558, 0.0
        %v8431 = vadd.f32 %v8429, %v8430
        %v8432 = vsel %vm4228, %v7559, 0.0
        %v8433 = vadd.f32 %v8431, %v8432
        %v8434 = vsel %vm4228, %v7560, 0.0
        %v8435 = vadd.f32 %v8433, %v8434
        %v8436 = vsel %vm4228, %v7561, 0.0
        %v8437 = vadd.f32 %v8435, %v8436
        %v8438 = vsel %vm4228, %v7562, 0.0
        %v8439 = vadd.f32 %v8437, %v8438
        %v8440 = vsel %vm4228, %v7563, 0.0
        %v8441 = vadd.f32 %v8439, %v8440
        %v8442 = vsel %vm4228, %v7564, 0.0
        %v8443 = vadd.f32 %v8441, %v8442
        %v8444 = vsel %vm4228, %v7565, 0.0
        %v8445 = vadd.f32 %v8443, %v8444
        %v8446 = vsel %vm4228, %v7566, 0.0
        %v8447 = vadd.f32 %v8445, %v8446
        %v8448 = vsel %vm4228, %v7567, 0.0
        %v8449 = vadd.f32 %v8447, %v8448
        %v8450 = vsel %vm4228, %v7568, 0.0
        %v8451 = vadd.f32 %v8449, %v8450
        %v8452 = vsel %vm4228, %v7569, 0.0
        %v8453 = vadd.f32 %v8451, %v8452
        %v8454 = vsel %vm4228, %v7570, 0.0
        %v8455 = vadd.f32 %v8453, %v8454
        %v8456 = vsel %vm4228, %v7571, 0.0
        %v8457 = vadd.f32 %v8455, %v8456
        %v8458 = vsel %vm4228, %v7572, 0.0
        %v8459 = vadd.f32 %v8457, %v8458
        %v8460 = vsel %vm4228, %v7573, 0.0
        %v8461 = vadd.f32 %v8459, %v8460
        %v8462 = vsel %vm4228, %v7574, 0.0
        %v8463 = vadd.f32 %v8461, %v8462
        %v8464 = vsel %vm4228, %v7575, 0.0
        %v8465 = vadd.f32 %v8463, %v8464
        %v8466 = vsel %vm4228, %v7576, 0.0
        %v8467 = vadd.f32 %v8465, %v8466
        %v8468 = vsel %vm4228, %v7577, 0.0
        %v8469 = vadd.f32 %v8467, %v8468
        %v8470 = vsel %vm4228, %v7578, 0.0
        %v8471 = vadd.f32 %v8469, %v8470
        %v8472 = vsel %vm4228, %v7579, 0.0
        %v8473 = vadd.f32 %v8471, %v8472
        %v8474 = vsel %vm4228, %v7580, 0.0
        %v8475 = vadd.f32 %v8473, %v8474
        %v8476 = vsel %vm4228, %v7581, 0.0
        %v8477 = vadd.f32 %v8475, %v8476
        %v8478 = vsel %vm4228, %v7582, 0.0
        %v8479 = vadd.f32 %v8477, %v8478
        %v8480 = vsel %vm4228, %v7583, 0.0
        %v8481 = vadd.f32 %v8479, %v8480
        %v8482 = vsel %vm4228, %v7584, 0.0
        %v8483 = vadd.f32 %v8481, %v8482
        %v8484 = vsel %vm4228, %v7585, 0.0
        %v8485 = vadd.f32 %v8483, %v8484
        %v8486 = vsel %vm4228, %v7586, 0.0
        %v8487 = vadd.f32 %v8485, %v8486
        %v8488 = vsel %vm4228, %v7587, 0.0
        %v8489 = vadd.f32 %v8487, %v8488
        %v8490 = vsel %vm4228, %v7588, 0.0
        %v8491 = vadd.f32 %v8489, %v8490
        %v8492 = vsel %vm4228, %v7589, 0.0
        %v8493 = vadd.f32 %v8491, %v8492
        %v8494 = vsel %vm4228, %v7590, 0.0
        %v8495 = vadd.f32 %v8493, %v8494
        %v8496 = vsel %vm4228, %v7591, 0.0
        %v8497 = vadd.f32 %v8495, %v8496
        %v8498 = vsel %vm4228, %v7592, 0.0
        %v8499 = vadd.f32 %v8497, %v8498
        %v8500 = vsel %vm4228, %v7593, 0.0
        %v8501 = vadd.f32 %v8499, %v8500
        %v8502 = vsel %vm4228, %v7594, 0.0
        %v8503 = vadd.f32 %v8501, %v8502
        %v8504 = vsel %vm4228, %v7595, 0.0
        %v8505 = vadd.f32 %v8503, %v8504
        %v8506 = vsel %vm4228, %v7596, 0.0
        %v8507 = vadd.f32 %v8505, %v8506
        %v8508 = vsel %vm4228, %v7597, 0.0
        %v8509 = vadd.f32 %v8507, %v8508
        %v8510 = vsel %vm4228, %v7598, 0.0
        %v8511 = vadd.f32 %v8509, %v8510
        %v8512 = vsel %vm4228, %v7599, 0.0
        %v8513 = vadd.f32 %v8511, %v8512
        %v8514 = vsel %vm4228, %v7600, 0.0
        %v8515 = vadd.f32 %v8513, %v8514
        %v8516 = vsel %vm4228, %v7601, 0.0
        %v8517 = vadd.f32 %v8515, %v8516
        %v8518 = vsel %vm4228, %v7602, 0.0
        %v8519 = vadd.f32 %v8517, %v8518
        %v8520 = vsel %vm4228, %v7603, 0.0
        %v8521 = vadd.f32 %v8519, %v8520
        %v8522 = vsel %vm4228, %v7604, 0.0
        %v8523 = vadd.f32 %v8521, %v8522
        %v8524 = vsel %vm4228, %v7605, 0.0
        %v8525 = vadd.f32 %v8523, %v8524
        %v8526 = vsel %vm4228, %v7606, 0.0
        %v8527 = vadd.f32 %v8525, %v8526
        %v8528 = vsel %vm4228, %v7607, 0.0
        %v8529 = vadd.f32 %v8527, %v8528
        %v8530 = vsel %vm4228, %v7608, 0.0
        %v8531 = vadd.f32 %v8529, %v8530
        %v8532 = vsel %vm4228, %v7609, 0.0
        %v8533 = vadd.f32 %v8531, %v8532
        %v8534 = vsel %vm4228, %v7610, 0.0
        %v8535 = vadd.f32 %v8533, %v8534
        %v8536 = vsel %vm4228, %v7611, 0.0
        %v8537 = vadd.f32 %v8535, %v8536
        %v8538 = vsel %vm4228, %v7612, 0.0
        %v8539 = vadd.f32 %v8537, %v8538
        %v8540 = vsel %vm4228, %v7613, 0.0
        %v8541 = vadd.f32 %v8539, %v8540
        %v8542 = vsel %vm4228, %v7614, 0.0
        %v8543 = vadd.f32 %v8541, %v8542
        %v8544 = vsel %vm4228, %v7615, 0.0
        %v8545 = vadd.f32 %v8543, %v8544
        %v8546 = vsel %vm4228, %v7616, 0.0
        %v8547 = vadd.f32 %v8545, %v8546
        %v8548 = vsel %vm4228, %v7617, 0.0
        %v8549 = vadd.f32 %v8547, %v8548
        %v8550 = vsel %vm4228, %v7618, 0.0
        %v8551 = vadd.f32 %v8549, %v8550
        %v8552 = vsel %vm4228, %v7619, 0.0
        %v8553 = vadd.f32 %v8551, %v8552
        %v8554 = vsel %vm4228, %v7620, 0.0
        %v8555 = vadd.f32 %v8553, %v8554
        %v8556 = vsel %vm4228, %v7621, 0.0
        %v8557 = vadd.f32 %v8555, %v8556
        %v8558 = vsel %vm4228, %v7622, 0.0
        %v8559 = vadd.f32 %v8557, %v8558
        %v8560 = vsel %vm4228, %v7623, 0.0
        %v8561 = vadd.f32 %v8559, %v8560
        %v8562 = vsel %vm4228, %v7624, 0.0
        %v8563 = vadd.f32 %v8561, %v8562
        %v8564 = vsel %vm4228, %v7625, 0.0
        %v8565 = vadd.f32 %v8563, %v8564
        %v8566 = vsel %vm4228, %v7626, 0.0
        %v8567 = vadd.f32 %v8565, %v8566
        %v8568 = vsel %vm4228, %v7627, 0.0
        %v8569 = vadd.f32 %v8567, %v8568
        %v8570 = vsel %vm4228, %v7628, 0.0
        %v8571 = vadd.f32 %v8569, %v8570
        %v8572 = vsel %vm4228, %v7629, 0.0
        %v8573 = vadd.f32 %v8571, %v8572
        %v8574 = vsel %vm4228, %v7630, 0.0
        %v8575 = vadd.f32 %v8573, %v8574
        %v8576 = vsel %vm4228, %v7631, 0.0
        %v8577 = vadd.f32 %v8575, %v8576
        %v8578 = vsel %vm4228, %v7632, 0.0
        %v8579 = vadd.f32 %v8577, %v8578
        %v8580 = vsel %vm4228, %v7633, 0.0
        %v8581 = vadd.f32 %v8579, %v8580
        %v8582 = vsel %vm4228, %v7634, 0.0
        %v8583 = vadd.f32 %v8581, %v8582
        %v8584 = vsel %vm4228, %v7635, 0.0
        %v8585 = vadd.f32 %v8583, %v8584
        %v8586 = vsel %vm4228, %v7636, 0.0
        %v8587 = vadd.f32 %v8585, %v8586
        %v8588 = vsel %vm4228, %v7637, 0.0
        %v8589 = vadd.f32 %v8587, %v8588
        %v8590 = vsel %vm4228, %v7638, 0.0
        %v8591 = vadd.f32 %v8589, %v8590
        %v8592 = vsel %vm4228, %v7639, 0.0
        %v8593 = vadd.f32 %v8591, %v8592
        %v8594 = vsel %vm4228, %v7640, 0.0
        %v8595 = vadd.f32 %v8593, %v8594
        %v8596 = vsel %vm4228, %v7641, 0.0
        %v8597 = vadd.f32 %v8595, %v8596
        %v8598 = vsel %vm4228, %v7642, 0.0
        %v8599 = vadd.f32 %v8597, %v8598
        %v8600 = vsel %vm4228, %v7643, 0.0
        %v8601 = vadd.f32 %v8599, %v8600
        %v8602 = vsel %vm4228, %v7644, 0.0
        %v8603 = vadd.f32 %v8601, %v8602
        %v8604 = vsel %vm4228, %v7645, 0.0
        %v8605 = vadd.f32 %v8603, %v8604
        %v8606 = vsel %vm4228, %v7646, 0.0
        %v8607 = vadd.f32 %v8605, %v8606
        %v8608 = vsel %vm4228, %v7647, 0.0
        %v8609 = vadd.f32 %v8607, %v8608
        %v8610 = vsel %vm4228, %v7648, 0.0
        %v8611 = vadd.f32 %v8609, %v8610
        %v8612 = vsel %vm4228, %v7649, 0.0
        %v8613 = vadd.f32 %v8611, %v8612
        %v8614 = vsel %vm4228, %v7650, 0.0
        %v8615 = vadd.f32 %v8613, %v8614
        %v8616 = vsel %vm4228, %v7651, 0.0
        %v8617 = vadd.f32 %v8615, %v8616
        %v8618 = vsel %vm4228, %v7652, 0.0
        %v8619 = vadd.f32 %v8617, %v8618
        %v8620 = vsel %vm4228, %v7653, 0.0
        %v8621 = vadd.f32 %v8619, %v8620
        %v8622 = vsel %vm4228, %v7654, 0.0
        %v8623 = vadd.f32 %v8621, %v8622
        %v8624 = vsel %vm4228, %v7655, 0.0
        %v8625 = vadd.f32 %v8623, %v8624
        %v8626 = vsel %vm4228, %v7656, 0.0
        %v8627 = vadd.f32 %v8625, %v8626
        %v8628 = vsel %vm4228, %v7657, 0.0
        %v8629 = vadd.f32 %v8627, %v8628
        %v8630 = vsel %vm4228, %v7658, 0.0
        %v8631 = vadd.f32 %v8629, %v8630
        %v8632 = vsel %vm4228, %v7659, 0.0
        %v8633 = vadd.f32 %v8631, %v8632
        %v8634 = vsel %vm4228, %v7660, 0.0
        %v8635 = vadd.f32 %v8633, %v8634
        %v8636 = vsel %vm4228, %v7661, 0.0
        %v8637 = vadd.f32 %v8635, %v8636
        %v8638 = vsel %vm4228, %v7662, 0.0
        %v8639 = vadd.f32 %v8637, %v8638
        %v8640 = vsel %vm4228, %v7663, 0.0
        %v8641 = vadd.f32 %v8639, %v8640
        %v8642 = vsel %vm4228, %v7664, 0.0
        %v8643 = vadd.f32 %v8641, %v8642
        %v8644 = vsel %vm4228, %v7665, 0.0
        %v8645 = vadd.f32 %v8643, %v8644
        %v8646 = vsel %vm4228, %v7666, 0.0
        %v8647 = vadd.f32 %v8645, %v8646
        %v8648 = vsel %vm4228, %v7667, 0.0
        %v8649 = vadd.f32 %v8647, %v8648
        %v8650 = vsel %vm4228, %v7668, 0.0
        %v8651 = vadd.f32 %v8649, %v8650
        %v8652 = vsel %vm4228, %v7669, 0.0
        %v8653 = vadd.f32 %v8651, %v8652
        %v8654 = vsel %vm4228, %v7670, 0.0
        %v8655 = vadd.f32 %v8653, %v8654
        %v8656 = vsel %vm4228, %v7671, 0.0
        %v8657 = vadd.f32 %v8655, %v8656
        %v8658 = vsel %vm4228, %v7672, 0.0
        %v8659 = vadd.f32 %v8657, %v8658
        %v8660 = vsel %vm4228, %v7673, 0.0
        %v8661 = vadd.f32 %v8659, %v8660
        %v8662 = vsel %vm4228, %v7674, 0.0
        %v8663 = vadd.f32 %v8661, %v8662
        %v8664 = vsel %vm4228, %v7675, 0.0
        %v8665 = vadd.f32 %v8663, %v8664
        %v8666 = vsel %vm4228, %v7676, 0.0
        %v8667 = vadd.f32 %v8665, %v8666
        %v8668 = vsel %vm4228, %v7677, 0.0
        %v8669 = vadd.f32 %v8667, %v8668
        %v8670 = vsel %vm4228, %v7678, 0.0
        %v8671 = vadd.f32 %v8669, %v8670
        %v8672 = vsel %vm4228, %v7679, 0.0
        %v8673 = vadd.f32 %v8671, %v8672
        %v8674 = vsel %vm4228, %v7680, 0.0
        %v8675 = vadd.f32 %v8673, %v8674
        %v8676 = vsel %vm4228, %v7681, 0.0
        %v8677 = vadd.f32 %v8675, %v8676
        %v8678 = vsel %vm4228, %v7682, 0.0
        %v8679 = vadd.f32 %v8677, %v8678
        %v8680 = vsel %vm4228, %v7683, 0.0
        %v8681 = vadd.f32 %v8679, %v8680
        %v8682 = vsel %vm4228, %v7684, 0.0
        %v8683 = vadd.f32 %v8681, %v8682
        %v8684 = vsel %vm4228, %v7685, 0.0
        %v8685 = vadd.f32 %v8683, %v8684
        %v8686 = vsel %vm4228, %v7686, 0.0
        %v8687 = vadd.f32 %v8685, %v8686
        %v8688 = vsel %vm4228, %v7687, 0.0
        %v8689 = vadd.f32 %v8687, %v8688
        %v8690 = vsel %vm4228, %v7688, 0.0
        %v8691 = vadd.f32 %v8689, %v8690
        %v8692 = vsel %vm4228, %v7689, 0.0
        %v8693 = vadd.f32 %v8691, %v8692
        %v8694 = vsel %vm4228, %v7690, 0.0
        %v8695 = vadd.f32 %v8693, %v8694
        %v8696 = vsel %vm4228, %v7691, 0.0
        %v8697 = vadd.f32 %v8695, %v8696
        %v8698 = vsel %vm4228, %v7692, 0.0
        %v8699 = vadd.f32 %v8697, %v8698
        %v8700 = vsel %vm4228, %v7693, 0.0
        %v8701 = vadd.f32 %v8699, %v8700
        %v8702 = vsel %vm4228, %v7694, 0.0
        %v8703 = vadd.f32 %v8701, %v8702
        %v8704 = vsel %vm4228, %v7695, 0.0
        %v8705 = vadd.f32 %v8703, %v8704
        %v8706 = vsel %vm4228, %v7696, 0.0
        %v8707 = vadd.f32 %v8705, %v8706
        %v8708 = vsel %vm4228, %v7697, 0.0
        %v8709 = vadd.f32 %v8707, %v8708
        %v8710 = vsel %vm4228, %v7698, 0.0
        %v8711 = vadd.f32 %v8709, %v8710
        %v8712 = vsel %vm4228, %v7699, 0.0
        %v8713 = vadd.f32 %v8711, %v8712
        %v8714 = vsel %vm4228, %v7700, 0.0
        %v8715 = vadd.f32 %v8713, %v8714
        %v8716 = vsel %vm4228, %v7701, 0.0
        %v8717 = vadd.f32 %v8715, %v8716
        %v8718 = vsel %vm4228, %v7702, 0.0
        %v8719 = vadd.f32 %v8717, %v8718
        %v8720 = vsel %vm4228, %v7703, 0.0
        %v8721 = vadd.f32 %v8719, %v8720
        %v8722 = vsel %vm4228, %v7704, 0.0
        %v8723 = vadd.f32 %v8721, %v8722
        %v8724 = vsel %vm4228, %v7705, 0.0
        %v8725 = vadd.f32 %v8723, %v8724
        %v8726 = vsel %vm4228, %v7706, 0.0
        %v8727 = vadd.f32 %v8725, %v8726
        %v8728 = vsel %vm4228, %v7707, 0.0
        %v8729 = vadd.f32 %v8727, %v8728
        %v8730 = vsel %vm4228, %v7708, 0.0
        %v8731 = vadd.f32 %v8729, %v8730
        %v8732 = vsel %vm4228, %v7709, 0.0
        %v8733 = vadd.f32 %v8731, %v8732
        %v8734 = vsel %vm4228, %v7710, 0.0
        %v8735 = vadd.f32 %v8733, %v8734
        %v8736 = vsel %vm4228, %v7711, 0.0
        %v8737 = vadd.f32 %v8735, %v8736
        %v8738 = vsel %vm4228, %v7712, 0.0
        %v8739 = vadd.f32 %v8737, %v8738
        %v8740 = vsel %vm4228, %v7713, 0.0
        %v8741 = vadd.f32 %v8739, %v8740
        %v8742 = vsel %vm4228, %v7714, 0.0
        %v8743 = vadd.f32 %v8741, %v8742
        %v8744 = vsel %vm4228, %v7715, 0.0
        %v8745 = vadd.f32 %v8743, %v8744
        %v8746 = vsel %vm4228, %v7716, 0.0
        %v8747 = vadd.f32 %v8745, %v8746
        %v8748 = vsel %vm4228, %v7717, 0.0
        %v8749 = vadd.f32 %v8747, %v8748
        %v8750 = vsel %vm4228, %v7718, 0.0
        %v8751 = vadd.f32 %v8749, %v8750
        %v8752 = vsel %vm4228, %v7719, 0.0
        %v8753 = vadd.f32 %v8751, %v8752
        %v8754 = vsel %vm4228, %v7720, 0.0
        %v8755 = vadd.f32 %v8753, %v8754
        %v8756 = vsel %vm4228, %v7721, 0.0
        %v8757 = vadd.f32 %v8755, %v8756
        %v8758 = vsel %vm4228, %v7722, 0.0
        %v8759 = vadd.f32 %v8757, %v8758
        %v8760 = vsel %vm4228, %v7723, 0.0
        %v8761 = vadd.f32 %v8759, %v8760
        %v8762 = vsel %vm4228, %v7724, 0.0
        %v8763 = vadd.f32 %v8761, %v8762
        %v8764 = vsel %vm4228, %v7725, 0.0
        %v8765 = vadd.f32 %v8763, %v8764
        %v8766 = vsel %vm4228, %v7726, 0.0
        %v8767 = vadd.f32 %v8765, %v8766
        %v8768 = vsel %vm4228, %v7727, 0.0
        %v8769 = vadd.f32 %v8767, %v8768
        %v8770 = vsel %vm4228, %v7728, 0.0
        %v8771 = vadd.f32 %v8769, %v8770
        %v8772 = vsel %vm4228, %v7729, 0.0
        %v8773 = vadd.f32 %v8771, %v8772
        %v8774 = vsel %vm4228, %v7730, 0.0
        %v8775 = vadd.f32 %v8773, %v8774
        %v8776 = vsel %vm4228, %v7731, 0.0
        %v8777 = vadd.f32 %v8775, %v8776
        %v8778 = vsel %vm4228, %v7732, 0.0
        %v8779 = vadd.f32 %v8777, %v8778
        %v8780 = vsel %vm4228, %v7733, 0.0
        %v8781 = vadd.f32 %v8779, %v8780
        %v8782 = vsel %vm4228, %v7734, 0.0
        %v8783 = vadd.f32 %v8781, %v8782
        %v8784 = vsel %vm4228, %v7735, 0.0
        %v8785 = vadd.f32 %v8783, %v8784
        %v8786 = vsel %vm4228, %v7736, 0.0
        %v8787 = vadd.f32 %v8785, %v8786
        %v8788 = vsel %vm4228, %v7737, 0.0
        %v8789 = vadd.f32 %v8787, %v8788
        %v8790 = vsel %vm4228, %v7738, 0.0
        %v8791 = vadd.f32 %v8789, %v8790
        %v8792 = vsel %vm4228, %v7739, 0.0
        %v8793 = vadd.f32 %v8791, %v8792
        %v8794 = vsel %vm4228, %v7740, 0.0
        %v8795 = vadd.f32 %v8793, %v8794
        %v8796 = vsel %vm4228, %v7741, 0.0
        %v8797 = vadd.f32 %v8795, %v8796
        %v8798 = vsel %vm4228, %v7742, 0.0
        %v8799 = vadd.f32 %v8797, %v8798
        %v8800 = vsel %vm4228, %v7743, 0.0
        %v8801 = vadd.f32 %v8799, %v8800
        %v8802 = vsel %vm4228, %v7744, 0.0
        %v8803 = vadd.f32 %v8801, %v8802
        %v8804 = vsel %vm4228, %v7745, 0.0
        %v8805 = vadd.f32 %v8803, %v8804
        %v8806 = vsel %vm4228, %v7746, 0.0
        %v8807 = vadd.f32 %v8805, %v8806
        %v8808 = vsel %vm4228, %v7747, 0.0
        %v8809 = vadd.f32 %v8807, %v8808
        %v8810 = vsel %vm4228, %v7748, 0.0
        %v8811 = vadd.f32 %v8809, %v8810
        %v8812 = vsel %vm4228, %v7749, 0.0
        %v8813 = vadd.f32 %v8811, %v8812
        %v8814 = vsel %vm4228, %v7750, 0.0
        %v8815 = vadd.f32 %v8813, %v8814
        %v8816 = vsel %vm4228, %v7751, 0.0
        %v8817 = vadd.f32 %v8815, %v8816
        %v8818 = vsel %vm4228, %v7752, 0.0
        %v8819 = vadd.f32 %v8817, %v8818
        %v8820 = vsel %vm4228, %v7753, 0.0
        %v8821 = vadd.f32 %v8819, %v8820
        %v8822 = vsel %vm4228, %v7754, 0.0
        %v8823 = vadd.f32 %v8821, %v8822
        %v8824 = vsel %vm4228, %v7755, 0.0
        %v8825 = vadd.f32 %v8823, %v8824
        %v8826 = vsel %vm4228, %v7756, 0.0
        %v8827 = vadd.f32 %v8825, %v8826
        %v8828 = vsel %vm4228, %v7757, 0.0
        %v8829 = vadd.f32 %v8827, %v8828
        %v8830 = vsel %vm4228, %v7758, 0.0
        %v8831 = vadd.f32 %v8829, %v8830
        %v8832 = vsel %vm4228, %v7759, 0.0
        %v8833 = vadd.f32 %v8831, %v8832
        %v8834 = vsel %vm4228, %v7760, 0.0
        %v8835 = vadd.f32 %v8833, %v8834
        %v8836 = vsel %vm4228, %v7761, 0.0
        %v8837 = vadd.f32 %v8835, %v8836
        %v8838 = vsel %vm4228, %v7762, 0.0
        %v8839 = vadd.f32 %v8837, %v8838
        %v8840 = vsel %vm4228, %v7763, 0.0
        %v8841 = vadd.f32 %v8839, %v8840
        %v8842 = vsel %vm4228, %v7764, 0.0
        %v8843 = vadd.f32 %v8841, %v8842
        %v8844 = vsel %vm4228, %v7765, 0.0
        %v8845 = vadd.f32 %v8843, %v8844
        %v8846 = vsel %vm4228, %v7766, 0.0
        %v8847 = vadd.f32 %v8845, %v8846
        %v8848 = vsel %vm4228, %v7767, 0.0
        %v8849 = vadd.f32 %v8847, %v8848
        %v8850 = vsel %vm4228, %v7768, 0.0
        %v8851 = vadd.f32 %v8849, %v8850
        %v8852 = vsel %vm4228, %v7769, 0.0
        %v8853 = vadd.f32 %v8851, %v8852
        %v8854 = vsel %vm4228, %v7770, 0.0
        %v8855 = vadd.f32 %v8853, %v8854
        %v8856 = vsel %vm4228, %v7771, 0.0
        %v8857 = vadd.f32 %v8855, %v8856
        %v8858 = vsel %vm4228, %v7772, 0.0
        %v8859 = vadd.f32 %v8857, %v8858
        %v8860 = vsel %vm4228, %v7773, 0.0
        %v8861 = vadd.f32 %v8859, %v8860
        %v8862 = vsel %vm4228, %v7774, 0.0
        %v8863 = vadd.f32 %v8861, %v8862
        %v8864 = vsel %vm4228, %v7775, 0.0
        %v8865 = vadd.f32 %v8863, %v8864
        %v8866 = vsel %vm4228, %v7776, 0.0
        %v8867 = vadd.f32 %v8865, %v8866
        %v8868 = vsel %vm4228, %v7777, 0.0
        %v8869 = vadd.f32 %v8867, %v8868
        %v8870 = vsel %vm4228, %v7778, 0.0
        %v8871 = vadd.f32 %v8869, %v8870
        %v8872 = vsel %vm4228, %v7779, 0.0
        %v8873 = vadd.f32 %v8871, %v8872
        %v8874 = vsel %vm4228, %v7780, 0.0
        %v8875 = vadd.f32 %v8873, %v8874
        %v8876 = vsel %vm4228, %v7781, 0.0
        %v8877 = vadd.f32 %v8875, %v8876
        %v8878 = vsel %vm4228, %v7782, 0.0
        %v8879 = vadd.f32 %v8877, %v8878
        %v8880 = vsel %vm4228, %v7783, 0.0
        %v8881 = vadd.f32 %v8879, %v8880
        %v8882 = vsel %vm4228, %v7784, 0.0
        %v8883 = vadd.f32 %v8881, %v8882
        %v8884 = vsel %vm4228, %v7785, 0.0
        %v8885 = vadd.f32 %v8883, %v8884
        %v8886 = vsel %vm4228, %v7786, 0.0
        %v8887 = vadd.f32 %v8885, %v8886
        %v8888 = vsel %vm4228, %v7787, 0.0
        %v8889 = vadd.f32 %v8887, %v8888
        %v8890 = vsel %vm4228, %v7788, 0.0
        %v8891 = vadd.f32 %v8889, %v8890
        %v8892 = vsel %vm4228, %v7789, 0.0
        %v8893 = vadd.f32 %v8891, %v8892
        %v8894 = vsel %vm4228, %v7790, 0.0
        %v8895 = vadd.f32 %v8893, %v8894
        %v8896 = vsel %vm4228, %v7791, 0.0
        %v8897 = vadd.f32 %v8895, %v8896
        %v8898 = vsel %vm4228, %v7792, 0.0
        %v8899 = vadd.f32 %v8897, %v8898
        %v8900 = vsel %vm4228, %v7793, 0.0
        %v8901 = vadd.f32 %v8899, %v8900
        %v8902 = vsel %vm4228, %v7794, 0.0
        %v8903 = vadd.f32 %v8901, %v8902
        %v8904 = vsel %vm4228, %v7795, 0.0
        %v8905 = vadd.f32 %v8903, %v8904
        %v8906 = vsel %vm4228, %v7796, 0.0
        %v8907 = vadd.f32 %v8905, %v8906
        %v8908 = vsel %vm4228, %v7797, 0.0
        %v8909 = vadd.f32 %v8907, %v8908
        %v8910 = vsel %vm4228, %v7798, 0.0
        %v8911 = vadd.f32 %v8909, %v8910
        %v8912 = vsel %vm4228, %v7799, 0.0
        %v8913 = vadd.f32 %v8911, %v8912
        %v8914 = vsel %vm4228, %v7800, 0.0
        %v8915 = vadd.f32 %v8913, %v8914
        %v8916 = vsel %vm4228, %v7801, 0.0
        %v8917 = vadd.f32 %v8915, %v8916
        %v8918 = vsel %vm4228, %v7802, 0.0
        %v8919 = vadd.f32 %v8917, %v8918
        %v8920 = vsel %vm4228, %v7803, 0.0
        %v8921 = vadd.f32 %v8919, %v8920
        %v8922 = vsel %vm4228, %v7804, 0.0
        %v8923 = vadd.f32 %v8921, %v8922
        %v8924 = vsel %vm4228, %v7805, 0.0
        %v8925 = vadd.f32 %v8923, %v8924
        %v8926 = vsel %vm4228, %v7806, 0.0
        %v8927 = vadd.f32 %v8925, %v8926
        %v8928 = vsel %vm4228, %v7807, 0.0
        %v8929 = vadd.f32 %v8927, %v8928
        %v8930 = vsel %vm4228, %v7808, 0.0
        %v8931 = vadd.f32 %v8929, %v8930
        %v8932 = vsel %vm4228, %v7809, 0.0
        %v8933 = vadd.f32 %v8931, %v8932
        %v8934 = vsel %vm4228, %v7810, 0.0
        %v8935 = vadd.f32 %v8933, %v8934
        %v8936 = vsel %vm4228, %v7811, 0.0
        %v8937 = vadd.f32 %v8935, %v8936
        %v8938 = vsel %vm4228, %v7812, 0.0
        %v8939 = vadd.f32 %v8937, %v8938
        %v8940 = vsel %vm4228, %v7813, 0.0
        %v8941 = vadd.f32 %v8939, %v8940
        %v8942 = vsel %vm4228, %v7814, 0.0
        %v8943 = vadd.f32 %v8941, %v8942
        %v8944 = vsel %vm4228, %v7815, 0.0
        %v8945 = vadd.f32 %v8943, %v8944
        %v8946 = vsel %vm4228, %v7816, 0.0
        %v8947 = vadd.f32 %v8945, %v8946
        %v8948 = vsel %vm4228, %v7817, 0.0
        %v8949 = vadd.f32 %v8947, %v8948
        %v8950 = vsel %vm4228, %v7818, 0.0
        %v8951 = vadd.f32 %v8949, %v8950
        %v8952 = vsel %vm4228, %v7819, 0.0
        %v8953 = vadd.f32 %v8951, %v8952
        %v8954 = vsel %vm4228, %v7820, 0.0
        %v8955 = vadd.f32 %v8953, %v8954
        %v8956 = vsel %vm4228, %v7821, 0.0
        %v8957 = vadd.f32 %v8955, %v8956
        %v8958 = vsel %vm4228, %v7822, 0.0
        %v8959 = vadd.f32 %v8957, %v8958
        %v8960 = vsel %vm4228, %v7823, 0.0
        %v8961 = vadd.f32 %v8959, %v8960
        %v8962 = vsel %vm4228, %v7824, 0.0
        %v8963 = vadd.f32 %v8961, %v8962
        %v8964 = vsel %vm4228, %v7825, 0.0
        %v8965 = vadd.f32 %v8963, %v8964
        %v8966 = vsel %vm4228, %v7826, 0.0
        %v8967 = vadd.f32 %v8965, %v8966
        %v8968 = vsel %vm4228, %v7827, 0.0
        %v8969 = vadd.f32 %v8967, %v8968
        %v8970 = vsel %vm4228, %v7828, 0.0
        %v8971 = vadd.f32 %v8969, %v8970
        %v8972 = vsel %vm4228, %v7829, 0.0
        %v8973 = vadd.f32 %v8971, %v8972
        %v8974 = vsel %vm4228, %v7830, 0.0
        %v8975 = vadd.f32 %v8973, %v8974
        %v8976 = vsel %vm4228, %v7831, 0.0
        %v8977 = vadd.f32 %v8975, %v8976
        %v8978 = vsel %vm4228, %v7832, 0.0
        %v8979 = vadd.f32 %v8977, %v8978
        %v8980 = vsel %vm4228, %v7833, 0.0
        %v8981 = vadd.f32 %v8979, %v8980
        %v8982 = vsel %vm4228, %v7834, 0.0
        %v8983 = vadd.f32 %v8981, %v8982
        %v8984 = vsel %vm4228, %v7835, 0.0
        %v8985 = vadd.f32 %v8983, %v8984
        %v8986 = vsel %vm4228, %v7836, 0.0
        %v8987 = vadd.f32 %v8985, %v8986
        %v8988 = vsel %vm4228, %v7837, 0.0
        %v8989 = vadd.f32 %v8987, %v8988
        %8990 = vadd.xlane.f32.xlu0 %v8989
        %v8991 = vpop.xlane.xlu0 %8990
        %v8992 = vadd.f32 %v5100, %v8222
        %v8993 = vadd.f32 %v5101, %v8991
        %8994 = vst.msk [vmem:[#allocation3] sm:$0xff] %vm5000, %v8992
        %8995 = vst.msk [vmem:[#allocation3 + $0x8] sm:$0x3] %vm5002, %v8993
        %p8996 = scmp.eq.s32.totalorder %s24, 1
        // Predicated region
        $region41: #{linear_pallas.1} parent=27 // pred_check
          %p8997 = pneg %p8996
        $region42: #{linear_pallas.1} parent=27 // pred_check_branch
          %8999 = sbr.rel (%p8997) target = $region44
        $region43: #{linear_pallas.1} parent=27 // pred_region
          %v9000 = vld [vmem:[#allocation2] sm:$0xff]
          %v9001 = vld [vmem:[#allocation2 + $0x8] sm:$0x3]
          %9002 = vst.msk [vmem:[%s231] sm:$0xff] %vm5000, %v9000
          %9003 = vst.msk [vmem:[%s231 + $0x8] sm:$0x3] %vm5002, %v9001
          %v9004 = vld [vmem:[#allocation3] sm:$0xff]
          %v9005 = vld [vmem:[#allocation3 + $0x8] sm:$0x3]
          %9008 = vrot.lane.b32.xlu0 %v9004, 1
          %v9009 = vpop.permute.xlu0 %9008
          %9010 = vrot.lane.b32.xlu0 %v9005, 1
          %v9011 = vpop.permute.xlu0 %9010
          %vm9014 = vcmask 15368
          %9015 = vst.msk [vmem:[%s231] sm:$0xff] %vm9014, %v9009
          %vm9016 = vcmask 9224
          %9017 = vst.msk [vmem:[%s231 + $0x8] sm:$0x3] %vm9016, %v9011
        $region44: #{linear_pallas.1} parent=27 // pred_fallthru
          _
        %p9018 = scmp.lt.s32.totalorder %s23, 1
        %s9019 = scalar_select %p9018, %s23, 1
        %s9020 = smul.addr %s9019, 2
        %s9021 = smul.addr %s9020, 8
        %s9022 = scalar_lea.vmem %s2, %s9021
        // Predicated region
        $region45: #{linear_pallas.1} parent=27 // pred_check
          %p9023 = pneg %p109
        $region46: #{linear_pallas.1} parent=27 // pred_check_branch
          %9025 = sbr.rel (%p9023) target = $region48
        $region47: #{linear_pallas.1} parent=27 // pred_region
          _
        $region48: #{linear_pallas.1} parent=27 // pred_fallthru
          _
      $region28: #{linear_pallas.1} parent=5 // pred_fallthru
        _
      %p9026 = scmp.le.s32.totalorder 2, %s14
      // Predicated region
      $region49: #{linear_pallas.1} parent=5 // pred_check
        %p9027 = pneg %p9026
      $region50: #{linear_pallas.1} parent=5 // pred_check_branch
        %9029 = sbr.rel (%p9027) target = $region52
      $region51: #{linear_pallas.1} parent=5 // pred_region
        %s9030 = ssub.s32 %s14, 2
        // Predicated region
        $region53: #{linear_pallas.1} parent=51 // pred_check
          %p9031 = pneg %p115
        $region54: #{linear_pallas.1} parent=51 // pred_check_branch
          %9033 = sbr.rel (%p9031) target = $region56
        $region55: #{linear_pallas.1} parent=51 // pred_region
          %p9034 = scmp.lt.s32.totalorder %s25, 1
          %s9035 = scalar_select %p9034, %s25, 1
          %s9036 = smul.addr %s9035, 2
          %s9037 = smul.addr %s9036, 8
          %s9038 = scalar_lea.vmem %s2, %s9037
        $region56: #{linear_pallas.1} parent=51 // pred_fallthru
          _
      $region52: #{linear_pallas.1} parent=5 // pred_fallthru
        _
    $region6: #{linear_pallas.1} parent=1 // loop_footer
      %s18 = sadd.s32 1, %s14
    $region7: #{linear_pallas.1} parent=1 // loop_footer_branch
      %13 = sbr.rel target = $region3
    $region8: #{linear_pallas.1} parent=1 // loop_exit
      _
    %9039 = vsyncpa [#allocation5], 1
    %s9040 = scalar_lea.sflag [#allocation5], 1
    %9041 = vsyncpa %s9040, 1
    %9042 = vsyncpa [#allocation7], 1
    %s9043 = scalar_lea.sflag [#allocation7], 1
    %9044 = vsyncpa %s9043, 1

</llo_original>
